<compile_context>
chip_gen: v5e
topology: v5e:2x2
jax: 0.10.0
libtpu: 0.0.40
codegen_flags: <defaults>
</compile_context>

<pallas_src>
import functools
from typing import NamedTuple

import jax
import jax.numpy as jnp
from jax.experimental import pallas as pl
from jax.experimental.pallas import tpu as pltpu


# ----------------------------------------------------------------------------
# Helpers
# ----------------------------------------------------------------------------
def _round_up(x, m):
    return (x + m - 1) // m * m


def _pad2(x, rows, cols):
    r, c = x.shape
    if r == rows and c == cols:
        return x
    return jnp.pad(x, ((0, rows - r), (0, cols - c)))


def _pick_reduction_tiling(img_in, max_tk=2048):
    """Pick (TK, IMG_IN_P).

    IMG_IN is first padded to a multiple of 128 (lane alignment).  TK is the largest
    multiple of 128 (capped at max_tk) whose additional zero-pad waste on the reduction
    dim stays under 1/8 of the real data — avoids the tens-of-percent wasted wv DMA the
    old round-up-to-TK scheme could produce, while still giving 1024-2048-deep K tiles.
    """
    p128 = _round_up(img_in, 128)
    best_tk, best_pad = 128, p128
    tk = 128
    while tk <= min(max_tk, p128):
        padded = _round_up(p128, tk)
        if (padded - img_in) * 8 <= img_in or tk == 128:
            best_tk, best_pad = tk, padded
        tk += 128
    return best_tk, best_pad


class Dims(NamedTuple):
    TK: int
    IMG_IN_P: int
    TXT_IN_P: int
    IMG_FEAT_P: int
    TXT_FEAT_P: int
    HID_P: int
    NC: int
    NC_P: int


# ----------------------------------------------------------------------------
# One-time parameter preparation (hoisted out of the jitted forward):
# pad + cast every weight once so the dominant wv tensor is never re-padded per call.
# ----------------------------------------------------------------------------
def prepare_params(params, *, max_tk=2048):
    f32, bf16 = jnp.float32, jnp.bfloat16

    IMG_IN, IMG_FEAT = params["wv"].shape
    TXT_IN, TXT_FEAT = params["wt"].shape
    HIDDEN = params["w1_img"].shape[1]
    NC = params["w2"].shape[1]

    TK, IMG_IN_P = _pick_reduction_tiling(IMG_IN, max_tk=max_tk)
    dims = Dims(
        TK=TK,
        IMG_IN_P=IMG_IN_P,
        TXT_IN_P=_round_up(TXT_IN, 128),
        IMG_FEAT_P=_round_up(IMG_FEAT, 128),
        TXT_FEAT_P=_round_up(TXT_FEAT, 128),   # 312 -> 384
        HID_P=_round_up(HIDDEN, 128),
        NC=NC,
        NC_P=_round_up(NC, 128),               # 18 -> 128 (lane-dense output stores)
    )

    prepped = {
        "embed": params["embed"].astype(bf16),
        "wv": _pad2(params["wv"].astype(bf16), IMG_IN_P, dims.IMG_FEAT_P),
        "bv": _pad2(params["bv"].astype(f32), 1, dims.IMG_FEAT_P),
        "wt": _pad2(params["wt"].astype(bf16), dims.TXT_IN_P, dims.TXT_FEAT_P),
        "bt": _pad2(params["bt"].astype(f32), 1, dims.TXT_FEAT_P),
        "w1_img": _pad2(params["w1_img"].astype(bf16), dims.IMG_FEAT_P, dims.HID_P),
        "w1_txt": _pad2(params["w1_txt"].astype(bf16), dims.TXT_FEAT_P, dims.HID_P),
        "b1": _pad2(params["b1"].astype(f32), 1, dims.HID_P),
        "w2": _pad2(params["w2"].astype(bf16), dims.HID_P, dims.NC_P),
        "b2": _pad2(params["b2"].astype(f32), 1, dims.NC_P),
    }
    prepped = jax.tree_util.tree_map(jnp.asarray, prepped)
    return prepped, dims


# ----------------------------------------------------------------------------
# Pallas kernel
#   grid = (M tiles over padded batch, K tiles over flattened-image reduction dim)
# ----------------------------------------------------------------------------
def _mm_classifier_kernel(
    img_flat_ref,   # [TM, TK]               bf16  flattened image tile
    txt_pool_ref,   # [TM, TXT_IN_P]         bf16  mask-pooled token embeddings
    wv_ref,         # [TK, IMG_FEAT_P]       bf16  vision surrogate projection (K tile)
    bv_ref,         # [1, IMG_FEAT_P]        f32
    wt_ref,         # [TXT_IN_P, TXT_FEAT_P] bf16  text surrogate projection
    bt_ref,         # [1, TXT_FEAT_P]        f32
    w1i_ref,        # [IMG_FEAT_P, HID_P]    bf16  classifier layer-1 (image rows)
    w1t_ref,        # [TXT_FEAT_P, HID_P]    bf16  classifier layer-1 (text rows)
    b1_ref,         # [1, HID_P]             f32
    w2_ref,         # [HID_P, NC_P]          bf16  classifier layer-2
    b2_ref,         # [1, NC_P]              f32
    out_ref,        # [TM, NC_P]             f32
    acc_ref,        # [TM, IMG_FEAT_P]       f32   scratch accumulator for img_feat
):
    f32 = jnp.float32
    k = pl.program_id(1)

    # --- init accumulator at the first reduction step of each batch tile ---
    @pl.when(k == 0)
    def _():
        acc_ref[...] = jnp.zeros_like(acc_ref)

    # --- vision surrogate: accumulate partial img_flat @ wv over K tiles (MXU, f32 acc) ---
    acc_ref[...] += jnp.dot(img_flat_ref[...], wv_ref[...],
                            preferred_element_type=f32)

    # --- finalize: biases, text path, fused classifier (hoisted out of K loop).
    #     Activations stay f32 into the (tiny) classifier matmuls — correctness-review fix. ---
    @pl.when(k == pl.num_programs(1) - 1)
    def _():
        img_feat = acc_ref[...] + bv_ref[...]                                   # f32
        txt_feat = (jnp.dot(txt_pool_ref[...], wt_ref[...],
                            preferred_element_type=f32) + bt_ref[...])          # f32

        # concat([img_feat, txt_feat]) @ W1 == img_feat @ W1[:d_img] + txt_feat @ W1[d_img:]
        h = (jnp.dot(img_feat, w1i_ref[...].astype(f32), preferred_element_type=f32)
             + jnp.dot(txt_feat, w1t_ref[...].astype(f32), preferred_element_type=f32)
             + b1_ref[...])
        h = jnp.maximum(h, 0.0)                                                 # ReLU

        out = (jnp.dot(h, w2_ref[...].astype(f32), preferred_element_type=f32)
               + b2_ref[...])
        out_ref[...] = out.astype(out_ref.dtype)


# ----------------------------------------------------------------------------
# Jitted forward: glue (flatten, embedding lookup, masked mean pool), per-call
# activation padding only (weights are pre-padded), pallas_call.
# ----------------------------------------------------------------------------
@functools.partial(jax.jit, static_argnames=("dims",))
def multimodal_classifier_forward(image, input_ids, attention_mask, prepped, dims):
    f32, bf16 = jnp.float32, jnp.bfloat16
    d = dims
    B = image.shape[0]

    # --- glue: NCHW image -> flat [B, C*H*W] ---
    img_flat = image.reshape(B, -1).astype(f32)

    # --- glue: token embedding lookup + masked mean pooling -> [B, TXT_IN] ---
    emb = jnp.take(prepped["embed"], input_ids, axis=0).astype(f32)        # [B, S, E]
    mask = attention_mask.astype(f32)[..., None]                            # [B, S, 1]
    txt_pool = (emb * mask).sum(axis=1) / jnp.maximum(mask.sum(axis=1), 1.0)

    # --- batch tiling: maximize TM (256 fills v6e/v7x MXU height and halves wv
    #     re-streams; on v5e 128-row tiles are already MXU-height) ---
    TM = min(256, _round_up(B, 16))
    B_P = _round_up(B, TM)
    TK = d.TK

    # --- per-call activation padding (batch-sized, cheap); weights are pre-padded ---
    img_flat_p = _pad2(img_flat, B_P, d.IMG_IN_P).astype(bf16)
    txt_pool_p = _pad2(txt_pool, B_P, d.TXT_IN_P).astype(bf16)

    # --- VMEM budget: 2x (double buffering) * block bytes + scratch + headroom,
    #     clamped under v7x's 64 MiB physical VMEM. ---
    blk_bytes = (
        TM * TK * 2 + TM * d.TXT_IN_P * 2 + TK * d.IMG_FEAT_P * 2 + d.IMG_FEAT_P * 4
        + d.TXT_IN_P * d.TXT_FEAT_P * 2 + d.TXT_FEAT_P * 4
        + d.IMG_FEAT_P * d.HID_P * 2 + d.TXT_FEAT_P * d.HID_P * 2 + d.HID_P * 4
        + d.HID_P * d.NC_P * 2 + d.NC_P * 4 + TM * d.NC_P * 4
    )
    scratch_bytes = TM * d.IMG_FEAT_P * 4
    vmem_limit = int(min(48 << 20, 2 * blk_bytes + scratch_bytes + (8 << 20)))

    grid = (B_P // TM, d.IMG_IN_P // TK)

    in_specs = [
        pl.BlockSpec((TM, TK), lambda m, k: (m, k)),                            # img_flat (streamed)
        pl.BlockSpec((TM, d.TXT_IN_P), lambda m, k: (m, 0)),                    # txt_pool
        pl.BlockSpec((TK, d.IMG_FEAT_P), lambda m, k: (k, 0)),                  # wv (K-tiled stream)
        pl.BlockSpec((1, d.IMG_FEAT_P), lambda m, k: (0, 0)),                   # bv (resident)
        pl.BlockSpec((d.TXT_IN_P, d.TXT_FEAT_P), lambda m, k: (0, 0)),          # wt (resident)
        pl.BlockSpec((1, d.TXT_FEAT_P), lambda m, k: (0, 0)),                   # bt
        pl.BlockSpec((d.IMG_FEAT_P, d.HID_P), lambda m, k: (0, 0)),             # w1_img (resident)
        pl.BlockSpec((d.TXT_FEAT_P, d.HID_P), lambda m, k: (0, 0)),             # w1_txt (resident)
        pl.BlockSpec((1, d.HID_P), lambda m, k: (0, 0)),                        # b1
        pl.BlockSpec((d.HID_P, d.NC_P), lambda m, k: (0, 0)),                   # w2 (resident)
        pl.BlockSpec((1, d.NC_P), lambda m, k: (0, 0)),                         # b2
    ]
    out_spec = pl.BlockSpec((TM, d.NC_P), lambda m, k: (m, 0))

    out_p = pl.pallas_call(
        _mm_classifier_kernel,
        out_shape=jax.ShapeDtypeStruct((B_P, d.NC_P), f32),
        grid_spec=pltpu.PrefetchScalarGridSpec(
            num_scalar_prefetch=0,
            grid=grid,
            in_specs=in_specs,
            out_specs=out_spec,
            scratch_shapes=[pltpu.VMEM((TM, d.IMG_FEAT_P), f32)],
        ),
        compiler_params=pltpu.CompilerParams(
            dimension_semantics=("parallel", "arbitrary"),
            vmem_limit_bytes=vmem_limit,
        ),
    )(img_flat_p, txt_pool_p,
      prepped["wv"], prepped["bv"], prepped["wt"], prepped["bt"],
      prepped["w1_img"], prepped["w1_txt"], prepped["b1"],
      prepped["w2"], prepped["b2"])

    return out_p[:B, :d.NC]


# ----------------------------------------------------------------------------
# Pure-JAX reference (same surrogate backbones) for correctness validation.
# ----------------------------------------------------------------------------
def reference_forward(image, input_ids, attention_mask, params):
    f32 = jnp.float32
    B = image.shape[0]
    img_flat = image.reshape(B, -1).astype(f32)
    emb = jnp.take(params["embed"].astype(f32), input_ids, axis=0)
    mask = attention_mask.astype(f32)[..., None]
    txt_pool = (emb * mask).sum(axis=1) / jnp.maximum(mask.sum(axis=1), 1.0)

    img_feat = img_flat @ params["wv"].astype(f32) + params["bv"].astype(f32)
    txt_feat = txt_pool @ params["wt"].astype(f32) + params["bt"].astype(f32)
    fused = jnp.concatenate([img_feat, txt_feat], axis=1)
    w1 = jnp.concatenate([params["w1_img"], params["w1_txt"]], axis=0).astype(f32)
    h = jnp.maximum(fused @ w1 + params["b1"].astype(f32), 0.0)
    return h @ params["w2"].astype(f32) + params["b2"].astype(f32)


# ----------------------------------------------------------------------------
# Deterministic parameter construction (shapes from the module's __init__).
# Big weights stored in bfloat16; biases in f32.
# ----------------------------------------------------------------------------
def make_params(key, *, img_in, txt_in, img_feat_dim=1280, text_feat_dim=312,
                hidden_dim=512, num_classes=18, vocab_size=100):
    ks = jax.random.split(key, 10)
    scale = 0.02

    def w(k, shape):
        return (scale * jax.random.normal(k, shape, dtype=jnp.float32)).astype(jnp.bfloat16)

    def b(k, shape):
        return (scale * jax.random.normal(k, shape, dtype=jnp.float32)).astype(jnp.float32)

    return {
        # text token embedding table (surrogate backbone front-end)
        "embed": w(ks[0], (vocab_size, txt_in)),
        # vision surrogate projection: [C*H*W] -> img_feat_dim
        "wv": w(ks[1], (img_in, img_feat_dim)),
        "bv": b(ks[2], (1, img_feat_dim)),
        # text surrogate projection: pooled-emb -> text_feat_dim
        "wt": w(ks[3], (txt_in, text_feat_dim)),
        "bt": b(ks[4], (1, text_feat_dim)),
        # classifier layer 1: Linear(img_feat_dim + text_feat_dim, hidden_dim), split by rows
        "w1_img": w(ks[5], (img_feat_dim, hidden_dim)),
        "w1_txt": w(ks[6], (text_feat_dim, hidden_dim)),
        "b1": b(ks[7], (1, hidden_dim)),
        # classifier layer 2: Linear(hidden_dim, num_classes)
        "w2": w(ks[8], (hidden_dim, num_classes)),
        "b2": b(ks[9], (1, num_classes)),
    }


if __name__ == "__main__":
    key = jax.random.PRNGKey(0)
    k_img, k_ids, k_mask, k_par = jax.random.split(key, 4)

    # Small example shapes consistent with the module's forward signature.
    B, C, H, W = 2, 4, 16, 16        # image: NCHW
    S, VOCAB = 8, 100                # text: [B, S] token ids + attention mask
    TXT_IN = 312                     # embedding width feeding the text surrogate

    image = jax.random.normal(k_img, (B, C, H, W), dtype=jnp.float32)
    input_ids = jax.random.randint(k_ids, (B, S), 0, VOCAB, dtype=jnp.int32)
    attention_mask = (jax.random.uniform(k_mask, (B, S)) > 0.2).astype(jnp.int32)

    params = make_params(k_par, img_in=C * H * W, txt_in=TXT_IN)

    # One-time weight padding/casting (hoisted out of the jitted per-call forward).
    prepped, dims = prepare_params(params)

    out = multimodal_classifier_forward(image, input_ids, attention_mask, prepped, dims)
    out = jax.block_until_ready(out)

    ref = reference_forward(image, input_ids, attention_mask, params)

    assert out.shape == (B, 18), out.shape
    assert jnp.isfinite(out).all()
    # bf16 streamed operands with f32 accumulation + f32 classifier activations
    # -> small, bounded drift vs the f32 reference.
    assert jnp.allclose(out, ref, atol=3e-2, rtol=3e-2), \
        float(jnp.max(jnp.abs(out - ref)))
    print("KERNEL_OK")
</pallas_src>

<mosaic_0001>
module attributes {stable_mosaic.version = 11 : i64} {
  func.func @_mm_classifier_kernel(%arg0: i32, %arg1: i32, %arg2: memref<16x1024xbf16, #tpu.memory_space<vmem>>, %arg3: memref<16x384xbf16, #tpu.memory_space<vmem>>, %arg4: memref<1024x1280xbf16, #tpu.memory_space<vmem>>, %arg5: memref<1x1280xf32, #tpu.memory_space<vmem>>, %arg6: memref<384x384xbf16, #tpu.memory_space<vmem>>, %arg7: memref<1x384xf32, #tpu.memory_space<vmem>>, %arg8: memref<1280x512xbf16, #tpu.memory_space<vmem>>, %arg9: memref<384x512xbf16, #tpu.memory_space<vmem>>, %arg10: memref<1x512xf32, #tpu.memory_space<vmem>>, %arg11: memref<512x128xbf16, #tpu.memory_space<vmem>>, %arg12: memref<1x128xf32, #tpu.memory_space<vmem>>, %arg13: memref<16x128xf32, #tpu.memory_space<vmem>>, %arg14: memref<16x1280xf32, #tpu.memory_space<vmem>>) attributes {dimension_semantics = [#tpu.dimension_semantics<parallel>, #tpu.dimension_semantics<arbitrary>], iteration_bounds = array<i64: 1, 1>, scalar_prefetch = 0 : i64, scratch_operands = 1 : i64, tpu.core_type = #tpu.core_type<tc>, window_params = [{transform_indices = @transform_0, window_bounds = array<i64: 16, 1024>}, {transform_indices = @transform_1, window_bounds = array<i64: 16, 384>}, {transform_indices = @transform_2, window_bounds = array<i64: 1024, 1280>}, {pipeline_mode = #tpu.pipeline_mode<synchronous>, transform_indices = @transform_3, window_bounds = array<i64: 1, 1280>}, {pipeline_mode = #tpu.pipeline_mode<synchronous>, transform_indices = @transform_4, window_bounds = array<i64: 384, 384>}, {pipeline_mode = #tpu.pipeline_mode<synchronous>, transform_indices = @transform_5, window_bounds = array<i64: 1, 384>}, {pipeline_mode = #tpu.pipeline_mode<synchronous>, transform_indices = @transform_6, window_bounds = array<i64: 1280, 512>}, {pipeline_mode = #tpu.pipeline_mode<synchronous>, transform_indices = @transform_7, window_bounds = array<i64: 384, 512>}, {pipeline_mode = #tpu.pipeline_mode<synchronous>, transform_indices = @transform_8, window_bounds = array<i64: 1, 512>}, {pipeline_mode = #tpu.pipeline_mode<synchronous>, transform_indices = @transform_9, window_bounds = array<i64: 512, 128>}, {pipeline_mode = #tpu.pipeline_mode<synchronous>, transform_indices = @transform_10, window_bounds = array<i64: 1, 128>}, {transform_indices = @transform_11, window_bounds = array<i64: 16, 128>}]} {
    %c0_i32 = arith.constant 0 : i32
    %0 = arith.cmpi eq, %arg1, %c0_i32 : i32
    %1 = arith.extui %0 : i1 to i32
    %c0_i32_0 = arith.constant 0 : i32
    %2 = arith.cmpi ne, %1, %c0_i32_0 : i32
    scf.if %2 {
      %cst_10 = arith.constant 0.000000e+00 : f32
      %12 = vector.broadcast %cst_10 : f32 to vector<16x1280xf32>
      %c0_11 = arith.constant 0 : index
      %c0_12 = arith.constant 0 : index
      %13 = vector.load %arg14[%c0_11, %c0_12] : memref<16x1280xf32, #tpu.memory_space<vmem>>, vector<16x1280xf32>
      tpu.vector_store %arg14[%c0_11, %c0_12], %12 {strides = array<i32>} : memref<16x1280xf32, #tpu.memory_space<vmem>>, vector<16x1280xf32>,
    } else {
    }
    %c0 = arith.constant 0 : index
    %c0_1 = arith.constant 0 : index
    %3 = vector.load %arg14[%c0, %c0_1] : memref<16x1280xf32, #tpu.memory_space<vmem>>, vector<16x1280xf32>
    %c0_2 = arith.constant 0 : index
    %c0_3 = arith.constant 0 : index
    %4 = vector.load %arg2[%c0_2, %c0_3] : memref<16x1024xbf16, #tpu.memory_space<vmem>>, vector<16x1024xbf16>
    %c0_4 = arith.constant 0 : index
    %c0_5 = arith.constant 0 : index
    %5 = vector.load %arg4[%c0_4, %c0_5] : memref<1024x1280xbf16, #tpu.memory_space<vmem>>, vector<1024x1280xbf16>
    %cst = arith.constant dense<0.000000e+00> : vector<16x1280xf32>
    %6 = tpu.matmul %4, %5, %cst {dimension_numbers = #tpu.dot_dimension_numbers<[1], [0], [0], [1], [0, 0, 1, 1], [], []>} : vector<16x1024xbf16>, vector<1024x1280xbf16>, vector<16x1280xf32> -> vector<16x1280xf32>
    %7 = arith.addf %3, %6 : vector<16x1280xf32>
    %c0_6 = arith.constant 0 : index
    %c0_7 = arith.constant 0 : index
    %8 = vector.load %arg14[%c0_6, %c0_7] : memref<16x1280xf32, #tpu.memory_space<vmem>>, vector<16x1280xf32>
    tpu.vector_store %arg14[%c0_6, %c0_7], %7 {strides = array<i32>} : memref<16x1280xf32, #tpu.memory_space<vmem>>, vector<16x1280xf32>,
    %c0_i32_8 = arith.constant 0 : i32
    %9 = arith.cmpi eq, %arg1, %c0_i32_8 : i32
    %10 = arith.extui %9 : i1 to i32
    %c0_i32_9 = arith.constant 0 : i32
    %11 = arith.cmpi ne, %10, %c0_i32_9 : i32
    scf.if %11 {
      %c0_10 = arith.constant 0 : index
      %c0_11 = arith.constant 0 : index
      %12 = vector.load %arg14[%c0_10, %c0_11] : memref<16x1280xf32, #tpu.memory_space<vmem>>, vector<16x1280xf32>
      %c0_12 = arith.constant 0 : index
      %c0_13 = arith.constant 0 : index
      %13 = vector.load %arg5[%c0_12, %c0_13] : memref<1x1280xf32, #tpu.memory_space<vmem>>, vector<1x1280xf32>
      %14 = vector.broadcast %13 : vector<1x1280xf32> to vector<16x1280xf32>
      %15 = arith.addf %12, %14 : vector<16x1280xf32>
      %c0_14 = arith.constant 0 : index
      %c0_15 = arith.constant 0 : index
      %16 = vector.load %arg3[%c0_14, %c0_15] : memref<16x384xbf16, #tpu.memory_space<vmem>>, vector<16x384xbf16>
      %c0_16 = arith.constant 0 : index
      %c0_17 = arith.constant 0 : index
      %17 = vector.load %arg6[%c0_16, %c0_17] : memref<384x384xbf16, #tpu.memory_space<vmem>>, vector<384x384xbf16>
      %cst_18 = arith.constant dense<0.000000e+00> : vector<16x384xf32>
      %18 = tpu.matmul %16, %17, %cst_18 {dimension_numbers = #tpu.dot_dimension_numbers<[1], [0], [0], [1], [0, 0, 1, 1], [], []>} : vector<16x384xbf16>, vector<384x384xbf16>, vector<16x384xf32> -> vector<16x384xf32>
      %c0_19 = arith.constant 0 : index
      %c0_20 = arith.constant 0 : index
      %19 = vector.load %arg7[%c0_19, %c0_20] : memref<1x384xf32, #tpu.memory_space<vmem>>, vector<1x384xf32>
      %20 = vector.broadcast %19 : vector<1x384xf32> to vector<16x384xf32>
      %21 = arith.addf %18, %20 : vector<16x384xf32>
      %c0_21 = arith.constant 0 : index
      %c0_22 = arith.constant 0 : index
      %22 = vector.load %arg8[%c0_21, %c0_22] : memref<1280x512xbf16, #tpu.memory_space<vmem>>, vector<1280x512xbf16>
      %23 = arith.extf %22 : vector<1280x512xbf16> to vector<1280x512xf32>
      %cst_23 = arith.constant dense<0.000000e+00> : vector<16x512xf32>
      %24 = tpu.matmul %15, %23, %cst_23 {dimension_numbers = #tpu.dot_dimension_numbers<[1], [0], [0], [1], [0, 0, 1, 1], [], []>} : vector<16x1280xf32>, vector<1280x512xf32>, vector<16x512xf32> -> vector<16x512xf32>
      %c0_24 = arith.constant 0 : index
      %c0_25 = arith.constant 0 : index
      %25 = vector.load %arg9[%c0_24, %c0_25] : memref<384x512xbf16, #tpu.memory_space<vmem>>, vector<384x512xbf16>
      %26 = arith.extf %25 : vector<384x512xbf16> to vector<384x512xf32>
      %cst_26 = arith.constant dense<0.000000e+00> : vector<16x512xf32>
      %27 = tpu.matmul %21, %26, %cst_26 {dimension_numbers = #tpu.dot_dimension_numbers<[1], [0], [0], [1], [0, 0, 1, 1], [], []>} : vector<16x384xf32>, vector<384x512xf32>, vector<16x512xf32> -> vector<16x512xf32>
      %28 = arith.addf %24, %27 : vector<16x512xf32>
      %c0_27 = arith.constant 0 : index
      %c0_28 = arith.constant 0 : index
      %29 = vector.load %arg10[%c0_27, %c0_28] : memref<1x512xf32, #tpu.memory_space<vmem>>, vector<1x512xf32>
      %30 = vector.broadcast %29 : vector<1x512xf32> to vector<16x512xf32>
      %31 = arith.addf %28, %30 : vector<16x512xf32>
      %cst_29 = arith.constant 0.000000e+00 : f32
      %32 = vector.broadcast %cst_29 : f32 to vector<16x512xf32>
      %33 = arith.maximumf %31, %32 : vector<16x512xf32>
      %c0_30 = arith.constant 0 : index
      %c0_31 = arith.constant 0 : index
      %34 = vector.load %arg11[%c0_30, %c0_31] : memref<512x128xbf16, #tpu.memory_space<vmem>>, vector<512x128xbf16>
      %35 = arith.extf %34 : vector<512x128xbf16> to vector<512x128xf32>
      %cst_32 = arith.constant dense<0.000000e+00> : vector<16x128xf32>
      %36 = tpu.matmul %33, %35, %cst_32 {dimension_numbers = #tpu.dot_dimension_numbers<[1], [0], [0], [1], [0, 0, 1, 1], [], []>} : vector<16x512xf32>, vector<512x128xf32>, vector<16x128xf32> -> vector<16x128xf32>
      %c0_33 = arith.constant 0 : index
      %c0_34 = arith.constant 0 : index
      %37 = vector.load %arg12[%c0_33, %c0_34] : memref<1x128xf32, #tpu.memory_space<vmem>>, vector<1x128xf32>
      %38 = vector.broadcast %37 : vector<1x128xf32> to vector<16x128xf32>
      %39 = arith.addf %36, %38 : vector<16x128xf32>
      %c0_35 = arith.constant 0 : index
      %c0_36 = arith.constant 0 : index
      %40 = vector.load %arg13[%c0_35, %c0_36] : memref<16x128xf32, #tpu.memory_space<vmem>>, vector<16x128xf32>
      tpu.vector_store %arg13[%c0_35, %c0_36], %39 {strides = array<i32>} : memref<16x128xf32, #tpu.memory_space<vmem>>, vector<16x128xf32>,
    } else {
    }
    return
  }
  func.func @transform_0(%arg0: i32, %arg1: i32) -> (i32, i32) {
    %c0_i32 = arith.constant 0 : i32
    return %arg0, %arg1 : i32, i32
  }
  func.func @transform_1(%arg0: i32, %arg1: i32) -> (i32, i32) {
    %c0_i32 = arith.constant 0 : i32
    %c0_i32_0 = arith.constant 0 : i32
    return %arg0, %c0_i32 : i32, i32
  }
  func.func @transform_2(%arg0: i32, %arg1: i32) -> (i32, i32) {
    %c0_i32 = arith.constant 0 : i32
    %c0_i32_0 = arith.constant 0 : i32
    return %arg1, %c0_i32 : i32, i32
  }
  func.func @transform_3(%arg0: i32, %arg1: i32) -> (i32, i32) {
    %c0_i32 = arith.constant 0 : i32
    %c0_i32_0 = arith.constant 0 : i32
    %c0_i32_1 = arith.constant 0 : i32
    return %c0_i32, %c0_i32_0 : i32, i32
  }
  func.func @transform_4(%arg0: i32, %arg1: i32) -> (i32, i32) {
    %c0_i32 = arith.constant 0 : i32
    %c0_i32_0 = arith.constant 0 : i32
    %c0_i32_1 = arith.constant 0 : i32
    return %c0_i32, %c0_i32_0 : i32, i32
  }
  func.func @transform_5(%arg0: i32, %arg1: i32) -> (i32, i32) {
    %c0_i32 = arith.constant 0 : i32
    %c0_i32_0 = arith.constant 0 : i32
    %c0_i32_1 = arith.constant 0 : i32
    return %c0_i32, %c0_i32_0 : i32, i32
  }
  func.func @transform_6(%arg0: i32, %arg1: i32) -> (i32, i32) {
    %c0_i32 = arith.constant 0 : i32
    %c0_i32_0 = arith.constant 0 : i32
    %c0_i32_1 = arith.constant 0 : i32
    return %c0_i32, %c0_i32_0 : i32, i32
  }
  func.func @transform_7(%arg0: i32, %arg1: i32) -> (i32, i32) {
    %c0_i32 = arith.constant 0 : i32
    %c0_i32_0 = arith.constant 0 : i32
    %c0_i32_1 = arith.constant 0 : i32
    return %c0_i32, %c0_i32_0 : i32, i32
  }
  func.func @transform_8(%arg0: i32, %arg1: i32) -> (i32, i32) {
    %c0_i32 = arith.constant 0 : i32
    %c0_i32_0 = arith.constant 0 : i32
    %c0_i32_1 = arith.constant 0 : i32
    return %c0_i32, %c0_i32_0 : i32, i32
  }
  func.func @transform_9(%arg0: i32, %arg1: i32) -> (i32, i32) {
    %c0_i32 = arith.constant 0 : i32
    %c0_i32_0 = arith.constant 0 : i32
    %c0_i32_1 = arith.constant 0 : i32
    return %c0_i32, %c0_i32_0 : i32, i32
  }
  func.func @transform_10(%arg0: i32, %arg1: i32) -> (i32, i32) {
    %c0_i32 = arith.constant 0 : i32
    %c0_i32_0 = arith.constant 0 : i32
    %c0_i32_1 = arith.constant 0 : i32
    return %c0_i32, %c0_i32_0 : i32, i32
  }
  func.func @transform_11(%arg0: i32, %arg1: i32) -> (i32, i32) {
    %c0_i32 = arith.constant 0 : i32
    %c0_i32_0 = arith.constant 0 : i32
    return %arg0, %c0_i32 : i32, i32
  }
}

</mosaic_0001>

<llo_original>
// kernel: multimodal_classifier_forward.1
$region0: #{multimodal_classifier_forward.1}
  #allocation0 [shape = 'u32[]', space=smem, size = 0x4, offset = 0x4, fixed_abs, tag = 'smem constant byte address 0x4 - core index']
  #allocation1 [shape = 'u32[72,128]{1,0:T(1,128)}', space=vmem, size = 0x9000, scoped, tag = 'internal scratch']
  #allocation2 [shape = 'f32[16,1280]{1,0:T(8,128)}', space=vmem, size = 0x14000, scoped, tag = 'scratch operand']
  %s0 = inlined_call_operand.vmem [shape: bf16[16,1024], index: 0, kind: input, shape index: {}]
  %s1 = inlined_call_operand.vmem [shape: bf16[16,384], index: 1, kind: input, shape index: {}]
  %s2 = inlined_call_operand.hbm [shape: bf16[1024,1280], index: 2, kind: input, shape index: {}]
  %s3 = inlined_call_operand.hbm [shape: f32[1,1280], index: 3, kind: input, shape index: {}]
  %s4 = inlined_call_operand.hbm [shape: bf16[384,384], index: 4, kind: input, shape index: {}]
  %s5 = inlined_call_operand.hbm [shape: f32[1,384], index: 5, kind: input, shape index: {}]
  %s6 = inlined_call_operand.hbm [shape: bf16[1280,512], index: 6, kind: input, shape index: {}]
  %s7 = inlined_call_operand.hbm [shape: bf16[384,512], index: 7, kind: input, shape index: {}]
  %s8 = inlined_call_operand.hbm [shape: f32[1,512], index: 8, kind: input, shape index: {}]
  %s9 = inlined_call_operand.hbm [shape: bf16[512,128], index: 9, kind: input, shape index: {}]
  %s10 = inlined_call_operand.hbm [shape: f32[1,128], index: 10, kind: input, shape index: {}]
  %s11 = inlined_call_operand.vmem [shape: f32[16,128], index: 11, kind: output, shape index: {}]
  %s12 = sld [smem:[#allocation0]]
  $region98: #{multimodal_classifier_forward.1} parent=0
    _
  %s14 = ssub.s32 1, %s12
  %s15 = scalar_select 0, %s14, %s12
  $region1: #{multimodal_classifier_forward.1} parent=0
    #allocation3 [shape = 'u8[2621440]{0}', space=vmem, size = 0x280000, scoped, tag = 'input window, operand 2, single buffered']
    #allocation4 [shape = 's32[1]{0}', space=sflag, size = 0x4, scoped, tag = 'scoped memory for multimodal_classifier_forward.1']
    #allocation5 [shape = 'u8[5120]{0}', space=vmem, size = 0x1400, scoped, tag = 'input window, operand 3, single buffered']
    #allocation6 [shape = 's32[1]{0}', space=sflag, size = 0x4, scoped, tag = 'scoped memory for multimodal_classifier_forward.1']
    #allocation7 [shape = 'u8[294912]{0}', space=vmem, size = 0x48000, scoped, tag = 'input window, operand 4, single buffered']
    #allocation8 [shape = 'u8[1536]{0}', space=vmem, size = 0x800, scoped, tag = 'input window, operand 5, single buffered']
    #allocation9 [shape = 's32[1]{0}', space=sflag, size = 0x4, scoped, tag = 'scoped memory for multimodal_classifier_forward.1']
    #allocation10 [shape = 'u8[1310720]{0}', space=vmem, size = 0x140000, scoped, tag = 'input window, operand 6, single buffered']
    #allocation11 [shape = 'u8[393216]{0}', space=vmem, size = 0x60000, scoped, tag = 'input window, operand 7, single buffered']
    #allocation12 [shape = 's32[1]{0}', space=sflag, size = 0x4, scoped, tag = 'scoped memory for multimodal_classifier_forward.1']
    #allocation13 [shape = 'u8[2048]{0}', space=vmem, size = 0x800, scoped, tag = 'input window, operand 8, single buffered']
    #allocation14 [shape = 'u8[131072]{0}', space=vmem, size = 0x20000, scoped, tag = 'input window, operand 9, single buffered']
    #allocation15 [shape = 's32[1]{0}', space=sflag, size = 0x4, scoped, tag = 'scoped memory for multimodal_classifier_forward.1']
    #allocation16 [shape = 'u8[512]{0}', space=vmem, size = 0x400, scoped, tag = 'input window, operand 10, single buffered']
    %16 = vsyncpa [#allocation4], 0
    %17 = vsyncpa [#allocation6], 0
    %18 = vsyncpa [#allocation9], 0
    %19 = vsyncpa [#allocation12], 0
    %20 = vsyncpa [#allocation15], 0
    // Predicated region
    $region2: #{multimodal_classifier_forward.1} parent=1 // pred_check
      _
    $region3: #{multimodal_classifier_forward.1} parent=1 // pred_check_branch
      %22 = sbr.rel (0) target = $region5
    $region4: #{multimodal_classifier_forward.1} parent=1 // pred_region
      _
    $region5: #{multimodal_classifier_forward.1} parent=1 // pred_fallthru
      _
    // Predicated region
    $region6: #{multimodal_classifier_forward.1} parent=1 // pred_check
      _
    $region7: #{multimodal_classifier_forward.1} parent=1 // pred_check_branch
      %24 = sbr.rel (0) target = $region9
    $region8: #{multimodal_classifier_forward.1} parent=1 // pred_region
      _
    $region9: #{multimodal_classifier_forward.1} parent=1 // pred_fallthru
      _
    // Predicated region
    $region10: #{multimodal_classifier_forward.1} parent=1 // pred_check
      _
    $region11: #{multimodal_classifier_forward.1} parent=1 // pred_check_branch
      %26 = sbr.rel (0) target = $region13
    $region12: #{multimodal_classifier_forward.1} parent=1 // pred_region
      %28 = vsyncadd [#allocation4], 0
      %s29 = sshll.u32 %s2, 4
      %s30 = int_to_ptr.hbm [resolvable:$true] %s29
      %s31 = sshll.u32 [#allocation3], 4
      %s32 = int_to_ptr.vmem [resolvable:$true] %s31
      %37 = dma.hbm_to_vmem [thread:$0]  %s30, 81920, %s32, [#allocation4], 640, 640, 40
    $region13: #{multimodal_classifier_forward.1} parent=1 // pred_fallthru
      _
    // Predicated region
    $region14: #{multimodal_classifier_forward.1} parent=1 // pred_check
      _
    $region15: #{multimodal_classifier_forward.1} parent=1 // pred_check_branch
      %39 = sbr.rel (0) target = $region17
    $region16: #{multimodal_classifier_forward.1} parent=1 // pred_region
      %41 = vsyncadd [#allocation6], 0
      %s43 = sshll.u32 %s3, 4
      %s44 = int_to_ptr.hbm [resolvable:$true] %s43
      %s45 = sshll.u32 [#allocation5], 4
      %s46 = int_to_ptr.vmem [resolvable:$true] %s45
      %48 = dma.hbm_to_vmem [thread:$0]  %s44, 160, %s46, [#allocation6]
    $region17: #{multimodal_classifier_forward.1} parent=1 // pred_fallthru
      _
    // Predicated region
    $region18: #{multimodal_classifier_forward.1} parent=1 // pred_check
      _
    $region19: #{multimodal_classifier_forward.1} parent=1 // pred_check_branch
      %50 = sbr.rel (0) target = $region21
    $region20: #{multimodal_classifier_forward.1} parent=1 // pred_region
      %52 = vsyncadd [#allocation6], 0
      %s53 = sshll.u32 %s4, 4
      %s54 = int_to_ptr.hbm [resolvable:$true] %s53
      %s55 = sshll.u32 [#allocation7], 4
      %s56 = int_to_ptr.vmem [resolvable:$true] %s55
      %61 = dma.hbm_to_vmem [thread:$0]  %s54, 9216, %s56, [#allocation6], 192, 192, 12
    $region21: #{multimodal_classifier_forward.1} parent=1 // pred_fallthru
      _
    // Predicated region
    $region22: #{multimodal_classifier_forward.1} parent=1 // pred_check
      _
    $region23: #{multimodal_classifier_forward.1} parent=1 // pred_check_branch
      %63 = sbr.rel (0) target = $region25
    $region24: #{multimodal_classifier_forward.1} parent=1 // pred_region
      %65 = vsyncadd [#allocation9], 0
      %s67 = sshll.u32 %s5, 4
      %s68 = int_to_ptr.hbm [resolvable:$true] %s67
      %s69 = sshll.u32 [#allocation8], 4
      %s70 = int_to_ptr.vmem [resolvable:$true] %s69
      %72 = dma.hbm_to_vmem [thread:$0]  %s68, 48, %s70, [#allocation9]
    $region25: #{multimodal_classifier_forward.1} parent=1 // pred_fallthru
      _
    // Predicated region
    $region26: #{multimodal_classifier_forward.1} parent=1 // pred_check
      _
    $region27: #{multimodal_classifier_forward.1} parent=1 // pred_check_branch
      %74 = sbr.rel (0) target = $region29
    $region28: #{multimodal_classifier_forward.1} parent=1 // pred_region
      %76 = vsyncadd [#allocation9], 0
      %s77 = sshll.u32 %s6, 4
      %s78 = int_to_ptr.hbm [resolvable:$true] %s77
      %s79 = sshll.u32 [#allocation10], 4
      %s80 = int_to_ptr.vmem [resolvable:$true] %s79
      %85 = dma.hbm_to_vmem [thread:$0]  %s78, 40960, %s80, [#allocation9], 256, 256, 16
    $region29: #{multimodal_classifier_forward.1} parent=1 // pred_fallthru
      _
    // Predicated region
    $region30: #{multimodal_classifier_forward.1} parent=1 // pred_check
      _
    $region31: #{multimodal_classifier_forward.1} parent=1 // pred_check_branch
      %87 = sbr.rel (0) target = $region33
    $region32: #{multimodal_classifier_forward.1} parent=1 // pred_region
      %89 = vsyncadd [#allocation12], 0
      %s90 = sshll.u32 %s7, 4
      %s91 = int_to_ptr.hbm [resolvable:$true] %s90
      %s92 = sshll.u32 [#allocation11], 4
      %s93 = int_to_ptr.vmem [resolvable:$true] %s92
      %98 = dma.hbm_to_vmem [thread:$0]  %s91, 12288, %s93, [#allocation12], 256, 256, 16
    $region33: #{multimodal_classifier_forward.1} parent=1 // pred_fallthru
      _
    // Predicated region
    $region34: #{multimodal_classifier_forward.1} parent=1 // pred_check
      _
    $region35: #{multimodal_classifier_forward.1} parent=1 // pred_check_branch
      %100 = sbr.rel (0) target = $region37
    $region36: #{multimodal_classifier_forward.1} parent=1 // pred_region
      %102 = vsyncadd [#allocation12], 0
      %s104 = sshll.u32 %s8, 4
      %s105 = int_to_ptr.hbm [resolvable:$true] %s104
      %s106 = sshll.u32 [#allocation13], 4
      %s107 = int_to_ptr.vmem [resolvable:$true] %s106
      %109 = dma.hbm_to_vmem [thread:$0]  %s105, 64, %s107, [#allocation12]
    $region37: #{multimodal_classifier_forward.1} parent=1 // pred_fallthru
      _
    // Predicated region
    $region38: #{multimodal_classifier_forward.1} parent=1 // pred_check
      _
    $region39: #{multimodal_classifier_forward.1} parent=1 // pred_check_branch
      %111 = sbr.rel (0) target = $region41
    $region40: #{multimodal_classifier_forward.1} parent=1 // pred_region
      %113 = vsyncadd [#allocation15], 0
      %s114 = sshll.u32 %s9, 4
      %s115 = int_to_ptr.hbm [resolvable:$true] %s114
      %s116 = sshll.u32 [#allocation14], 4
      %s117 = int_to_ptr.vmem [resolvable:$true] %s116
      %122 = dma.hbm_to_vmem [thread:$0]  %s115, 4096, %s117, [#allocation15], 64, 64, 4
    $region41: #{multimodal_classifier_forward.1} parent=1 // pred_fallthru
      _
    // Predicated region
    $region42: #{multimodal_classifier_forward.1} parent=1 // pred_check
      _
    $region43: #{multimodal_classifier_forward.1} parent=1 // pred_check_branch
      %124 = sbr.rel (0) target = $region45
    $region44: #{multimodal_classifier_forward.1} parent=1 // pred_region
      %126 = vsyncadd [#allocation15], 0
      %s128 = sshll.u32 %s10, 4
      %s129 = int_to_ptr.hbm [resolvable:$true] %s128
      %s130 = sshll.u32 [#allocation16], 4
      %s131 = int_to_ptr.vmem [resolvable:$true] %s130
      %133 = dma.hbm_to_vmem [thread:$0]  %s129, 16, %s131, [#allocation15]
    $region45: #{multimodal_classifier_forward.1} parent=1 // pred_fallthru
      _
    // Predicated region
    $region46: #{multimodal_classifier_forward.1} parent=1 // pred_check
      _
    $region47: #{multimodal_classifier_forward.1} parent=1 // pred_check_branch
      %135 = sbr.rel (0) target = $region49
    $region48: #{multimodal_classifier_forward.1} parent=1 // pred_region
      %137 = dma.done [#allocation4], 81920
    $region49: #{multimodal_classifier_forward.1} parent=1 // pred_fallthru
      _
    // Predicated region
    $region50: #{multimodal_classifier_forward.1} parent=1 // pred_check
      _
    $region51: #{multimodal_classifier_forward.1} parent=1 // pred_check_branch
      %139 = sbr.rel (0) target = $region53
    $region52: #{multimodal_classifier_forward.1} parent=1 // pred_region
      %141 = dma.done [#allocation6], 160
    $region53: #{multimodal_classifier_forward.1} parent=1 // pred_fallthru
      _
    // Predicated region
    $region54: #{multimodal_classifier_forward.1} parent=1 // pred_check
      _
    $region55: #{multimodal_classifier_forward.1} parent=1 // pred_check_branch
      %143 = sbr.rel (0) target = $region57
    $region56: #{multimodal_classifier_forward.1} parent=1 // pred_region
      %145 = dma.done [#allocation6], 9216
    $region57: #{multimodal_classifier_forward.1} parent=1 // pred_fallthru
      _
    // Predicated region
    $region58: #{multimodal_classifier_forward.1} parent=1 // pred_check
      _
    $region59: #{multimodal_classifier_forward.1} parent=1 // pred_check_branch
      %147 = sbr.rel (0) target = $region61
    $region60: #{multimodal_classifier_forward.1} parent=1 // pred_region
      %149 = dma.done [#allocation9], 48
    $region61: #{multimodal_classifier_forward.1} parent=1 // pred_fallthru
      _
    // Predicated region
    $region62: #{multimodal_classifier_forward.1} parent=1 // pred_check
      _
    $region63: #{multimodal_classifier_forward.1} parent=1 // pred_check_branch
      %151 = sbr.rel (0) target = $region65
    $region64: #{multimodal_classifier_forward.1} parent=1 // pred_region
      %153 = dma.done [#allocation9], 40960
    $region65: #{multimodal_classifier_forward.1} parent=1 // pred_fallthru
      _
    // Predicated region
    $region66: #{multimodal_classifier_forward.1} parent=1 // pred_check
      _
    $region67: #{multimodal_classifier_forward.1} parent=1 // pred_check_branch
      %155 = sbr.rel (0) target = $region69
    $region68: #{multimodal_classifier_forward.1} parent=1 // pred_region
      %157 = dma.done [#allocation12], 12288
    $region69: #{multimodal_classifier_forward.1} parent=1 // pred_fallthru
      _
    // Predicated region
    $region70: #{multimodal_classifier_forward.1} parent=1 // pred_check
      _
    $region71: #{multimodal_classifier_forward.1} parent=1 // pred_check_branch
      %159 = sbr.rel (0) target = $region73
    $region72: #{multimodal_classifier_forward.1} parent=1 // pred_region
      %161 = dma.done [#allocation12], 64
    $region73: #{multimodal_classifier_forward.1} parent=1 // pred_fallthru
      _
    // Predicated region
    $region74: #{multimodal_classifier_forward.1} parent=1 // pred_check
      _
    $region75: #{multimodal_classifier_forward.1} parent=1 // pred_check_branch
      %163 = sbr.rel (0) target = $region77
    $region76: #{multimodal_classifier_forward.1} parent=1 // pred_region
      %165 = dma.done [#allocation15], 4096
    $region77: #{multimodal_classifier_forward.1} parent=1 // pred_fallthru
      _
    // Predicated region
    $region78: #{multimodal_classifier_forward.1} parent=1 // pred_check
      _
    $region79: #{multimodal_classifier_forward.1} parent=1 // pred_check_branch
      %167 = sbr.rel (0) target = $region81
    $region80: #{multimodal_classifier_forward.1} parent=1 // pred_region
      %169 = dma.done [#allocation15], 16
    $region81: #{multimodal_classifier_forward.1} parent=1 // pred_fallthru
      _
    %p170 = scmp.eq.s32.totalorder 0, 0
    // Predicated region
    $region82: #{multimodal_classifier_forward.1} parent=1 // pred_check
      %p171 = pneg %p170
    $region83: #{multimodal_classifier_forward.1} parent=1 // pred_check_branch
      %173 = sbr.rel (%p171) target = $region85
    $region84: #{multimodal_classifier_forward.1} parent=1 // pred_region
      %174 = vst [vmem:[#allocation2] sm:$0xff] 0.0
      %175 = vst [vmem:[#allocation2 + $0x8] sm:$0xff] 0.0
      %176 = vst [vmem:[#allocation2 + $0x10] sm:$0xff] 0.0
      %177 = vst [vmem:[#allocation2 + $0x18] sm:$0xff] 0.0
      %178 = vst [vmem:[#allocation2 + $0x20] sm:$0xff] 0.0
      %179 = vst [vmem:[#allocation2 + $0x28] sm:$0xff] 0.0
      %180 = vst [vmem:[#allocation2 + $0x30] sm:$0xff] 0.0
      %181 = vst [vmem:[#allocation2 + $0x38] sm:$0xff] 0.0
      %182 = vst [vmem:[#allocation2 + $0x40] sm:$0xff] 0.0
      %183 = vst [vmem:[#allocation2 + $0x48] sm:$0xff] 0.0
      %184 = vst [vmem:[#allocation2 + $0x50] sm:$0xff] 0.0
      %185 = vst [vmem:[#allocation2 + $0x58] sm:$0xff] 0.0
      %186 = vst [vmem:[#allocation2 + $0x60] sm:$0xff] 0.0
      %187 = vst [vmem:[#allocation2 + $0x68] sm:$0xff] 0.0
      %188 = vst [vmem:[#allocation2 + $0x70] sm:$0xff] 0.0
      %189 = vst [vmem:[#allocation2 + $0x78] sm:$0xff] 0.0
      %190 = vst [vmem:[#allocation2 + $0x80] sm:$0xff] 0.0
      %191 = vst [vmem:[#allocation2 + $0x88] sm:$0xff] 0.0
      %192 = vst [vmem:[#allocation2 + $0x90] sm:$0xff] 0.0
      %193 = vst [vmem:[#allocation2 + $0x98] sm:$0xff] 0.0
    $region85: #{multimodal_classifier_forward.1} parent=1 // pred_fallthru
      _
    %v194 = vld [vmem:[#allocation2] sm:$0xff]
    %v195 = vld [vmem:[#allocation2 + $0x8] sm:$0xff]
    %v196 = vld [vmem:[#allocation2 + $0x10] sm:$0xff]
    %v197 = vld [vmem:[#allocation2 + $0x18] sm:$0xff]
    %v198 = vld [vmem:[#allocation2 + $0x20] sm:$0xff]
    %v199 = vld [vmem:[#allocation2 + $0x28] sm:$0xff]
    %v200 = vld [vmem:[#allocation2 + $0x30] sm:$0xff]
    %v201 = vld [vmem:[#allocation2 + $0x38] sm:$0xff]
    %v202 = vld [vmem:[#allocation2 + $0x40] sm:$0xff]
    %v203 = vld [vmem:[#allocation2 + $0x48] sm:$0xff]
    %v204 = vld [vmem:[#allocation2 + $0x50] sm:$0xff]
    %v205 = vld [vmem:[#allocation2 + $0x58] sm:$0xff]
    %v206 = vld [vmem:[#allocation2 + $0x60] sm:$0xff]
    %v207 = vld [vmem:[#allocation2 + $0x68] sm:$0xff]
    %v208 = vld [vmem:[#allocation2 + $0x70] sm:$0xff]
    %v209 = vld [vmem:[#allocation2 + $0x78] sm:$0xff]
    %v210 = vld [vmem:[#allocation2 + $0x80] sm:$0xff]
    %v211 = vld [vmem:[#allocation2 + $0x88] sm:$0xff]
    %v212 = vld [vmem:[#allocation2 + $0x90] sm:$0xff]
    %v213 = vld [vmem:[#allocation2 + $0x98] sm:$0xff]
    %v214 = vld [vmem:[%s0] sm:$0xff]
    %v215 = vld [vmem:[%s0 + $0x8] sm:$0xff]
    %v216 = vld [vmem:[%s0 + $0x10] sm:$0xff]
    %v217 = vld [vmem:[%s0 + $0x18] sm:$0xff]
    %v218 = vld [vmem:[%s0 + $0x20] sm:$0xff]
    %v219 = vld [vmem:[%s0 + $0x28] sm:$0xff]
    %v220 = vld [vmem:[%s0 + $0x30] sm:$0xff]
    %v221 = vld [vmem:[%s0 + $0x38] sm:$0xff]
    %v222 = vld [vmem:[#allocation3] sm:$0xff]
    %v223 = vld [vmem:[#allocation3 + $0x8] sm:$0xff]
    %v224 = vld [vmem:[#allocation3 + $0x10] sm:$0xff]
    %v225 = vld [vmem:[#allocation3 + $0x18] sm:$0xff]
    %v226 = vld [vmem:[#allocation3 + $0x20] sm:$0xff]
    %v227 = vld [vmem:[#allocation3 + $0x28] sm:$0xff]
    %v228 = vld [vmem:[#allocation3 + $0x30] sm:$0xff]
    %v229 = vld [vmem:[#allocation3 + $0x38] sm:$0xff]
    %v230 = vld [vmem:[#allocation3 + $0x40] sm:$0xff]
    %v231 = vld [vmem:[#allocation3 + $0x48] sm:$0xff]
    %v232 = vld [vmem:[#allocation3 + $0x50] sm:$0xff]
    %v233 = vld [vmem:[#allocation3 + $0x58] sm:$0xff]
    %v234 = vld [vmem:[#allocation3 + $0x60] sm:$0xff]
    %v235 = vld [vmem:[#allocation3 + $0x68] sm:$0xff]
    %v236 = vld [vmem:[#allocation3 + $0x70] sm:$0xff]
    %v237 = vld [vmem:[#allocation3 + $0x78] sm:$0xff]
    %v238 = vld [vmem:[#allocation3 + $0x80] sm:$0xff]
    %v239 = vld [vmem:[#allocation3 + $0x88] sm:$0xff]
    %v240 = vld [vmem:[#allocation3 + $0x90] sm:$0xff]
    %v241 = vld [vmem:[#allocation3 + $0x98] sm:$0xff]
    %v242 = vld [vmem:[#allocation3 + $0xa0] sm:$0xff]
    %v243 = vld [vmem:[#allocation3 + $0xa8] sm:$0xff]
    %v244 = vld [vmem:[#allocation3 + $0xb0] sm:$0xff]
    %v245 = vld [vmem:[#allocation3 + $0xb8] sm:$0xff]
    %v246 = vld [vmem:[#allocation3 + $0xc0] sm:$0xff]
    %v247 = vld [vmem:[#allocation3 + $0xc8] sm:$0xff]
    %v248 = vld [vmem:[#allocation3 + $0xd0] sm:$0xff]
    %v249 = vld [vmem:[#allocation3 + $0xd8] sm:$0xff]
    %v250 = vld [vmem:[#allocation3 + $0xe0] sm:$0xff]
    %v251 = vld [vmem:[#allocation3 + $0xe8] sm:$0xff]
    %v252 = vld [vmem:[#allocation3 + $0xf0] sm:$0xff]
    %v253 = vld [vmem:[#allocation3 + $0xf8] sm:$0xff]
    %v254 = vld [vmem:[#allocation3 + $0x100] sm:$0xff]
    %v255 = vld [vmem:[#allocation3 + $0x108] sm:$0xff]
    %v256 = vld [vmem:[#allocation3 + $0x110] sm:$0xff]
    %v257 = vld [vmem:[#allocation3 + $0x118] sm:$0xff]
    %v258 = vld [vmem:[#allocation3 + $0x120] sm:$0xff]
    %v259 = vld [vmem:[#allocation3 + $0x128] sm:$0xff]
    %v260 = vld [vmem:[#allocation3 + $0x130] sm:$0xff]
    %v261 = vld [vmem:[#allocation3 + $0x138] sm:$0xff]
    %v262 = vld [vmem:[#allocation3 + $0x140] sm:$0xff]
    %v263 = vld [vmem:[#allocation3 + $0x148] sm:$0xff]
    %v264 = vld [vmem:[#allocation3 + $0x150] sm:$0xff]
    %v265 = vld [vmem:[#allocation3 + $0x158] sm:$0xff]
    %v266 = vld [vmem:[#allocation3 + $0x160] sm:$0xff]
    %v267 = vld [vmem:[#allocation3 + $0x168] sm:$0xff]
    %v268 = vld [vmem:[#allocation3 + $0x170] sm:$0xff]
    %v269 = vld [vmem:[#allocation3 + $0x178] sm:$0xff]
    %v270 = vld [vmem:[#allocation3 + $0x180] sm:$0xff]
    %v271 = vld [vmem:[#allocation3 + $0x188] sm:$0xff]
    %v272 = vld [vmem:[#allocation3 + $0x190] sm:$0xff]
    %v273 = vld [vmem:[#allocation3 + $0x198] sm:$0xff]
    %v274 = vld [vmem:[#allocation3 + $0x1a0] sm:$0xff]
    %v275 = vld [vmem:[#allocation3 + $0x1a8] sm:$0xff]
    %v276 = vld [vmem:[#allocation3 + $0x1b0] sm:$0xff]
    %v277 = vld [vmem:[#allocation3 + $0x1b8] sm:$0xff]
    %v278 = vld [vmem:[#allocation3 + $0x1c0] sm:$0xff]
    %v279 = vld [vmem:[#allocation3 + $0x1c8] sm:$0xff]
    %v280 = vld [vmem:[#allocation3 + $0x1d0] sm:$0xff]
    %v281 = vld [vmem:[#allocation3 + $0x1d8] sm:$0xff]
    %v282 = vld [vmem:[#allocation3 + $0x1e0] sm:$0xff]
    %v283 = vld [vmem:[#allocation3 + $0x1e8] sm:$0xff]
    %v284 = vld [vmem:[#allocation3 + $0x1f0] sm:$0xff]
    %v285 = vld [vmem:[#allocation3 + $0x1f8] sm:$0xff]
    %v286 = vld [vmem:[#allocation3 + $0x200] sm:$0xff]
    %v287 = vld [vmem:[#allocation3 + $0x208] sm:$0xff]
    %v288 = vld [vmem:[#allocation3 + $0x210] sm:$0xff]
    %v289 = vld [vmem:[#allocation3 + $0x218] sm:$0xff]
    %v290 = vld [vmem:[#allocation3 + $0x220] sm:$0xff]
    %v291 = vld [vmem:[#allocation3 + $0x228] sm:$0xff]
    %v292 = vld [vmem:[#allocation3 + $0x230] sm:$0xff]
    %v293 = vld [vmem:[#allocation3 + $0x238] sm:$0xff]
    %v294 = vld [vmem:[#allocation3 + $0x240] sm:$0xff]
    %v295 = vld [vmem:[#allocation3 + $0x248] sm:$0xff]
    %v296 = vld [vmem:[#allocation3 + $0x250] sm:$0xff]
    %v297 = vld [vmem:[#allocation3 + $0x258] sm:$0xff]
    %v298 = vld [vmem:[#allocation3 + $0x260] sm:$0xff]
    %v299 = vld [vmem:[#allocation3 + $0x268] sm:$0xff]
    %v300 = vld [vmem:[#allocation3 + $0x270] sm:$0xff]
    %v301 = vld [vmem:[#allocation3 + $0x278] sm:$0xff]
    %v302 = vld [vmem:[#allocation3 + $0x280] sm:$0xff]
    %v303 = vld [vmem:[#allocation3 + $0x288] sm:$0xff]
    %v304 = vld [vmem:[#allocation3 + $0x290] sm:$0xff]
    %v305 = vld [vmem:[#allocation3 + $0x298] sm:$0xff]
    %v306 = vld [vmem:[#allocation3 + $0x2a0] sm:$0xff]
    %v307 = vld [vmem:[#allocation3 + $0x2a8] sm:$0xff]
    %v308 = vld [vmem:[#allocation3 + $0x2b0] sm:$0xff]
    %v309 = vld [vmem:[#allocation3 + $0x2b8] sm:$0xff]
    %v310 = vld [vmem:[#allocation3 + $0x2c0] sm:$0xff]
    %v311 = vld [vmem:[#allocation3 + $0x2c8] sm:$0xff]
    %v312 = vld [vmem:[#allocation3 + $0x2d0] sm:$0xff]
    %v313 = vld [vmem:[#allocation3 + $0x2d8] sm:$0xff]
    %v314 = vld [vmem:[#allocation3 + $0x2e0] sm:$0xff]
    %v315 = vld [vmem:[#allocation3 + $0x2e8] sm:$0xff]
    %v316 = vld [vmem:[#allocation3 + $0x2f0] sm:$0xff]
    %v317 = vld [vmem:[#allocation3 + $0x2f8] sm:$0xff]
    %v318 = vld [vmem:[#allocation3 + $0x300] sm:$0xff]
    %v319 = vld [vmem:[#allocation3 + $0x308] sm:$0xff]
    %v320 = vld [vmem:[#allocation3 + $0x310] sm:$0xff]
    %v321 = vld [vmem:[#allocation3 + $0x318] sm:$0xff]
    %v322 = vld [vmem:[#allocation3 + $0x320] sm:$0xff]
    %v323 = vld [vmem:[#allocation3 + $0x328] sm:$0xff]
    %v324 = vld [vmem:[#allocation3 + $0x330] sm:$0xff]
    %v325 = vld [vmem:[#allocation3 + $0x338] sm:$0xff]
    %v326 = vld [vmem:[#allocation3 + $0x340] sm:$0xff]
    %v327 = vld [vmem:[#allocation3 + $0x348] sm:$0xff]
    %v328 = vld [vmem:[#allocation3 + $0x350] sm:$0xff]
    %v329 = vld [vmem:[#allocation3 + $0x358] sm:$0xff]
    %v330 = vld [vmem:[#allocation3 + $0x360] sm:$0xff]
    %v331 = vld [vmem:[#allocation3 + $0x368] sm:$0xff]
    %v332 = vld [vmem:[#allocation3 + $0x370] sm:$0xff]
    %v333 = vld [vmem:[#allocation3 + $0x378] sm:$0xff]
    %v334 = vld [vmem:[#allocation3 + $0x380] sm:$0xff]
    %v335 = vld [vmem:[#allocation3 + $0x388] sm:$0xff]
    %v336 = vld [vmem:[#allocation3 + $0x390] sm:$0xff]
    %v337 = vld [vmem:[#allocation3 + $0x398] sm:$0xff]
    %v338 = vld [vmem:[#allocation3 + $0x3a0] sm:$0xff]
    %v339 = vld [vmem:[#allocation3 + $0x3a8] sm:$0xff]
    %v340 = vld [vmem:[#allocation3 + $0x3b0] sm:$0xff]
    %v341 = vld [vmem:[#allocation3 + $0x3b8] sm:$0xff]
    %v342 = vld [vmem:[#allocation3 + $0x3c0] sm:$0xff]
    %v343 = vld [vmem:[#allocation3 + $0x3c8] sm:$0xff]
    %v344 = vld [vmem:[#allocation3 + $0x3d0] sm:$0xff]
    %v345 = vld [vmem:[#allocation3 + $0x3d8] sm:$0xff]
    %v346 = vld [vmem:[#allocation3 + $0x3e0] sm:$0xff]
    %v347 = vld [vmem:[#allocation3 + $0x3e8] sm:$0xff]
    %v348 = vld [vmem:[#allocation3 + $0x3f0] sm:$0xff]
    %v349 = vld [vmem:[#allocation3 + $0x3f8] sm:$0xff]
    %v350 = vld [vmem:[#allocation3 + $0x400] sm:$0xff]
    %v351 = vld [vmem:[#allocation3 + $0x408] sm:$0xff]
    %v352 = vld [vmem:[#allocation3 + $0x410] sm:$0xff]
    %v353 = vld [vmem:[#allocation3 + $0x418] sm:$0xff]
    %v354 = vld [vmem:[#allocation3 + $0x420] sm:$0xff]
    %v355 = vld [vmem:[#allocation3 + $0x428] sm:$0xff]
    %v356 = vld [vmem:[#allocation3 + $0x430] sm:$0xff]
    %v357 = vld [vmem:[#allocation3 + $0x438] sm:$0xff]
    %v358 = vld [vmem:[#allocation3 + $0x440] sm:$0xff]
    %v359 = vld [vmem:[#allocation3 + $0x448] sm:$0xff]
    %v360 = vld [vmem:[#allocation3 + $0x450] sm:$0xff]
    %v361 = vld [vmem:[#allocation3 + $0x458] sm:$0xff]
    %v362 = vld [vmem:[#allocation3 + $0x460] sm:$0xff]
    %v363 = vld [vmem:[#allocation3 + $0x468] sm:$0xff]
    %v364 = vld [vmem:[#allocation3 + $0x470] sm:$0xff]
    %v365 = vld [vmem:[#allocation3 + $0x478] sm:$0xff]
    %v366 = vld [vmem:[#allocation3 + $0x480] sm:$0xff]
    %v367 = vld [vmem:[#allocation3 + $0x488] sm:$0xff]
    %v368 = vld [vmem:[#allocation3 + $0x490] sm:$0xff]
    %v369 = vld [vmem:[#allocation3 + $0x498] sm:$0xff]
    %v370 = vld [vmem:[#allocation3 + $0x4a0] sm:$0xff]
    %v371 = vld [vmem:[#allocation3 + $0x4a8] sm:$0xff]
    %v372 = vld [vmem:[#allocation3 + $0x4b0] sm:$0xff]
    %v373 = vld [vmem:[#allocation3 + $0x4b8] sm:$0xff]
    %v374 = vld [vmem:[#allocation3 + $0x4c0] sm:$0xff]
    %v375 = vld [vmem:[#allocation3 + $0x4c8] sm:$0xff]
    %v376 = vld [vmem:[#allocation3 + $0x4d0] sm:$0xff]
    %v377 = vld [vmem:[#allocation3 + $0x4d8] sm:$0xff]
    %v378 = vld [vmem:[#allocation3 + $0x4e0] sm:$0xff]
    %v379 = vld [vmem:[#allocation3 + $0x4e8] sm:$0xff]
    %v380 = vld [vmem:[#allocation3 + $0x4f0] sm:$0xff]
    %v381 = vld [vmem:[#allocation3 + $0x4f8] sm:$0xff]
    %v382 = vld [vmem:[#allocation3 + $0x500] sm:$0xff]
    %v383 = vld [vmem:[#allocation3 + $0x508] sm:$0xff]
    %v384 = vld [vmem:[#allocation3 + $0x510] sm:$0xff]
    %v385 = vld [vmem:[#allocation3 + $0x518] sm:$0xff]
    %v386 = vld [vmem:[#allocation3 + $0x520] sm:$0xff]
    %v387 = vld [vmem:[#allocation3 + $0x528] sm:$0xff]
    %v388 = vld [vmem:[#allocation3 + $0x530] sm:$0xff]
    %v389 = vld [vmem:[#allocation3 + $0x538] sm:$0xff]
    %v390 = vld [vmem:[#allocation3 + $0x540] sm:$0xff]
    %v391 = vld [vmem:[#allocation3 + $0x548] sm:$0xff]
    %v392 = vld [vmem:[#allocation3 + $0x550] sm:$0xff]
    %v393 = vld [vmem:[#allocation3 + $0x558] sm:$0xff]
    %v394 = vld [vmem:[#allocation3 + $0x560] sm:$0xff]
    %v395 = vld [vmem:[#allocation3 + $0x568] sm:$0xff]
    %v396 = vld [vmem:[#allocation3 + $0x570] sm:$0xff]
    %v397 = vld [vmem:[#allocation3 + $0x578] sm:$0xff]
    %v398 = vld [vmem:[#allocation3 + $0x580] sm:$0xff]
    %v399 = vld [vmem:[#allocation3 + $0x588] sm:$0xff]
    %v400 = vld [vmem:[#allocation3 + $0x590] sm:$0xff]
    %v401 = vld [vmem:[#allocation3 + $0x598] sm:$0xff]
    %v402 = vld [vmem:[#allocation3 + $0x5a0] sm:$0xff]
    %v403 = vld [vmem:[#allocation3 + $0x5a8] sm:$0xff]
    %v404 = vld [vmem:[#allocation3 + $0x5b0] sm:$0xff]
    %v405 = vld [vmem:[#allocation3 + $0x5b8] sm:$0xff]
    %v406 = vld [vmem:[#allocation3 + $0x5c0] sm:$0xff]
    %v407 = vld [vmem:[#allocation3 + $0x5c8] sm:$0xff]
    %v408 = vld [vmem:[#allocation3 + $0x5d0] sm:$0xff]
    %v409 = vld [vmem:[#allocation3 + $0x5d8] sm:$0xff]
    %v410 = vld [vmem:[#allocation3 + $0x5e0] sm:$0xff]
    %v411 = vld [vmem:[#allocation3 + $0x5e8] sm:$0xff]
    %v412 = vld [vmem:[#allocation3 + $0x5f0] sm:$0xff]
    %v413 = vld [vmem:[#allocation3 + $0x5f8] sm:$0xff]
    %v414 = vld [vmem:[#allocation3 + $0x600] sm:$0xff]
    %v415 = vld [vmem:[#allocation3 + $0x608] sm:$0xff]
    %v416 = vld [vmem:[#allocation3 + $0x610] sm:$0xff]
    %v417 = vld [vmem:[#allocation3 + $0x618] sm:$0xff]
    %v418 = vld [vmem:[#allocation3 + $0x620] sm:$0xff]
    %v419 = vld [vmem:[#allocation3 + $0x628] sm:$0xff]
    %v420 = vld [vmem:[#allocation3 + $0x630] sm:$0xff]
    %v421 = vld [vmem:[#allocation3 + $0x638] sm:$0xff]
    %v422 = vld [vmem:[#allocation3 + $0x640] sm:$0xff]
    %v423 = vld [vmem:[#allocation3 + $0x648] sm:$0xff]
    %v424 = vld [vmem:[#allocation3 + $0x650] sm:$0xff]
    %v425 = vld [vmem:[#allocation3 + $0x658] sm:$0xff]
    %v426 = vld [vmem:[#allocation3 + $0x660] sm:$0xff]
    %v427 = vld [vmem:[#allocation3 + $0x668] sm:$0xff]
    %v428 = vld [vmem:[#allocation3 + $0x670] sm:$0xff]
    %v429 = vld [vmem:[#allocation3 + $0x678] sm:$0xff]
    %v430 = vld [vmem:[#allocation3 + $0x680] sm:$0xff]
    %v431 = vld [vmem:[#allocation3 + $0x688] sm:$0xff]
    %v432 = vld [vmem:[#allocation3 + $0x690] sm:$0xff]
    %v433 = vld [vmem:[#allocation3 + $0x698] sm:$0xff]
    %v434 = vld [vmem:[#allocation3 + $0x6a0] sm:$0xff]
    %v435 = vld [vmem:[#allocation3 + $0x6a8] sm:$0xff]
    %v436 = vld [vmem:[#allocation3 + $0x6b0] sm:$0xff]
    %v437 = vld [vmem:[#allocation3 + $0x6b8] sm:$0xff]
    %v438 = vld [vmem:[#allocation3 + $0x6c0] sm:$0xff]
    %v439 = vld [vmem:[#allocation3 + $0x6c8] sm:$0xff]
    %v440 = vld [vmem:[#allocation3 + $0x6d0] sm:$0xff]
    %v441 = vld [vmem:[#allocation3 + $0x6d8] sm:$0xff]
    %v442 = vld [vmem:[#allocation3 + $0x6e0] sm:$0xff]
    %v443 = vld [vmem:[#allocation3 + $0x6e8] sm:$0xff]
    %v444 = vld [vmem:[#allocation3 + $0x6f0] sm:$0xff]
    %v445 = vld [vmem:[#allocation3 + $0x6f8] sm:$0xff]
    %v446 = vld [vmem:[#allocation3 + $0x700] sm:$0xff]
    %v447 = vld [vmem:[#allocation3 + $0x708] sm:$0xff]
    %v448 = vld [vmem:[#allocation3 + $0x710] sm:$0xff]
    %v449 = vld [vmem:[#allocation3 + $0x718] sm:$0xff]
    %v450 = vld [vmem:[#allocation3 + $0x720] sm:$0xff]
    %v451 = vld [vmem:[#allocation3 + $0x728] sm:$0xff]
    %v452 = vld [vmem:[#allocation3 + $0x730] sm:$0xff]
    %v453 = vld [vmem:[#allocation3 + $0x738] sm:$0xff]
    %v454 = vld [vmem:[#allocation3 + $0x740] sm:$0xff]
    %v455 = vld [vmem:[#allocation3 + $0x748] sm:$0xff]
    %v456 = vld [vmem:[#allocation3 + $0x750] sm:$0xff]
    %v457 = vld [vmem:[#allocation3 + $0x758] sm:$0xff]
    %v458 = vld [vmem:[#allocation3 + $0x760] sm:$0xff]
    %v459 = vld [vmem:[#allocation3 + $0x768] sm:$0xff]
    %v460 = vld [vmem:[#allocation3 + $0x770] sm:$0xff]
    %v461 = vld [vmem:[#allocation3 + $0x778] sm:$0xff]
    %v462 = vld [vmem:[#allocation3 + $0x780] sm:$0xff]
    %v463 = vld [vmem:[#allocation3 + $0x788] sm:$0xff]
    %v464 = vld [vmem:[#allocation3 + $0x790] sm:$0xff]
    %v465 = vld [vmem:[#allocation3 + $0x798] sm:$0xff]
    %v466 = vld [vmem:[#allocation3 + $0x7a0] sm:$0xff]
    %v467 = vld [vmem:[#allocation3 + $0x7a8] sm:$0xff]
    %v468 = vld [vmem:[#allocation3 + $0x7b0] sm:$0xff]
    %v469 = vld [vmem:[#allocation3 + $0x7b8] sm:$0xff]
    %v470 = vld [vmem:[#allocation3 + $0x7c0] sm:$0xff]
    %v471 = vld [vmem:[#allocation3 + $0x7c8] sm:$0xff]
    %v472 = vld [vmem:[#allocation3 + $0x7d0] sm:$0xff]
    %v473 = vld [vmem:[#allocation3 + $0x7d8] sm:$0xff]
    %v474 = vld [vmem:[#allocation3 + $0x7e0] sm:$0xff]
    %v475 = vld [vmem:[#allocation3 + $0x7e8] sm:$0xff]
    %v476 = vld [vmem:[#allocation3 + $0x7f0] sm:$0xff]
    %v477 = vld [vmem:[#allocation3 + $0x7f8] sm:$0xff]
    %v478 = vld [vmem:[#allocation3 + $0x800] sm:$0xff]
    %v479 = vld [vmem:[#allocation3 + $0x808] sm:$0xff]
    %v480 = vld [vmem:[#allocation3 + $0x810] sm:$0xff]
    %v481 = vld [vmem:[#allocation3 + $0x818] sm:$0xff]
    %v482 = vld [vmem:[#allocation3 + $0x820] sm:$0xff]
    %v483 = vld [vmem:[#allocation3 + $0x828] sm:$0xff]
    %v484 = vld [vmem:[#allocation3 + $0x830] sm:$0xff]
    %v485 = vld [vmem:[#allocation3 + $0x838] sm:$0xff]
    %v486 = vld [vmem:[#allocation3 + $0x840] sm:$0xff]
    %v487 = vld [vmem:[#allocation3 + $0x848] sm:$0xff]
    %v488 = vld [vmem:[#allocation3 + $0x850] sm:$0xff]
    %v489 = vld [vmem:[#allocation3 + $0x858] sm:$0xff]
    %v490 = vld [vmem:[#allocation3 + $0x860] sm:$0xff]
    %v491 = vld [vmem:[#allocation3 + $0x868] sm:$0xff]
    %v492 = vld [vmem:[#allocation3 + $0x870] sm:$0xff]
    %v493 = vld [vmem:[#allocation3 + $0x878] sm:$0xff]
    %v494 = vld [vmem:[#allocation3 + $0x880] sm:$0xff]
    %v495 = vld [vmem:[#allocation3 + $0x888] sm:$0xff]
    %v496 = vld [vmem:[#allocation3 + $0x890] sm:$0xff]
    %v497 = vld [vmem:[#allocation3 + $0x898] sm:$0xff]
    %v498 = vld [vmem:[#allocation3 + $0x8a0] sm:$0xff]
    %v499 = vld [vmem:[#allocation3 + $0x8a8] sm:$0xff]
    %v500 = vld [vmem:[#allocation3 + $0x8b0] sm:$0xff]
    %v501 = vld [vmem:[#allocation3 + $0x8b8] sm:$0xff]
    %v502 = vld [vmem:[#allocation3 + $0x8c0] sm:$0xff]
    %v503 = vld [vmem:[#allocation3 + $0x8c8] sm:$0xff]
    %v504 = vld [vmem:[#allocation3 + $0x8d0] sm:$0xff]
    %v505 = vld [vmem:[#allocation3 + $0x8d8] sm:$0xff]
    %v506 = vld [vmem:[#allocation3 + $0x8e0] sm:$0xff]
    %v507 = vld [vmem:[#allocation3 + $0x8e8] sm:$0xff]
    %v508 = vld [vmem:[#allocation3 + $0x8f0] sm:$0xff]
    %v509 = vld [vmem:[#allocation3 + $0x8f8] sm:$0xff]
    %v510 = vld [vmem:[#allocation3 + $0x900] sm:$0xff]
    %v511 = vld [vmem:[#allocation3 + $0x908] sm:$0xff]
    %v512 = vld [vmem:[#allocation3 + $0x910] sm:$0xff]
    %v513 = vld [vmem:[#allocation3 + $0x918] sm:$0xff]
    %v514 = vld [vmem:[#allocation3 + $0x920] sm:$0xff]
    %v515 = vld [vmem:[#allocation3 + $0x928] sm:$0xff]
    %v516 = vld [vmem:[#allocation3 + $0x930] sm:$0xff]
    %v517 = vld [vmem:[#allocation3 + $0x938] sm:$0xff]
    %v518 = vld [vmem:[#allocation3 + $0x940] sm:$0xff]
    %v519 = vld [vmem:[#allocation3 + $0x948] sm:$0xff]
    %v520 = vld [vmem:[#allocation3 + $0x950] sm:$0xff]
    %v521 = vld [vmem:[#allocation3 + $0x958] sm:$0xff]
    %v522 = vld [vmem:[#allocation3 + $0x960] sm:$0xff]
    %v523 = vld [vmem:[#allocation3 + $0x968] sm:$0xff]
    %v524 = vld [vmem:[#allocation3 + $0x970] sm:$0xff]
    %v525 = vld [vmem:[#allocation3 + $0x978] sm:$0xff]
    %v526 = vld [vmem:[#allocation3 + $0x980] sm:$0xff]
    %v527 = vld [vmem:[#allocation3 + $0x988] sm:$0xff]
    %v528 = vld [vmem:[#allocation3 + $0x990] sm:$0xff]
    %v529 = vld [vmem:[#allocation3 + $0x998] sm:$0xff]
    %v530 = vld [vmem:[#allocation3 + $0x9a0] sm:$0xff]
    %v531 = vld [vmem:[#allocation3 + $0x9a8] sm:$0xff]
    %v532 = vld [vmem:[#allocation3 + $0x9b0] sm:$0xff]
    %v533 = vld [vmem:[#allocation3 + $0x9b8] sm:$0xff]
    %v534 = vld [vmem:[#allocation3 + $0x9c0] sm:$0xff]
    %v535 = vld [vmem:[#allocation3 + $0x9c8] sm:$0xff]
    %v536 = vld [vmem:[#allocation3 + $0x9d0] sm:$0xff]
    %v537 = vld [vmem:[#allocation3 + $0x9d8] sm:$0xff]
    %v538 = vld [vmem:[#allocation3 + $0x9e0] sm:$0xff]
    %v539 = vld [vmem:[#allocation3 + $0x9e8] sm:$0xff]
    %v540 = vld [vmem:[#allocation3 + $0x9f0] sm:$0xff]
    %v541 = vld [vmem:[#allocation3 + $0x9f8] sm:$0xff]
    %v542 = vld [vmem:[#allocation3 + $0xa00] sm:$0xff]
    %v543 = vld [vmem:[#allocation3 + $0xa08] sm:$0xff]
    %v544 = vld [vmem:[#allocation3 + $0xa10] sm:$0xff]
    %v545 = vld [vmem:[#allocation3 + $0xa18] sm:$0xff]
    %v546 = vld [vmem:[#allocation3 + $0xa20] sm:$0xff]
    %v547 = vld [vmem:[#allocation3 + $0xa28] sm:$0xff]
    %v548 = vld [vmem:[#allocation3 + $0xa30] sm:$0xff]
    %v549 = vld [vmem:[#allocation3 + $0xa38] sm:$0xff]
    %v550 = vld [vmem:[#allocation3 + $0xa40] sm:$0xff]
    %v551 = vld [vmem:[#allocation3 + $0xa48] sm:$0xff]
    %v552 = vld [vmem:[#allocation3 + $0xa50] sm:$0xff]
    %v553 = vld [vmem:[#allocation3 + $0xa58] sm:$0xff]
    %v554 = vld [vmem:[#allocation3 + $0xa60] sm:$0xff]
    %v555 = vld [vmem:[#allocation3 + $0xa68] sm:$0xff]
    %v556 = vld [vmem:[#allocation3 + $0xa70] sm:$0xff]
    %v557 = vld [vmem:[#allocation3 + $0xa78] sm:$0xff]
    %v558 = vld [vmem:[#allocation3 + $0xa80] sm:$0xff]
    %v559 = vld [vmem:[#allocation3 + $0xa88] sm:$0xff]
    %v560 = vld [vmem:[#allocation3 + $0xa90] sm:$0xff]
    %v561 = vld [vmem:[#allocation3 + $0xa98] sm:$0xff]
    %v562 = vld [vmem:[#allocation3 + $0xaa0] sm:$0xff]
    %v563 = vld [vmem:[#allocation3 + $0xaa8] sm:$0xff]
    %v564 = vld [vmem:[#allocation3 + $0xab0] sm:$0xff]
    %v565 = vld [vmem:[#allocation3 + $0xab8] sm:$0xff]
    %v566 = vld [vmem:[#allocation3 + $0xac0] sm:$0xff]
    %v567 = vld [vmem:[#allocation3 + $0xac8] sm:$0xff]
    %v568 = vld [vmem:[#allocation3 + $0xad0] sm:$0xff]
    %v569 = vld [vmem:[#allocation3 + $0xad8] sm:$0xff]
    %v570 = vld [vmem:[#allocation3 + $0xae0] sm:$0xff]
    %v571 = vld [vmem:[#allocation3 + $0xae8] sm:$0xff]
    %v572 = vld [vmem:[#allocation3 + $0xaf0] sm:$0xff]
    %v573 = vld [vmem:[#allocation3 + $0xaf8] sm:$0xff]
    %v574 = vld [vmem:[#allocation3 + $0xb00] sm:$0xff]
    %v575 = vld [vmem:[#allocation3 + $0xb08] sm:$0xff]
    %v576 = vld [vmem:[#allocation3 + $0xb10] sm:$0xff]
    %v577 = vld [vmem:[#allocation3 + $0xb18] sm:$0xff]
    %v578 = vld [vmem:[#allocation3 + $0xb20] sm:$0xff]
    %v579 = vld [vmem:[#allocation3 + $0xb28] sm:$0xff]
    %v580 = vld [vmem:[#allocation3 + $0xb30] sm:$0xff]
    %v581 = vld [vmem:[#allocation3 + $0xb38] sm:$0xff]
    %v582 = vld [vmem:[#allocation3 + $0xb40] sm:$0xff]
    %v583 = vld [vmem:[#allocation3 + $0xb48] sm:$0xff]
    %v584 = vld [vmem:[#allocation3 + $0xb50] sm:$0xff]
    %v585 = vld [vmem:[#allocation3 + $0xb58] sm:$0xff]
    %v586 = vld [vmem:[#allocation3 + $0xb60] sm:$0xff]
    %v587 = vld [vmem:[#allocation3 + $0xb68] sm:$0xff]
    %v588 = vld [vmem:[#allocation3 + $0xb70] sm:$0xff]
    %v589 = vld [vmem:[#allocation3 + $0xb78] sm:$0xff]
    %v590 = vld [vmem:[#allocation3 + $0xb80] sm:$0xff]
    %v591 = vld [vmem:[#allocation3 + $0xb88] sm:$0xff]
    %v592 = vld [vmem:[#allocation3 + $0xb90] sm:$0xff]
    %v593 = vld [vmem:[#allocation3 + $0xb98] sm:$0xff]
    %v594 = vld [vmem:[#allocation3 + $0xba0] sm:$0xff]
    %v595 = vld [vmem:[#allocation3 + $0xba8] sm:$0xff]
    %v596 = vld [vmem:[#allocation3 + $0xbb0] sm:$0xff]
    %v597 = vld [vmem:[#allocation3 + $0xbb8] sm:$0xff]
    %v598 = vld [vmem:[#allocation3 + $0xbc0] sm:$0xff]
    %v599 = vld [vmem:[#allocation3 + $0xbc8] sm:$0xff]
    %v600 = vld [vmem:[#allocation3 + $0xbd0] sm:$0xff]
    %v601 = vld [vmem:[#allocation3 + $0xbd8] sm:$0xff]
    %v602 = vld [vmem:[#allocation3 + $0xbe0] sm:$0xff]
    %v603 = vld [vmem:[#allocation3 + $0xbe8] sm:$0xff]
    %v604 = vld [vmem:[#allocation3 + $0xbf0] sm:$0xff]
    %v605 = vld [vmem:[#allocation3 + $0xbf8] sm:$0xff]
    %v606 = vld [vmem:[#allocation3 + $0xc00] sm:$0xff]
    %v607 = vld [vmem:[#allocation3 + $0xc08] sm:$0xff]
    %v608 = vld [vmem:[#allocation3 + $0xc10] sm:$0xff]
    %v609 = vld [vmem:[#allocation3 + $0xc18] sm:$0xff]
    %v610 = vld [vmem:[#allocation3 + $0xc20] sm:$0xff]
    %v611 = vld [vmem:[#allocation3 + $0xc28] sm:$0xff]
    %v612 = vld [vmem:[#allocation3 + $0xc30] sm:$0xff]
    %v613 = vld [vmem:[#allocation3 + $0xc38] sm:$0xff]
    %v614 = vld [vmem:[#allocation3 + $0xc40] sm:$0xff]
    %v615 = vld [vmem:[#allocation3 + $0xc48] sm:$0xff]
    %v616 = vld [vmem:[#allocation3 + $0xc50] sm:$0xff]
    %v617 = vld [vmem:[#allocation3 + $0xc58] sm:$0xff]
    %v618 = vld [vmem:[#allocation3 + $0xc60] sm:$0xff]
    %v619 = vld [vmem:[#allocation3 + $0xc68] sm:$0xff]
    %v620 = vld [vmem:[#allocation3 + $0xc70] sm:$0xff]
    %v621 = vld [vmem:[#allocation3 + $0xc78] sm:$0xff]
    %v622 = vld [vmem:[#allocation3 + $0xc80] sm:$0xff]
    %v623 = vld [vmem:[#allocation3 + $0xc88] sm:$0xff]
    %v624 = vld [vmem:[#allocation3 + $0xc90] sm:$0xff]
    %v625 = vld [vmem:[#allocation3 + $0xc98] sm:$0xff]
    %v626 = vld [vmem:[#allocation3 + $0xca0] sm:$0xff]
    %v627 = vld [vmem:[#allocation3 + $0xca8] sm:$0xff]
    %v628 = vld [vmem:[#allocation3 + $0xcb0] sm:$0xff]
    %v629 = vld [vmem:[#allocation3 + $0xcb8] sm:$0xff]
    %v630 = vld [vmem:[#allocation3 + $0xcc0] sm:$0xff]
    %v631 = vld [vmem:[#allocation3 + $0xcc8] sm:$0xff]
    %v632 = vld [vmem:[#allocation3 + $0xcd0] sm:$0xff]
    %v633 = vld [vmem:[#allocation3 + $0xcd8] sm:$0xff]
    %v634 = vld [vmem:[#allocation3 + $0xce0] sm:$0xff]
    %v635 = vld [vmem:[#allocation3 + $0xce8] sm:$0xff]
    %v636 = vld [vmem:[#allocation3 + $0xcf0] sm:$0xff]
    %v637 = vld [vmem:[#allocation3 + $0xcf8] sm:$0xff]
    %v638 = vld [vmem:[#allocation3 + $0xd00] sm:$0xff]
    %v639 = vld [vmem:[#allocation3 + $0xd08] sm:$0xff]
    %v640 = vld [vmem:[#allocation3 + $0xd10] sm:$0xff]
    %v641 = vld [vmem:[#allocation3 + $0xd18] sm:$0xff]
    %v642 = vld [vmem:[#allocation3 + $0xd20] sm:$0xff]
    %v643 = vld [vmem:[#allocation3 + $0xd28] sm:$0xff]
    %v644 = vld [vmem:[#allocation3 + $0xd30] sm:$0xff]
    %v645 = vld [vmem:[#allocation3 + $0xd38] sm:$0xff]
    %v646 = vld [vmem:[#allocation3 + $0xd40] sm:$0xff]
    %v647 = vld [vmem:[#allocation3 + $0xd48] sm:$0xff]
    %v648 = vld [vmem:[#allocation3 + $0xd50] sm:$0xff]
    %v649 = vld [vmem:[#allocation3 + $0xd58] sm:$0xff]
    %v650 = vld [vmem:[#allocation3 + $0xd60] sm:$0xff]
    %v651 = vld [vmem:[#allocation3 + $0xd68] sm:$0xff]
    %v652 = vld [vmem:[#allocation3 + $0xd70] sm:$0xff]
    %v653 = vld [vmem:[#allocation3 + $0xd78] sm:$0xff]
    %v654 = vld [vmem:[#allocation3 + $0xd80] sm:$0xff]
    %v655 = vld [vmem:[#allocation3 + $0xd88] sm:$0xff]
    %v656 = vld [vmem:[#allocation3 + $0xd90] sm:$0xff]
    %v657 = vld [vmem:[#allocation3 + $0xd98] sm:$0xff]
    %v658 = vld [vmem:[#allocation3 + $0xda0] sm:$0xff]
    %v659 = vld [vmem:[#allocation3 + $0xda8] sm:$0xff]
    %v660 = vld [vmem:[#allocation3 + $0xdb0] sm:$0xff]
    %v661 = vld [vmem:[#allocation3 + $0xdb8] sm:$0xff]
    %v662 = vld [vmem:[#allocation3 + $0xdc0] sm:$0xff]
    %v663 = vld [vmem:[#allocation3 + $0xdc8] sm:$0xff]
    %v664 = vld [vmem:[#allocation3 + $0xdd0] sm:$0xff]
    %v665 = vld [vmem:[#allocation3 + $0xdd8] sm:$0xff]
    %v666 = vld [vmem:[#allocation3 + $0xde0] sm:$0xff]
    %v667 = vld [vmem:[#allocation3 + $0xde8] sm:$0xff]
    %v668 = vld [vmem:[#allocation3 + $0xdf0] sm:$0xff]
    %v669 = vld [vmem:[#allocation3 + $0xdf8] sm:$0xff]
    %v670 = vld [vmem:[#allocation3 + $0xe00] sm:$0xff]
    %v671 = vld [vmem:[#allocation3 + $0xe08] sm:$0xff]
    %v672 = vld [vmem:[#allocation3 + $0xe10] sm:$0xff]
    %v673 = vld [vmem:[#allocation3 + $0xe18] sm:$0xff]
    %v674 = vld [vmem:[#allocation3 + $0xe20] sm:$0xff]
    %v675 = vld [vmem:[#allocation3 + $0xe28] sm:$0xff]
    %v676 = vld [vmem:[#allocation3 + $0xe30] sm:$0xff]
    %v677 = vld [vmem:[#allocation3 + $0xe38] sm:$0xff]
    %v678 = vld [vmem:[#allocation3 + $0xe40] sm:$0xff]
    %v679 = vld [vmem:[#allocation3 + $0xe48] sm:$0xff]
    %v680 = vld [vmem:[#allocation3 + $0xe50] sm:$0xff]
    %v681 = vld [vmem:[#allocation3 + $0xe58] sm:$0xff]
    %v682 = vld [vmem:[#allocation3 + $0xe60] sm:$0xff]
    %v683 = vld [vmem:[#allocation3 + $0xe68] sm:$0xff]
    %v684 = vld [vmem:[#allocation3 + $0xe70] sm:$0xff]
    %v685 = vld [vmem:[#allocation3 + $0xe78] sm:$0xff]
    %v686 = vld [vmem:[#allocation3 + $0xe80] sm:$0xff]
    %v687 = vld [vmem:[#allocation3 + $0xe88] sm:$0xff]
    %v688 = vld [vmem:[#allocation3 + $0xe90] sm:$0xff]
    %v689 = vld [vmem:[#allocation3 + $0xe98] sm:$0xff]
    %v690 = vld [vmem:[#allocation3 + $0xea0] sm:$0xff]
    %v691 = vld [vmem:[#allocation3 + $0xea8] sm:$0xff]
    %v692 = vld [vmem:[#allocation3 + $0xeb0] sm:$0xff]
    %v693 = vld [vmem:[#allocation3 + $0xeb8] sm:$0xff]
    %v694 = vld [vmem:[#allocation3 + $0xec0] sm:$0xff]
    %v695 = vld [vmem:[#allocation3 + $0xec8] sm:$0xff]
    %v696 = vld [vmem:[#allocation3 + $0xed0] sm:$0xff]
    %v697 = vld [vmem:[#allocation3 + $0xed8] sm:$0xff]
    %v698 = vld [vmem:[#allocation3 + $0xee0] sm:$0xff]
    %v699 = vld [vmem:[#allocation3 + $0xee8] sm:$0xff]
    %v700 = vld [vmem:[#allocation3 + $0xef0] sm:$0xff]
    %v701 = vld [vmem:[#allocation3 + $0xef8] sm:$0xff]
    %v702 = vld [vmem:[#allocation3 + $0xf00] sm:$0xff]
    %v703 = vld [vmem:[#allocation3 + $0xf08] sm:$0xff]
    %v704 = vld [vmem:[#allocation3 + $0xf10] sm:$0xff]
    %v705 = vld [vmem:[#allocation3 + $0xf18] sm:$0xff]
    %v706 = vld [vmem:[#allocation3 + $0xf20] sm:$0xff]
    %v707 = vld [vmem:[#allocation3 + $0xf28] sm:$0xff]
    %v708 = vld [vmem:[#allocation3 + $0xf30] sm:$0xff]
    %v709 = vld [vmem:[#allocation3 + $0xf38] sm:$0xff]
    %v710 = vld [vmem:[#allocation3 + $0xf40] sm:$0xff]
    %v711 = vld [vmem:[#allocation3 + $0xf48] sm:$0xff]
    %v712 = vld [vmem:[#allocation3 + $0xf50] sm:$0xff]
    %v713 = vld [vmem:[#allocation3 + $0xf58] sm:$0xff]
    %v714 = vld [vmem:[#allocation3 + $0xf60] sm:$0xff]
    %v715 = vld [vmem:[#allocation3 + $0xf68] sm:$0xff]
    %v716 = vld [vmem:[#allocation3 + $0xf70] sm:$0xff]
    %v717 = vld [vmem:[#allocation3 + $0xf78] sm:$0xff]
    %v718 = vld [vmem:[#allocation3 + $0xf80] sm:$0xff]
    %v719 = vld [vmem:[#allocation3 + $0xf88] sm:$0xff]
    %v720 = vld [vmem:[#allocation3 + $0xf90] sm:$0xff]
    %v721 = vld [vmem:[#allocation3 + $0xf98] sm:$0xff]
    %v722 = vld [vmem:[#allocation3 + $0xfa0] sm:$0xff]
    %v723 = vld [vmem:[#allocation3 + $0xfa8] sm:$0xff]
    %v724 = vld [vmem:[#allocation3 + $0xfb0] sm:$0xff]
    %v725 = vld [vmem:[#allocation3 + $0xfb8] sm:$0xff]
    %v726 = vld [vmem:[#allocation3 + $0xfc0] sm:$0xff]
    %v727 = vld [vmem:[#allocation3 + $0xfc8] sm:$0xff]
    %v728 = vld [vmem:[#allocation3 + $0xfd0] sm:$0xff]
    %v729 = vld [vmem:[#allocation3 + $0xfd8] sm:$0xff]
    %v730 = vld [vmem:[#allocation3 + $0xfe0] sm:$0xff]
    %v731 = vld [vmem:[#allocation3 + $0xfe8] sm:$0xff]
    %v732 = vld [vmem:[#allocation3 + $0xff0] sm:$0xff]
    %v733 = vld [vmem:[#allocation3 + $0xff8] sm:$0xff]
    %v734 = vld [vmem:[#allocation3 + $0x1000] sm:$0xff]
    %v735 = vld [vmem:[#allocation3 + $0x1008] sm:$0xff]
    %v736 = vld [vmem:[#allocation3 + $0x1010] sm:$0xff]
    %v737 = vld [vmem:[#allocation3 + $0x1018] sm:$0xff]
    %v738 = vld [vmem:[#allocation3 + $0x1020] sm:$0xff]
    %v739 = vld [vmem:[#allocation3 + $0x1028] sm:$0xff]
    %v740 = vld [vmem:[#allocation3 + $0x1030] sm:$0xff]
    %v741 = vld [vmem:[#allocation3 + $0x1038] sm:$0xff]
    %v742 = vld [vmem:[#allocation3 + $0x1040] sm:$0xff]
    %v743 = vld [vmem:[#allocation3 + $0x1048] sm:$0xff]
    %v744 = vld [vmem:[#allocation3 + $0x1050] sm:$0xff]
    %v745 = vld [vmem:[#allocation3 + $0x1058] sm:$0xff]
    %v746 = vld [vmem:[#allocation3 + $0x1060] sm:$0xff]
    %v747 = vld [vmem:[#allocation3 + $0x1068] sm:$0xff]
    %v748 = vld [vmem:[#allocation3 + $0x1070] sm:$0xff]
    %v749 = vld [vmem:[#allocation3 + $0x1078] sm:$0xff]
    %v750 = vld [vmem:[#allocation3 + $0x1080] sm:$0xff]
    %v751 = vld [vmem:[#allocation3 + $0x1088] sm:$0xff]
    %v752 = vld [vmem:[#allocation3 + $0x1090] sm:$0xff]
    %v753 = vld [vmem:[#allocation3 + $0x1098] sm:$0xff]
    %v754 = vld [vmem:[#allocation3 + $0x10a0] sm:$0xff]
    %v755 = vld [vmem:[#allocation3 + $0x10a8] sm:$0xff]
    %v756 = vld [vmem:[#allocation3 + $0x10b0] sm:$0xff]
    %v757 = vld [vmem:[#allocation3 + $0x10b8] sm:$0xff]
    %v758 = vld [vmem:[#allocation3 + $0x10c0] sm:$0xff]
    %v759 = vld [vmem:[#allocation3 + $0x10c8] sm:$0xff]
    %v760 = vld [vmem:[#allocation3 + $0x10d0] sm:$0xff]
    %v761 = vld [vmem:[#allocation3 + $0x10d8] sm:$0xff]
    %v762 = vld [vmem:[#allocation3 + $0x10e0] sm:$0xff]
    %v763 = vld [vmem:[#allocation3 + $0x10e8] sm:$0xff]
    %v764 = vld [vmem:[#allocation3 + $0x10f0] sm:$0xff]
    %v765 = vld [vmem:[#allocation3 + $0x10f8] sm:$0xff]
    %v766 = vld [vmem:[#allocation3 + $0x1100] sm:$0xff]
    %v767 = vld [vmem:[#allocation3 + $0x1108] sm:$0xff]
    %v768 = vld [vmem:[#allocation3 + $0x1110] sm:$0xff]
    %v769 = vld [vmem:[#allocation3 + $0x1118] sm:$0xff]
    %v770 = vld [vmem:[#allocation3 + $0x1120] sm:$0xff]
    %v771 = vld [vmem:[#allocation3 + $0x1128] sm:$0xff]
    %v772 = vld [vmem:[#allocation3 + $0x1130] sm:$0xff]
    %v773 = vld [vmem:[#allocation3 + $0x1138] sm:$0xff]
    %v774 = vld [vmem:[#allocation3 + $0x1140] sm:$0xff]
    %v775 = vld [vmem:[#allocation3 + $0x1148] sm:$0xff]
    %v776 = vld [vmem:[#allocation3 + $0x1150] sm:$0xff]
    %v777 = vld [vmem:[#allocation3 + $0x1158] sm:$0xff]
    %v778 = vld [vmem:[#allocation3 + $0x1160] sm:$0xff]
    %v779 = vld [vmem:[#allocation3 + $0x1168] sm:$0xff]
    %v780 = vld [vmem:[#allocation3 + $0x1170] sm:$0xff]
    %v781 = vld [vmem:[#allocation3 + $0x1178] sm:$0xff]
    %v782 = vld [vmem:[#allocation3 + $0x1180] sm:$0xff]
    %v783 = vld [vmem:[#allocation3 + $0x1188] sm:$0xff]
    %v784 = vld [vmem:[#allocation3 + $0x1190] sm:$0xff]
    %v785 = vld [vmem:[#allocation3 + $0x1198] sm:$0xff]
    %v786 = vld [vmem:[#allocation3 + $0x11a0] sm:$0xff]
    %v787 = vld [vmem:[#allocation3 + $0x11a8] sm:$0xff]
    %v788 = vld [vmem:[#allocation3 + $0x11b0] sm:$0xff]
    %v789 = vld [vmem:[#allocation3 + $0x11b8] sm:$0xff]
    %v790 = vld [vmem:[#allocation3 + $0x11c0] sm:$0xff]
    %v791 = vld [vmem:[#allocation3 + $0x11c8] sm:$0xff]
    %v792 = vld [vmem:[#allocation3 + $0x11d0] sm:$0xff]
    %v793 = vld [vmem:[#allocation3 + $0x11d8] sm:$0xff]
    %v794 = vld [vmem:[#allocation3 + $0x11e0] sm:$0xff]
    %v795 = vld [vmem:[#allocation3 + $0x11e8] sm:$0xff]
    %v796 = vld [vmem:[#allocation3 + $0x11f0] sm:$0xff]
    %v797 = vld [vmem:[#allocation3 + $0x11f8] sm:$0xff]
    %v798 = vld [vmem:[#allocation3 + $0x1200] sm:$0xff]
    %v799 = vld [vmem:[#allocation3 + $0x1208] sm:$0xff]
    %v800 = vld [vmem:[#allocation3 + $0x1210] sm:$0xff]
    %v801 = vld [vmem:[#allocation3 + $0x1218] sm:$0xff]
    %v802 = vld [vmem:[#allocation3 + $0x1220] sm:$0xff]
    %v803 = vld [vmem:[#allocation3 + $0x1228] sm:$0xff]
    %v804 = vld [vmem:[#allocation3 + $0x1230] sm:$0xff]
    %v805 = vld [vmem:[#allocation3 + $0x1238] sm:$0xff]
    %v806 = vld [vmem:[#allocation3 + $0x1240] sm:$0xff]
    %v807 = vld [vmem:[#allocation3 + $0x1248] sm:$0xff]
    %v808 = vld [vmem:[#allocation3 + $0x1250] sm:$0xff]
    %v809 = vld [vmem:[#allocation3 + $0x1258] sm:$0xff]
    %v810 = vld [vmem:[#allocation3 + $0x1260] sm:$0xff]
    %v811 = vld [vmem:[#allocation3 + $0x1268] sm:$0xff]
    %v812 = vld [vmem:[#allocation3 + $0x1270] sm:$0xff]
    %v813 = vld [vmem:[#allocation3 + $0x1278] sm:$0xff]
    %v814 = vld [vmem:[#allocation3 + $0x1280] sm:$0xff]
    %v815 = vld [vmem:[#allocation3 + $0x1288] sm:$0xff]
    %v816 = vld [vmem:[#allocation3 + $0x1290] sm:$0xff]
    %v817 = vld [vmem:[#allocation3 + $0x1298] sm:$0xff]
    %v818 = vld [vmem:[#allocation3 + $0x12a0] sm:$0xff]
    %v819 = vld [vmem:[#allocation3 + $0x12a8] sm:$0xff]
    %v820 = vld [vmem:[#allocation3 + $0x12b0] sm:$0xff]
    %v821 = vld [vmem:[#allocation3 + $0x12b8] sm:$0xff]
    %v822 = vld [vmem:[#allocation3 + $0x12c0] sm:$0xff]
    %v823 = vld [vmem:[#allocation3 + $0x12c8] sm:$0xff]
    %v824 = vld [vmem:[#allocation3 + $0x12d0] sm:$0xff]
    %v825 = vld [vmem:[#allocation3 + $0x12d8] sm:$0xff]
    %v826 = vld [vmem:[#allocation3 + $0x12e0] sm:$0xff]
    %v827 = vld [vmem:[#allocation3 + $0x12e8] sm:$0xff]
    %v828 = vld [vmem:[#allocation3 + $0x12f0] sm:$0xff]
    %v829 = vld [vmem:[#allocation3 + $0x12f8] sm:$0xff]
    %v830 = vld [vmem:[#allocation3 + $0x1300] sm:$0xff]
    %v831 = vld [vmem:[#allocation3 + $0x1308] sm:$0xff]
    %v832 = vld [vmem:[#allocation3 + $0x1310] sm:$0xff]
    %v833 = vld [vmem:[#allocation3 + $0x1318] sm:$0xff]
    %v834 = vld [vmem:[#allocation3 + $0x1320] sm:$0xff]
    %v835 = vld [vmem:[#allocation3 + $0x1328] sm:$0xff]
    %v836 = vld [vmem:[#allocation3 + $0x1330] sm:$0xff]
    %v837 = vld [vmem:[#allocation3 + $0x1338] sm:$0xff]
    %v838 = vld [vmem:[#allocation3 + $0x1340] sm:$0xff]
    %v839 = vld [vmem:[#allocation3 + $0x1348] sm:$0xff]
    %v840 = vld [vmem:[#allocation3 + $0x1350] sm:$0xff]
    %v841 = vld [vmem:[#allocation3 + $0x1358] sm:$0xff]
    %v842 = vld [vmem:[#allocation3 + $0x1360] sm:$0xff]
    %v843 = vld [vmem:[#allocation3 + $0x1368] sm:$0xff]
    %v844 = vld [vmem:[#allocation3 + $0x1370] sm:$0xff]
    %v845 = vld [vmem:[#allocation3 + $0x1378] sm:$0xff]
    %v846 = vld [vmem:[#allocation3 + $0x1380] sm:$0xff]
    %v847 = vld [vmem:[#allocation3 + $0x1388] sm:$0xff]
    %v848 = vld [vmem:[#allocation3 + $0x1390] sm:$0xff]
    %v849 = vld [vmem:[#allocation3 + $0x1398] sm:$0xff]
    %v850 = vld [vmem:[#allocation3 + $0x13a0] sm:$0xff]
    %v851 = vld [vmem:[#allocation3 + $0x13a8] sm:$0xff]
    %v852 = vld [vmem:[#allocation3 + $0x13b0] sm:$0xff]
    %v853 = vld [vmem:[#allocation3 + $0x13b8] sm:$0xff]
    %v854 = vld [vmem:[#allocation3 + $0x13c0] sm:$0xff]
    %v855 = vld [vmem:[#allocation3 + $0x13c8] sm:$0xff]
    %v856 = vld [vmem:[#allocation3 + $0x13d0] sm:$0xff]
    %v857 = vld [vmem:[#allocation3 + $0x13d8] sm:$0xff]
    %v858 = vld [vmem:[#allocation3 + $0x13e0] sm:$0xff]
    %v859 = vld [vmem:[#allocation3 + $0x13e8] sm:$0xff]
    %v860 = vld [vmem:[#allocation3 + $0x13f0] sm:$0xff]
    %v861 = vld [vmem:[#allocation3 + $0x13f8] sm:$0xff]
    %v870 = vunpack.c.l.b16 %v214
    %v871 = vunpack.c.h.b16 %v214
    %v872 = vunpack.c.l.b16 %v215
    %v873 = vunpack.c.h.b16 %v215
    %v874 = vunpack.c.l.b16 %v216
    %v875 = vunpack.c.h.b16 %v216
    %v876 = vunpack.c.l.b16 %v217
    %v877 = vunpack.c.h.b16 %v217
    %v878 = vunpack.c.l.b16 %v218
    %v879 = vunpack.c.h.b16 %v218
    %v880 = vunpack.c.l.b16 %v219
    %v881 = vunpack.c.h.b16 %v219
    %v882 = vunpack.c.l.b16 %v220
    %v883 = vunpack.c.h.b16 %v220
    %v884 = vunpack.c.l.b16 %v221
    %v885 = vunpack.c.h.b16 %v221
    %v886 = vpack.c.b16 %v878, %v870
    %v887 = vpack.c.b16 %v879, %v871
    %v888 = vpack.c.b16 %v880, %v872
    %v889 = vpack.c.b16 %v881, %v873
    %v890 = vpack.c.b16 %v882, %v874
    %v891 = vpack.c.b16 %v883, %v875
    %v892 = vpack.c.b16 %v884, %v876
    %v893 = vpack.c.b16 %v885, %v877
    %v1542 = vunpack.c.l.b16 %v222
    %v1543 = vunpack.c.h.b16 %v222
    %v1544 = vunpack.c.l.b16 %v223
    %v1545 = vunpack.c.h.b16 %v223
    %v1546 = vunpack.c.l.b16 %v224
    %v1547 = vunpack.c.h.b16 %v224
    %v1548 = vunpack.c.l.b16 %v225
    %v1549 = vunpack.c.h.b16 %v225
    %v1550 = vunpack.c.l.b16 %v226
    %v1551 = vunpack.c.h.b16 %v226
    %v1552 = vunpack.c.l.b16 %v227
    %v1553 = vunpack.c.h.b16 %v227
    %v1554 = vunpack.c.l.b16 %v228
    %v1555 = vunpack.c.h.b16 %v228
    %v1556 = vunpack.c.l.b16 %v229
    %v1557 = vunpack.c.h.b16 %v229
    %v1558 = vunpack.c.l.b16 %v230
    %v1559 = vunpack.c.h.b16 %v230
    %v1560 = vunpack.c.l.b16 %v231
    %v1561 = vunpack.c.h.b16 %v231
    %v1562 = vunpack.c.l.b16 %v232
    %v1563 = vunpack.c.h.b16 %v232
    %v1564 = vunpack.c.l.b16 %v233
    %v1565 = vunpack.c.h.b16 %v233
    %v1566 = vunpack.c.l.b16 %v234
    %v1567 = vunpack.c.h.b16 %v234
    %v1568 = vunpack.c.l.b16 %v235
    %v1569 = vunpack.c.h.b16 %v235
    %v1570 = vunpack.c.l.b16 %v236
    %v1571 = vunpack.c.h.b16 %v236
    %v1572 = vunpack.c.l.b16 %v237
    %v1573 = vunpack.c.h.b16 %v237
    %v1574 = vunpack.c.l.b16 %v238
    %v1575 = vunpack.c.h.b16 %v238
    %v1576 = vunpack.c.l.b16 %v239
    %v1577 = vunpack.c.h.b16 %v239
    %v1578 = vunpack.c.l.b16 %v240
    %v1579 = vunpack.c.h.b16 %v240
    %v1580 = vunpack.c.l.b16 %v241
    %v1581 = vunpack.c.h.b16 %v241
    %v1582 = vunpack.c.l.b16 %v242
    %v1583 = vunpack.c.h.b16 %v242
    %v1584 = vunpack.c.l.b16 %v243
    %v1585 = vunpack.c.h.b16 %v243
    %v1586 = vunpack.c.l.b16 %v244
    %v1587 = vunpack.c.h.b16 %v244
    %v1588 = vunpack.c.l.b16 %v245
    %v1589 = vunpack.c.h.b16 %v245
    %v1590 = vunpack.c.l.b16 %v246
    %v1591 = vunpack.c.h.b16 %v246
    %v1592 = vunpack.c.l.b16 %v247
    %v1593 = vunpack.c.h.b16 %v247
    %v1594 = vunpack.c.l.b16 %v248
    %v1595 = vunpack.c.h.b16 %v248
    %v1596 = vunpack.c.l.b16 %v249
    %v1597 = vunpack.c.h.b16 %v249
    %v1598 = vunpack.c.l.b16 %v250
    %v1599 = vunpack.c.h.b16 %v250
    %v1600 = vunpack.c.l.b16 %v251
    %v1601 = vunpack.c.h.b16 %v251
    %v1602 = vunpack.c.l.b16 %v252
    %v1603 = vunpack.c.h.b16 %v252
    %v1604 = vunpack.c.l.b16 %v253
    %v1605 = vunpack.c.h.b16 %v253
    %v1606 = vunpack.c.l.b16 %v254
    %v1607 = vunpack.c.h.b16 %v254
    %v1608 = vunpack.c.l.b16 %v255
    %v1609 = vunpack.c.h.b16 %v255
    %v1610 = vunpack.c.l.b16 %v256
    %v1611 = vunpack.c.h.b16 %v256
    %v1612 = vunpack.c.l.b16 %v257
    %v1613 = vunpack.c.h.b16 %v257
    %v1614 = vunpack.c.l.b16 %v258
    %v1615 = vunpack.c.h.b16 %v258
    %v1616 = vunpack.c.l.b16 %v259
    %v1617 = vunpack.c.h.b16 %v259
    %v1618 = vunpack.c.l.b16 %v260
    %v1619 = vunpack.c.h.b16 %v260
    %v1620 = vunpack.c.l.b16 %v261
    %v1621 = vunpack.c.h.b16 %v261
    %v1622 = vunpack.c.l.b16 %v262
    %v1623 = vunpack.c.h.b16 %v262
    %v1624 = vunpack.c.l.b16 %v263
    %v1625 = vunpack.c.h.b16 %v263
    %v1626 = vunpack.c.l.b16 %v264
    %v1627 = vunpack.c.h.b16 %v264
    %v1628 = vunpack.c.l.b16 %v265
    %v1629 = vunpack.c.h.b16 %v265
    %v1630 = vunpack.c.l.b16 %v266
    %v1631 = vunpack.c.h.b16 %v266
    %v1632 = vunpack.c.l.b16 %v267
    %v1633 = vunpack.c.h.b16 %v267
    %v1634 = vunpack.c.l.b16 %v268
    %v1635 = vunpack.c.h.b16 %v268
    %v1636 = vunpack.c.l.b16 %v269
    %v1637 = vunpack.c.h.b16 %v269
    %v1638 = vunpack.c.l.b16 %v270
    %v1639 = vunpack.c.h.b16 %v270
    %v1640 = vunpack.c.l.b16 %v271
    %v1641 = vunpack.c.h.b16 %v271
    %v1642 = vunpack.c.l.b16 %v272
    %v1643 = vunpack.c.h.b16 %v272
    %v1644 = vunpack.c.l.b16 %v273
    %v1645 = vunpack.c.h.b16 %v273
    %v1646 = vunpack.c.l.b16 %v274
    %v1647 = vunpack.c.h.b16 %v274
    %v1648 = vunpack.c.l.b16 %v275
    %v1649 = vunpack.c.h.b16 %v275
    %v1650 = vunpack.c.l.b16 %v276
    %v1651 = vunpack.c.h.b16 %v276
    %v1652 = vunpack.c.l.b16 %v277
    %v1653 = vunpack.c.h.b16 %v277
    %v1654 = vunpack.c.l.b16 %v278
    %v1655 = vunpack.c.h.b16 %v278
    %v1656 = vunpack.c.l.b16 %v279
    %v1657 = vunpack.c.h.b16 %v279
    %v1658 = vunpack.c.l.b16 %v280
    %v1659 = vunpack.c.h.b16 %v280
    %v1660 = vunpack.c.l.b16 %v281
    %v1661 = vunpack.c.h.b16 %v281
    %v1662 = vunpack.c.l.b16 %v282
    %v1663 = vunpack.c.h.b16 %v282
    %v1664 = vunpack.c.l.b16 %v283
    %v1665 = vunpack.c.h.b16 %v283
    %v1666 = vunpack.c.l.b16 %v284
    %v1667 = vunpack.c.h.b16 %v284
    %v1668 = vunpack.c.l.b16 %v285
    %v1669 = vunpack.c.h.b16 %v285
    %v1670 = vunpack.c.l.b16 %v286
    %v1671 = vunpack.c.h.b16 %v286
    %v1672 = vunpack.c.l.b16 %v287
    %v1673 = vunpack.c.h.b16 %v287
    %v1674 = vunpack.c.l.b16 %v288
    %v1675 = vunpack.c.h.b16 %v288
    %v1676 = vunpack.c.l.b16 %v289
    %v1677 = vunpack.c.h.b16 %v289
    %v1678 = vunpack.c.l.b16 %v290
    %v1679 = vunpack.c.h.b16 %v290
    %v1680 = vunpack.c.l.b16 %v291
    %v1681 = vunpack.c.h.b16 %v291
    %v1682 = vunpack.c.l.b16 %v292
    %v1683 = vunpack.c.h.b16 %v292
    %v1684 = vunpack.c.l.b16 %v293
    %v1685 = vunpack.c.h.b16 %v293
    %v1686 = vunpack.c.l.b16 %v294
    %v1687 = vunpack.c.h.b16 %v294
    %v1688 = vunpack.c.l.b16 %v295
    %v1689 = vunpack.c.h.b16 %v295
    %v1690 = vunpack.c.l.b16 %v296
    %v1691 = vunpack.c.h.b16 %v296
    %v1692 = vunpack.c.l.b16 %v297
    %v1693 = vunpack.c.h.b16 %v297
    %v1694 = vunpack.c.l.b16 %v298
    %v1695 = vunpack.c.h.b16 %v298
    %v1696 = vunpack.c.l.b16 %v299
    %v1697 = vunpack.c.h.b16 %v299
    %v1698 = vunpack.c.l.b16 %v300
    %v1699 = vunpack.c.h.b16 %v300
    %v1700 = vunpack.c.l.b16 %v301
    %v1701 = vunpack.c.h.b16 %v301
    %v1702 = vunpack.c.l.b16 %v302
    %v1703 = vunpack.c.h.b16 %v302
    %v1704 = vunpack.c.l.b16 %v303
    %v1705 = vunpack.c.h.b16 %v303
    %v1706 = vunpack.c.l.b16 %v304
    %v1707 = vunpack.c.h.b16 %v304
    %v1708 = vunpack.c.l.b16 %v305
    %v1709 = vunpack.c.h.b16 %v305
    %v1710 = vunpack.c.l.b16 %v306
    %v1711 = vunpack.c.h.b16 %v306
    %v1712 = vunpack.c.l.b16 %v307
    %v1713 = vunpack.c.h.b16 %v307
    %v1714 = vunpack.c.l.b16 %v308
    %v1715 = vunpack.c.h.b16 %v308
    %v1716 = vunpack.c.l.b16 %v309
    %v1717 = vunpack.c.h.b16 %v309
    %v1718 = vunpack.c.l.b16 %v310
    %v1719 = vunpack.c.h.b16 %v310
    %v1720 = vunpack.c.l.b16 %v311
    %v1721 = vunpack.c.h.b16 %v311
    %v1722 = vunpack.c.l.b16 %v312
    %v1723 = vunpack.c.h.b16 %v312
    %v1724 = vunpack.c.l.b16 %v313
    %v1725 = vunpack.c.h.b16 %v313
    %v1726 = vunpack.c.l.b16 %v314
    %v1727 = vunpack.c.h.b16 %v314
    %v1728 = vunpack.c.l.b16 %v315
    %v1729 = vunpack.c.h.b16 %v315
    %v1730 = vunpack.c.l.b16 %v316
    %v1731 = vunpack.c.h.b16 %v316
    %v1732 = vunpack.c.l.b16 %v317
    %v1733 = vunpack.c.h.b16 %v317
    %v1734 = vunpack.c.l.b16 %v318
    %v1735 = vunpack.c.h.b16 %v318
    %v1736 = vunpack.c.l.b16 %v319
    %v1737 = vunpack.c.h.b16 %v319
    %v1738 = vunpack.c.l.b16 %v320
    %v1739 = vunpack.c.h.b16 %v320
    %v1740 = vunpack.c.l.b16 %v321
    %v1741 = vunpack.c.h.b16 %v321
    %v1742 = vunpack.c.l.b16 %v322
    %v1743 = vunpack.c.h.b16 %v322
    %v1744 = vunpack.c.l.b16 %v323
    %v1745 = vunpack.c.h.b16 %v323
    %v1746 = vunpack.c.l.b16 %v324
    %v1747 = vunpack.c.h.b16 %v324
    %v1748 = vunpack.c.l.b16 %v325
    %v1749 = vunpack.c.h.b16 %v325
    %v1750 = vunpack.c.l.b16 %v326
    %v1751 = vunpack.c.h.b16 %v326
    %v1752 = vunpack.c.l.b16 %v327
    %v1753 = vunpack.c.h.b16 %v327
    %v1754 = vunpack.c.l.b16 %v328
    %v1755 = vunpack.c.h.b16 %v328
    %v1756 = vunpack.c.l.b16 %v329
    %v1757 = vunpack.c.h.b16 %v329
    %v1758 = vunpack.c.l.b16 %v330
    %v1759 = vunpack.c.h.b16 %v330
    %v1760 = vunpack.c.l.b16 %v331
    %v1761 = vunpack.c.h.b16 %v331
    %v1762 = vunpack.c.l.b16 %v332
    %v1763 = vunpack.c.h.b16 %v332
    %v1764 = vunpack.c.l.b16 %v333
    %v1765 = vunpack.c.h.b16 %v333
    %v1766 = vunpack.c.l.b16 %v334
    %v1767 = vunpack.c.h.b16 %v334
    %v1768 = vunpack.c.l.b16 %v335
    %v1769 = vunpack.c.h.b16 %v335
    %v1770 = vunpack.c.l.b16 %v336
    %v1771 = vunpack.c.h.b16 %v336
    %v1772 = vunpack.c.l.b16 %v337
    %v1773 = vunpack.c.h.b16 %v337
    %v1774 = vunpack.c.l.b16 %v338
    %v1775 = vunpack.c.h.b16 %v338
    %v1776 = vunpack.c.l.b16 %v339
    %v1777 = vunpack.c.h.b16 %v339
    %v1778 = vunpack.c.l.b16 %v340
    %v1779 = vunpack.c.h.b16 %v340
    %v1780 = vunpack.c.l.b16 %v341
    %v1781 = vunpack.c.h.b16 %v341
    %v1782 = vunpack.c.l.b16 %v342
    %v1783 = vunpack.c.h.b16 %v342
    %v1784 = vunpack.c.l.b16 %v343
    %v1785 = vunpack.c.h.b16 %v343
    %v1786 = vunpack.c.l.b16 %v344
    %v1787 = vunpack.c.h.b16 %v344
    %v1788 = vunpack.c.l.b16 %v345
    %v1789 = vunpack.c.h.b16 %v345
    %v1790 = vunpack.c.l.b16 %v346
    %v1791 = vunpack.c.h.b16 %v346
    %v1792 = vunpack.c.l.b16 %v347
    %v1793 = vunpack.c.h.b16 %v347
    %v1794 = vunpack.c.l.b16 %v348
    %v1795 = vunpack.c.h.b16 %v348
    %v1796 = vunpack.c.l.b16 %v349
    %v1797 = vunpack.c.h.b16 %v349
    %v1798 = vunpack.c.l.b16 %v350
    %v1799 = vunpack.c.h.b16 %v350
    %v1800 = vunpack.c.l.b16 %v351
    %v1801 = vunpack.c.h.b16 %v351
    %v1802 = vunpack.c.l.b16 %v352
    %v1803 = vunpack.c.h.b16 %v352
    %v1804 = vunpack.c.l.b16 %v353
    %v1805 = vunpack.c.h.b16 %v353
    %v1806 = vunpack.c.l.b16 %v354
    %v1807 = vunpack.c.h.b16 %v354
    %v1808 = vunpack.c.l.b16 %v355
    %v1809 = vunpack.c.h.b16 %v355
    %v1810 = vunpack.c.l.b16 %v356
    %v1811 = vunpack.c.h.b16 %v356
    %v1812 = vunpack.c.l.b16 %v357
    %v1813 = vunpack.c.h.b16 %v357
    %v1814 = vunpack.c.l.b16 %v358
    %v1815 = vunpack.c.h.b16 %v358
    %v1816 = vunpack.c.l.b16 %v359
    %v1817 = vunpack.c.h.b16 %v359
    %v1818 = vunpack.c.l.b16 %v360
    %v1819 = vunpack.c.h.b16 %v360
    %v1820 = vunpack.c.l.b16 %v361
    %v1821 = vunpack.c.h.b16 %v361
    %v1822 = vunpack.c.l.b16 %v362
    %v1823 = vunpack.c.h.b16 %v362
    %v1824 = vunpack.c.l.b16 %v363
    %v1825 = vunpack.c.h.b16 %v363
    %v1826 = vunpack.c.l.b16 %v364
    %v1827 = vunpack.c.h.b16 %v364
    %v1828 = vunpack.c.l.b16 %v365
    %v1829 = vunpack.c.h.b16 %v365
    %v1830 = vunpack.c.l.b16 %v366
    %v1831 = vunpack.c.h.b16 %v366
    %v1832 = vunpack.c.l.b16 %v367
    %v1833 = vunpack.c.h.b16 %v367
    %v1834 = vunpack.c.l.b16 %v368
    %v1835 = vunpack.c.h.b16 %v368
    %v1836 = vunpack.c.l.b16 %v369
    %v1837 = vunpack.c.h.b16 %v369
    %v1838 = vunpack.c.l.b16 %v370
    %v1839 = vunpack.c.h.b16 %v370
    %v1840 = vunpack.c.l.b16 %v371
    %v1841 = vunpack.c.h.b16 %v371
    %v1842 = vunpack.c.l.b16 %v372
    %v1843 = vunpack.c.h.b16 %v372
    %v1844 = vunpack.c.l.b16 %v373
    %v1845 = vunpack.c.h.b16 %v373
    %v1846 = vunpack.c.l.b16 %v374
    %v1847 = vunpack.c.h.b16 %v374
    %v1848 = vunpack.c.l.b16 %v375
    %v1849 = vunpack.c.h.b16 %v375
    %v1850 = vunpack.c.l.b16 %v376
    %v1851 = vunpack.c.h.b16 %v376
    %v1852 = vunpack.c.l.b16 %v377
    %v1853 = vunpack.c.h.b16 %v377
    %v1854 = vunpack.c.l.b16 %v378
    %v1855 = vunpack.c.h.b16 %v378
    %v1856 = vunpack.c.l.b16 %v379
    %v1857 = vunpack.c.h.b16 %v379
    %v1858 = vunpack.c.l.b16 %v380
    %v1859 = vunpack.c.h.b16 %v380
    %v1860 = vunpack.c.l.b16 %v381
    %v1861 = vunpack.c.h.b16 %v381
    %v1862 = vunpack.c.l.b16 %v382
    %v1863 = vunpack.c.h.b16 %v382
    %v1864 = vunpack.c.l.b16 %v383
    %v1865 = vunpack.c.h.b16 %v383
    %v1866 = vunpack.c.l.b16 %v384
    %v1867 = vunpack.c.h.b16 %v384
    %v1868 = vunpack.c.l.b16 %v385
    %v1869 = vunpack.c.h.b16 %v385
    %v1870 = vunpack.c.l.b16 %v386
    %v1871 = vunpack.c.h.b16 %v386
    %v1872 = vunpack.c.l.b16 %v387
    %v1873 = vunpack.c.h.b16 %v387
    %v1874 = vunpack.c.l.b16 %v388
    %v1875 = vunpack.c.h.b16 %v388
    %v1876 = vunpack.c.l.b16 %v389
    %v1877 = vunpack.c.h.b16 %v389
    %v1878 = vunpack.c.l.b16 %v390
    %v1879 = vunpack.c.h.b16 %v390
    %v1880 = vunpack.c.l.b16 %v391
    %v1881 = vunpack.c.h.b16 %v391
    %v1882 = vunpack.c.l.b16 %v392
    %v1883 = vunpack.c.h.b16 %v392
    %v1884 = vunpack.c.l.b16 %v393
    %v1885 = vunpack.c.h.b16 %v393
    %v1886 = vunpack.c.l.b16 %v394
    %v1887 = vunpack.c.h.b16 %v394
    %v1888 = vunpack.c.l.b16 %v395
    %v1889 = vunpack.c.h.b16 %v395
    %v1890 = vunpack.c.l.b16 %v396
    %v1891 = vunpack.c.h.b16 %v396
    %v1892 = vunpack.c.l.b16 %v397
    %v1893 = vunpack.c.h.b16 %v397
    %v1894 = vunpack.c.l.b16 %v398
    %v1895 = vunpack.c.h.b16 %v398
    %v1896 = vunpack.c.l.b16 %v399
    %v1897 = vunpack.c.h.b16 %v399
    %v1898 = vunpack.c.l.b16 %v400
    %v1899 = vunpack.c.h.b16 %v400
    %v1900 = vunpack.c.l.b16 %v401
    %v1901 = vunpack.c.h.b16 %v401
    %v1902 = vunpack.c.l.b16 %v402
    %v1903 = vunpack.c.h.b16 %v402
    %v1904 = vunpack.c.l.b16 %v403
    %v1905 = vunpack.c.h.b16 %v403
    %v1906 = vunpack.c.l.b16 %v404
    %v1907 = vunpack.c.h.b16 %v404
    %v1908 = vunpack.c.l.b16 %v405
    %v1909 = vunpack.c.h.b16 %v405
    %v1910 = vunpack.c.l.b16 %v406
    %v1911 = vunpack.c.h.b16 %v406
    %v1912 = vunpack.c.l.b16 %v407
    %v1913 = vunpack.c.h.b16 %v407
    %v1914 = vunpack.c.l.b16 %v408
    %v1915 = vunpack.c.h.b16 %v408
    %v1916 = vunpack.c.l.b16 %v409
    %v1917 = vunpack.c.h.b16 %v409
    %v1918 = vunpack.c.l.b16 %v410
    %v1919 = vunpack.c.h.b16 %v410
    %v1920 = vunpack.c.l.b16 %v411
    %v1921 = vunpack.c.h.b16 %v411
    %v1922 = vunpack.c.l.b16 %v412
    %v1923 = vunpack.c.h.b16 %v412
    %v1924 = vunpack.c.l.b16 %v413
    %v1925 = vunpack.c.h.b16 %v413
    %v1926 = vunpack.c.l.b16 %v414
    %v1927 = vunpack.c.h.b16 %v414
    %v1928 = vunpack.c.l.b16 %v415
    %v1929 = vunpack.c.h.b16 %v415
    %v1930 = vunpack.c.l.b16 %v416
    %v1931 = vunpack.c.h.b16 %v416
    %v1932 = vunpack.c.l.b16 %v417
    %v1933 = vunpack.c.h.b16 %v417
    %v1934 = vunpack.c.l.b16 %v418
    %v1935 = vunpack.c.h.b16 %v418
    %v1936 = vunpack.c.l.b16 %v419
    %v1937 = vunpack.c.h.b16 %v419
    %v1938 = vunpack.c.l.b16 %v420
    %v1939 = vunpack.c.h.b16 %v420
    %v1940 = vunpack.c.l.b16 %v421
    %v1941 = vunpack.c.h.b16 %v421
    %v1942 = vunpack.c.l.b16 %v422
    %v1943 = vunpack.c.h.b16 %v422
    %v1944 = vunpack.c.l.b16 %v423
    %v1945 = vunpack.c.h.b16 %v423
    %v1946 = vunpack.c.l.b16 %v424
    %v1947 = vunpack.c.h.b16 %v424
    %v1948 = vunpack.c.l.b16 %v425
    %v1949 = vunpack.c.h.b16 %v425
    %v1950 = vunpack.c.l.b16 %v426
    %v1951 = vunpack.c.h.b16 %v426
    %v1952 = vunpack.c.l.b16 %v427
    %v1953 = vunpack.c.h.b16 %v427
    %v1954 = vunpack.c.l.b16 %v428
    %v1955 = vunpack.c.h.b16 %v428
    %v1956 = vunpack.c.l.b16 %v429
    %v1957 = vunpack.c.h.b16 %v429
    %v1958 = vunpack.c.l.b16 %v430
    %v1959 = vunpack.c.h.b16 %v430
    %v1960 = vunpack.c.l.b16 %v431
    %v1961 = vunpack.c.h.b16 %v431
    %v1962 = vunpack.c.l.b16 %v432
    %v1963 = vunpack.c.h.b16 %v432
    %v1964 = vunpack.c.l.b16 %v433
    %v1965 = vunpack.c.h.b16 %v433
    %v1966 = vunpack.c.l.b16 %v434
    %v1967 = vunpack.c.h.b16 %v434
    %v1968 = vunpack.c.l.b16 %v435
    %v1969 = vunpack.c.h.b16 %v435
    %v1970 = vunpack.c.l.b16 %v436
    %v1971 = vunpack.c.h.b16 %v436
    %v1972 = vunpack.c.l.b16 %v437
    %v1973 = vunpack.c.h.b16 %v437
    %v1974 = vunpack.c.l.b16 %v438
    %v1975 = vunpack.c.h.b16 %v438
    %v1976 = vunpack.c.l.b16 %v439
    %v1977 = vunpack.c.h.b16 %v439
    %v1978 = vunpack.c.l.b16 %v440
    %v1979 = vunpack.c.h.b16 %v440
    %v1980 = vunpack.c.l.b16 %v441
    %v1981 = vunpack.c.h.b16 %v441
    %v1982 = vunpack.c.l.b16 %v442
    %v1983 = vunpack.c.h.b16 %v442
    %v1984 = vunpack.c.l.b16 %v443
    %v1985 = vunpack.c.h.b16 %v443
    %v1986 = vunpack.c.l.b16 %v444
    %v1987 = vunpack.c.h.b16 %v444
    %v1988 = vunpack.c.l.b16 %v445
    %v1989 = vunpack.c.h.b16 %v445
    %v1990 = vunpack.c.l.b16 %v446
    %v1991 = vunpack.c.h.b16 %v446
    %v1992 = vunpack.c.l.b16 %v447
    %v1993 = vunpack.c.h.b16 %v447
    %v1994 = vunpack.c.l.b16 %v448
    %v1995 = vunpack.c.h.b16 %v448
    %v1996 = vunpack.c.l.b16 %v449
    %v1997 = vunpack.c.h.b16 %v449
    %v1998 = vunpack.c.l.b16 %v450
    %v1999 = vunpack.c.h.b16 %v450
    %v2000 = vunpack.c.l.b16 %v451
    %v2001 = vunpack.c.h.b16 %v451
    %v2002 = vunpack.c.l.b16 %v452
    %v2003 = vunpack.c.h.b16 %v452
    %v2004 = vunpack.c.l.b16 %v453
    %v2005 = vunpack.c.h.b16 %v453
    %v2006 = vunpack.c.l.b16 %v454
    %v2007 = vunpack.c.h.b16 %v454
    %v2008 = vunpack.c.l.b16 %v455
    %v2009 = vunpack.c.h.b16 %v455
    %v2010 = vunpack.c.l.b16 %v456
    %v2011 = vunpack.c.h.b16 %v456
    %v2012 = vunpack.c.l.b16 %v457
    %v2013 = vunpack.c.h.b16 %v457
    %v2014 = vunpack.c.l.b16 %v458
    %v2015 = vunpack.c.h.b16 %v458
    %v2016 = vunpack.c.l.b16 %v459
    %v2017 = vunpack.c.h.b16 %v459
    %v2018 = vunpack.c.l.b16 %v460
    %v2019 = vunpack.c.h.b16 %v460
    %v2020 = vunpack.c.l.b16 %v461
    %v2021 = vunpack.c.h.b16 %v461
    %v2022 = vunpack.c.l.b16 %v462
    %v2023 = vunpack.c.h.b16 %v462
    %v2024 = vunpack.c.l.b16 %v463
    %v2025 = vunpack.c.h.b16 %v463
    %v2026 = vunpack.c.l.b16 %v464
    %v2027 = vunpack.c.h.b16 %v464
    %v2028 = vunpack.c.l.b16 %v465
    %v2029 = vunpack.c.h.b16 %v465
    %v2030 = vunpack.c.l.b16 %v466
    %v2031 = vunpack.c.h.b16 %v466
    %v2032 = vunpack.c.l.b16 %v467
    %v2033 = vunpack.c.h.b16 %v467
    %v2034 = vunpack.c.l.b16 %v468
    %v2035 = vunpack.c.h.b16 %v468
    %v2036 = vunpack.c.l.b16 %v469
    %v2037 = vunpack.c.h.b16 %v469
    %v2038 = vunpack.c.l.b16 %v470
    %v2039 = vunpack.c.h.b16 %v470
    %v2040 = vunpack.c.l.b16 %v471
    %v2041 = vunpack.c.h.b16 %v471
    %v2042 = vunpack.c.l.b16 %v472
    %v2043 = vunpack.c.h.b16 %v472
    %v2044 = vunpack.c.l.b16 %v473
    %v2045 = vunpack.c.h.b16 %v473
    %v2046 = vunpack.c.l.b16 %v474
    %v2047 = vunpack.c.h.b16 %v474
    %v2048 = vunpack.c.l.b16 %v475
    %v2049 = vunpack.c.h.b16 %v475
    %v2050 = vunpack.c.l.b16 %v476
    %v2051 = vunpack.c.h.b16 %v476
    %v2052 = vunpack.c.l.b16 %v477
    %v2053 = vunpack.c.h.b16 %v477
    %v2054 = vunpack.c.l.b16 %v478
    %v2055 = vunpack.c.h.b16 %v478
    %v2056 = vunpack.c.l.b16 %v479
    %v2057 = vunpack.c.h.b16 %v479
    %v2058 = vunpack.c.l.b16 %v480
    %v2059 = vunpack.c.h.b16 %v480
    %v2060 = vunpack.c.l.b16 %v481
    %v2061 = vunpack.c.h.b16 %v481
    %v2062 = vunpack.c.l.b16 %v482
    %v2063 = vunpack.c.h.b16 %v482
    %v2064 = vunpack.c.l.b16 %v483
    %v2065 = vunpack.c.h.b16 %v483
    %v2066 = vunpack.c.l.b16 %v484
    %v2067 = vunpack.c.h.b16 %v484
    %v2068 = vunpack.c.l.b16 %v485
    %v2069 = vunpack.c.h.b16 %v485
    %v2070 = vunpack.c.l.b16 %v486
    %v2071 = vunpack.c.h.b16 %v486
    %v2072 = vunpack.c.l.b16 %v487
    %v2073 = vunpack.c.h.b16 %v487
    %v2074 = vunpack.c.l.b16 %v488
    %v2075 = vunpack.c.h.b16 %v488
    %v2076 = vunpack.c.l.b16 %v489
    %v2077 = vunpack.c.h.b16 %v489
    %v2078 = vunpack.c.l.b16 %v490
    %v2079 = vunpack.c.h.b16 %v490
    %v2080 = vunpack.c.l.b16 %v491
    %v2081 = vunpack.c.h.b16 %v491
    %v2082 = vunpack.c.l.b16 %v492
    %v2083 = vunpack.c.h.b16 %v492
    %v2084 = vunpack.c.l.b16 %v493
    %v2085 = vunpack.c.h.b16 %v493
    %v2086 = vunpack.c.l.b16 %v494
    %v2087 = vunpack.c.h.b16 %v494
    %v2088 = vunpack.c.l.b16 %v495
    %v2089 = vunpack.c.h.b16 %v495
    %v2090 = vunpack.c.l.b16 %v496
    %v2091 = vunpack.c.h.b16 %v496
    %v2092 = vunpack.c.l.b16 %v497
    %v2093 = vunpack.c.h.b16 %v497
    %v2094 = vunpack.c.l.b16 %v498
    %v2095 = vunpack.c.h.b16 %v498
    %v2096 = vunpack.c.l.b16 %v499
    %v2097 = vunpack.c.h.b16 %v499
    %v2098 = vunpack.c.l.b16 %v500
    %v2099 = vunpack.c.h.b16 %v500
    %v2100 = vunpack.c.l.b16 %v501
    %v2101 = vunpack.c.h.b16 %v501
    %v2102 = vunpack.c.l.b16 %v502
    %v2103 = vunpack.c.h.b16 %v502
    %v2104 = vunpack.c.l.b16 %v503
    %v2105 = vunpack.c.h.b16 %v503
    %v2106 = vunpack.c.l.b16 %v504
    %v2107 = vunpack.c.h.b16 %v504
    %v2108 = vunpack.c.l.b16 %v505
    %v2109 = vunpack.c.h.b16 %v505
    %v2110 = vunpack.c.l.b16 %v506
    %v2111 = vunpack.c.h.b16 %v506
    %v2112 = vunpack.c.l.b16 %v507
    %v2113 = vunpack.c.h.b16 %v507
    %v2114 = vunpack.c.l.b16 %v508
    %v2115 = vunpack.c.h.b16 %v508
    %v2116 = vunpack.c.l.b16 %v509
    %v2117 = vunpack.c.h.b16 %v509
    %v2118 = vunpack.c.l.b16 %v510
    %v2119 = vunpack.c.h.b16 %v510
    %v2120 = vunpack.c.l.b16 %v511
    %v2121 = vunpack.c.h.b16 %v511
    %v2122 = vunpack.c.l.b16 %v512
    %v2123 = vunpack.c.h.b16 %v512
    %v2124 = vunpack.c.l.b16 %v513
    %v2125 = vunpack.c.h.b16 %v513
    %v2126 = vunpack.c.l.b16 %v514
    %v2127 = vunpack.c.h.b16 %v514
    %v2128 = vunpack.c.l.b16 %v515
    %v2129 = vunpack.c.h.b16 %v515
    %v2130 = vunpack.c.l.b16 %v516
    %v2131 = vunpack.c.h.b16 %v516
    %v2132 = vunpack.c.l.b16 %v517
    %v2133 = vunpack.c.h.b16 %v517
    %v2134 = vunpack.c.l.b16 %v518
    %v2135 = vunpack.c.h.b16 %v518
    %v2136 = vunpack.c.l.b16 %v519
    %v2137 = vunpack.c.h.b16 %v519
    %v2138 = vunpack.c.l.b16 %v520
    %v2139 = vunpack.c.h.b16 %v520
    %v2140 = vunpack.c.l.b16 %v521
    %v2141 = vunpack.c.h.b16 %v521
    %v2142 = vunpack.c.l.b16 %v522
    %v2143 = vunpack.c.h.b16 %v522
    %v2144 = vunpack.c.l.b16 %v523
    %v2145 = vunpack.c.h.b16 %v523
    %v2146 = vunpack.c.l.b16 %v524
    %v2147 = vunpack.c.h.b16 %v524
    %v2148 = vunpack.c.l.b16 %v525
    %v2149 = vunpack.c.h.b16 %v525
    %v2150 = vunpack.c.l.b16 %v526
    %v2151 = vunpack.c.h.b16 %v526
    %v2152 = vunpack.c.l.b16 %v527
    %v2153 = vunpack.c.h.b16 %v527
    %v2154 = vunpack.c.l.b16 %v528
    %v2155 = vunpack.c.h.b16 %v528
    %v2156 = vunpack.c.l.b16 %v529
    %v2157 = vunpack.c.h.b16 %v529
    %v2158 = vunpack.c.l.b16 %v530
    %v2159 = vunpack.c.h.b16 %v530
    %v2160 = vunpack.c.l.b16 %v531
    %v2161 = vunpack.c.h.b16 %v531
    %v2162 = vunpack.c.l.b16 %v532
    %v2163 = vunpack.c.h.b16 %v532
    %v2164 = vunpack.c.l.b16 %v533
    %v2165 = vunpack.c.h.b16 %v533
    %v2166 = vunpack.c.l.b16 %v534
    %v2167 = vunpack.c.h.b16 %v534
    %v2168 = vunpack.c.l.b16 %v535
    %v2169 = vunpack.c.h.b16 %v535
    %v2170 = vunpack.c.l.b16 %v536
    %v2171 = vunpack.c.h.b16 %v536
    %v2172 = vunpack.c.l.b16 %v537
    %v2173 = vunpack.c.h.b16 %v537
    %v2174 = vunpack.c.l.b16 %v538
    %v2175 = vunpack.c.h.b16 %v538
    %v2176 = vunpack.c.l.b16 %v539
    %v2177 = vunpack.c.h.b16 %v539
    %v2178 = vunpack.c.l.b16 %v540
    %v2179 = vunpack.c.h.b16 %v540
    %v2180 = vunpack.c.l.b16 %v541
    %v2181 = vunpack.c.h.b16 %v541
    %v2182 = vunpack.c.l.b16 %v542
    %v2183 = vunpack.c.h.b16 %v542
    %v2184 = vunpack.c.l.b16 %v543
    %v2185 = vunpack.c.h.b16 %v543
    %v2186 = vunpack.c.l.b16 %v544
    %v2187 = vunpack.c.h.b16 %v544
    %v2188 = vunpack.c.l.b16 %v545
    %v2189 = vunpack.c.h.b16 %v545
    %v2190 = vunpack.c.l.b16 %v546
    %v2191 = vunpack.c.h.b16 %v546
    %v2192 = vunpack.c.l.b16 %v547
    %v2193 = vunpack.c.h.b16 %v547
    %v2194 = vunpack.c.l.b16 %v548
    %v2195 = vunpack.c.h.b16 %v548
    %v2196 = vunpack.c.l.b16 %v549
    %v2197 = vunpack.c.h.b16 %v549
    %v2198 = vunpack.c.l.b16 %v550
    %v2199 = vunpack.c.h.b16 %v550
    %v2200 = vunpack.c.l.b16 %v551
    %v2201 = vunpack.c.h.b16 %v551
    %v2202 = vunpack.c.l.b16 %v552
    %v2203 = vunpack.c.h.b16 %v552
    %v2204 = vunpack.c.l.b16 %v553
    %v2205 = vunpack.c.h.b16 %v553
    %v2206 = vunpack.c.l.b16 %v554
    %v2207 = vunpack.c.h.b16 %v554
    %v2208 = vunpack.c.l.b16 %v555
    %v2209 = vunpack.c.h.b16 %v555
    %v2210 = vunpack.c.l.b16 %v556
    %v2211 = vunpack.c.h.b16 %v556
    %v2212 = vunpack.c.l.b16 %v557
    %v2213 = vunpack.c.h.b16 %v557
    %v2214 = vunpack.c.l.b16 %v558
    %v2215 = vunpack.c.h.b16 %v558
    %v2216 = vunpack.c.l.b16 %v559
    %v2217 = vunpack.c.h.b16 %v559
    %v2218 = vunpack.c.l.b16 %v560
    %v2219 = vunpack.c.h.b16 %v560
    %v2220 = vunpack.c.l.b16 %v561
    %v2221 = vunpack.c.h.b16 %v561
    %v2222 = vunpack.c.l.b16 %v562
    %v2223 = vunpack.c.h.b16 %v562
    %v2224 = vunpack.c.l.b16 %v563
    %v2225 = vunpack.c.h.b16 %v563
    %v2226 = vunpack.c.l.b16 %v564
    %v2227 = vunpack.c.h.b16 %v564
    %v2228 = vunpack.c.l.b16 %v565
    %v2229 = vunpack.c.h.b16 %v565
    %v2230 = vunpack.c.l.b16 %v566
    %v2231 = vunpack.c.h.b16 %v566
    %v2232 = vunpack.c.l.b16 %v567
    %v2233 = vunpack.c.h.b16 %v567
    %v2234 = vunpack.c.l.b16 %v568
    %v2235 = vunpack.c.h.b16 %v568
    %v2236 = vunpack.c.l.b16 %v569
    %v2237 = vunpack.c.h.b16 %v569
    %v2238 = vunpack.c.l.b16 %v570
    %v2239 = vunpack.c.h.b16 %v570
    %v2240 = vunpack.c.l.b16 %v571
    %v2241 = vunpack.c.h.b16 %v571
    %v2242 = vunpack.c.l.b16 %v572
    %v2243 = vunpack.c.h.b16 %v572
    %v2244 = vunpack.c.l.b16 %v573
    %v2245 = vunpack.c.h.b16 %v573
    %v2246 = vunpack.c.l.b16 %v574
    %v2247 = vunpack.c.h.b16 %v574
    %v2248 = vunpack.c.l.b16 %v575
    %v2249 = vunpack.c.h.b16 %v575
    %v2250 = vunpack.c.l.b16 %v576
    %v2251 = vunpack.c.h.b16 %v576
    %v2252 = vunpack.c.l.b16 %v577
    %v2253 = vunpack.c.h.b16 %v577
    %v2254 = vunpack.c.l.b16 %v578
    %v2255 = vunpack.c.h.b16 %v578
    %v2256 = vunpack.c.l.b16 %v579
    %v2257 = vunpack.c.h.b16 %v579
    %v2258 = vunpack.c.l.b16 %v580
    %v2259 = vunpack.c.h.b16 %v580
    %v2260 = vunpack.c.l.b16 %v581
    %v2261 = vunpack.c.h.b16 %v581
    %v2262 = vunpack.c.l.b16 %v582
    %v2263 = vunpack.c.h.b16 %v582
    %v2264 = vunpack.c.l.b16 %v583
    %v2265 = vunpack.c.h.b16 %v583
    %v2266 = vunpack.c.l.b16 %v584
    %v2267 = vunpack.c.h.b16 %v584
    %v2268 = vunpack.c.l.b16 %v585
    %v2269 = vunpack.c.h.b16 %v585
    %v2270 = vunpack.c.l.b16 %v586
    %v2271 = vunpack.c.h.b16 %v586
    %v2272 = vunpack.c.l.b16 %v587
    %v2273 = vunpack.c.h.b16 %v587
    %v2274 = vunpack.c.l.b16 %v588
    %v2275 = vunpack.c.h.b16 %v588
    %v2276 = vunpack.c.l.b16 %v589
    %v2277 = vunpack.c.h.b16 %v589
    %v2278 = vunpack.c.l.b16 %v590
    %v2279 = vunpack.c.h.b16 %v590
    %v2280 = vunpack.c.l.b16 %v591
    %v2281 = vunpack.c.h.b16 %v591
    %v2282 = vunpack.c.l.b16 %v592
    %v2283 = vunpack.c.h.b16 %v592
    %v2284 = vunpack.c.l.b16 %v593
    %v2285 = vunpack.c.h.b16 %v593
    %v2286 = vunpack.c.l.b16 %v594
    %v2287 = vunpack.c.h.b16 %v594
    %v2288 = vunpack.c.l.b16 %v595
    %v2289 = vunpack.c.h.b16 %v595
    %v2290 = vunpack.c.l.b16 %v596
    %v2291 = vunpack.c.h.b16 %v596
    %v2292 = vunpack.c.l.b16 %v597
    %v2293 = vunpack.c.h.b16 %v597
    %v2294 = vunpack.c.l.b16 %v598
    %v2295 = vunpack.c.h.b16 %v598
    %v2296 = vunpack.c.l.b16 %v599
    %v2297 = vunpack.c.h.b16 %v599
    %v2298 = vunpack.c.l.b16 %v600
    %v2299 = vunpack.c.h.b16 %v600
    %v2300 = vunpack.c.l.b16 %v601
    %v2301 = vunpack.c.h.b16 %v601
    %v2302 = vunpack.c.l.b16 %v602
    %v2303 = vunpack.c.h.b16 %v602
    %v2304 = vunpack.c.l.b16 %v603
    %v2305 = vunpack.c.h.b16 %v603
    %v2306 = vunpack.c.l.b16 %v604
    %v2307 = vunpack.c.h.b16 %v604
    %v2308 = vunpack.c.l.b16 %v605
    %v2309 = vunpack.c.h.b16 %v605
    %v2310 = vunpack.c.l.b16 %v606
    %v2311 = vunpack.c.h.b16 %v606
    %v2312 = vunpack.c.l.b16 %v607
    %v2313 = vunpack.c.h.b16 %v607
    %v2314 = vunpack.c.l.b16 %v608
    %v2315 = vunpack.c.h.b16 %v608
    %v2316 = vunpack.c.l.b16 %v609
    %v2317 = vunpack.c.h.b16 %v609
    %v2318 = vunpack.c.l.b16 %v610
    %v2319 = vunpack.c.h.b16 %v610
    %v2320 = vunpack.c.l.b16 %v611
    %v2321 = vunpack.c.h.b16 %v611
    %v2322 = vunpack.c.l.b16 %v612
    %v2323 = vunpack.c.h.b16 %v612
    %v2324 = vunpack.c.l.b16 %v613
    %v2325 = vunpack.c.h.b16 %v613
    %v2326 = vunpack.c.l.b16 %v614
    %v2327 = vunpack.c.h.b16 %v614
    %v2328 = vunpack.c.l.b16 %v615
    %v2329 = vunpack.c.h.b16 %v615
    %v2330 = vunpack.c.l.b16 %v616
    %v2331 = vunpack.c.h.b16 %v616
    %v2332 = vunpack.c.l.b16 %v617
    %v2333 = vunpack.c.h.b16 %v617
    %v2334 = vunpack.c.l.b16 %v618
    %v2335 = vunpack.c.h.b16 %v618
    %v2336 = vunpack.c.l.b16 %v619
    %v2337 = vunpack.c.h.b16 %v619
    %v2338 = vunpack.c.l.b16 %v620
    %v2339 = vunpack.c.h.b16 %v620
    %v2340 = vunpack.c.l.b16 %v621
    %v2341 = vunpack.c.h.b16 %v621
    %v2342 = vunpack.c.l.b16 %v622
    %v2343 = vunpack.c.h.b16 %v622
    %v2344 = vunpack.c.l.b16 %v623
    %v2345 = vunpack.c.h.b16 %v623
    %v2346 = vunpack.c.l.b16 %v624
    %v2347 = vunpack.c.h.b16 %v624
    %v2348 = vunpack.c.l.b16 %v625
    %v2349 = vunpack.c.h.b16 %v625
    %v2350 = vunpack.c.l.b16 %v626
    %v2351 = vunpack.c.h.b16 %v626
    %v2352 = vunpack.c.l.b16 %v627
    %v2353 = vunpack.c.h.b16 %v627
    %v2354 = vunpack.c.l.b16 %v628
    %v2355 = vunpack.c.h.b16 %v628
    %v2356 = vunpack.c.l.b16 %v629
    %v2357 = vunpack.c.h.b16 %v629
    %v2358 = vunpack.c.l.b16 %v630
    %v2359 = vunpack.c.h.b16 %v630
    %v2360 = vunpack.c.l.b16 %v631
    %v2361 = vunpack.c.h.b16 %v631
    %v2362 = vunpack.c.l.b16 %v632
    %v2363 = vunpack.c.h.b16 %v632
    %v2364 = vunpack.c.l.b16 %v633
    %v2365 = vunpack.c.h.b16 %v633
    %v2366 = vunpack.c.l.b16 %v634
    %v2367 = vunpack.c.h.b16 %v634
    %v2368 = vunpack.c.l.b16 %v635
    %v2369 = vunpack.c.h.b16 %v635
    %v2370 = vunpack.c.l.b16 %v636
    %v2371 = vunpack.c.h.b16 %v636
    %v2372 = vunpack.c.l.b16 %v637
    %v2373 = vunpack.c.h.b16 %v637
    %v2374 = vunpack.c.l.b16 %v638
    %v2375 = vunpack.c.h.b16 %v638
    %v2376 = vunpack.c.l.b16 %v639
    %v2377 = vunpack.c.h.b16 %v639
    %v2378 = vunpack.c.l.b16 %v640
    %v2379 = vunpack.c.h.b16 %v640
    %v2380 = vunpack.c.l.b16 %v641
    %v2381 = vunpack.c.h.b16 %v641
    %v2382 = vunpack.c.l.b16 %v642
    %v2383 = vunpack.c.h.b16 %v642
    %v2384 = vunpack.c.l.b16 %v643
    %v2385 = vunpack.c.h.b16 %v643
    %v2386 = vunpack.c.l.b16 %v644
    %v2387 = vunpack.c.h.b16 %v644
    %v2388 = vunpack.c.l.b16 %v645
    %v2389 = vunpack.c.h.b16 %v645
    %v2390 = vunpack.c.l.b16 %v646
    %v2391 = vunpack.c.h.b16 %v646
    %v2392 = vunpack.c.l.b16 %v647
    %v2393 = vunpack.c.h.b16 %v647
    %v2394 = vunpack.c.l.b16 %v648
    %v2395 = vunpack.c.h.b16 %v648
    %v2396 = vunpack.c.l.b16 %v649
    %v2397 = vunpack.c.h.b16 %v649
    %v2398 = vunpack.c.l.b16 %v650
    %v2399 = vunpack.c.h.b16 %v650
    %v2400 = vunpack.c.l.b16 %v651
    %v2401 = vunpack.c.h.b16 %v651
    %v2402 = vunpack.c.l.b16 %v652
    %v2403 = vunpack.c.h.b16 %v652
    %v2404 = vunpack.c.l.b16 %v653
    %v2405 = vunpack.c.h.b16 %v653
    %v2406 = vunpack.c.l.b16 %v654
    %v2407 = vunpack.c.h.b16 %v654
    %v2408 = vunpack.c.l.b16 %v655
    %v2409 = vunpack.c.h.b16 %v655
    %v2410 = vunpack.c.l.b16 %v656
    %v2411 = vunpack.c.h.b16 %v656
    %v2412 = vunpack.c.l.b16 %v657
    %v2413 = vunpack.c.h.b16 %v657
    %v2414 = vunpack.c.l.b16 %v658
    %v2415 = vunpack.c.h.b16 %v658
    %v2416 = vunpack.c.l.b16 %v659
    %v2417 = vunpack.c.h.b16 %v659
    %v2418 = vunpack.c.l.b16 %v660
    %v2419 = vunpack.c.h.b16 %v660
    %v2420 = vunpack.c.l.b16 %v661
    %v2421 = vunpack.c.h.b16 %v661
    %v2422 = vunpack.c.l.b16 %v662
    %v2423 = vunpack.c.h.b16 %v662
    %v2424 = vunpack.c.l.b16 %v663
    %v2425 = vunpack.c.h.b16 %v663
    %v2426 = vunpack.c.l.b16 %v664
    %v2427 = vunpack.c.h.b16 %v664
    %v2428 = vunpack.c.l.b16 %v665
    %v2429 = vunpack.c.h.b16 %v665
    %v2430 = vunpack.c.l.b16 %v666
    %v2431 = vunpack.c.h.b16 %v666
    %v2432 = vunpack.c.l.b16 %v667
    %v2433 = vunpack.c.h.b16 %v667
    %v2434 = vunpack.c.l.b16 %v668
    %v2435 = vunpack.c.h.b16 %v668
    %v2436 = vunpack.c.l.b16 %v669
    %v2437 = vunpack.c.h.b16 %v669
    %v2438 = vunpack.c.l.b16 %v670
    %v2439 = vunpack.c.h.b16 %v670
    %v2440 = vunpack.c.l.b16 %v671
    %v2441 = vunpack.c.h.b16 %v671
    %v2442 = vunpack.c.l.b16 %v672
    %v2443 = vunpack.c.h.b16 %v672
    %v2444 = vunpack.c.l.b16 %v673
    %v2445 = vunpack.c.h.b16 %v673
    %v2446 = vunpack.c.l.b16 %v674
    %v2447 = vunpack.c.h.b16 %v674
    %v2448 = vunpack.c.l.b16 %v675
    %v2449 = vunpack.c.h.b16 %v675
    %v2450 = vunpack.c.l.b16 %v676
    %v2451 = vunpack.c.h.b16 %v676
    %v2452 = vunpack.c.l.b16 %v677
    %v2453 = vunpack.c.h.b16 %v677
    %v2454 = vunpack.c.l.b16 %v678
    %v2455 = vunpack.c.h.b16 %v678
    %v2456 = vunpack.c.l.b16 %v679
    %v2457 = vunpack.c.h.b16 %v679
    %v2458 = vunpack.c.l.b16 %v680
    %v2459 = vunpack.c.h.b16 %v680
    %v2460 = vunpack.c.l.b16 %v681
    %v2461 = vunpack.c.h.b16 %v681
    %v2462 = vunpack.c.l.b16 %v682
    %v2463 = vunpack.c.h.b16 %v682
    %v2464 = vunpack.c.l.b16 %v683
    %v2465 = vunpack.c.h.b16 %v683
    %v2466 = vunpack.c.l.b16 %v684
    %v2467 = vunpack.c.h.b16 %v684
    %v2468 = vunpack.c.l.b16 %v685
    %v2469 = vunpack.c.h.b16 %v685
    %v2470 = vunpack.c.l.b16 %v686
    %v2471 = vunpack.c.h.b16 %v686
    %v2472 = vunpack.c.l.b16 %v687
    %v2473 = vunpack.c.h.b16 %v687
    %v2474 = vunpack.c.l.b16 %v688
    %v2475 = vunpack.c.h.b16 %v688
    %v2476 = vunpack.c.l.b16 %v689
    %v2477 = vunpack.c.h.b16 %v689
    %v2478 = vunpack.c.l.b16 %v690
    %v2479 = vunpack.c.h.b16 %v690
    %v2480 = vunpack.c.l.b16 %v691
    %v2481 = vunpack.c.h.b16 %v691
    %v2482 = vunpack.c.l.b16 %v692
    %v2483 = vunpack.c.h.b16 %v692
    %v2484 = vunpack.c.l.b16 %v693
    %v2485 = vunpack.c.h.b16 %v693
    %v2486 = vunpack.c.l.b16 %v694
    %v2487 = vunpack.c.h.b16 %v694
    %v2488 = vunpack.c.l.b16 %v695
    %v2489 = vunpack.c.h.b16 %v695
    %v2490 = vunpack.c.l.b16 %v696
    %v2491 = vunpack.c.h.b16 %v696
    %v2492 = vunpack.c.l.b16 %v697
    %v2493 = vunpack.c.h.b16 %v697
    %v2494 = vunpack.c.l.b16 %v698
    %v2495 = vunpack.c.h.b16 %v698
    %v2496 = vunpack.c.l.b16 %v699
    %v2497 = vunpack.c.h.b16 %v699
    %v2498 = vunpack.c.l.b16 %v700
    %v2499 = vunpack.c.h.b16 %v700
    %v2500 = vunpack.c.l.b16 %v701
    %v2501 = vunpack.c.h.b16 %v701
    %v2502 = vunpack.c.l.b16 %v702
    %v2503 = vunpack.c.h.b16 %v702
    %v2504 = vunpack.c.l.b16 %v703
    %v2505 = vunpack.c.h.b16 %v703
    %v2506 = vunpack.c.l.b16 %v704
    %v2507 = vunpack.c.h.b16 %v704
    %v2508 = vunpack.c.l.b16 %v705
    %v2509 = vunpack.c.h.b16 %v705
    %v2510 = vunpack.c.l.b16 %v706
    %v2511 = vunpack.c.h.b16 %v706
    %v2512 = vunpack.c.l.b16 %v707
    %v2513 = vunpack.c.h.b16 %v707
    %v2514 = vunpack.c.l.b16 %v708
    %v2515 = vunpack.c.h.b16 %v708
    %v2516 = vunpack.c.l.b16 %v709
    %v2517 = vunpack.c.h.b16 %v709
    %v2518 = vunpack.c.l.b16 %v710
    %v2519 = vunpack.c.h.b16 %v710
    %v2520 = vunpack.c.l.b16 %v711
    %v2521 = vunpack.c.h.b16 %v711
    %v2522 = vunpack.c.l.b16 %v712
    %v2523 = vunpack.c.h.b16 %v712
    %v2524 = vunpack.c.l.b16 %v713
    %v2525 = vunpack.c.h.b16 %v713
    %v2526 = vunpack.c.l.b16 %v714
    %v2527 = vunpack.c.h.b16 %v714
    %v2528 = vunpack.c.l.b16 %v715
    %v2529 = vunpack.c.h.b16 %v715
    %v2530 = vunpack.c.l.b16 %v716
    %v2531 = vunpack.c.h.b16 %v716
    %v2532 = vunpack.c.l.b16 %v717
    %v2533 = vunpack.c.h.b16 %v717
    %v2534 = vunpack.c.l.b16 %v718
    %v2535 = vunpack.c.h.b16 %v718
    %v2536 = vunpack.c.l.b16 %v719
    %v2537 = vunpack.c.h.b16 %v719
    %v2538 = vunpack.c.l.b16 %v720
    %v2539 = vunpack.c.h.b16 %v720
    %v2540 = vunpack.c.l.b16 %v721
    %v2541 = vunpack.c.h.b16 %v721
    %v2542 = vunpack.c.l.b16 %v722
    %v2543 = vunpack.c.h.b16 %v722
    %v2544 = vunpack.c.l.b16 %v723
    %v2545 = vunpack.c.h.b16 %v723
    %v2546 = vunpack.c.l.b16 %v724
    %v2547 = vunpack.c.h.b16 %v724
    %v2548 = vunpack.c.l.b16 %v725
    %v2549 = vunpack.c.h.b16 %v725
    %v2550 = vunpack.c.l.b16 %v726
    %v2551 = vunpack.c.h.b16 %v726
    %v2552 = vunpack.c.l.b16 %v727
    %v2553 = vunpack.c.h.b16 %v727
    %v2554 = vunpack.c.l.b16 %v728
    %v2555 = vunpack.c.h.b16 %v728
    %v2556 = vunpack.c.l.b16 %v729
    %v2557 = vunpack.c.h.b16 %v729
    %v2558 = vunpack.c.l.b16 %v730
    %v2559 = vunpack.c.h.b16 %v730
    %v2560 = vunpack.c.l.b16 %v731
    %v2561 = vunpack.c.h.b16 %v731
    %v2562 = vunpack.c.l.b16 %v732
    %v2563 = vunpack.c.h.b16 %v732
    %v2564 = vunpack.c.l.b16 %v733
    %v2565 = vunpack.c.h.b16 %v733
    %v2566 = vunpack.c.l.b16 %v734
    %v2567 = vunpack.c.h.b16 %v734
    %v2568 = vunpack.c.l.b16 %v735
    %v2569 = vunpack.c.h.b16 %v735
    %v2570 = vunpack.c.l.b16 %v736
    %v2571 = vunpack.c.h.b16 %v736
    %v2572 = vunpack.c.l.b16 %v737
    %v2573 = vunpack.c.h.b16 %v737
    %v2574 = vunpack.c.l.b16 %v738
    %v2575 = vunpack.c.h.b16 %v738
    %v2576 = vunpack.c.l.b16 %v739
    %v2577 = vunpack.c.h.b16 %v739
    %v2578 = vunpack.c.l.b16 %v740
    %v2579 = vunpack.c.h.b16 %v740
    %v2580 = vunpack.c.l.b16 %v741
    %v2581 = vunpack.c.h.b16 %v741
    %v2582 = vunpack.c.l.b16 %v742
    %v2583 = vunpack.c.h.b16 %v742
    %v2584 = vunpack.c.l.b16 %v743
    %v2585 = vunpack.c.h.b16 %v743
    %v2586 = vunpack.c.l.b16 %v744
    %v2587 = vunpack.c.h.b16 %v744
    %v2588 = vunpack.c.l.b16 %v745
    %v2589 = vunpack.c.h.b16 %v745
    %v2590 = vunpack.c.l.b16 %v746
    %v2591 = vunpack.c.h.b16 %v746
    %v2592 = vunpack.c.l.b16 %v747
    %v2593 = vunpack.c.h.b16 %v747
    %v2594 = vunpack.c.l.b16 %v748
    %v2595 = vunpack.c.h.b16 %v748
    %v2596 = vunpack.c.l.b16 %v749
    %v2597 = vunpack.c.h.b16 %v749
    %v2598 = vunpack.c.l.b16 %v750
    %v2599 = vunpack.c.h.b16 %v750
    %v2600 = vunpack.c.l.b16 %v751
    %v2601 = vunpack.c.h.b16 %v751
    %v2602 = vunpack.c.l.b16 %v752
    %v2603 = vunpack.c.h.b16 %v752
    %v2604 = vunpack.c.l.b16 %v753
    %v2605 = vunpack.c.h.b16 %v753
    %v2606 = vunpack.c.l.b16 %v754
    %v2607 = vunpack.c.h.b16 %v754
    %v2608 = vunpack.c.l.b16 %v755
    %v2609 = vunpack.c.h.b16 %v755
    %v2610 = vunpack.c.l.b16 %v756
    %v2611 = vunpack.c.h.b16 %v756
    %v2612 = vunpack.c.l.b16 %v757
    %v2613 = vunpack.c.h.b16 %v757
    %v2614 = vunpack.c.l.b16 %v758
    %v2615 = vunpack.c.h.b16 %v758
    %v2616 = vunpack.c.l.b16 %v759
    %v2617 = vunpack.c.h.b16 %v759
    %v2618 = vunpack.c.l.b16 %v760
    %v2619 = vunpack.c.h.b16 %v760
    %v2620 = vunpack.c.l.b16 %v761
    %v2621 = vunpack.c.h.b16 %v761
    %v2622 = vunpack.c.l.b16 %v762
    %v2623 = vunpack.c.h.b16 %v762
    %v2624 = vunpack.c.l.b16 %v763
    %v2625 = vunpack.c.h.b16 %v763
    %v2626 = vunpack.c.l.b16 %v764
    %v2627 = vunpack.c.h.b16 %v764
    %v2628 = vunpack.c.l.b16 %v765
    %v2629 = vunpack.c.h.b16 %v765
    %v2630 = vunpack.c.l.b16 %v766
    %v2631 = vunpack.c.h.b16 %v766
    %v2632 = vunpack.c.l.b16 %v767
    %v2633 = vunpack.c.h.b16 %v767
    %v2634 = vunpack.c.l.b16 %v768
    %v2635 = vunpack.c.h.b16 %v768
    %v2636 = vunpack.c.l.b16 %v769
    %v2637 = vunpack.c.h.b16 %v769
    %v2638 = vunpack.c.l.b16 %v770
    %v2639 = vunpack.c.h.b16 %v770
    %v2640 = vunpack.c.l.b16 %v771
    %v2641 = vunpack.c.h.b16 %v771
    %v2642 = vunpack.c.l.b16 %v772
    %v2643 = vunpack.c.h.b16 %v772
    %v2644 = vunpack.c.l.b16 %v773
    %v2645 = vunpack.c.h.b16 %v773
    %v2646 = vunpack.c.l.b16 %v774
    %v2647 = vunpack.c.h.b16 %v774
    %v2648 = vunpack.c.l.b16 %v775
    %v2649 = vunpack.c.h.b16 %v775
    %v2650 = vunpack.c.l.b16 %v776
    %v2651 = vunpack.c.h.b16 %v776
    %v2652 = vunpack.c.l.b16 %v777
    %v2653 = vunpack.c.h.b16 %v777
    %v2654 = vunpack.c.l.b16 %v778
    %v2655 = vunpack.c.h.b16 %v778
    %v2656 = vunpack.c.l.b16 %v779
    %v2657 = vunpack.c.h.b16 %v779
    %v2658 = vunpack.c.l.b16 %v780
    %v2659 = vunpack.c.h.b16 %v780
    %v2660 = vunpack.c.l.b16 %v781
    %v2661 = vunpack.c.h.b16 %v781
    %v2662 = vunpack.c.l.b16 %v782
    %v2663 = vunpack.c.h.b16 %v782
    %v2664 = vunpack.c.l.b16 %v783
    %v2665 = vunpack.c.h.b16 %v783
    %v2666 = vunpack.c.l.b16 %v784
    %v2667 = vunpack.c.h.b16 %v784
    %v2668 = vunpack.c.l.b16 %v785
    %v2669 = vunpack.c.h.b16 %v785
    %v2670 = vunpack.c.l.b16 %v786
    %v2671 = vunpack.c.h.b16 %v786
    %v2672 = vunpack.c.l.b16 %v787
    %v2673 = vunpack.c.h.b16 %v787
    %v2674 = vunpack.c.l.b16 %v788
    %v2675 = vunpack.c.h.b16 %v788
    %v2676 = vunpack.c.l.b16 %v789
    %v2677 = vunpack.c.h.b16 %v789
    %v2678 = vunpack.c.l.b16 %v790
    %v2679 = vunpack.c.h.b16 %v790
    %v2680 = vunpack.c.l.b16 %v791
    %v2681 = vunpack.c.h.b16 %v791
    %v2682 = vunpack.c.l.b16 %v792
    %v2683 = vunpack.c.h.b16 %v792
    %v2684 = vunpack.c.l.b16 %v793
    %v2685 = vunpack.c.h.b16 %v793
    %v2686 = vunpack.c.l.b16 %v794
    %v2687 = vunpack.c.h.b16 %v794
    %v2688 = vunpack.c.l.b16 %v795
    %v2689 = vunpack.c.h.b16 %v795
    %v2690 = vunpack.c.l.b16 %v796
    %v2691 = vunpack.c.h.b16 %v796
    %v2692 = vunpack.c.l.b16 %v797
    %v2693 = vunpack.c.h.b16 %v797
    %v2694 = vunpack.c.l.b16 %v798
    %v2695 = vunpack.c.h.b16 %v798
    %v2696 = vunpack.c.l.b16 %v799
    %v2697 = vunpack.c.h.b16 %v799
    %v2698 = vunpack.c.l.b16 %v800
    %v2699 = vunpack.c.h.b16 %v800
    %v2700 = vunpack.c.l.b16 %v801
    %v2701 = vunpack.c.h.b16 %v801
    %v2702 = vunpack.c.l.b16 %v802
    %v2703 = vunpack.c.h.b16 %v802
    %v2704 = vunpack.c.l.b16 %v803
    %v2705 = vunpack.c.h.b16 %v803
    %v2706 = vunpack.c.l.b16 %v804
    %v2707 = vunpack.c.h.b16 %v804
    %v2708 = vunpack.c.l.b16 %v805
    %v2709 = vunpack.c.h.b16 %v805
    %v2710 = vunpack.c.l.b16 %v806
    %v2711 = vunpack.c.h.b16 %v806
    %v2712 = vunpack.c.l.b16 %v807
    %v2713 = vunpack.c.h.b16 %v807
    %v2714 = vunpack.c.l.b16 %v808
    %v2715 = vunpack.c.h.b16 %v808
    %v2716 = vunpack.c.l.b16 %v809
    %v2717 = vunpack.c.h.b16 %v809
    %v2718 = vunpack.c.l.b16 %v810
    %v2719 = vunpack.c.h.b16 %v810
    %v2720 = vunpack.c.l.b16 %v811
    %v2721 = vunpack.c.h.b16 %v811
    %v2722 = vunpack.c.l.b16 %v812
    %v2723 = vunpack.c.h.b16 %v812
    %v2724 = vunpack.c.l.b16 %v813
    %v2725 = vunpack.c.h.b16 %v813
    %v2726 = vunpack.c.l.b16 %v814
    %v2727 = vunpack.c.h.b16 %v814
    %v2728 = vunpack.c.l.b16 %v815
    %v2729 = vunpack.c.h.b16 %v815
    %v2730 = vunpack.c.l.b16 %v816
    %v2731 = vunpack.c.h.b16 %v816
    %v2732 = vunpack.c.l.b16 %v817
    %v2733 = vunpack.c.h.b16 %v817
    %v2734 = vunpack.c.l.b16 %v818
    %v2735 = vunpack.c.h.b16 %v818
    %v2736 = vunpack.c.l.b16 %v819
    %v2737 = vunpack.c.h.b16 %v819
    %v2738 = vunpack.c.l.b16 %v820
    %v2739 = vunpack.c.h.b16 %v820
    %v2740 = vunpack.c.l.b16 %v821
    %v2741 = vunpack.c.h.b16 %v821
    %v2742 = vunpack.c.l.b16 %v822
    %v2743 = vunpack.c.h.b16 %v822
    %v2744 = vunpack.c.l.b16 %v823
    %v2745 = vunpack.c.h.b16 %v823
    %v2746 = vunpack.c.l.b16 %v824
    %v2747 = vunpack.c.h.b16 %v824
    %v2748 = vunpack.c.l.b16 %v825
    %v2749 = vunpack.c.h.b16 %v825
    %v2750 = vunpack.c.l.b16 %v826
    %v2751 = vunpack.c.h.b16 %v826
    %v2752 = vunpack.c.l.b16 %v827
    %v2753 = vunpack.c.h.b16 %v827
    %v2754 = vunpack.c.l.b16 %v828
    %v2755 = vunpack.c.h.b16 %v828
    %v2756 = vunpack.c.l.b16 %v829
    %v2757 = vunpack.c.h.b16 %v829
    %v2758 = vunpack.c.l.b16 %v830
    %v2759 = vunpack.c.h.b16 %v830
    %v2760 = vunpack.c.l.b16 %v831
    %v2761 = vunpack.c.h.b16 %v831
    %v2762 = vunpack.c.l.b16 %v832
    %v2763 = vunpack.c.h.b16 %v832
    %v2764 = vunpack.c.l.b16 %v833
    %v2765 = vunpack.c.h.b16 %v833
    %v2766 = vunpack.c.l.b16 %v834
    %v2767 = vunpack.c.h.b16 %v834
    %v2768 = vunpack.c.l.b16 %v835
    %v2769 = vunpack.c.h.b16 %v835
    %v2770 = vunpack.c.l.b16 %v836
    %v2771 = vunpack.c.h.b16 %v836
    %v2772 = vunpack.c.l.b16 %v837
    %v2773 = vunpack.c.h.b16 %v837
    %v2774 = vunpack.c.l.b16 %v838
    %v2775 = vunpack.c.h.b16 %v838
    %v2776 = vunpack.c.l.b16 %v839
    %v2777 = vunpack.c.h.b16 %v839
    %v2778 = vunpack.c.l.b16 %v840
    %v2779 = vunpack.c.h.b16 %v840
    %v2780 = vunpack.c.l.b16 %v841
    %v2781 = vunpack.c.h.b16 %v841
    %v2782 = vunpack.c.l.b16 %v842
    %v2783 = vunpack.c.h.b16 %v842
    %v2784 = vunpack.c.l.b16 %v843
    %v2785 = vunpack.c.h.b16 %v843
    %v2786 = vunpack.c.l.b16 %v844
    %v2787 = vunpack.c.h.b16 %v844
    %v2788 = vunpack.c.l.b16 %v845
    %v2789 = vunpack.c.h.b16 %v845
    %v2790 = vunpack.c.l.b16 %v846
    %v2791 = vunpack.c.h.b16 %v846
    %v2792 = vunpack.c.l.b16 %v847
    %v2793 = vunpack.c.h.b16 %v847
    %v2794 = vunpack.c.l.b16 %v848
    %v2795 = vunpack.c.h.b16 %v848
    %v2796 = vunpack.c.l.b16 %v849
    %v2797 = vunpack.c.h.b16 %v849
    %v2798 = vunpack.c.l.b16 %v850
    %v2799 = vunpack.c.h.b16 %v850
    %v2800 = vunpack.c.l.b16 %v851
    %v2801 = vunpack.c.h.b16 %v851
    %v2802 = vunpack.c.l.b16 %v852
    %v2803 = vunpack.c.h.b16 %v852
    %v2804 = vunpack.c.l.b16 %v853
    %v2805 = vunpack.c.h.b16 %v853
    %v2806 = vunpack.c.l.b16 %v854
    %v2807 = vunpack.c.h.b16 %v854
    %v2808 = vunpack.c.l.b16 %v855
    %v2809 = vunpack.c.h.b16 %v855
    %v2810 = vunpack.c.l.b16 %v856
    %v2811 = vunpack.c.h.b16 %v856
    %v2812 = vunpack.c.l.b16 %v857
    %v2813 = vunpack.c.h.b16 %v857
    %v2814 = vunpack.c.l.b16 %v858
    %v2815 = vunpack.c.h.b16 %v858
    %v2816 = vunpack.c.l.b16 %v859
    %v2817 = vunpack.c.h.b16 %v859
    %v2818 = vunpack.c.l.b16 %v860
    %v2819 = vunpack.c.h.b16 %v860
    %v2820 = vunpack.c.l.b16 %v861
    %v2821 = vunpack.c.h.b16 %v861
    %v2822 = vpack.c.b16 %v1552, %v1542
    %v2823 = vpack.c.b16 %v1553, %v1543
    %v2824 = vpack.c.b16 %v1554, %v1544
    %v2825 = vpack.c.b16 %v1555, %v1545
    %v2826 = vpack.c.b16 %v1556, %v1546
    %v2827 = vpack.c.b16 %v1557, %v1547
    %v2828 = vpack.c.b16 %v1558, %v1548
    %v2829 = vpack.c.b16 %v1559, %v1549
    %v2830 = vpack.c.b16 %v1560, %v1550
    %v2831 = vpack.c.b16 %v1561, %v1551
    %v2832 = vpack.c.b16 %v1572, %v1562
    %v2833 = vpack.c.b16 %v1573, %v1563
    %v2834 = vpack.c.b16 %v1574, %v1564
    %v2835 = vpack.c.b16 %v1575, %v1565
    %v2836 = vpack.c.b16 %v1576, %v1566
    %v2837 = vpack.c.b16 %v1577, %v1567
    %v2838 = vpack.c.b16 %v1578, %v1568
    %v2839 = vpack.c.b16 %v1579, %v1569
    %v2840 = vpack.c.b16 %v1580, %v1570
    %v2841 = vpack.c.b16 %v1581, %v1571
    %v2842 = vpack.c.b16 %v1592, %v1582
    %v2843 = vpack.c.b16 %v1593, %v1583
    %v2844 = vpack.c.b16 %v1594, %v1584
    %v2845 = vpack.c.b16 %v1595, %v1585
    %v2846 = vpack.c.b16 %v1596, %v1586
    %v2847 = vpack.c.b16 %v1597, %v1587
    %v2848 = vpack.c.b16 %v1598, %v1588
    %v2849 = vpack.c.b16 %v1599, %v1589
    %v2850 = vpack.c.b16 %v1600, %v1590
    %v2851 = vpack.c.b16 %v1601, %v1591
    %v2852 = vpack.c.b16 %v1612, %v1602
    %v2853 = vpack.c.b16 %v1613, %v1603
    %v2854 = vpack.c.b16 %v1614, %v1604
    %v2855 = vpack.c.b16 %v1615, %v1605
    %v2856 = vpack.c.b16 %v1616, %v1606
    %v2857 = vpack.c.b16 %v1617, %v1607
    %v2858 = vpack.c.b16 %v1618, %v1608
    %v2859 = vpack.c.b16 %v1619, %v1609
    %v2860 = vpack.c.b16 %v1620, %v1610
    %v2861 = vpack.c.b16 %v1621, %v1611
    %v2862 = vpack.c.b16 %v1632, %v1622
    %v2863 = vpack.c.b16 %v1633, %v1623
    %v2864 = vpack.c.b16 %v1634, %v1624
    %v2865 = vpack.c.b16 %v1635, %v1625
    %v2866 = vpack.c.b16 %v1636, %v1626
    %v2867 = vpack.c.b16 %v1637, %v1627
    %v2868 = vpack.c.b16 %v1638, %v1628
    %v2869 = vpack.c.b16 %v1639, %v1629
    %v2870 = vpack.c.b16 %v1640, %v1630
    %v2871 = vpack.c.b16 %v1641, %v1631
    %v2872 = vpack.c.b16 %v1652, %v1642
    %v2873 = vpack.c.b16 %v1653, %v1643
    %v2874 = vpack.c.b16 %v1654, %v1644
    %v2875 = vpack.c.b16 %v1655, %v1645
    %v2876 = vpack.c.b16 %v1656, %v1646
    %v2877 = vpack.c.b16 %v1657, %v1647
    %v2878 = vpack.c.b16 %v1658, %v1648
    %v2879 = vpack.c.b16 %v1659, %v1649
    %v2880 = vpack.c.b16 %v1660, %v1650
    %v2881 = vpack.c.b16 %v1661, %v1651
    %v2882 = vpack.c.b16 %v1672, %v1662
    %v2883 = vpack.c.b16 %v1673, %v1663
    %v2884 = vpack.c.b16 %v1674, %v1664
    %v2885 = vpack.c.b16 %v1675, %v1665
    %v2886 = vpack.c.b16 %v1676, %v1666
    %v2887 = vpack.c.b16 %v1677, %v1667
    %v2888 = vpack.c.b16 %v1678, %v1668
    %v2889 = vpack.c.b16 %v1679, %v1669
    %v2890 = vpack.c.b16 %v1680, %v1670
    %v2891 = vpack.c.b16 %v1681, %v1671
    %v2892 = vpack.c.b16 %v1692, %v1682
    %v2893 = vpack.c.b16 %v1693, %v1683
    %v2894 = vpack.c.b16 %v1694, %v1684
    %v2895 = vpack.c.b16 %v1695, %v1685
    %v2896 = vpack.c.b16 %v1696, %v1686
    %v2897 = vpack.c.b16 %v1697, %v1687
    %v2898 = vpack.c.b16 %v1698, %v1688
    %v2899 = vpack.c.b16 %v1699, %v1689
    %v2900 = vpack.c.b16 %v1700, %v1690
    %v2901 = vpack.c.b16 %v1701, %v1691
    %v2902 = vpack.c.b16 %v1712, %v1702
    %v2903 = vpack.c.b16 %v1713, %v1703
    %v2904 = vpack.c.b16 %v1714, %v1704
    %v2905 = vpack.c.b16 %v1715, %v1705
    %v2906 = vpack.c.b16 %v1716, %v1706
    %v2907 = vpack.c.b16 %v1717, %v1707
    %v2908 = vpack.c.b16 %v1718, %v1708
    %v2909 = vpack.c.b16 %v1719, %v1709
    %v2910 = vpack.c.b16 %v1720, %v1710
    %v2911 = vpack.c.b16 %v1721, %v1711
    %v2912 = vpack.c.b16 %v1732, %v1722
    %v2913 = vpack.c.b16 %v1733, %v1723
    %v2914 = vpack.c.b16 %v1734, %v1724
    %v2915 = vpack.c.b16 %v1735, %v1725
    %v2916 = vpack.c.b16 %v1736, %v1726
    %v2917 = vpack.c.b16 %v1737, %v1727
    %v2918 = vpack.c.b16 %v1738, %v1728
    %v2919 = vpack.c.b16 %v1739, %v1729
    %v2920 = vpack.c.b16 %v1740, %v1730
    %v2921 = vpack.c.b16 %v1741, %v1731
    %v2922 = vpack.c.b16 %v1752, %v1742
    %v2923 = vpack.c.b16 %v1753, %v1743
    %v2924 = vpack.c.b16 %v1754, %v1744
    %v2925 = vpack.c.b16 %v1755, %v1745
    %v2926 = vpack.c.b16 %v1756, %v1746
    %v2927 = vpack.c.b16 %v1757, %v1747
    %v2928 = vpack.c.b16 %v1758, %v1748
    %v2929 = vpack.c.b16 %v1759, %v1749
    %v2930 = vpack.c.b16 %v1760, %v1750
    %v2931 = vpack.c.b16 %v1761, %v1751
    %v2932 = vpack.c.b16 %v1772, %v1762
    %v2933 = vpack.c.b16 %v1773, %v1763
    %v2934 = vpack.c.b16 %v1774, %v1764
    %v2935 = vpack.c.b16 %v1775, %v1765
    %v2936 = vpack.c.b16 %v1776, %v1766
    %v2937 = vpack.c.b16 %v1777, %v1767
    %v2938 = vpack.c.b16 %v1778, %v1768
    %v2939 = vpack.c.b16 %v1779, %v1769
    %v2940 = vpack.c.b16 %v1780, %v1770
    %v2941 = vpack.c.b16 %v1781, %v1771
    %v2942 = vpack.c.b16 %v1792, %v1782
    %v2943 = vpack.c.b16 %v1793, %v1783
    %v2944 = vpack.c.b16 %v1794, %v1784
    %v2945 = vpack.c.b16 %v1795, %v1785
    %v2946 = vpack.c.b16 %v1796, %v1786
    %v2947 = vpack.c.b16 %v1797, %v1787
    %v2948 = vpack.c.b16 %v1798, %v1788
    %v2949 = vpack.c.b16 %v1799, %v1789
    %v2950 = vpack.c.b16 %v1800, %v1790
    %v2951 = vpack.c.b16 %v1801, %v1791
    %v2952 = vpack.c.b16 %v1812, %v1802
    %v2953 = vpack.c.b16 %v1813, %v1803
    %v2954 = vpack.c.b16 %v1814, %v1804
    %v2955 = vpack.c.b16 %v1815, %v1805
    %v2956 = vpack.c.b16 %v1816, %v1806
    %v2957 = vpack.c.b16 %v1817, %v1807
    %v2958 = vpack.c.b16 %v1818, %v1808
    %v2959 = vpack.c.b16 %v1819, %v1809
    %v2960 = vpack.c.b16 %v1820, %v1810
    %v2961 = vpack.c.b16 %v1821, %v1811
    %v2962 = vpack.c.b16 %v1832, %v1822
    %v2963 = vpack.c.b16 %v1833, %v1823
    %v2964 = vpack.c.b16 %v1834, %v1824
    %v2965 = vpack.c.b16 %v1835, %v1825
    %v2966 = vpack.c.b16 %v1836, %v1826
    %v2967 = vpack.c.b16 %v1837, %v1827
    %v2968 = vpack.c.b16 %v1838, %v1828
    %v2969 = vpack.c.b16 %v1839, %v1829
    %v2970 = vpack.c.b16 %v1840, %v1830
    %v2971 = vpack.c.b16 %v1841, %v1831
    %v2972 = vpack.c.b16 %v1852, %v1842
    %v2973 = vpack.c.b16 %v1853, %v1843
    %v2974 = vpack.c.b16 %v1854, %v1844
    %v2975 = vpack.c.b16 %v1855, %v1845
    %v2976 = vpack.c.b16 %v1856, %v1846
    %v2977 = vpack.c.b16 %v1857, %v1847
    %v2978 = vpack.c.b16 %v1858, %v1848
    %v2979 = vpack.c.b16 %v1859, %v1849
    %v2980 = vpack.c.b16 %v1860, %v1850
    %v2981 = vpack.c.b16 %v1861, %v1851
    %v2982 = vpack.c.b16 %v1872, %v1862
    %v2983 = vpack.c.b16 %v1873, %v1863
    %v2984 = vpack.c.b16 %v1874, %v1864
    %v2985 = vpack.c.b16 %v1875, %v1865
    %v2986 = vpack.c.b16 %v1876, %v1866
    %v2987 = vpack.c.b16 %v1877, %v1867
    %v2988 = vpack.c.b16 %v1878, %v1868
    %v2989 = vpack.c.b16 %v1879, %v1869
    %v2990 = vpack.c.b16 %v1880, %v1870
    %v2991 = vpack.c.b16 %v1881, %v1871
    %v2992 = vpack.c.b16 %v1892, %v1882
    %v2993 = vpack.c.b16 %v1893, %v1883
    %v2994 = vpack.c.b16 %v1894, %v1884
    %v2995 = vpack.c.b16 %v1895, %v1885
    %v2996 = vpack.c.b16 %v1896, %v1886
    %v2997 = vpack.c.b16 %v1897, %v1887
    %v2998 = vpack.c.b16 %v1898, %v1888
    %v2999 = vpack.c.b16 %v1899, %v1889
    %v3000 = vpack.c.b16 %v1900, %v1890
    %v3001 = vpack.c.b16 %v1901, %v1891
    %v3002 = vpack.c.b16 %v1912, %v1902
    %v3003 = vpack.c.b16 %v1913, %v1903
    %v3004 = vpack.c.b16 %v1914, %v1904
    %v3005 = vpack.c.b16 %v1915, %v1905
    %v3006 = vpack.c.b16 %v1916, %v1906
    %v3007 = vpack.c.b16 %v1917, %v1907
    %v3008 = vpack.c.b16 %v1918, %v1908
    %v3009 = vpack.c.b16 %v1919, %v1909
    %v3010 = vpack.c.b16 %v1920, %v1910
    %v3011 = vpack.c.b16 %v1921, %v1911
    %v3012 = vpack.c.b16 %v1932, %v1922
    %v3013 = vpack.c.b16 %v1933, %v1923
    %v3014 = vpack.c.b16 %v1934, %v1924
    %v3015 = vpack.c.b16 %v1935, %v1925
    %v3016 = vpack.c.b16 %v1936, %v1926
    %v3017 = vpack.c.b16 %v1937, %v1927
    %v3018 = vpack.c.b16 %v1938, %v1928
    %v3019 = vpack.c.b16 %v1939, %v1929
    %v3020 = vpack.c.b16 %v1940, %v1930
    %v3021 = vpack.c.b16 %v1941, %v1931
    %v3022 = vpack.c.b16 %v1952, %v1942
    %v3023 = vpack.c.b16 %v1953, %v1943
    %v3024 = vpack.c.b16 %v1954, %v1944
    %v3025 = vpack.c.b16 %v1955, %v1945
    %v3026 = vpack.c.b16 %v1956, %v1946
    %v3027 = vpack.c.b16 %v1957, %v1947
    %v3028 = vpack.c.b16 %v1958, %v1948
    %v3029 = vpack.c.b16 %v1959, %v1949
    %v3030 = vpack.c.b16 %v1960, %v1950
    %v3031 = vpack.c.b16 %v1961, %v1951
    %v3032 = vpack.c.b16 %v1972, %v1962
    %v3033 = vpack.c.b16 %v1973, %v1963
    %v3034 = vpack.c.b16 %v1974, %v1964
    %v3035 = vpack.c.b16 %v1975, %v1965
    %v3036 = vpack.c.b16 %v1976, %v1966
    %v3037 = vpack.c.b16 %v1977, %v1967
    %v3038 = vpack.c.b16 %v1978, %v1968
    %v3039 = vpack.c.b16 %v1979, %v1969
    %v3040 = vpack.c.b16 %v1980, %v1970
    %v3041 = vpack.c.b16 %v1981, %v1971
    %v3042 = vpack.c.b16 %v1992, %v1982
    %v3043 = vpack.c.b16 %v1993, %v1983
    %v3044 = vpack.c.b16 %v1994, %v1984
    %v3045 = vpack.c.b16 %v1995, %v1985
    %v3046 = vpack.c.b16 %v1996, %v1986
    %v3047 = vpack.c.b16 %v1997, %v1987
    %v3048 = vpack.c.b16 %v1998, %v1988
    %v3049 = vpack.c.b16 %v1999, %v1989
    %v3050 = vpack.c.b16 %v2000, %v1990
    %v3051 = vpack.c.b16 %v2001, %v1991
    %v3052 = vpack.c.b16 %v2012, %v2002
    %v3053 = vpack.c.b16 %v2013, %v2003
    %v3054 = vpack.c.b16 %v2014, %v2004
    %v3055 = vpack.c.b16 %v2015, %v2005
    %v3056 = vpack.c.b16 %v2016, %v2006
    %v3057 = vpack.c.b16 %v2017, %v2007
    %v3058 = vpack.c.b16 %v2018, %v2008
    %v3059 = vpack.c.b16 %v2019, %v2009
    %v3060 = vpack.c.b16 %v2020, %v2010
    %v3061 = vpack.c.b16 %v2021, %v2011
    %v3062 = vpack.c.b16 %v2032, %v2022
    %v3063 = vpack.c.b16 %v2033, %v2023
    %v3064 = vpack.c.b16 %v2034, %v2024
    %v3065 = vpack.c.b16 %v2035, %v2025
    %v3066 = vpack.c.b16 %v2036, %v2026
    %v3067 = vpack.c.b16 %v2037, %v2027
    %v3068 = vpack.c.b16 %v2038, %v2028
    %v3069 = vpack.c.b16 %v2039, %v2029
    %v3070 = vpack.c.b16 %v2040, %v2030
    %v3071 = vpack.c.b16 %v2041, %v2031
    %v3072 = vpack.c.b16 %v2052, %v2042
    %v3073 = vpack.c.b16 %v2053, %v2043
    %v3074 = vpack.c.b16 %v2054, %v2044
    %v3075 = vpack.c.b16 %v2055, %v2045
    %v3076 = vpack.c.b16 %v2056, %v2046
    %v3077 = vpack.c.b16 %v2057, %v2047
    %v3078 = vpack.c.b16 %v2058, %v2048
    %v3079 = vpack.c.b16 %v2059, %v2049
    %v3080 = vpack.c.b16 %v2060, %v2050
    %v3081 = vpack.c.b16 %v2061, %v2051
    %v3082 = vpack.c.b16 %v2072, %v2062
    %v3083 = vpack.c.b16 %v2073, %v2063
    %v3084 = vpack.c.b16 %v2074, %v2064
    %v3085 = vpack.c.b16 %v2075, %v2065
    %v3086 = vpack.c.b16 %v2076, %v2066
    %v3087 = vpack.c.b16 %v2077, %v2067
    %v3088 = vpack.c.b16 %v2078, %v2068
    %v3089 = vpack.c.b16 %v2079, %v2069
    %v3090 = vpack.c.b16 %v2080, %v2070
    %v3091 = vpack.c.b16 %v2081, %v2071
    %v3092 = vpack.c.b16 %v2092, %v2082
    %v3093 = vpack.c.b16 %v2093, %v2083
    %v3094 = vpack.c.b16 %v2094, %v2084
    %v3095 = vpack.c.b16 %v2095, %v2085
    %v3096 = vpack.c.b16 %v2096, %v2086
    %v3097 = vpack.c.b16 %v2097, %v2087
    %v3098 = vpack.c.b16 %v2098, %v2088
    %v3099 = vpack.c.b16 %v2099, %v2089
    %v3100 = vpack.c.b16 %v2100, %v2090
    %v3101 = vpack.c.b16 %v2101, %v2091
    %v3102 = vpack.c.b16 %v2112, %v2102
    %v3103 = vpack.c.b16 %v2113, %v2103
    %v3104 = vpack.c.b16 %v2114, %v2104
    %v3105 = vpack.c.b16 %v2115, %v2105
    %v3106 = vpack.c.b16 %v2116, %v2106
    %v3107 = vpack.c.b16 %v2117, %v2107
    %v3108 = vpack.c.b16 %v2118, %v2108
    %v3109 = vpack.c.b16 %v2119, %v2109
    %v3110 = vpack.c.b16 %v2120, %v2110
    %v3111 = vpack.c.b16 %v2121, %v2111
    %v3112 = vpack.c.b16 %v2132, %v2122
    %v3113 = vpack.c.b16 %v2133, %v2123
    %v3114 = vpack.c.b16 %v2134, %v2124
    %v3115 = vpack.c.b16 %v2135, %v2125
    %v3116 = vpack.c.b16 %v2136, %v2126
    %v3117 = vpack.c.b16 %v2137, %v2127
    %v3118 = vpack.c.b16 %v2138, %v2128
    %v3119 = vpack.c.b16 %v2139, %v2129
    %v3120 = vpack.c.b16 %v2140, %v2130
    %v3121 = vpack.c.b16 %v2141, %v2131
    %v3122 = vpack.c.b16 %v2152, %v2142
    %v3123 = vpack.c.b16 %v2153, %v2143
    %v3124 = vpack.c.b16 %v2154, %v2144
    %v3125 = vpack.c.b16 %v2155, %v2145
    %v3126 = vpack.c.b16 %v2156, %v2146
    %v3127 = vpack.c.b16 %v2157, %v2147
    %v3128 = vpack.c.b16 %v2158, %v2148
    %v3129 = vpack.c.b16 %v2159, %v2149
    %v3130 = vpack.c.b16 %v2160, %v2150
    %v3131 = vpack.c.b16 %v2161, %v2151
    %v3132 = vpack.c.b16 %v2172, %v2162
    %v3133 = vpack.c.b16 %v2173, %v2163
    %v3134 = vpack.c.b16 %v2174, %v2164
    %v3135 = vpack.c.b16 %v2175, %v2165
    %v3136 = vpack.c.b16 %v2176, %v2166
    %v3137 = vpack.c.b16 %v2177, %v2167
    %v3138 = vpack.c.b16 %v2178, %v2168
    %v3139 = vpack.c.b16 %v2179, %v2169
    %v3140 = vpack.c.b16 %v2180, %v2170
    %v3141 = vpack.c.b16 %v2181, %v2171
    %v3142 = vpack.c.b16 %v2192, %v2182
    %v3143 = vpack.c.b16 %v2193, %v2183
    %v3144 = vpack.c.b16 %v2194, %v2184
    %v3145 = vpack.c.b16 %v2195, %v2185
    %v3146 = vpack.c.b16 %v2196, %v2186
    %v3147 = vpack.c.b16 %v2197, %v2187
    %v3148 = vpack.c.b16 %v2198, %v2188
    %v3149 = vpack.c.b16 %v2199, %v2189
    %v3150 = vpack.c.b16 %v2200, %v2190
    %v3151 = vpack.c.b16 %v2201, %v2191
    %v3152 = vpack.c.b16 %v2212, %v2202
    %v3153 = vpack.c.b16 %v2213, %v2203
    %v3154 = vpack.c.b16 %v2214, %v2204
    %v3155 = vpack.c.b16 %v2215, %v2205
    %v3156 = vpack.c.b16 %v2216, %v2206
    %v3157 = vpack.c.b16 %v2217, %v2207
    %v3158 = vpack.c.b16 %v2218, %v2208
    %v3159 = vpack.c.b16 %v2219, %v2209
    %v3160 = vpack.c.b16 %v2220, %v2210
    %v3161 = vpack.c.b16 %v2221, %v2211
    %v3162 = vpack.c.b16 %v2232, %v2222
    %v3163 = vpack.c.b16 %v2233, %v2223
    %v3164 = vpack.c.b16 %v2234, %v2224
    %v3165 = vpack.c.b16 %v2235, %v2225
    %v3166 = vpack.c.b16 %v2236, %v2226
    %v3167 = vpack.c.b16 %v2237, %v2227
    %v3168 = vpack.c.b16 %v2238, %v2228
    %v3169 = vpack.c.b16 %v2239, %v2229
    %v3170 = vpack.c.b16 %v2240, %v2230
    %v3171 = vpack.c.b16 %v2241, %v2231
    %v3172 = vpack.c.b16 %v2252, %v2242
    %v3173 = vpack.c.b16 %v2253, %v2243
    %v3174 = vpack.c.b16 %v2254, %v2244
    %v3175 = vpack.c.b16 %v2255, %v2245
    %v3176 = vpack.c.b16 %v2256, %v2246
    %v3177 = vpack.c.b16 %v2257, %v2247
    %v3178 = vpack.c.b16 %v2258, %v2248
    %v3179 = vpack.c.b16 %v2259, %v2249
    %v3180 = vpack.c.b16 %v2260, %v2250
    %v3181 = vpack.c.b16 %v2261, %v2251
    %v3182 = vpack.c.b16 %v2272, %v2262
    %v3183 = vpack.c.b16 %v2273, %v2263
    %v3184 = vpack.c.b16 %v2274, %v2264
    %v3185 = vpack.c.b16 %v2275, %v2265
    %v3186 = vpack.c.b16 %v2276, %v2266
    %v3187 = vpack.c.b16 %v2277, %v2267
    %v3188 = vpack.c.b16 %v2278, %v2268
    %v3189 = vpack.c.b16 %v2279, %v2269
    %v3190 = vpack.c.b16 %v2280, %v2270
    %v3191 = vpack.c.b16 %v2281, %v2271
    %v3192 = vpack.c.b16 %v2292, %v2282
    %v3193 = vpack.c.b16 %v2293, %v2283
    %v3194 = vpack.c.b16 %v2294, %v2284
    %v3195 = vpack.c.b16 %v2295, %v2285
    %v3196 = vpack.c.b16 %v2296, %v2286
    %v3197 = vpack.c.b16 %v2297, %v2287
    %v3198 = vpack.c.b16 %v2298, %v2288
    %v3199 = vpack.c.b16 %v2299, %v2289
    %v3200 = vpack.c.b16 %v2300, %v2290
    %v3201 = vpack.c.b16 %v2301, %v2291
    %v3202 = vpack.c.b16 %v2312, %v2302
    %v3203 = vpack.c.b16 %v2313, %v2303
    %v3204 = vpack.c.b16 %v2314, %v2304
    %v3205 = vpack.c.b16 %v2315, %v2305
    %v3206 = vpack.c.b16 %v2316, %v2306
    %v3207 = vpack.c.b16 %v2317, %v2307
    %v3208 = vpack.c.b16 %v2318, %v2308
    %v3209 = vpack.c.b16 %v2319, %v2309
    %v3210 = vpack.c.b16 %v2320, %v2310
    %v3211 = vpack.c.b16 %v2321, %v2311
    %v3212 = vpack.c.b16 %v2332, %v2322
    %v3213 = vpack.c.b16 %v2333, %v2323
    %v3214 = vpack.c.b16 %v2334, %v2324
    %v3215 = vpack.c.b16 %v2335, %v2325
    %v3216 = vpack.c.b16 %v2336, %v2326
    %v3217 = vpack.c.b16 %v2337, %v2327
    %v3218 = vpack.c.b16 %v2338, %v2328
    %v3219 = vpack.c.b16 %v2339, %v2329
    %v3220 = vpack.c.b16 %v2340, %v2330
    %v3221 = vpack.c.b16 %v2341, %v2331
    %v3222 = vpack.c.b16 %v2352, %v2342
    %v3223 = vpack.c.b16 %v2353, %v2343
    %v3224 = vpack.c.b16 %v2354, %v2344
    %v3225 = vpack.c.b16 %v2355, %v2345
    %v3226 = vpack.c.b16 %v2356, %v2346
    %v3227 = vpack.c.b16 %v2357, %v2347
    %v3228 = vpack.c.b16 %v2358, %v2348
    %v3229 = vpack.c.b16 %v2359, %v2349
    %v3230 = vpack.c.b16 %v2360, %v2350
    %v3231 = vpack.c.b16 %v2361, %v2351
    %v3232 = vpack.c.b16 %v2372, %v2362
    %v3233 = vpack.c.b16 %v2373, %v2363
    %v3234 = vpack.c.b16 %v2374, %v2364
    %v3235 = vpack.c.b16 %v2375, %v2365
    %v3236 = vpack.c.b16 %v2376, %v2366
    %v3237 = vpack.c.b16 %v2377, %v2367
    %v3238 = vpack.c.b16 %v2378, %v2368
    %v3239 = vpack.c.b16 %v2379, %v2369
    %v3240 = vpack.c.b16 %v2380, %v2370
    %v3241 = vpack.c.b16 %v2381, %v2371
    %v3242 = vpack.c.b16 %v2392, %v2382
    %v3243 = vpack.c.b16 %v2393, %v2383
    %v3244 = vpack.c.b16 %v2394, %v2384
    %v3245 = vpack.c.b16 %v2395, %v2385
    %v3246 = vpack.c.b16 %v2396, %v2386
    %v3247 = vpack.c.b16 %v2397, %v2387
    %v3248 = vpack.c.b16 %v2398, %v2388
    %v3249 = vpack.c.b16 %v2399, %v2389
    %v3250 = vpack.c.b16 %v2400, %v2390
    %v3251 = vpack.c.b16 %v2401, %v2391
    %v3252 = vpack.c.b16 %v2412, %v2402
    %v3253 = vpack.c.b16 %v2413, %v2403
    %v3254 = vpack.c.b16 %v2414, %v2404
    %v3255 = vpack.c.b16 %v2415, %v2405
    %v3256 = vpack.c.b16 %v2416, %v2406
    %v3257 = vpack.c.b16 %v2417, %v2407
    %v3258 = vpack.c.b16 %v2418, %v2408
    %v3259 = vpack.c.b16 %v2419, %v2409
    %v3260 = vpack.c.b16 %v2420, %v2410
    %v3261 = vpack.c.b16 %v2421, %v2411
    %v3262 = vpack.c.b16 %v2432, %v2422
    %v3263 = vpack.c.b16 %v2433, %v2423
    %v3264 = vpack.c.b16 %v2434, %v2424
    %v3265 = vpack.c.b16 %v2435, %v2425
    %v3266 = vpack.c.b16 %v2436, %v2426
    %v3267 = vpack.c.b16 %v2437, %v2427
    %v3268 = vpack.c.b16 %v2438, %v2428
    %v3269 = vpack.c.b16 %v2439, %v2429
    %v3270 = vpack.c.b16 %v2440, %v2430
    %v3271 = vpack.c.b16 %v2441, %v2431
    %v3272 = vpack.c.b16 %v2452, %v2442
    %v3273 = vpack.c.b16 %v2453, %v2443
    %v3274 = vpack.c.b16 %v2454, %v2444
    %v3275 = vpack.c.b16 %v2455, %v2445
    %v3276 = vpack.c.b16 %v2456, %v2446
    %v3277 = vpack.c.b16 %v2457, %v2447
    %v3278 = vpack.c.b16 %v2458, %v2448
    %v3279 = vpack.c.b16 %v2459, %v2449
    %v3280 = vpack.c.b16 %v2460, %v2450
    %v3281 = vpack.c.b16 %v2461, %v2451
    %v3282 = vpack.c.b16 %v2472, %v2462
    %v3283 = vpack.c.b16 %v2473, %v2463
    %v3284 = vpack.c.b16 %v2474, %v2464
    %v3285 = vpack.c.b16 %v2475, %v2465
    %v3286 = vpack.c.b16 %v2476, %v2466
    %v3287 = vpack.c.b16 %v2477, %v2467
    %v3288 = vpack.c.b16 %v2478, %v2468
    %v3289 = vpack.c.b16 %v2479, %v2469
    %v3290 = vpack.c.b16 %v2480, %v2470
    %v3291 = vpack.c.b16 %v2481, %v2471
    %v3292 = vpack.c.b16 %v2492, %v2482
    %v3293 = vpack.c.b16 %v2493, %v2483
    %v3294 = vpack.c.b16 %v2494, %v2484
    %v3295 = vpack.c.b16 %v2495, %v2485
    %v3296 = vpack.c.b16 %v2496, %v2486
    %v3297 = vpack.c.b16 %v2497, %v2487
    %v3298 = vpack.c.b16 %v2498, %v2488
    %v3299 = vpack.c.b16 %v2499, %v2489
    %v3300 = vpack.c.b16 %v2500, %v2490
    %v3301 = vpack.c.b16 %v2501, %v2491
    %v3302 = vpack.c.b16 %v2512, %v2502
    %v3303 = vpack.c.b16 %v2513, %v2503
    %v3304 = vpack.c.b16 %v2514, %v2504
    %v3305 = vpack.c.b16 %v2515, %v2505
    %v3306 = vpack.c.b16 %v2516, %v2506
    %v3307 = vpack.c.b16 %v2517, %v2507
    %v3308 = vpack.c.b16 %v2518, %v2508
    %v3309 = vpack.c.b16 %v2519, %v2509
    %v3310 = vpack.c.b16 %v2520, %v2510
    %v3311 = vpack.c.b16 %v2521, %v2511
    %v3312 = vpack.c.b16 %v2532, %v2522
    %v3313 = vpack.c.b16 %v2533, %v2523
    %v3314 = vpack.c.b16 %v2534, %v2524
    %v3315 = vpack.c.b16 %v2535, %v2525
    %v3316 = vpack.c.b16 %v2536, %v2526
    %v3317 = vpack.c.b16 %v2537, %v2527
    %v3318 = vpack.c.b16 %v2538, %v2528
    %v3319 = vpack.c.b16 %v2539, %v2529
    %v3320 = vpack.c.b16 %v2540, %v2530
    %v3321 = vpack.c.b16 %v2541, %v2531
    %v3322 = vpack.c.b16 %v2552, %v2542
    %v3323 = vpack.c.b16 %v2553, %v2543
    %v3324 = vpack.c.b16 %v2554, %v2544
    %v3325 = vpack.c.b16 %v2555, %v2545
    %v3326 = vpack.c.b16 %v2556, %v2546
    %v3327 = vpack.c.b16 %v2557, %v2547
    %v3328 = vpack.c.b16 %v2558, %v2548
    %v3329 = vpack.c.b16 %v2559, %v2549
    %v3330 = vpack.c.b16 %v2560, %v2550
    %v3331 = vpack.c.b16 %v2561, %v2551
    %v3332 = vpack.c.b16 %v2572, %v2562
    %v3333 = vpack.c.b16 %v2573, %v2563
    %v3334 = vpack.c.b16 %v2574, %v2564
    %v3335 = vpack.c.b16 %v2575, %v2565
    %v3336 = vpack.c.b16 %v2576, %v2566
    %v3337 = vpack.c.b16 %v2577, %v2567
    %v3338 = vpack.c.b16 %v2578, %v2568
    %v3339 = vpack.c.b16 %v2579, %v2569
    %v3340 = vpack.c.b16 %v2580, %v2570
    %v3341 = vpack.c.b16 %v2581, %v2571
    %v3342 = vpack.c.b16 %v2592, %v2582
    %v3343 = vpack.c.b16 %v2593, %v2583
    %v3344 = vpack.c.b16 %v2594, %v2584
    %v3345 = vpack.c.b16 %v2595, %v2585
    %v3346 = vpack.c.b16 %v2596, %v2586
    %v3347 = vpack.c.b16 %v2597, %v2587
    %v3348 = vpack.c.b16 %v2598, %v2588
    %v3349 = vpack.c.b16 %v2599, %v2589
    %v3350 = vpack.c.b16 %v2600, %v2590
    %v3351 = vpack.c.b16 %v2601, %v2591
    %v3352 = vpack.c.b16 %v2612, %v2602
    %v3353 = vpack.c.b16 %v2613, %v2603
    %v3354 = vpack.c.b16 %v2614, %v2604
    %v3355 = vpack.c.b16 %v2615, %v2605
    %v3356 = vpack.c.b16 %v2616, %v2606
    %v3357 = vpack.c.b16 %v2617, %v2607
    %v3358 = vpack.c.b16 %v2618, %v2608
    %v3359 = vpack.c.b16 %v2619, %v2609
    %v3360 = vpack.c.b16 %v2620, %v2610
    %v3361 = vpack.c.b16 %v2621, %v2611
    %v3362 = vpack.c.b16 %v2632, %v2622
    %v3363 = vpack.c.b16 %v2633, %v2623
    %v3364 = vpack.c.b16 %v2634, %v2624
    %v3365 = vpack.c.b16 %v2635, %v2625
    %v3366 = vpack.c.b16 %v2636, %v2626
    %v3367 = vpack.c.b16 %v2637, %v2627
    %v3368 = vpack.c.b16 %v2638, %v2628
    %v3369 = vpack.c.b16 %v2639, %v2629
    %v3370 = vpack.c.b16 %v2640, %v2630
    %v3371 = vpack.c.b16 %v2641, %v2631
    %v3372 = vpack.c.b16 %v2652, %v2642
    %v3373 = vpack.c.b16 %v2653, %v2643
    %v3374 = vpack.c.b16 %v2654, %v2644
    %v3375 = vpack.c.b16 %v2655, %v2645
    %v3376 = vpack.c.b16 %v2656, %v2646
    %v3377 = vpack.c.b16 %v2657, %v2647
    %v3378 = vpack.c.b16 %v2658, %v2648
    %v3379 = vpack.c.b16 %v2659, %v2649
    %v3380 = vpack.c.b16 %v2660, %v2650
    %v3381 = vpack.c.b16 %v2661, %v2651
    %v3382 = vpack.c.b16 %v2672, %v2662
    %v3383 = vpack.c.b16 %v2673, %v2663
    %v3384 = vpack.c.b16 %v2674, %v2664
    %v3385 = vpack.c.b16 %v2675, %v2665
    %v3386 = vpack.c.b16 %v2676, %v2666
    %v3387 = vpack.c.b16 %v2677, %v2667
    %v3388 = vpack.c.b16 %v2678, %v2668
    %v3389 = vpack.c.b16 %v2679, %v2669
    %v3390 = vpack.c.b16 %v2680, %v2670
    %v3391 = vpack.c.b16 %v2681, %v2671
    %v3392 = vpack.c.b16 %v2692, %v2682
    %v3393 = vpack.c.b16 %v2693, %v2683
    %v3394 = vpack.c.b16 %v2694, %v2684
    %v3395 = vpack.c.b16 %v2695, %v2685
    %v3396 = vpack.c.b16 %v2696, %v2686
    %v3397 = vpack.c.b16 %v2697, %v2687
    %v3398 = vpack.c.b16 %v2698, %v2688
    %v3399 = vpack.c.b16 %v2699, %v2689
    %v3400 = vpack.c.b16 %v2700, %v2690
    %v3401 = vpack.c.b16 %v2701, %v2691
    %v3402 = vpack.c.b16 %v2712, %v2702
    %v3403 = vpack.c.b16 %v2713, %v2703
    %v3404 = vpack.c.b16 %v2714, %v2704
    %v3405 = vpack.c.b16 %v2715, %v2705
    %v3406 = vpack.c.b16 %v2716, %v2706
    %v3407 = vpack.c.b16 %v2717, %v2707
    %v3408 = vpack.c.b16 %v2718, %v2708
    %v3409 = vpack.c.b16 %v2719, %v2709
    %v3410 = vpack.c.b16 %v2720, %v2710
    %v3411 = vpack.c.b16 %v2721, %v2711
    %v3412 = vpack.c.b16 %v2732, %v2722
    %v3413 = vpack.c.b16 %v2733, %v2723
    %v3414 = vpack.c.b16 %v2734, %v2724
    %v3415 = vpack.c.b16 %v2735, %v2725
    %v3416 = vpack.c.b16 %v2736, %v2726
    %v3417 = vpack.c.b16 %v2737, %v2727
    %v3418 = vpack.c.b16 %v2738, %v2728
    %v3419 = vpack.c.b16 %v2739, %v2729
    %v3420 = vpack.c.b16 %v2740, %v2730
    %v3421 = vpack.c.b16 %v2741, %v2731
    %v3422 = vpack.c.b16 %v2752, %v2742
    %v3423 = vpack.c.b16 %v2753, %v2743
    %v3424 = vpack.c.b16 %v2754, %v2744
    %v3425 = vpack.c.b16 %v2755, %v2745
    %v3426 = vpack.c.b16 %v2756, %v2746
    %v3427 = vpack.c.b16 %v2757, %v2747
    %v3428 = vpack.c.b16 %v2758, %v2748
    %v3429 = vpack.c.b16 %v2759, %v2749
    %v3430 = vpack.c.b16 %v2760, %v2750
    %v3431 = vpack.c.b16 %v2761, %v2751
    %v3432 = vpack.c.b16 %v2772, %v2762
    %v3433 = vpack.c.b16 %v2773, %v2763
    %v3434 = vpack.c.b16 %v2774, %v2764
    %v3435 = vpack.c.b16 %v2775, %v2765
    %v3436 = vpack.c.b16 %v2776, %v2766
    %v3437 = vpack.c.b16 %v2777, %v2767
    %v3438 = vpack.c.b16 %v2778, %v2768
    %v3439 = vpack.c.b16 %v2779, %v2769
    %v3440 = vpack.c.b16 %v2780, %v2770
    %v3441 = vpack.c.b16 %v2781, %v2771
    %v3442 = vpack.c.b16 %v2792, %v2782
    %v3443 = vpack.c.b16 %v2793, %v2783
    %v3444 = vpack.c.b16 %v2794, %v2784
    %v3445 = vpack.c.b16 %v2795, %v2785
    %v3446 = vpack.c.b16 %v2796, %v2786
    %v3447 = vpack.c.b16 %v2797, %v2787
    %v3448 = vpack.c.b16 %v2798, %v2788
    %v3449 = vpack.c.b16 %v2799, %v2789
    %v3450 = vpack.c.b16 %v2800, %v2790
    %v3451 = vpack.c.b16 %v2801, %v2791
    %v3452 = vpack.c.b16 %v2812, %v2802
    %v3453 = vpack.c.b16 %v2813, %v2803
    %v3454 = vpack.c.b16 %v2814, %v2804
    %v3455 = vpack.c.b16 %v2815, %v2805
    %v3456 = vpack.c.b16 %v2816, %v2806
    %v3457 = vpack.c.b16 %v2817, %v2807
    %v3458 = vpack.c.b16 %v2818, %v2808
    %v3459 = vpack.c.b16 %v2819, %v2809
    %v3460 = vpack.c.b16 %v2820, %v2810
    %v3461 = vpack.c.b16 %v2821, %v2811
    %4102 = vmatpush.bf16.msra.mxu0 %v2892
    %4103 = vmatpush.bf16.msra.mxu0 %v2882
    %4104 = vmatpush.bf16.msra.mxu0 %v2872
    %4105 = vmatpush.bf16.msra.mxu0 %v2862
    %4106 = vmatpush.bf16.msra.mxu0 %v2852
    %4107 = vmatpush.bf16.msra.mxu0 %v2842
    %4108 = vmatpush.bf16.msra.mxu0 %v2832
    %4109 = vmatpush.bf16.msra.mxu0 %v2822
    %4110 = vmatmul.bf16.gmra.mxu0 %v886
    %v4111 = vpop.f32.mrf.mxu0
    %v4112 = vadd.f32 0.0, %v4111
    %v4113 = vpop.f32.mrf.mxu0
    %v4114 = vadd.f32 0.0, %v4113
    %4115 = vdwg.mxu0
    %4116 = vmatpush.bf16.msra.mxu0 %v2972
    %4117 = vmatpush.bf16.msra.mxu0 %v2962
    %4118 = vmatpush.bf16.msra.mxu0 %v2952
    %4119 = vmatpush.bf16.msra.mxu0 %v2942
    %4120 = vmatpush.bf16.msra.mxu0 %v2932
    %4121 = vmatpush.bf16.msra.mxu0 %v2922
    %4122 = vmatpush.bf16.msra.mxu0 %v2912
    %4123 = vmatpush.bf16.msra.mxu0 %v2902
    %4124 = vmatmul.bf16.gmra.mxu0 %v887
    %v4125 = vpop.f32.mrf.mxu0
    %v4126 = vadd.f32 %v4112, %v4125
    %v4127 = vpop.f32.mrf.mxu0
    %v4128 = vadd.f32 %v4114, %v4127
    %4129 = vdwg.mxu0
    %4130 = vmatpush.bf16.msra.mxu0 %v3052
    %4131 = vmatpush.bf16.msra.mxu0 %v3042
    %4132 = vmatpush.bf16.msra.mxu0 %v3032
    %4133 = vmatpush.bf16.msra.mxu0 %v3022
    %4134 = vmatpush.bf16.msra.mxu0 %v3012
    %4135 = vmatpush.bf16.msra.mxu0 %v3002
    %4136 = vmatpush.bf16.msra.mxu0 %v2992
    %4137 = vmatpush.bf16.msra.mxu0 %v2982
    %4138 = vmatmul.bf16.gmra.mxu0 %v888
    %v4139 = vpop.f32.mrf.mxu0
    %v4140 = vadd.f32 %v4126, %v4139
    %v4141 = vpop.f32.mrf.mxu0
    %v4142 = vadd.f32 %v4128, %v4141
    %4143 = vdwg.mxu0
    %4144 = vmatpush.bf16.msra.mxu0 %v3132
    %4145 = vmatpush.bf16.msra.mxu0 %v3122
    %4146 = vmatpush.bf16.msra.mxu0 %v3112
    %4147 = vmatpush.bf16.msra.mxu0 %v3102
    %4148 = vmatpush.bf16.msra.mxu0 %v3092
    %4149 = vmatpush.bf16.msra.mxu0 %v3082
    %4150 = vmatpush.bf16.msra.mxu0 %v3072
    %4151 = vmatpush.bf16.msra.mxu0 %v3062
    %4152 = vmatmul.bf16.gmra.mxu0 %v889
    %v4153 = vpop.f32.mrf.mxu0
    %v4154 = vadd.f32 %v4140, %v4153
    %v4155 = vpop.f32.mrf.mxu0
    %v4156 = vadd.f32 %v4142, %v4155
    %4157 = vdwg.mxu0
    %4158 = vmatpush.bf16.msra.mxu0 %v3212
    %4159 = vmatpush.bf16.msra.mxu0 %v3202
    %4160 = vmatpush.bf16.msra.mxu0 %v3192
    %4161 = vmatpush.bf16.msra.mxu0 %v3182
    %4162 = vmatpush.bf16.msra.mxu0 %v3172
    %4163 = vmatpush.bf16.msra.mxu0 %v3162
    %4164 = vmatpush.bf16.msra.mxu0 %v3152
    %4165 = vmatpush.bf16.msra.mxu0 %v3142
    %4166 = vmatmul.bf16.gmra.mxu0 %v890
    %v4167 = vpop.f32.mrf.mxu0
    %v4168 = vadd.f32 %v4154, %v4167
    %v4169 = vpop.f32.mrf.mxu0
    %v4170 = vadd.f32 %v4156, %v4169
    %4171 = vdwg.mxu0
    %4172 = vmatpush.bf16.msra.mxu0 %v3292
    %4173 = vmatpush.bf16.msra.mxu0 %v3282
    %4174 = vmatpush.bf16.msra.mxu0 %v3272
    %4175 = vmatpush.bf16.msra.mxu0 %v3262
    %4176 = vmatpush.bf16.msra.mxu0 %v3252
    %4177 = vmatpush.bf16.msra.mxu0 %v3242
    %4178 = vmatpush.bf16.msra.mxu0 %v3232
    %4179 = vmatpush.bf16.msra.mxu0 %v3222
    %4180 = vmatmul.bf16.gmra.mxu0 %v891
    %v4181 = vpop.f32.mrf.mxu0
    %v4182 = vadd.f32 %v4168, %v4181
    %v4183 = vpop.f32.mrf.mxu0
    %v4184 = vadd.f32 %v4170, %v4183
    %4185 = vdwg.mxu0
    %4186 = vmatpush.bf16.msra.mxu0 %v3372
    %4187 = vmatpush.bf16.msra.mxu0 %v3362
    %4188 = vmatpush.bf16.msra.mxu0 %v3352
    %4189 = vmatpush.bf16.msra.mxu0 %v3342
    %4190 = vmatpush.bf16.msra.mxu0 %v3332
    %4191 = vmatpush.bf16.msra.mxu0 %v3322
    %4192 = vmatpush.bf16.msra.mxu0 %v3312
    %4193 = vmatpush.bf16.msra.mxu0 %v3302
    %4194 = vmatmul.bf16.gmra.mxu0 %v892
    %v4195 = vpop.f32.mrf.mxu0
    %v4196 = vadd.f32 %v4182, %v4195
    %v4197 = vpop.f32.mrf.mxu0
    %v4198 = vadd.f32 %v4184, %v4197
    %4199 = vdwg.mxu0
    %4200 = vmatpush.bf16.msra.mxu0 %v3452
    %4201 = vmatpush.bf16.msra.mxu0 %v3442
    %4202 = vmatpush.bf16.msra.mxu0 %v3432
    %4203 = vmatpush.bf16.msra.mxu0 %v3422
    %4204 = vmatpush.bf16.msra.mxu0 %v3412
    %4205 = vmatpush.bf16.msra.mxu0 %v3402
    %4206 = vmatpush.bf16.msra.mxu0 %v3392
    %4207 = vmatpush.bf16.msra.mxu0 %v3382
    %4208 = vmatmul.bf16.gmra.mxu0 %v893
    %v4209 = vpop.f32.mrf.mxu0
    %v4210 = vadd.f32 %v4196, %v4209
    %v4211 = vpop.f32.mrf.mxu0
    %v4212 = vadd.f32 %v4198, %v4211
    %4213 = vdwg.mxu0
    %4214 = vmatpush.bf16.msra.mxu0 %v2893
    %4215 = vmatpush.bf16.msra.mxu0 %v2883
    %4216 = vmatpush.bf16.msra.mxu0 %v2873
    %4217 = vmatpush.bf16.msra.mxu0 %v2863
    %4218 = vmatpush.bf16.msra.mxu0 %v2853
    %4219 = vmatpush.bf16.msra.mxu0 %v2843
    %4220 = vmatpush.bf16.msra.mxu0 %v2833
    %4221 = vmatpush.bf16.msra.mxu0 %v2823
    %4222 = vmatmul.bf16.gmra.mxu0 %v886
    %v4223 = vpop.f32.mrf.mxu0
    %v4224 = vadd.f32 0.0, %v4223
    %v4225 = vpop.f32.mrf.mxu0
    %v4226 = vadd.f32 0.0, %v4225
    %4227 = vdwg.mxu0
    %4228 = vmatpush.bf16.msra.mxu0 %v2973
    %4229 = vmatpush.bf16.msra.mxu0 %v2963
    %4230 = vmatpush.bf16.msra.mxu0 %v2953
    %4231 = vmatpush.bf16.msra.mxu0 %v2943
    %4232 = vmatpush.bf16.msra.mxu0 %v2933
    %4233 = vmatpush.bf16.msra.mxu0 %v2923
    %4234 = vmatpush.bf16.msra.mxu0 %v2913
    %4235 = vmatpush.bf16.msra.mxu0 %v2903
    %4236 = vmatmul.bf16.gmra.mxu0 %v887
    %v4237 = vpop.f32.mrf.mxu0
    %v4238 = vadd.f32 %v4224, %v4237
    %v4239 = vpop.f32.mrf.mxu0
    %v4240 = vadd.f32 %v4226, %v4239
    %4241 = vdwg.mxu0
    %4242 = vmatpush.bf16.msra.mxu0 %v3053
    %4243 = vmatpush.bf16.msra.mxu0 %v3043
    %4244 = vmatpush.bf16.msra.mxu0 %v3033
    %4245 = vmatpush.bf16.msra.mxu0 %v3023
    %4246 = vmatpush.bf16.msra.mxu0 %v3013
    %4247 = vmatpush.bf16.msra.mxu0 %v3003
    %4248 = vmatpush.bf16.msra.mxu0 %v2993
    %4249 = vmatpush.bf16.msra.mxu0 %v2983
    %4250 = vmatmul.bf16.gmra.mxu0 %v888
    %v4251 = vpop.f32.mrf.mxu0
    %v4252 = vadd.f32 %v4238, %v4251
    %v4253 = vpop.f32.mrf.mxu0
    %v4254 = vadd.f32 %v4240, %v4253
    %4255 = vdwg.mxu0
    %4256 = vmatpush.bf16.msra.mxu0 %v3133
    %4257 = vmatpush.bf16.msra.mxu0 %v3123
    %4258 = vmatpush.bf16.msra.mxu0 %v3113
    %4259 = vmatpush.bf16.msra.mxu0 %v3103
    %4260 = vmatpush.bf16.msra.mxu0 %v3093
    %4261 = vmatpush.bf16.msra.mxu0 %v3083
    %4262 = vmatpush.bf16.msra.mxu0 %v3073
    %4263 = vmatpush.bf16.msra.mxu0 %v3063
    %4264 = vmatmul.bf16.gmra.mxu0 %v889
    %v4265 = vpop.f32.mrf.mxu0
    %v4266 = vadd.f32 %v4252, %v4265
    %v4267 = vpop.f32.mrf.mxu0
    %v4268 = vadd.f32 %v4254, %v4267
    %4269 = vdwg.mxu0
    %4270 = vmatpush.bf16.msra.mxu0 %v3213
    %4271 = vmatpush.bf16.msra.mxu0 %v3203
    %4272 = vmatpush.bf16.msra.mxu0 %v3193
    %4273 = vmatpush.bf16.msra.mxu0 %v3183
    %4274 = vmatpush.bf16.msra.mxu0 %v3173
    %4275 = vmatpush.bf16.msra.mxu0 %v3163
    %4276 = vmatpush.bf16.msra.mxu0 %v3153
    %4277 = vmatpush.bf16.msra.mxu0 %v3143
    %4278 = vmatmul.bf16.gmra.mxu0 %v890
    %v4279 = vpop.f32.mrf.mxu0
    %v4280 = vadd.f32 %v4266, %v4279
    %v4281 = vpop.f32.mrf.mxu0
    %v4282 = vadd.f32 %v4268, %v4281
    %4283 = vdwg.mxu0
    %4284 = vmatpush.bf16.msra.mxu0 %v3293
    %4285 = vmatpush.bf16.msra.mxu0 %v3283
    %4286 = vmatpush.bf16.msra.mxu0 %v3273
    %4287 = vmatpush.bf16.msra.mxu0 %v3263
    %4288 = vmatpush.bf16.msra.mxu0 %v3253
    %4289 = vmatpush.bf16.msra.mxu0 %v3243
    %4290 = vmatpush.bf16.msra.mxu0 %v3233
    %4291 = vmatpush.bf16.msra.mxu0 %v3223
    %4292 = vmatmul.bf16.gmra.mxu0 %v891
    %v4293 = vpop.f32.mrf.mxu0
    %v4294 = vadd.f32 %v4280, %v4293
    %v4295 = vpop.f32.mrf.mxu0
    %v4296 = vadd.f32 %v4282, %v4295
    %4297 = vdwg.mxu0
    %4298 = vmatpush.bf16.msra.mxu0 %v3373
    %4299 = vmatpush.bf16.msra.mxu0 %v3363
    %4300 = vmatpush.bf16.msra.mxu0 %v3353
    %4301 = vmatpush.bf16.msra.mxu0 %v3343
    %4302 = vmatpush.bf16.msra.mxu0 %v3333
    %4303 = vmatpush.bf16.msra.mxu0 %v3323
    %4304 = vmatpush.bf16.msra.mxu0 %v3313
    %4305 = vmatpush.bf16.msra.mxu0 %v3303
    %4306 = vmatmul.bf16.gmra.mxu0 %v892
    %v4307 = vpop.f32.mrf.mxu0
    %v4308 = vadd.f32 %v4294, %v4307
    %v4309 = vpop.f32.mrf.mxu0
    %v4310 = vadd.f32 %v4296, %v4309
    %4311 = vdwg.mxu0
    %4312 = vmatpush.bf16.msra.mxu0 %v3453
    %4313 = vmatpush.bf16.msra.mxu0 %v3443
    %4314 = vmatpush.bf16.msra.mxu0 %v3433
    %4315 = vmatpush.bf16.msra.mxu0 %v3423
    %4316 = vmatpush.bf16.msra.mxu0 %v3413
    %4317 = vmatpush.bf16.msra.mxu0 %v3403
    %4318 = vmatpush.bf16.msra.mxu0 %v3393
    %4319 = vmatpush.bf16.msra.mxu0 %v3383
    %4320 = vmatmul.bf16.gmra.mxu0 %v893
    %v4321 = vpop.f32.mrf.mxu0
    %v4322 = vadd.f32 %v4308, %v4321
    %v4323 = vpop.f32.mrf.mxu0
    %v4324 = vadd.f32 %v4310, %v4323
    %4325 = vdwg.mxu0
    %4326 = vmatpush.bf16.msra.mxu0 %v2894
    %4327 = vmatpush.bf16.msra.mxu0 %v2884
    %4328 = vmatpush.bf16.msra.mxu0 %v2874
    %4329 = vmatpush.bf16.msra.mxu0 %v2864
    %4330 = vmatpush.bf16.msra.mxu0 %v2854
    %4331 = vmatpush.bf16.msra.mxu0 %v2844
    %4332 = vmatpush.bf16.msra.mxu0 %v2834
    %4333 = vmatpush.bf16.msra.mxu0 %v2824
    %4334 = vmatmul.bf16.gmra.mxu0 %v886
    %v4335 = vpop.f32.mrf.mxu0
    %v4336 = vadd.f32 0.0, %v4335
    %v4337 = vpop.f32.mrf.mxu0
    %v4338 = vadd.f32 0.0, %v4337
    %4339 = vdwg.mxu0
    %4340 = vmatpush.bf16.msra.mxu0 %v2974
    %4341 = vmatpush.bf16.msra.mxu0 %v2964
    %4342 = vmatpush.bf16.msra.mxu0 %v2954
    %4343 = vmatpush.bf16.msra.mxu0 %v2944
    %4344 = vmatpush.bf16.msra.mxu0 %v2934
    %4345 = vmatpush.bf16.msra.mxu0 %v2924
    %4346 = vmatpush.bf16.msra.mxu0 %v2914
    %4347 = vmatpush.bf16.msra.mxu0 %v2904
    %4348 = vmatmul.bf16.gmra.mxu0 %v887
    %v4349 = vpop.f32.mrf.mxu0
    %v4350 = vadd.f32 %v4336, %v4349
    %v4351 = vpop.f32.mrf.mxu0
    %v4352 = vadd.f32 %v4338, %v4351
    %4353 = vdwg.mxu0
    %4354 = vmatpush.bf16.msra.mxu0 %v3054
    %4355 = vmatpush.bf16.msra.mxu0 %v3044
    %4356 = vmatpush.bf16.msra.mxu0 %v3034
    %4357 = vmatpush.bf16.msra.mxu0 %v3024
    %4358 = vmatpush.bf16.msra.mxu0 %v3014
    %4359 = vmatpush.bf16.msra.mxu0 %v3004
    %4360 = vmatpush.bf16.msra.mxu0 %v2994
    %4361 = vmatpush.bf16.msra.mxu0 %v2984
    %4362 = vmatmul.bf16.gmra.mxu0 %v888
    %v4363 = vpop.f32.mrf.mxu0
    %v4364 = vadd.f32 %v4350, %v4363
    %v4365 = vpop.f32.mrf.mxu0
    %v4366 = vadd.f32 %v4352, %v4365
    %4367 = vdwg.mxu0
    %4368 = vmatpush.bf16.msra.mxu0 %v3134
    %4369 = vmatpush.bf16.msra.mxu0 %v3124
    %4370 = vmatpush.bf16.msra.mxu0 %v3114
    %4371 = vmatpush.bf16.msra.mxu0 %v3104
    %4372 = vmatpush.bf16.msra.mxu0 %v3094
    %4373 = vmatpush.bf16.msra.mxu0 %v3084
    %4374 = vmatpush.bf16.msra.mxu0 %v3074
    %4375 = vmatpush.bf16.msra.mxu0 %v3064
    %4376 = vmatmul.bf16.gmra.mxu0 %v889
    %v4377 = vpop.f32.mrf.mxu0
    %v4378 = vadd.f32 %v4364, %v4377
    %v4379 = vpop.f32.mrf.mxu0
    %v4380 = vadd.f32 %v4366, %v4379
    %4381 = vdwg.mxu0
    %4382 = vmatpush.bf16.msra.mxu0 %v3214
    %4383 = vmatpush.bf16.msra.mxu0 %v3204
    %4384 = vmatpush.bf16.msra.mxu0 %v3194
    %4385 = vmatpush.bf16.msra.mxu0 %v3184
    %4386 = vmatpush.bf16.msra.mxu0 %v3174
    %4387 = vmatpush.bf16.msra.mxu0 %v3164
    %4388 = vmatpush.bf16.msra.mxu0 %v3154
    %4389 = vmatpush.bf16.msra.mxu0 %v3144
    %4390 = vmatmul.bf16.gmra.mxu0 %v890
    %v4391 = vpop.f32.mrf.mxu0
    %v4392 = vadd.f32 %v4378, %v4391
    %v4393 = vpop.f32.mrf.mxu0
    %v4394 = vadd.f32 %v4380, %v4393
    %4395 = vdwg.mxu0
    %4396 = vmatpush.bf16.msra.mxu0 %v3294
    %4397 = vmatpush.bf16.msra.mxu0 %v3284
    %4398 = vmatpush.bf16.msra.mxu0 %v3274
    %4399 = vmatpush.bf16.msra.mxu0 %v3264
    %4400 = vmatpush.bf16.msra.mxu0 %v3254
    %4401 = vmatpush.bf16.msra.mxu0 %v3244
    %4402 = vmatpush.bf16.msra.mxu0 %v3234
    %4403 = vmatpush.bf16.msra.mxu0 %v3224
    %4404 = vmatmul.bf16.gmra.mxu0 %v891
    %v4405 = vpop.f32.mrf.mxu0
    %v4406 = vadd.f32 %v4392, %v4405
    %v4407 = vpop.f32.mrf.mxu0
    %v4408 = vadd.f32 %v4394, %v4407
    %4409 = vdwg.mxu0
    %4410 = vmatpush.bf16.msra.mxu0 %v3374
    %4411 = vmatpush.bf16.msra.mxu0 %v3364
    %4412 = vmatpush.bf16.msra.mxu0 %v3354
    %4413 = vmatpush.bf16.msra.mxu0 %v3344
    %4414 = vmatpush.bf16.msra.mxu0 %v3334
    %4415 = vmatpush.bf16.msra.mxu0 %v3324
    %4416 = vmatpush.bf16.msra.mxu0 %v3314
    %4417 = vmatpush.bf16.msra.mxu0 %v3304
    %4418 = vmatmul.bf16.gmra.mxu0 %v892
    %v4419 = vpop.f32.mrf.mxu0
    %v4420 = vadd.f32 %v4406, %v4419
    %v4421 = vpop.f32.mrf.mxu0
    %v4422 = vadd.f32 %v4408, %v4421
    %4423 = vdwg.mxu0
    %4424 = vmatpush.bf16.msra.mxu0 %v3454
    %4425 = vmatpush.bf16.msra.mxu0 %v3444
    %4426 = vmatpush.bf16.msra.mxu0 %v3434
    %4427 = vmatpush.bf16.msra.mxu0 %v3424
    %4428 = vmatpush.bf16.msra.mxu0 %v3414
    %4429 = vmatpush.bf16.msra.mxu0 %v3404
    %4430 = vmatpush.bf16.msra.mxu0 %v3394
    %4431 = vmatpush.bf16.msra.mxu0 %v3384
    %4432 = vmatmul.bf16.gmra.mxu0 %v893
    %v4433 = vpop.f32.mrf.mxu0
    %v4434 = vadd.f32 %v4420, %v4433
    %v4435 = vpop.f32.mrf.mxu0
    %v4436 = vadd.f32 %v4422, %v4435
    %4437 = vdwg.mxu0
    %4438 = vmatpush.bf16.msra.mxu0 %v2895
    %4439 = vmatpush.bf16.msra.mxu0 %v2885
    %4440 = vmatpush.bf16.msra.mxu0 %v2875
    %4441 = vmatpush.bf16.msra.mxu0 %v2865
    %4442 = vmatpush.bf16.msra.mxu0 %v2855
    %4443 = vmatpush.bf16.msra.mxu0 %v2845
    %4444 = vmatpush.bf16.msra.mxu0 %v2835
    %4445 = vmatpush.bf16.msra.mxu0 %v2825
    %4446 = vmatmul.bf16.gmra.mxu0 %v886
    %v4447 = vpop.f32.mrf.mxu0
    %v4448 = vadd.f32 0.0, %v4447
    %v4449 = vpop.f32.mrf.mxu0
    %v4450 = vadd.f32 0.0, %v4449
    %4451 = vdwg.mxu0
    %4452 = vmatpush.bf16.msra.mxu0 %v2975
    %4453 = vmatpush.bf16.msra.mxu0 %v2965
    %4454 = vmatpush.bf16.msra.mxu0 %v2955
    %4455 = vmatpush.bf16.msra.mxu0 %v2945
    %4456 = vmatpush.bf16.msra.mxu0 %v2935
    %4457 = vmatpush.bf16.msra.mxu0 %v2925
    %4458 = vmatpush.bf16.msra.mxu0 %v2915
    %4459 = vmatpush.bf16.msra.mxu0 %v2905
    %4460 = vmatmul.bf16.gmra.mxu0 %v887
    %v4461 = vpop.f32.mrf.mxu0
    %v4462 = vadd.f32 %v4448, %v4461
    %v4463 = vpop.f32.mrf.mxu0
    %v4464 = vadd.f32 %v4450, %v4463
    %4465 = vdwg.mxu0
    %4466 = vmatpush.bf16.msra.mxu0 %v3055
    %4467 = vmatpush.bf16.msra.mxu0 %v3045
    %4468 = vmatpush.bf16.msra.mxu0 %v3035
    %4469 = vmatpush.bf16.msra.mxu0 %v3025
    %4470 = vmatpush.bf16.msra.mxu0 %v3015
    %4471 = vmatpush.bf16.msra.mxu0 %v3005
    %4472 = vmatpush.bf16.msra.mxu0 %v2995
    %4473 = vmatpush.bf16.msra.mxu0 %v2985
    %4474 = vmatmul.bf16.gmra.mxu0 %v888
    %v4475 = vpop.f32.mrf.mxu0
    %v4476 = vadd.f32 %v4462, %v4475
    %v4477 = vpop.f32.mrf.mxu0
    %v4478 = vadd.f32 %v4464, %v4477
    %4479 = vdwg.mxu0
    %4480 = vmatpush.bf16.msra.mxu0 %v3135
    %4481 = vmatpush.bf16.msra.mxu0 %v3125
    %4482 = vmatpush.bf16.msra.mxu0 %v3115
    %4483 = vmatpush.bf16.msra.mxu0 %v3105
    %4484 = vmatpush.bf16.msra.mxu0 %v3095
    %4485 = vmatpush.bf16.msra.mxu0 %v3085
    %4486 = vmatpush.bf16.msra.mxu0 %v3075
    %4487 = vmatpush.bf16.msra.mxu0 %v3065
    %4488 = vmatmul.bf16.gmra.mxu0 %v889
    %v4489 = vpop.f32.mrf.mxu0
    %v4490 = vadd.f32 %v4476, %v4489
    %v4491 = vpop.f32.mrf.mxu0
    %v4492 = vadd.f32 %v4478, %v4491
    %4493 = vdwg.mxu0
    %4494 = vmatpush.bf16.msra.mxu0 %v3215
    %4495 = vmatpush.bf16.msra.mxu0 %v3205
    %4496 = vmatpush.bf16.msra.mxu0 %v3195
    %4497 = vmatpush.bf16.msra.mxu0 %v3185
    %4498 = vmatpush.bf16.msra.mxu0 %v3175
    %4499 = vmatpush.bf16.msra.mxu0 %v3165
    %4500 = vmatpush.bf16.msra.mxu0 %v3155
    %4501 = vmatpush.bf16.msra.mxu0 %v3145
    %4502 = vmatmul.bf16.gmra.mxu0 %v890
    %v4503 = vpop.f32.mrf.mxu0
    %v4504 = vadd.f32 %v4490, %v4503
    %v4505 = vpop.f32.mrf.mxu0
    %v4506 = vadd.f32 %v4492, %v4505
    %4507 = vdwg.mxu0
    %4508 = vmatpush.bf16.msra.mxu0 %v3295
    %4509 = vmatpush.bf16.msra.mxu0 %v3285
    %4510 = vmatpush.bf16.msra.mxu0 %v3275
    %4511 = vmatpush.bf16.msra.mxu0 %v3265
    %4512 = vmatpush.bf16.msra.mxu0 %v3255
    %4513 = vmatpush.bf16.msra.mxu0 %v3245
    %4514 = vmatpush.bf16.msra.mxu0 %v3235
    %4515 = vmatpush.bf16.msra.mxu0 %v3225
    %4516 = vmatmul.bf16.gmra.mxu0 %v891
    %v4517 = vpop.f32.mrf.mxu0
    %v4518 = vadd.f32 %v4504, %v4517
    %v4519 = vpop.f32.mrf.mxu0
    %v4520 = vadd.f32 %v4506, %v4519
    %4521 = vdwg.mxu0
    %4522 = vmatpush.bf16.msra.mxu0 %v3375
    %4523 = vmatpush.bf16.msra.mxu0 %v3365
    %4524 = vmatpush.bf16.msra.mxu0 %v3355
    %4525 = vmatpush.bf16.msra.mxu0 %v3345
    %4526 = vmatpush.bf16.msra.mxu0 %v3335
    %4527 = vmatpush.bf16.msra.mxu0 %v3325
    %4528 = vmatpush.bf16.msra.mxu0 %v3315
    %4529 = vmatpush.bf16.msra.mxu0 %v3305
    %4530 = vmatmul.bf16.gmra.mxu0 %v892
    %v4531 = vpop.f32.mrf.mxu0
    %v4532 = vadd.f32 %v4518, %v4531
    %v4533 = vpop.f32.mrf.mxu0
    %v4534 = vadd.f32 %v4520, %v4533
    %4535 = vdwg.mxu0
    %4536 = vmatpush.bf16.msra.mxu0 %v3455
    %4537 = vmatpush.bf16.msra.mxu0 %v3445
    %4538 = vmatpush.bf16.msra.mxu0 %v3435
    %4539 = vmatpush.bf16.msra.mxu0 %v3425
    %4540 = vmatpush.bf16.msra.mxu0 %v3415
    %4541 = vmatpush.bf16.msra.mxu0 %v3405
    %4542 = vmatpush.bf16.msra.mxu0 %v3395
    %4543 = vmatpush.bf16.msra.mxu0 %v3385
    %4544 = vmatmul.bf16.gmra.mxu0 %v893
    %v4545 = vpop.f32.mrf.mxu0
    %v4546 = vadd.f32 %v4532, %v4545
    %v4547 = vpop.f32.mrf.mxu0
    %v4548 = vadd.f32 %v4534, %v4547
    %4549 = vdwg.mxu0
    %4550 = vmatpush.bf16.msra.mxu0 %v2896
    %4551 = vmatpush.bf16.msra.mxu0 %v2886
    %4552 = vmatpush.bf16.msra.mxu0 %v2876
    %4553 = vmatpush.bf16.msra.mxu0 %v2866
    %4554 = vmatpush.bf16.msra.mxu0 %v2856
    %4555 = vmatpush.bf16.msra.mxu0 %v2846
    %4556 = vmatpush.bf16.msra.mxu0 %v2836
    %4557 = vmatpush.bf16.msra.mxu0 %v2826
    %4558 = vmatmul.bf16.gmra.mxu0 %v886
    %v4559 = vpop.f32.mrf.mxu0
    %v4560 = vadd.f32 0.0, %v4559
    %v4561 = vpop.f32.mrf.mxu0
    %v4562 = vadd.f32 0.0, %v4561
    %4563 = vdwg.mxu0
    %4564 = vmatpush.bf16.msra.mxu0 %v2976
    %4565 = vmatpush.bf16.msra.mxu0 %v2966
    %4566 = vmatpush.bf16.msra.mxu0 %v2956
    %4567 = vmatpush.bf16.msra.mxu0 %v2946
    %4568 = vmatpush.bf16.msra.mxu0 %v2936
    %4569 = vmatpush.bf16.msra.mxu0 %v2926
    %4570 = vmatpush.bf16.msra.mxu0 %v2916
    %4571 = vmatpush.bf16.msra.mxu0 %v2906
    %4572 = vmatmul.bf16.gmra.mxu0 %v887
    %v4573 = vpop.f32.mrf.mxu0
    %v4574 = vadd.f32 %v4560, %v4573
    %v4575 = vpop.f32.mrf.mxu0
    %v4576 = vadd.f32 %v4562, %v4575
    %4577 = vdwg.mxu0
    %4578 = vmatpush.bf16.msra.mxu0 %v3056
    %4579 = vmatpush.bf16.msra.mxu0 %v3046
    %4580 = vmatpush.bf16.msra.mxu0 %v3036
    %4581 = vmatpush.bf16.msra.mxu0 %v3026
    %4582 = vmatpush.bf16.msra.mxu0 %v3016
    %4583 = vmatpush.bf16.msra.mxu0 %v3006
    %4584 = vmatpush.bf16.msra.mxu0 %v2996
    %4585 = vmatpush.bf16.msra.mxu0 %v2986
    %4586 = vmatmul.bf16.gmra.mxu0 %v888
    %v4587 = vpop.f32.mrf.mxu0
    %v4588 = vadd.f32 %v4574, %v4587
    %v4589 = vpop.f32.mrf.mxu0
    %v4590 = vadd.f32 %v4576, %v4589
    %4591 = vdwg.mxu0
    %4592 = vmatpush.bf16.msra.mxu0 %v3136
    %4593 = vmatpush.bf16.msra.mxu0 %v3126
    %4594 = vmatpush.bf16.msra.mxu0 %v3116
    %4595 = vmatpush.bf16.msra.mxu0 %v3106
    %4596 = vmatpush.bf16.msra.mxu0 %v3096
    %4597 = vmatpush.bf16.msra.mxu0 %v3086
    %4598 = vmatpush.bf16.msra.mxu0 %v3076
    %4599 = vmatpush.bf16.msra.mxu0 %v3066
    %4600 = vmatmul.bf16.gmra.mxu0 %v889
    %v4601 = vpop.f32.mrf.mxu0
    %v4602 = vadd.f32 %v4588, %v4601
    %v4603 = vpop.f32.mrf.mxu0
    %v4604 = vadd.f32 %v4590, %v4603
    %4605 = vdwg.mxu0
    %4606 = vmatpush.bf16.msra.mxu0 %v3216
    %4607 = vmatpush.bf16.msra.mxu0 %v3206
    %4608 = vmatpush.bf16.msra.mxu0 %v3196
    %4609 = vmatpush.bf16.msra.mxu0 %v3186
    %4610 = vmatpush.bf16.msra.mxu0 %v3176
    %4611 = vmatpush.bf16.msra.mxu0 %v3166
    %4612 = vmatpush.bf16.msra.mxu0 %v3156
    %4613 = vmatpush.bf16.msra.mxu0 %v3146
    %4614 = vmatmul.bf16.gmra.mxu0 %v890
    %v4615 = vpop.f32.mrf.mxu0
    %v4616 = vadd.f32 %v4602, %v4615
    %v4617 = vpop.f32.mrf.mxu0
    %v4618 = vadd.f32 %v4604, %v4617
    %4619 = vdwg.mxu0
    %4620 = vmatpush.bf16.msra.mxu0 %v3296
    %4621 = vmatpush.bf16.msra.mxu0 %v3286
    %4622 = vmatpush.bf16.msra.mxu0 %v3276
    %4623 = vmatpush.bf16.msra.mxu0 %v3266
    %4624 = vmatpush.bf16.msra.mxu0 %v3256
    %4625 = vmatpush.bf16.msra.mxu0 %v3246
    %4626 = vmatpush.bf16.msra.mxu0 %v3236
    %4627 = vmatpush.bf16.msra.mxu0 %v3226
    %4628 = vmatmul.bf16.gmra.mxu0 %v891
    %v4629 = vpop.f32.mrf.mxu0
    %v4630 = vadd.f32 %v4616, %v4629
    %v4631 = vpop.f32.mrf.mxu0
    %v4632 = vadd.f32 %v4618, %v4631
    %4633 = vdwg.mxu0
    %4634 = vmatpush.bf16.msra.mxu0 %v3376
    %4635 = vmatpush.bf16.msra.mxu0 %v3366
    %4636 = vmatpush.bf16.msra.mxu0 %v3356
    %4637 = vmatpush.bf16.msra.mxu0 %v3346
    %4638 = vmatpush.bf16.msra.mxu0 %v3336
    %4639 = vmatpush.bf16.msra.mxu0 %v3326
    %4640 = vmatpush.bf16.msra.mxu0 %v3316
    %4641 = vmatpush.bf16.msra.mxu0 %v3306
    %4642 = vmatmul.bf16.gmra.mxu0 %v892
    %v4643 = vpop.f32.mrf.mxu0
    %v4644 = vadd.f32 %v4630, %v4643
    %v4645 = vpop.f32.mrf.mxu0
    %v4646 = vadd.f32 %v4632, %v4645
    %4647 = vdwg.mxu0
    %4648 = vmatpush.bf16.msra.mxu0 %v3456
    %4649 = vmatpush.bf16.msra.mxu0 %v3446
    %4650 = vmatpush.bf16.msra.mxu0 %v3436
    %4651 = vmatpush.bf16.msra.mxu0 %v3426
    %4652 = vmatpush.bf16.msra.mxu0 %v3416
    %4653 = vmatpush.bf16.msra.mxu0 %v3406
    %4654 = vmatpush.bf16.msra.mxu0 %v3396
    %4655 = vmatpush.bf16.msra.mxu0 %v3386
    %4656 = vmatmul.bf16.gmra.mxu0 %v893
    %v4657 = vpop.f32.mrf.mxu0
    %v4658 = vadd.f32 %v4644, %v4657
    %v4659 = vpop.f32.mrf.mxu0
    %v4660 = vadd.f32 %v4646, %v4659
    %4661 = vdwg.mxu0
    %4662 = vmatpush.bf16.msra.mxu0 %v2897
    %4663 = vmatpush.bf16.msra.mxu0 %v2887
    %4664 = vmatpush.bf16.msra.mxu0 %v2877
    %4665 = vmatpush.bf16.msra.mxu0 %v2867
    %4666 = vmatpush.bf16.msra.mxu0 %v2857
    %4667 = vmatpush.bf16.msra.mxu0 %v2847
    %4668 = vmatpush.bf16.msra.mxu0 %v2837
    %4669 = vmatpush.bf16.msra.mxu0 %v2827
    %4670 = vmatmul.bf16.gmra.mxu0 %v886
    %v4671 = vpop.f32.mrf.mxu0
    %v4672 = vadd.f32 0.0, %v4671
    %v4673 = vpop.f32.mrf.mxu0
    %v4674 = vadd.f32 0.0, %v4673
    %4675 = vdwg.mxu0
    %4676 = vmatpush.bf16.msra.mxu0 %v2977
    %4677 = vmatpush.bf16.msra.mxu0 %v2967
    %4678 = vmatpush.bf16.msra.mxu0 %v2957
    %4679 = vmatpush.bf16.msra.mxu0 %v2947
    %4680 = vmatpush.bf16.msra.mxu0 %v2937
    %4681 = vmatpush.bf16.msra.mxu0 %v2927
    %4682 = vmatpush.bf16.msra.mxu0 %v2917
    %4683 = vmatpush.bf16.msra.mxu0 %v2907
    %4684 = vmatmul.bf16.gmra.mxu0 %v887
    %v4685 = vpop.f32.mrf.mxu0
    %v4686 = vadd.f32 %v4672, %v4685
    %v4687 = vpop.f32.mrf.mxu0
    %v4688 = vadd.f32 %v4674, %v4687
    %4689 = vdwg.mxu0
    %4690 = vmatpush.bf16.msra.mxu0 %v3057
    %4691 = vmatpush.bf16.msra.mxu0 %v3047
    %4692 = vmatpush.bf16.msra.mxu0 %v3037
    %4693 = vmatpush.bf16.msra.mxu0 %v3027
    %4694 = vmatpush.bf16.msra.mxu0 %v3017
    %4695 = vmatpush.bf16.msra.mxu0 %v3007
    %4696 = vmatpush.bf16.msra.mxu0 %v2997
    %4697 = vmatpush.bf16.msra.mxu0 %v2987
    %4698 = vmatmul.bf16.gmra.mxu0 %v888
    %v4699 = vpop.f32.mrf.mxu0
    %v4700 = vadd.f32 %v4686, %v4699
    %v4701 = vpop.f32.mrf.mxu0
    %v4702 = vadd.f32 %v4688, %v4701
    %4703 = vdwg.mxu0
    %4704 = vmatpush.bf16.msra.mxu0 %v3137
    %4705 = vmatpush.bf16.msra.mxu0 %v3127
    %4706 = vmatpush.bf16.msra.mxu0 %v3117
    %4707 = vmatpush.bf16.msra.mxu0 %v3107
    %4708 = vmatpush.bf16.msra.mxu0 %v3097
    %4709 = vmatpush.bf16.msra.mxu0 %v3087
    %4710 = vmatpush.bf16.msra.mxu0 %v3077
    %4711 = vmatpush.bf16.msra.mxu0 %v3067
    %4712 = vmatmul.bf16.gmra.mxu0 %v889
    %v4713 = vpop.f32.mrf.mxu0
    %v4714 = vadd.f32 %v4700, %v4713
    %v4715 = vpop.f32.mrf.mxu0
    %v4716 = vadd.f32 %v4702, %v4715
    %4717 = vdwg.mxu0
    %4718 = vmatpush.bf16.msra.mxu0 %v3217
    %4719 = vmatpush.bf16.msra.mxu0 %v3207
    %4720 = vmatpush.bf16.msra.mxu0 %v3197
    %4721 = vmatpush.bf16.msra.mxu0 %v3187
    %4722 = vmatpush.bf16.msra.mxu0 %v3177
    %4723 = vmatpush.bf16.msra.mxu0 %v3167
    %4724 = vmatpush.bf16.msra.mxu0 %v3157
    %4725 = vmatpush.bf16.msra.mxu0 %v3147
    %4726 = vmatmul.bf16.gmra.mxu0 %v890
    %v4727 = vpop.f32.mrf.mxu0
    %v4728 = vadd.f32 %v4714, %v4727
    %v4729 = vpop.f32.mrf.mxu0
    %v4730 = vadd.f32 %v4716, %v4729
    %4731 = vdwg.mxu0
    %4732 = vmatpush.bf16.msra.mxu0 %v3297
    %4733 = vmatpush.bf16.msra.mxu0 %v3287
    %4734 = vmatpush.bf16.msra.mxu0 %v3277
    %4735 = vmatpush.bf16.msra.mxu0 %v3267
    %4736 = vmatpush.bf16.msra.mxu0 %v3257
    %4737 = vmatpush.bf16.msra.mxu0 %v3247
    %4738 = vmatpush.bf16.msra.mxu0 %v3237
    %4739 = vmatpush.bf16.msra.mxu0 %v3227
    %4740 = vmatmul.bf16.gmra.mxu0 %v891
    %v4741 = vpop.f32.mrf.mxu0
    %v4742 = vadd.f32 %v4728, %v4741
    %v4743 = vpop.f32.mrf.mxu0
    %v4744 = vadd.f32 %v4730, %v4743
    %4745 = vdwg.mxu0
    %4746 = vmatpush.bf16.msra.mxu0 %v3377
    %4747 = vmatpush.bf16.msra.mxu0 %v3367
    %4748 = vmatpush.bf16.msra.mxu0 %v3357
    %4749 = vmatpush.bf16.msra.mxu0 %v3347
    %4750 = vmatpush.bf16.msra.mxu0 %v3337
    %4751 = vmatpush.bf16.msra.mxu0 %v3327
    %4752 = vmatpush.bf16.msra.mxu0 %v3317
    %4753 = vmatpush.bf16.msra.mxu0 %v3307
    %4754 = vmatmul.bf16.gmra.mxu0 %v892
    %v4755 = vpop.f32.mrf.mxu0
    %v4756 = vadd.f32 %v4742, %v4755
    %v4757 = vpop.f32.mrf.mxu0
    %v4758 = vadd.f32 %v4744, %v4757
    %4759 = vdwg.mxu0
    %4760 = vmatpush.bf16.msra.mxu0 %v3457
    %4761 = vmatpush.bf16.msra.mxu0 %v3447
    %4762 = vmatpush.bf16.msra.mxu0 %v3437
    %4763 = vmatpush.bf16.msra.mxu0 %v3427
    %4764 = vmatpush.bf16.msra.mxu0 %v3417
    %4765 = vmatpush.bf16.msra.mxu0 %v3407
    %4766 = vmatpush.bf16.msra.mxu0 %v3397
    %4767 = vmatpush.bf16.msra.mxu0 %v3387
    %4768 = vmatmul.bf16.gmra.mxu0 %v893
    %v4769 = vpop.f32.mrf.mxu0
    %v4770 = vadd.f32 %v4756, %v4769
    %v4771 = vpop.f32.mrf.mxu0
    %v4772 = vadd.f32 %v4758, %v4771
    %4773 = vdwg.mxu0
    %4774 = vmatpush.bf16.msra.mxu0 %v2898
    %4775 = vmatpush.bf16.msra.mxu0 %v2888
    %4776 = vmatpush.bf16.msra.mxu0 %v2878
    %4777 = vmatpush.bf16.msra.mxu0 %v2868
    %4778 = vmatpush.bf16.msra.mxu0 %v2858
    %4779 = vmatpush.bf16.msra.mxu0 %v2848
    %4780 = vmatpush.bf16.msra.mxu0 %v2838
    %4781 = vmatpush.bf16.msra.mxu0 %v2828
    %4782 = vmatmul.bf16.gmra.mxu0 %v886
    %v4783 = vpop.f32.mrf.mxu0
    %v4784 = vadd.f32 0.0, %v4783
    %v4785 = vpop.f32.mrf.mxu0
    %v4786 = vadd.f32 0.0, %v4785
    %4787 = vdwg.mxu0
    %4788 = vmatpush.bf16.msra.mxu0 %v2978
    %4789 = vmatpush.bf16.msra.mxu0 %v2968
    %4790 = vmatpush.bf16.msra.mxu0 %v2958
    %4791 = vmatpush.bf16.msra.mxu0 %v2948
    %4792 = vmatpush.bf16.msra.mxu0 %v2938
    %4793 = vmatpush.bf16.msra.mxu0 %v2928
    %4794 = vmatpush.bf16.msra.mxu0 %v2918
    %4795 = vmatpush.bf16.msra.mxu0 %v2908
    %4796 = vmatmul.bf16.gmra.mxu0 %v887
    %v4797 = vpop.f32.mrf.mxu0
    %v4798 = vadd.f32 %v4784, %v4797
    %v4799 = vpop.f32.mrf.mxu0
    %v4800 = vadd.f32 %v4786, %v4799
    %4801 = vdwg.mxu0
    %4802 = vmatpush.bf16.msra.mxu0 %v3058
    %4803 = vmatpush.bf16.msra.mxu0 %v3048
    %4804 = vmatpush.bf16.msra.mxu0 %v3038
    %4805 = vmatpush.bf16.msra.mxu0 %v3028
    %4806 = vmatpush.bf16.msra.mxu0 %v3018
    %4807 = vmatpush.bf16.msra.mxu0 %v3008
    %4808 = vmatpush.bf16.msra.mxu0 %v2998
    %4809 = vmatpush.bf16.msra.mxu0 %v2988
    %4810 = vmatmul.bf16.gmra.mxu0 %v888
    %v4811 = vpop.f32.mrf.mxu0
    %v4812 = vadd.f32 %v4798, %v4811
    %v4813 = vpop.f32.mrf.mxu0
    %v4814 = vadd.f32 %v4800, %v4813
    %4815 = vdwg.mxu0
    %4816 = vmatpush.bf16.msra.mxu0 %v3138
    %4817 = vmatpush.bf16.msra.mxu0 %v3128
    %4818 = vmatpush.bf16.msra.mxu0 %v3118
    %4819 = vmatpush.bf16.msra.mxu0 %v3108
    %4820 = vmatpush.bf16.msra.mxu0 %v3098
    %4821 = vmatpush.bf16.msra.mxu0 %v3088
    %4822 = vmatpush.bf16.msra.mxu0 %v3078
    %4823 = vmatpush.bf16.msra.mxu0 %v3068
    %4824 = vmatmul.bf16.gmra.mxu0 %v889
    %v4825 = vpop.f32.mrf.mxu0
    %v4826 = vadd.f32 %v4812, %v4825
    %v4827 = vpop.f32.mrf.mxu0
    %v4828 = vadd.f32 %v4814, %v4827
    %4829 = vdwg.mxu0
    %4830 = vmatpush.bf16.msra.mxu0 %v3218
    %4831 = vmatpush.bf16.msra.mxu0 %v3208
    %4832 = vmatpush.bf16.msra.mxu0 %v3198
    %4833 = vmatpush.bf16.msra.mxu0 %v3188
    %4834 = vmatpush.bf16.msra.mxu0 %v3178
    %4835 = vmatpush.bf16.msra.mxu0 %v3168
    %4836 = vmatpush.bf16.msra.mxu0 %v3158
    %4837 = vmatpush.bf16.msra.mxu0 %v3148
    %4838 = vmatmul.bf16.gmra.mxu0 %v890
    %v4839 = vpop.f32.mrf.mxu0
    %v4840 = vadd.f32 %v4826, %v4839
    %v4841 = vpop.f32.mrf.mxu0
    %v4842 = vadd.f32 %v4828, %v4841
    %4843 = vdwg.mxu0
    %4844 = vmatpush.bf16.msra.mxu0 %v3298
    %4845 = vmatpush.bf16.msra.mxu0 %v3288
    %4846 = vmatpush.bf16.msra.mxu0 %v3278
    %4847 = vmatpush.bf16.msra.mxu0 %v3268
    %4848 = vmatpush.bf16.msra.mxu0 %v3258
    %4849 = vmatpush.bf16.msra.mxu0 %v3248
    %4850 = vmatpush.bf16.msra.mxu0 %v3238
    %4851 = vmatpush.bf16.msra.mxu0 %v3228
    %4852 = vmatmul.bf16.gmra.mxu0 %v891
    %v4853 = vpop.f32.mrf.mxu0
    %v4854 = vadd.f32 %v4840, %v4853
    %v4855 = vpop.f32.mrf.mxu0
    %v4856 = vadd.f32 %v4842, %v4855
    %4857 = vdwg.mxu0
    %4858 = vmatpush.bf16.msra.mxu0 %v3378
    %4859 = vmatpush.bf16.msra.mxu0 %v3368
    %4860 = vmatpush.bf16.msra.mxu0 %v3358
    %4861 = vmatpush.bf16.msra.mxu0 %v3348
    %4862 = vmatpush.bf16.msra.mxu0 %v3338
    %4863 = vmatpush.bf16.msra.mxu0 %v3328
    %4864 = vmatpush.bf16.msra.mxu0 %v3318
    %4865 = vmatpush.bf16.msra.mxu0 %v3308
    %4866 = vmatmul.bf16.gmra.mxu0 %v892
    %v4867 = vpop.f32.mrf.mxu0
    %v4868 = vadd.f32 %v4854, %v4867
    %v4869 = vpop.f32.mrf.mxu0
    %v4870 = vadd.f32 %v4856, %v4869
    %4871 = vdwg.mxu0
    %4872 = vmatpush.bf16.msra.mxu0 %v3458
    %4873 = vmatpush.bf16.msra.mxu0 %v3448
    %4874 = vmatpush.bf16.msra.mxu0 %v3438
    %4875 = vmatpush.bf16.msra.mxu0 %v3428
    %4876 = vmatpush.bf16.msra.mxu0 %v3418
    %4877 = vmatpush.bf16.msra.mxu0 %v3408
    %4878 = vmatpush.bf16.msra.mxu0 %v3398
    %4879 = vmatpush.bf16.msra.mxu0 %v3388
    %4880 = vmatmul.bf16.gmra.mxu0 %v893
    %v4881 = vpop.f32.mrf.mxu0
    %v4882 = vadd.f32 %v4868, %v4881
    %v4883 = vpop.f32.mrf.mxu0
    %v4884 = vadd.f32 %v4870, %v4883
    %4885 = vdwg.mxu0
    %4886 = vmatpush.bf16.msra.mxu0 %v2899
    %4887 = vmatpush.bf16.msra.mxu0 %v2889
    %4888 = vmatpush.bf16.msra.mxu0 %v2879
    %4889 = vmatpush.bf16.msra.mxu0 %v2869
    %4890 = vmatpush.bf16.msra.mxu0 %v2859
    %4891 = vmatpush.bf16.msra.mxu0 %v2849
    %4892 = vmatpush.bf16.msra.mxu0 %v2839
    %4893 = vmatpush.bf16.msra.mxu0 %v2829
    %4894 = vmatmul.bf16.gmra.mxu0 %v886
    %v4895 = vpop.f32.mrf.mxu0
    %v4896 = vadd.f32 0.0, %v4895
    %v4897 = vpop.f32.mrf.mxu0
    %v4898 = vadd.f32 0.0, %v4897
    %4899 = vdwg.mxu0
    %4900 = vmatpush.bf16.msra.mxu0 %v2979
    %4901 = vmatpush.bf16.msra.mxu0 %v2969
    %4902 = vmatpush.bf16.msra.mxu0 %v2959
    %4903 = vmatpush.bf16.msra.mxu0 %v2949
    %4904 = vmatpush.bf16.msra.mxu0 %v2939
    %4905 = vmatpush.bf16.msra.mxu0 %v2929
    %4906 = vmatpush.bf16.msra.mxu0 %v2919
    %4907 = vmatpush.bf16.msra.mxu0 %v2909
    %4908 = vmatmul.bf16.gmra.mxu0 %v887
    %v4909 = vpop.f32.mrf.mxu0
    %v4910 = vadd.f32 %v4896, %v4909
    %v4911 = vpop.f32.mrf.mxu0
    %v4912 = vadd.f32 %v4898, %v4911
    %4913 = vdwg.mxu0
    %4914 = vmatpush.bf16.msra.mxu0 %v3059
    %4915 = vmatpush.bf16.msra.mxu0 %v3049
    %4916 = vmatpush.bf16.msra.mxu0 %v3039
    %4917 = vmatpush.bf16.msra.mxu0 %v3029
    %4918 = vmatpush.bf16.msra.mxu0 %v3019
    %4919 = vmatpush.bf16.msra.mxu0 %v3009
    %4920 = vmatpush.bf16.msra.mxu0 %v2999
    %4921 = vmatpush.bf16.msra.mxu0 %v2989
    %4922 = vmatmul.bf16.gmra.mxu0 %v888
    %v4923 = vpop.f32.mrf.mxu0
    %v4924 = vadd.f32 %v4910, %v4923
    %v4925 = vpop.f32.mrf.mxu0
    %v4926 = vadd.f32 %v4912, %v4925
    %4927 = vdwg.mxu0
    %4928 = vmatpush.bf16.msra.mxu0 %v3139
    %4929 = vmatpush.bf16.msra.mxu0 %v3129
    %4930 = vmatpush.bf16.msra.mxu0 %v3119
    %4931 = vmatpush.bf16.msra.mxu0 %v3109
    %4932 = vmatpush.bf16.msra.mxu0 %v3099
    %4933 = vmatpush.bf16.msra.mxu0 %v3089
    %4934 = vmatpush.bf16.msra.mxu0 %v3079
    %4935 = vmatpush.bf16.msra.mxu0 %v3069
    %4936 = vmatmul.bf16.gmra.mxu0 %v889
    %v4937 = vpop.f32.mrf.mxu0
    %v4938 = vadd.f32 %v4924, %v4937
    %v4939 = vpop.f32.mrf.mxu0
    %v4940 = vadd.f32 %v4926, %v4939
    %4941 = vdwg.mxu0
    %4942 = vmatpush.bf16.msra.mxu0 %v3219
    %4943 = vmatpush.bf16.msra.mxu0 %v3209
    %4944 = vmatpush.bf16.msra.mxu0 %v3199
    %4945 = vmatpush.bf16.msra.mxu0 %v3189
    %4946 = vmatpush.bf16.msra.mxu0 %v3179
    %4947 = vmatpush.bf16.msra.mxu0 %v3169
    %4948 = vmatpush.bf16.msra.mxu0 %v3159
    %4949 = vmatpush.bf16.msra.mxu0 %v3149
    %4950 = vmatmul.bf16.gmra.mxu0 %v890
    %v4951 = vpop.f32.mrf.mxu0
    %v4952 = vadd.f32 %v4938, %v4951
    %v4953 = vpop.f32.mrf.mxu0
    %v4954 = vadd.f32 %v4940, %v4953
    %4955 = vdwg.mxu0
    %4956 = vmatpush.bf16.msra.mxu0 %v3299
    %4957 = vmatpush.bf16.msra.mxu0 %v3289
    %4958 = vmatpush.bf16.msra.mxu0 %v3279
    %4959 = vmatpush.bf16.msra.mxu0 %v3269
    %4960 = vmatpush.bf16.msra.mxu0 %v3259
    %4961 = vmatpush.bf16.msra.mxu0 %v3249
    %4962 = vmatpush.bf16.msra.mxu0 %v3239
    %4963 = vmatpush.bf16.msra.mxu0 %v3229
    %4964 = vmatmul.bf16.gmra.mxu0 %v891
    %v4965 = vpop.f32.mrf.mxu0
    %v4966 = vadd.f32 %v4952, %v4965
    %v4967 = vpop.f32.mrf.mxu0
    %v4968 = vadd.f32 %v4954, %v4967
    %4969 = vdwg.mxu0
    %4970 = vmatpush.bf16.msra.mxu0 %v3379
    %4971 = vmatpush.bf16.msra.mxu0 %v3369
    %4972 = vmatpush.bf16.msra.mxu0 %v3359
    %4973 = vmatpush.bf16.msra.mxu0 %v3349
    %4974 = vmatpush.bf16.msra.mxu0 %v3339
    %4975 = vmatpush.bf16.msra.mxu0 %v3329
    %4976 = vmatpush.bf16.msra.mxu0 %v3319
    %4977 = vmatpush.bf16.msra.mxu0 %v3309
    %4978 = vmatmul.bf16.gmra.mxu0 %v892
    %v4979 = vpop.f32.mrf.mxu0
    %v4980 = vadd.f32 %v4966, %v4979
    %v4981 = vpop.f32.mrf.mxu0
    %v4982 = vadd.f32 %v4968, %v4981
    %4983 = vdwg.mxu0
    %4984 = vmatpush.bf16.msra.mxu0 %v3459
    %4985 = vmatpush.bf16.msra.mxu0 %v3449
    %4986 = vmatpush.bf16.msra.mxu0 %v3439
    %4987 = vmatpush.bf16.msra.mxu0 %v3429
    %4988 = vmatpush.bf16.msra.mxu0 %v3419
    %4989 = vmatpush.bf16.msra.mxu0 %v3409
    %4990 = vmatpush.bf16.msra.mxu0 %v3399
    %4991 = vmatpush.bf16.msra.mxu0 %v3389
    %4992 = vmatmul.bf16.gmra.mxu0 %v893
    %v4993 = vpop.f32.mrf.mxu0
    %v4994 = vadd.f32 %v4980, %v4993
    %v4995 = vpop.f32.mrf.mxu0
    %v4996 = vadd.f32 %v4982, %v4995
    %4997 = vdwg.mxu0
    %4998 = vmatpush.bf16.msra.mxu0 %v2900
    %4999 = vmatpush.bf16.msra.mxu0 %v2890
    %5000 = vmatpush.bf16.msra.mxu0 %v2880
    %5001 = vmatpush.bf16.msra.mxu0 %v2870
    %5002 = vmatpush.bf16.msra.mxu0 %v2860
    %5003 = vmatpush.bf16.msra.mxu0 %v2850
    %5004 = vmatpush.bf16.msra.mxu0 %v2840
    %5005 = vmatpush.bf16.msra.mxu0 %v2830
    %5006 = vmatmul.bf16.gmra.mxu0 %v886
    %v5007 = vpop.f32.mrf.mxu0
    %v5008 = vadd.f32 0.0, %v5007
    %v5009 = vpop.f32.mrf.mxu0
    %v5010 = vadd.f32 0.0, %v5009
    %5011 = vdwg.mxu0
    %5012 = vmatpush.bf16.msra.mxu0 %v2980
    %5013 = vmatpush.bf16.msra.mxu0 %v2970
    %5014 = vmatpush.bf16.msra.mxu0 %v2960
    %5015 = vmatpush.bf16.msra.mxu0 %v2950
    %5016 = vmatpush.bf16.msra.mxu0 %v2940
    %5017 = vmatpush.bf16.msra.mxu0 %v2930
    %5018 = vmatpush.bf16.msra.mxu0 %v2920
    %5019 = vmatpush.bf16.msra.mxu0 %v2910
    %5020 = vmatmul.bf16.gmra.mxu0 %v887
    %v5021 = vpop.f32.mrf.mxu0
    %v5022 = vadd.f32 %v5008, %v5021
    %v5023 = vpop.f32.mrf.mxu0
    %v5024 = vadd.f32 %v5010, %v5023
    %5025 = vdwg.mxu0
    %5026 = vmatpush.bf16.msra.mxu0 %v3060
    %5027 = vmatpush.bf16.msra.mxu0 %v3050
    %5028 = vmatpush.bf16.msra.mxu0 %v3040
    %5029 = vmatpush.bf16.msra.mxu0 %v3030
    %5030 = vmatpush.bf16.msra.mxu0 %v3020
    %5031 = vmatpush.bf16.msra.mxu0 %v3010
    %5032 = vmatpush.bf16.msra.mxu0 %v3000
    %5033 = vmatpush.bf16.msra.mxu0 %v2990
    %5034 = vmatmul.bf16.gmra.mxu0 %v888
    %v5035 = vpop.f32.mrf.mxu0
    %v5036 = vadd.f32 %v5022, %v5035
    %v5037 = vpop.f32.mrf.mxu0
    %v5038 = vadd.f32 %v5024, %v5037
    %5039 = vdwg.mxu0
    %5040 = vmatpush.bf16.msra.mxu0 %v3140
    %5041 = vmatpush.bf16.msra.mxu0 %v3130
    %5042 = vmatpush.bf16.msra.mxu0 %v3120
    %5043 = vmatpush.bf16.msra.mxu0 %v3110
    %5044 = vmatpush.bf16.msra.mxu0 %v3100
    %5045 = vmatpush.bf16.msra.mxu0 %v3090
    %5046 = vmatpush.bf16.msra.mxu0 %v3080
    %5047 = vmatpush.bf16.msra.mxu0 %v3070
    %5048 = vmatmul.bf16.gmra.mxu0 %v889
    %v5049 = vpop.f32.mrf.mxu0
    %v5050 = vadd.f32 %v5036, %v5049
    %v5051 = vpop.f32.mrf.mxu0
    %v5052 = vadd.f32 %v5038, %v5051
    %5053 = vdwg.mxu0
    %5054 = vmatpush.bf16.msra.mxu0 %v3220
    %5055 = vmatpush.bf16.msra.mxu0 %v3210
    %5056 = vmatpush.bf16.msra.mxu0 %v3200
    %5057 = vmatpush.bf16.msra.mxu0 %v3190
    %5058 = vmatpush.bf16.msra.mxu0 %v3180
    %5059 = vmatpush.bf16.msra.mxu0 %v3170
    %5060 = vmatpush.bf16.msra.mxu0 %v3160
    %5061 = vmatpush.bf16.msra.mxu0 %v3150
    %5062 = vmatmul.bf16.gmra.mxu0 %v890
    %v5063 = vpop.f32.mrf.mxu0
    %v5064 = vadd.f32 %v5050, %v5063
    %v5065 = vpop.f32.mrf.mxu0
    %v5066 = vadd.f32 %v5052, %v5065
    %5067 = vdwg.mxu0
    %5068 = vmatpush.bf16.msra.mxu0 %v3300
    %5069 = vmatpush.bf16.msra.mxu0 %v3290
    %5070 = vmatpush.bf16.msra.mxu0 %v3280
    %5071 = vmatpush.bf16.msra.mxu0 %v3270
    %5072 = vmatpush.bf16.msra.mxu0 %v3260
    %5073 = vmatpush.bf16.msra.mxu0 %v3250
    %5074 = vmatpush.bf16.msra.mxu0 %v3240
    %5075 = vmatpush.bf16.msra.mxu0 %v3230
    %5076 = vmatmul.bf16.gmra.mxu0 %v891
    %v5077 = vpop.f32.mrf.mxu0
    %v5078 = vadd.f32 %v5064, %v5077
    %v5079 = vpop.f32.mrf.mxu0
    %v5080 = vadd.f32 %v5066, %v5079
    %5081 = vdwg.mxu0
    %5082 = vmatpush.bf16.msra.mxu0 %v3380
    %5083 = vmatpush.bf16.msra.mxu0 %v3370
    %5084 = vmatpush.bf16.msra.mxu0 %v3360
    %5085 = vmatpush.bf16.msra.mxu0 %v3350
    %5086 = vmatpush.bf16.msra.mxu0 %v3340
    %5087 = vmatpush.bf16.msra.mxu0 %v3330
    %5088 = vmatpush.bf16.msra.mxu0 %v3320
    %5089 = vmatpush.bf16.msra.mxu0 %v3310
    %5090 = vmatmul.bf16.gmra.mxu0 %v892
    %v5091 = vpop.f32.mrf.mxu0
    %v5092 = vadd.f32 %v5078, %v5091
    %v5093 = vpop.f32.mrf.mxu0
    %v5094 = vadd.f32 %v5080, %v5093
    %5095 = vdwg.mxu0
    %5096 = vmatpush.bf16.msra.mxu0 %v3460
    %5097 = vmatpush.bf16.msra.mxu0 %v3450
    %5098 = vmatpush.bf16.msra.mxu0 %v3440
    %5099 = vmatpush.bf16.msra.mxu0 %v3430
    %5100 = vmatpush.bf16.msra.mxu0 %v3420
    %5101 = vmatpush.bf16.msra.mxu0 %v3410
    %5102 = vmatpush.bf16.msra.mxu0 %v3400
    %5103 = vmatpush.bf16.msra.mxu0 %v3390
    %5104 = vmatmul.bf16.gmra.mxu0 %v893
    %v5105 = vpop.f32.mrf.mxu0
    %v5106 = vadd.f32 %v5092, %v5105
    %v5107 = vpop.f32.mrf.mxu0
    %v5108 = vadd.f32 %v5094, %v5107
    %5109 = vdwg.mxu0
    %5110 = vmatpush.bf16.msra.mxu0 %v2901
    %5111 = vmatpush.bf16.msra.mxu0 %v2891
    %5112 = vmatpush.bf16.msra.mxu0 %v2881
    %5113 = vmatpush.bf16.msra.mxu0 %v2871
    %5114 = vmatpush.bf16.msra.mxu0 %v2861
    %5115 = vmatpush.bf16.msra.mxu0 %v2851
    %5116 = vmatpush.bf16.msra.mxu0 %v2841
    %5117 = vmatpush.bf16.msra.mxu0 %v2831
    %5118 = vmatmul.bf16.gmra.mxu0 %v886
    %v5119 = vpop.f32.mrf.mxu0
    %v5120 = vadd.f32 0.0, %v5119
    %v5121 = vpop.f32.mrf.mxu0
    %v5122 = vadd.f32 0.0, %v5121
    %5123 = vdwg.mxu0
    %5124 = vmatpush.bf16.msra.mxu0 %v2981
    %5125 = vmatpush.bf16.msra.mxu0 %v2971
    %5126 = vmatpush.bf16.msra.mxu0 %v2961
    %5127 = vmatpush.bf16.msra.mxu0 %v2951
    %5128 = vmatpush.bf16.msra.mxu0 %v2941
    %5129 = vmatpush.bf16.msra.mxu0 %v2931
    %5130 = vmatpush.bf16.msra.mxu0 %v2921
    %5131 = vmatpush.bf16.msra.mxu0 %v2911
    %5132 = vmatmul.bf16.gmra.mxu0 %v887
    %v5133 = vpop.f32.mrf.mxu0
    %v5134 = vadd.f32 %v5120, %v5133
    %v5135 = vpop.f32.mrf.mxu0
    %v5136 = vadd.f32 %v5122, %v5135
    %5137 = vdwg.mxu0
    %5138 = vmatpush.bf16.msra.mxu0 %v3061
    %5139 = vmatpush.bf16.msra.mxu0 %v3051
    %5140 = vmatpush.bf16.msra.mxu0 %v3041
    %5141 = vmatpush.bf16.msra.mxu0 %v3031
    %5142 = vmatpush.bf16.msra.mxu0 %v3021
    %5143 = vmatpush.bf16.msra.mxu0 %v3011
    %5144 = vmatpush.bf16.msra.mxu0 %v3001
    %5145 = vmatpush.bf16.msra.mxu0 %v2991
    %5146 = vmatmul.bf16.gmra.mxu0 %v888
    %v5147 = vpop.f32.mrf.mxu0
    %v5148 = vadd.f32 %v5134, %v5147
    %v5149 = vpop.f32.mrf.mxu0
    %v5150 = vadd.f32 %v5136, %v5149
    %5151 = vdwg.mxu0
    %5152 = vmatpush.bf16.msra.mxu0 %v3141
    %5153 = vmatpush.bf16.msra.mxu0 %v3131
    %5154 = vmatpush.bf16.msra.mxu0 %v3121
    %5155 = vmatpush.bf16.msra.mxu0 %v3111
    %5156 = vmatpush.bf16.msra.mxu0 %v3101
    %5157 = vmatpush.bf16.msra.mxu0 %v3091
    %5158 = vmatpush.bf16.msra.mxu0 %v3081
    %5159 = vmatpush.bf16.msra.mxu0 %v3071
    %5160 = vmatmul.bf16.gmra.mxu0 %v889
    %v5161 = vpop.f32.mrf.mxu0
    %v5162 = vadd.f32 %v5148, %v5161
    %v5163 = vpop.f32.mrf.mxu0
    %v5164 = vadd.f32 %v5150, %v5163
    %5165 = vdwg.mxu0
    %5166 = vmatpush.bf16.msra.mxu0 %v3221
    %5167 = vmatpush.bf16.msra.mxu0 %v3211
    %5168 = vmatpush.bf16.msra.mxu0 %v3201
    %5169 = vmatpush.bf16.msra.mxu0 %v3191
    %5170 = vmatpush.bf16.msra.mxu0 %v3181
    %5171 = vmatpush.bf16.msra.mxu0 %v3171
    %5172 = vmatpush.bf16.msra.mxu0 %v3161
    %5173 = vmatpush.bf16.msra.mxu0 %v3151
    %5174 = vmatmul.bf16.gmra.mxu0 %v890
    %v5175 = vpop.f32.mrf.mxu0
    %v5176 = vadd.f32 %v5162, %v5175
    %v5177 = vpop.f32.mrf.mxu0
    %v5178 = vadd.f32 %v5164, %v5177
    %5179 = vdwg.mxu0
    %5180 = vmatpush.bf16.msra.mxu0 %v3301
    %5181 = vmatpush.bf16.msra.mxu0 %v3291
    %5182 = vmatpush.bf16.msra.mxu0 %v3281
    %5183 = vmatpush.bf16.msra.mxu0 %v3271
    %5184 = vmatpush.bf16.msra.mxu0 %v3261
    %5185 = vmatpush.bf16.msra.mxu0 %v3251
    %5186 = vmatpush.bf16.msra.mxu0 %v3241
    %5187 = vmatpush.bf16.msra.mxu0 %v3231
    %5188 = vmatmul.bf16.gmra.mxu0 %v891
    %v5189 = vpop.f32.mrf.mxu0
    %v5190 = vadd.f32 %v5176, %v5189
    %v5191 = vpop.f32.mrf.mxu0
    %v5192 = vadd.f32 %v5178, %v5191
    %5193 = vdwg.mxu0
    %5194 = vmatpush.bf16.msra.mxu0 %v3381
    %5195 = vmatpush.bf16.msra.mxu0 %v3371
    %5196 = vmatpush.bf16.msra.mxu0 %v3361
    %5197 = vmatpush.bf16.msra.mxu0 %v3351
    %5198 = vmatpush.bf16.msra.mxu0 %v3341
    %5199 = vmatpush.bf16.msra.mxu0 %v3331
    %5200 = vmatpush.bf16.msra.mxu0 %v3321
    %5201 = vmatpush.bf16.msra.mxu0 %v3311
    %5202 = vmatmul.bf16.gmra.mxu0 %v892
    %v5203 = vpop.f32.mrf.mxu0
    %v5204 = vadd.f32 %v5190, %v5203
    %v5205 = vpop.f32.mrf.mxu0
    %v5206 = vadd.f32 %v5192, %v5205
    %5207 = vdwg.mxu0
    %5208 = vmatpush.bf16.msra.mxu0 %v3461
    %5209 = vmatpush.bf16.msra.mxu0 %v3451
    %5210 = vmatpush.bf16.msra.mxu0 %v3441
    %5211 = vmatpush.bf16.msra.mxu0 %v3431
    %5212 = vmatpush.bf16.msra.mxu0 %v3421
    %5213 = vmatpush.bf16.msra.mxu0 %v3411
    %5214 = vmatpush.bf16.msra.mxu0 %v3401
    %5215 = vmatpush.bf16.msra.mxu0 %v3391
    %5216 = vmatmul.bf16.gmra.mxu0 %v893
    %v5217 = vpop.f32.mrf.mxu0
    %v5218 = vadd.f32 %v5204, %v5217
    %v5219 = vpop.f32.mrf.mxu0
    %v5220 = vadd.f32 %v5206, %v5219
    %5221 = vdwg.mxu0
    %v5222 = vadd.f32 %v194, %v4210
    %v5223 = vadd.f32 %v195, %v4322
    %v5224 = vadd.f32 %v196, %v4434
    %v5225 = vadd.f32 %v197, %v4546
    %v5226 = vadd.f32 %v198, %v4658
    %v5227 = vadd.f32 %v199, %v4770
    %v5228 = vadd.f32 %v200, %v4882
    %v5229 = vadd.f32 %v201, %v4994
    %v5230 = vadd.f32 %v202, %v5106
    %v5231 = vadd.f32 %v203, %v5218
    %v5232 = vadd.f32 %v204, %v4212
    %v5233 = vadd.f32 %v205, %v4324
    %v5234 = vadd.f32 %v206, %v4436
    %v5235 = vadd.f32 %v207, %v4548
    %v5236 = vadd.f32 %v208, %v4660
    %v5237 = vadd.f32 %v209, %v4772
    %v5238 = vadd.f32 %v210, %v4884
    %v5239 = vadd.f32 %v211, %v4996
    %v5240 = vadd.f32 %v212, %v5108
    %v5241 = vadd.f32 %v213, %v5220
    %5242 = vst [vmem:[#allocation2] sm:$0xff] %v5222
    %5243 = vst [vmem:[#allocation2 + $0x8] sm:$0xff] %v5223
    %5244 = vst [vmem:[#allocation2 + $0x10] sm:$0xff] %v5224
    %5245 = vst [vmem:[#allocation2 + $0x18] sm:$0xff] %v5225
    %5246 = vst [vmem:[#allocation2 + $0x20] sm:$0xff] %v5226
    %5247 = vst [vmem:[#allocation2 + $0x28] sm:$0xff] %v5227
    %5248 = vst [vmem:[#allocation2 + $0x30] sm:$0xff] %v5228
    %5249 = vst [vmem:[#allocation2 + $0x38] sm:$0xff] %v5229
    %5250 = vst [vmem:[#allocation2 + $0x40] sm:$0xff] %v5230
    %5251 = vst [vmem:[#allocation2 + $0x48] sm:$0xff] %v5231
    %5252 = vst [vmem:[#allocation2 + $0x50] sm:$0xff] %v5232
    %5253 = vst [vmem:[#allocation2 + $0x58] sm:$0xff] %v5233
    %5254 = vst [vmem:[#allocation2 + $0x60] sm:$0xff] %v5234
    %5255 = vst [vmem:[#allocation2 + $0x68] sm:$0xff] %v5235
    %5256 = vst [vmem:[#allocation2 + $0x70] sm:$0xff] %v5236
    %5257 = vst [vmem:[#allocation2 + $0x78] sm:$0xff] %v5237
    %5258 = vst [vmem:[#allocation2 + $0x80] sm:$0xff] %v5238
    %5259 = vst [vmem:[#allocation2 + $0x88] sm:$0xff] %v5239
    %5260 = vst [vmem:[#allocation2 + $0x90] sm:$0xff] %v5240
    %5261 = vst [vmem:[#allocation2 + $0x98] sm:$0xff] %v5241
    // Predicated region
    $region86: #{multimodal_classifier_forward.1} parent=1 // pred_check
      %p5262 = pneg %p170
    $region87: #{multimodal_classifier_forward.1} parent=1 // pred_check_branch
      %5264 = sbr.rel (%p5262) target = $region89
    $region88: #{multimodal_classifier_forward.1} parent=1 // pred_region
      %v5265 = vld [vmem:[#allocation2] sm:$0xff]
      %v5266 = vld [vmem:[#allocation2 + $0x8] sm:$0xff]
      %v5267 = vld [vmem:[#allocation2 + $0x10] sm:$0xff]
      %v5268 = vld [vmem:[#allocation2 + $0x18] sm:$0xff]
      %v5269 = vld [vmem:[#allocation2 + $0x20] sm:$0xff]
      %v5270 = vld [vmem:[#allocation2 + $0x28] sm:$0xff]
      %v5271 = vld [vmem:[#allocation2 + $0x30] sm:$0xff]
      %v5272 = vld [vmem:[#allocation2 + $0x38] sm:$0xff]
      %v5273 = vld [vmem:[#allocation2 + $0x40] sm:$0xff]
      %v5274 = vld [vmem:[#allocation2 + $0x48] sm:$0xff]
      %v5275 = vld [vmem:[#allocation2 + $0x50] sm:$0xff]
      %v5276 = vld [vmem:[#allocation2 + $0x58] sm:$0xff]
      %v5277 = vld [vmem:[#allocation2 + $0x60] sm:$0xff]
      %v5278 = vld [vmem:[#allocation2 + $0x68] sm:$0xff]
      %v5279 = vld [vmem:[#allocation2 + $0x70] sm:$0xff]
      %v5280 = vld [vmem:[#allocation2 + $0x78] sm:$0xff]
      %v5281 = vld [vmem:[#allocation2 + $0x80] sm:$0xff]
      %v5282 = vld [vmem:[#allocation2 + $0x88] sm:$0xff]
      %v5283 = vld [vmem:[#allocation2 + $0x90] sm:$0xff]
      %v5284 = vld [vmem:[#allocation2 + $0x98] sm:$0xff]
      %v5285 = vld [vmem:[#allocation5] sm:$0xff]
      %v5286 = vld [vmem:[#allocation5 + $0x8] sm:$0x3]
      %v5289 = vperm.slane %v5285, 0
      %v5290 = vperm.slane %v5285, 1
      %v5291 = vperm.slane %v5285, 2
      %v5292 = vperm.slane %v5285, 3
      %v5293 = vperm.slane %v5285, 4
      %v5294 = vperm.slane %v5285, 5
      %v5295 = vperm.slane %v5285, 6
      %v5296 = vperm.slane %v5285, 7
      %v5297 = vperm.slane %v5286, 0
      %v5298 = vperm.slane %v5286, 1
      %v5309 = vadd.f32 %v5265, %v5289
      %v5310 = vadd.f32 %v5266, %v5290
      %v5311 = vadd.f32 %v5267, %v5291
      %v5312 = vadd.f32 %v5268, %v5292
      %v5313 = vadd.f32 %v5269, %v5293
      %v5314 = vadd.f32 %v5270, %v5294
      %v5315 = vadd.f32 %v5271, %v5295
      %v5316 = vadd.f32 %v5272, %v5296
      %v5317 = vadd.f32 %v5273, %v5297
      %v5318 = vadd.f32 %v5274, %v5298
      %v5319 = vadd.f32 %v5275, %v5289
      %v5320 = vadd.f32 %v5276, %v5290
      %v5321 = vadd.f32 %v5277, %v5291
      %v5322 = vadd.f32 %v5278, %v5292
      %v5323 = vadd.f32 %v5279, %v5293
      %v5324 = vadd.f32 %v5280, %v5294
      %v5325 = vadd.f32 %v5281, %v5295
      %v5326 = vadd.f32 %v5282, %v5296
      %v5327 = vadd.f32 %v5283, %v5297
      %v5328 = vadd.f32 %v5284, %v5298
      %v5329 = vld [vmem:[%s1] sm:$0xff]
      %v5330 = vld [vmem:[%s1 + $0x8] sm:$0xf]
      %v5331 = vld [vmem:[%s1 + $0xc] sm:$0xff]
      %v5332 = vld [vmem:[%s1 + $0x14] sm:$0xf]
      %v5333 = vld [vmem:[#allocation7] sm:$0xff]
      %v5334 = vld [vmem:[#allocation7 + $0x8] sm:$0xf]
      %v5335 = vld [vmem:[#allocation7 + $0xc] sm:$0xff]
      %v5336 = vld [vmem:[#allocation7 + $0x14] sm:$0xf]
      %v5337 = vld [vmem:[#allocation7 + $0x18] sm:$0xff]
      %v5338 = vld [vmem:[#allocation7 + $0x20] sm:$0xf]
      %v5339 = vld [vmem:[#allocation7 + $0x24] sm:$0xff]
      %v5340 = vld [vmem:[#allocation7 + $0x2c] sm:$0xf]
      %v5341 = vld [vmem:[#allocation7 + $0x30] sm:$0xff]
      %v5342 = vld [vmem:[#allocation7 + $0x38] sm:$0xf]
      %v5343 = vld [vmem:[#allocation7 + $0x3c] sm:$0xff]
      %v5344 = vld [vmem:[#allocation7 + $0x44] sm:$0xf]
      %v5345 = vld [vmem:[#allocation7 + $0x48] sm:$0xff]
      %v5346 = vld [vmem:[#allocation7 + $0x50] sm:$0xf]
      %v5347 = vld [vmem:[#allocation7 + $0x54] sm:$0xff]
      %v5348 = vld [vmem:[#allocation7 + $0x5c] sm:$0xf]
      %v5349 = vld [vmem:[#allocation7 + $0x60] sm:$0xff]
      %v5350 = vld [vmem:[#allocation7 + $0x68] sm:$0xf]
      %v5351 = vld [vmem:[#allocation7 + $0x6c] sm:$0xff]
      %v5352 = vld [vmem:[#allocation7 + $0x74] sm:$0xf]
      %v5353 = vld [vmem:[#allocation7 + $0x78] sm:$0xff]
      %v5354 = vld [vmem:[#allocation7 + $0x80] sm:$0xf]
      %v5355 = vld [vmem:[#allocation7 + $0x84] sm:$0xff]
      %v5356 = vld [vmem:[#allocation7 + $0x8c] sm:$0xf]
      %v5357 = vld [vmem:[#allocation7 + $0x90] sm:$0xff]
      %v5358 = vld [vmem:[#allocation7 + $0x98] sm:$0xf]
      %v5359 = vld [vmem:[#allocation7 + $0x9c] sm:$0xff]
      %v5360 = vld [vmem:[#allocation7 + $0xa4] sm:$0xf]
      %v5361 = vld [vmem:[#allocation7 + $0xa8] sm:$0xff]
      %v5362 = vld [vmem:[#allocation7 + $0xb0] sm:$0xf]
      %v5363 = vld [vmem:[#allocation7 + $0xb4] sm:$0xff]
      %v5364 = vld [vmem:[#allocation7 + $0xbc] sm:$0xf]
      %v5365 = vld [vmem:[#allocation7 + $0xc0] sm:$0xff]
      %v5366 = vld [vmem:[#allocation7 + $0xc8] sm:$0xf]
      %v5367 = vld [vmem:[#allocation7 + $0xcc] sm:$0xff]
      %v5368 = vld [vmem:[#allocation7 + $0xd4] sm:$0xf]
      %v5369 = vld [vmem:[#allocation7 + $0xd8] sm:$0xff]
      %v5370 = vld [vmem:[#allocation7 + $0xe0] sm:$0xf]
      %v5371 = vld [vmem:[#allocation7 + $0xe4] sm:$0xff]
      %v5372 = vld [vmem:[#allocation7 + $0xec] sm:$0xf]
      %v5373 = vld [vmem:[#allocation7 + $0xf0] sm:$0xff]
      %v5374 = vld [vmem:[#allocation7 + $0xf8] sm:$0xf]
      %v5375 = vld [vmem:[#allocation7 + $0xfc] sm:$0xff]
      %v5376 = vld [vmem:[#allocation7 + $0x104] sm:$0xf]
      %v5377 = vld [vmem:[#allocation7 + $0x108] sm:$0xff]
      %v5378 = vld [vmem:[#allocation7 + $0x110] sm:$0xf]
      %v5379 = vld [vmem:[#allocation7 + $0x114] sm:$0xff]
      %v5380 = vld [vmem:[#allocation7 + $0x11c] sm:$0xf]
      %v5381 = vld [vmem:[#allocation7 + $0x120] sm:$0xff]
      %v5382 = vld [vmem:[#allocation7 + $0x128] sm:$0xf]
      %v5383 = vld [vmem:[#allocation7 + $0x12c] sm:$0xff]
      %v5384 = vld [vmem:[#allocation7 + $0x134] sm:$0xf]
      %v5385 = vld [vmem:[#allocation7 + $0x138] sm:$0xff]
      %v5386 = vld [vmem:[#allocation7 + $0x140] sm:$0xf]
      %v5387 = vld [vmem:[#allocation7 + $0x144] sm:$0xff]
      %v5388 = vld [vmem:[#allocation7 + $0x14c] sm:$0xf]
      %v5389 = vld [vmem:[#allocation7 + $0x150] sm:$0xff]
      %v5390 = vld [vmem:[#allocation7 + $0x158] sm:$0xf]
      %v5391 = vld [vmem:[#allocation7 + $0x15c] sm:$0xff]
      %v5392 = vld [vmem:[#allocation7 + $0x164] sm:$0xf]
      %v5393 = vld [vmem:[#allocation7 + $0x168] sm:$0xff]
      %v5394 = vld [vmem:[#allocation7 + $0x170] sm:$0xf]
      %v5395 = vld [vmem:[#allocation7 + $0x174] sm:$0xff]
      %v5396 = vld [vmem:[#allocation7 + $0x17c] sm:$0xf]
      %v5397 = vld [vmem:[#allocation7 + $0x180] sm:$0xff]
      %v5398 = vld [vmem:[#allocation7 + $0x188] sm:$0xf]
      %v5399 = vld [vmem:[#allocation7 + $0x18c] sm:$0xff]
      %v5400 = vld [vmem:[#allocation7 + $0x194] sm:$0xf]
      %v5401 = vld [vmem:[#allocation7 + $0x198] sm:$0xff]
      %v5402 = vld [vmem:[#allocation7 + $0x1a0] sm:$0xf]
      %v5403 = vld [vmem:[#allocation7 + $0x1a4] sm:$0xff]
      %v5404 = vld [vmem:[#allocation7 + $0x1ac] sm:$0xf]
      %v5405 = vld [vmem:[#allocation7 + $0x1b0] sm:$0xff]
      %v5406 = vld [vmem:[#allocation7 + $0x1b8] sm:$0xf]
      %v5407 = vld [vmem:[#allocation7 + $0x1bc] sm:$0xff]
      %v5408 = vld [vmem:[#allocation7 + $0x1c4] sm:$0xf]
      %v5409 = vld [vmem:[#allocation7 + $0x1c8] sm:$0xff]
      %v5410 = vld [vmem:[#allocation7 + $0x1d0] sm:$0xf]
      %v5411 = vld [vmem:[#allocation7 + $0x1d4] sm:$0xff]
      %v5412 = vld [vmem:[#allocation7 + $0x1dc] sm:$0xf]
      %v5413 = vld [vmem:[#allocation7 + $0x1e0] sm:$0xff]
      %v5414 = vld [vmem:[#allocation7 + $0x1e8] sm:$0xf]
      %v5415 = vld [vmem:[#allocation7 + $0x1ec] sm:$0xff]
      %v5416 = vld [vmem:[#allocation7 + $0x1f4] sm:$0xf]
      %v5417 = vld [vmem:[#allocation7 + $0x1f8] sm:$0xff]
      %v5418 = vld [vmem:[#allocation7 + $0x200] sm:$0xf]
      %v5419 = vld [vmem:[#allocation7 + $0x204] sm:$0xff]
      %v5420 = vld [vmem:[#allocation7 + $0x20c] sm:$0xf]
      %v5421 = vld [vmem:[#allocation7 + $0x210] sm:$0xff]
      %v5422 = vld [vmem:[#allocation7 + $0x218] sm:$0xf]
      %v5423 = vld [vmem:[#allocation7 + $0x21c] sm:$0xff]
      %v5424 = vld [vmem:[#allocation7 + $0x224] sm:$0xf]
      %v5425 = vld [vmem:[#allocation7 + $0x228] sm:$0xff]
      %v5426 = vld [vmem:[#allocation7 + $0x230] sm:$0xf]
      %v5427 = vld [vmem:[#allocation7 + $0x234] sm:$0xff]
      %v5428 = vld [vmem:[#allocation7 + $0x23c] sm:$0xf]
      %v5429 = vld [vmem:[#allocation8] sm:$0x7]
      %v5431 = vperm.slane %v5429, 0
      %v5432 = vperm.slane %v5429, 1
      %v5433 = vperm.slane %v5429, 2
      %v5441 = vunpack.c.l.b16 %v5329
      %v5442 = vunpack.c.h.b16 %v5329
      %v5443 = vunpack.c.l.b16 %v5330
      %v5444 = vunpack.c.l.b16 %v5331
      %v5445 = vunpack.c.h.b16 %v5331
      %v5446 = vunpack.c.l.b16 %v5332
      %v5447 = vpack.c.b16 %v5444, %v5441
      %v5448 = vpack.c.b16 %v5445, %v5442
      %v5449 = vpack.c.b16 %v5446, %v5443
      %v5549 = vunpack.c.l.b16 %v5333
      %v5550 = vunpack.c.h.b16 %v5333
      %v5551 = vunpack.c.l.b16 %v5334
      %v5552 = vunpack.c.l.b16 %v5335
      %v5553 = vunpack.c.h.b16 %v5335
      %v5554 = vunpack.c.l.b16 %v5336
      %v5555 = vunpack.c.l.b16 %v5337
      %v5556 = vunpack.c.h.b16 %v5337
      %v5557 = vunpack.c.l.b16 %v5338
      %v5558 = vunpack.c.l.b16 %v5339
      %v5559 = vunpack.c.h.b16 %v5339
      %v5560 = vunpack.c.l.b16 %v5340
      %v5561 = vunpack.c.l.b16 %v5341
      %v5562 = vunpack.c.h.b16 %v5341
      %v5563 = vunpack.c.l.b16 %v5342
      %v5564 = vunpack.c.l.b16 %v5343
      %v5565 = vunpack.c.h.b16 %v5343
      %v5566 = vunpack.c.l.b16 %v5344
      %v5567 = vunpack.c.l.b16 %v5345
      %v5568 = vunpack.c.h.b16 %v5345
      %v5569 = vunpack.c.l.b16 %v5346
      %v5570 = vunpack.c.l.b16 %v5347
      %v5571 = vunpack.c.h.b16 %v5347
      %v5572 = vunpack.c.l.b16 %v5348
      %v5573 = vunpack.c.l.b16 %v5349
      %v5574 = vunpack.c.h.b16 %v5349
      %v5575 = vunpack.c.l.b16 %v5350
      %v5576 = vunpack.c.l.b16 %v5351
      %v5577 = vunpack.c.h.b16 %v5351
      %v5578 = vunpack.c.l.b16 %v5352
      %v5579 = vunpack.c.l.b16 %v5353
      %v5580 = vunpack.c.h.b16 %v5353
      %v5581 = vunpack.c.l.b16 %v5354
      %v5582 = vunpack.c.l.b16 %v5355
      %v5583 = vunpack.c.h.b16 %v5355
      %v5584 = vunpack.c.l.b16 %v5356
      %v5585 = vunpack.c.l.b16 %v5357
      %v5586 = vunpack.c.h.b16 %v5357
      %v5587 = vunpack.c.l.b16 %v5358
      %v5588 = vunpack.c.l.b16 %v5359
      %v5589 = vunpack.c.h.b16 %v5359
      %v5590 = vunpack.c.l.b16 %v5360
      %v5591 = vunpack.c.l.b16 %v5361
      %v5592 = vunpack.c.h.b16 %v5361
      %v5593 = vunpack.c.l.b16 %v5362
      %v5594 = vunpack.c.l.b16 %v5363
      %v5595 = vunpack.c.h.b16 %v5363
      %v5596 = vunpack.c.l.b16 %v5364
      %v5597 = vunpack.c.l.b16 %v5365
      %v5598 = vunpack.c.h.b16 %v5365
      %v5599 = vunpack.c.l.b16 %v5366
      %v5600 = vunpack.c.l.b16 %v5367
      %v5601 = vunpack.c.h.b16 %v5367
      %v5602 = vunpack.c.l.b16 %v5368
      %v5603 = vunpack.c.l.b16 %v5369
      %v5604 = vunpack.c.h.b16 %v5369
      %v5605 = vunpack.c.l.b16 %v5370
      %v5606 = vunpack.c.l.b16 %v5371
      %v5607 = vunpack.c.h.b16 %v5371
      %v5608 = vunpack.c.l.b16 %v5372
      %v5609 = vunpack.c.l.b16 %v5373
      %v5610 = vunpack.c.h.b16 %v5373
      %v5611 = vunpack.c.l.b16 %v5374
      %v5612 = vunpack.c.l.b16 %v5375
      %v5613 = vunpack.c.h.b16 %v5375
      %v5614 = vunpack.c.l.b16 %v5376
      %v5615 = vunpack.c.l.b16 %v5377
      %v5616 = vunpack.c.h.b16 %v5377
      %v5617 = vunpack.c.l.b16 %v5378
      %v5618 = vunpack.c.l.b16 %v5379
      %v5619 = vunpack.c.h.b16 %v5379
      %v5620 = vunpack.c.l.b16 %v5380
      %v5621 = vunpack.c.l.b16 %v5381
      %v5622 = vunpack.c.h.b16 %v5381
      %v5623 = vunpack.c.l.b16 %v5382
      %v5624 = vunpack.c.l.b16 %v5383
      %v5625 = vunpack.c.h.b16 %v5383
      %v5626 = vunpack.c.l.b16 %v5384
      %v5627 = vunpack.c.l.b16 %v5385
      %v5628 = vunpack.c.h.b16 %v5385
      %v5629 = vunpack.c.l.b16 %v5386
      %v5630 = vunpack.c.l.b16 %v5387
      %v5631 = vunpack.c.h.b16 %v5387
      %v5632 = vunpack.c.l.b16 %v5388
      %v5633 = vunpack.c.l.b16 %v5389
      %v5634 = vunpack.c.h.b16 %v5389
      %v5635 = vunpack.c.l.b16 %v5390
      %v5636 = vunpack.c.l.b16 %v5391
      %v5637 = vunpack.c.h.b16 %v5391
      %v5638 = vunpack.c.l.b16 %v5392
      %v5639 = vunpack.c.l.b16 %v5393
      %v5640 = vunpack.c.h.b16 %v5393
      %v5641 = vunpack.c.l.b16 %v5394
      %v5642 = vunpack.c.l.b16 %v5395
      %v5643 = vunpack.c.h.b16 %v5395
      %v5644 = vunpack.c.l.b16 %v5396
      %v5645 = vunpack.c.l.b16 %v5397
      %v5646 = vunpack.c.h.b16 %v5397
      %v5647 = vunpack.c.l.b16 %v5398
      %v5648 = vunpack.c.l.b16 %v5399
      %v5649 = vunpack.c.h.b16 %v5399
      %v5650 = vunpack.c.l.b16 %v5400
      %v5651 = vunpack.c.l.b16 %v5401
      %v5652 = vunpack.c.h.b16 %v5401
      %v5653 = vunpack.c.l.b16 %v5402
      %v5654 = vunpack.c.l.b16 %v5403
      %v5655 = vunpack.c.h.b16 %v5403
      %v5656 = vunpack.c.l.b16 %v5404
      %v5657 = vunpack.c.l.b16 %v5405
      %v5658 = vunpack.c.h.b16 %v5405
      %v5659 = vunpack.c.l.b16 %v5406
      %v5660 = vunpack.c.l.b16 %v5407
      %v5661 = vunpack.c.h.b16 %v5407
      %v5662 = vunpack.c.l.b16 %v5408
      %v5663 = vunpack.c.l.b16 %v5409
      %v5664 = vunpack.c.h.b16 %v5409
      %v5665 = vunpack.c.l.b16 %v5410
      %v5666 = vunpack.c.l.b16 %v5411
      %v5667 = vunpack.c.h.b16 %v5411
      %v5668 = vunpack.c.l.b16 %v5412
      %v5669 = vunpack.c.l.b16 %v5413
      %v5670 = vunpack.c.h.b16 %v5413
      %v5671 = vunpack.c.l.b16 %v5414
      %v5672 = vunpack.c.l.b16 %v5415
      %v5673 = vunpack.c.h.b16 %v5415
      %v5674 = vunpack.c.l.b16 %v5416
      %v5675 = vunpack.c.l.b16 %v5417
      %v5676 = vunpack.c.h.b16 %v5417
      %v5677 = vunpack.c.l.b16 %v5418
      %v5678 = vunpack.c.l.b16 %v5419
      %v5679 = vunpack.c.h.b16 %v5419
      %v5680 = vunpack.c.l.b16 %v5420
      %v5681 = vunpack.c.l.b16 %v5421
      %v5682 = vunpack.c.h.b16 %v5421
      %v5683 = vunpack.c.l.b16 %v5422
      %v5684 = vunpack.c.l.b16 %v5423
      %v5685 = vunpack.c.h.b16 %v5423
      %v5686 = vunpack.c.l.b16 %v5424
      %v5687 = vunpack.c.l.b16 %v5425
      %v5688 = vunpack.c.h.b16 %v5425
      %v5689 = vunpack.c.l.b16 %v5426
      %v5690 = vunpack.c.l.b16 %v5427
      %v5691 = vunpack.c.h.b16 %v5427
      %v5692 = vunpack.c.l.b16 %v5428
      %v5693 = vpack.c.b16 %v5552, %v5549
      %v5694 = vpack.c.b16 %v5553, %v5550
      %v5695 = vpack.c.b16 %v5554, %v5551
      %v5696 = vpack.c.b16 %v5558, %v5555
      %v5697 = vpack.c.b16 %v5559, %v5556
      %v5698 = vpack.c.b16 %v5560, %v5557
      %v5699 = vpack.c.b16 %v5564, %v5561
      %v5700 = vpack.c.b16 %v5565, %v5562
      %v5701 = vpack.c.b16 %v5566, %v5563
      %v5702 = vpack.c.b16 %v5570, %v5567
      %v5703 = vpack.c.b16 %v5571, %v5568
      %v5704 = vpack.c.b16 %v5572, %v5569
      %v5705 = vpack.c.b16 %v5576, %v5573
      %v5706 = vpack.c.b16 %v5577, %v5574
      %v5707 = vpack.c.b16 %v5578, %v5575
      %v5708 = vpack.c.b16 %v5582, %v5579
      %v5709 = vpack.c.b16 %v5583, %v5580
      %v5710 = vpack.c.b16 %v5584, %v5581
      %v5711 = vpack.c.b16 %v5588, %v5585
      %v5712 = vpack.c.b16 %v5589, %v5586
      %v5713 = vpack.c.b16 %v5590, %v5587
      %v5714 = vpack.c.b16 %v5594, %v5591
      %v5715 = vpack.c.b16 %v5595, %v5592
      %v5716 = vpack.c.b16 %v5596, %v5593
      %v5717 = vpack.c.b16 %v5600, %v5597
      %v5718 = vpack.c.b16 %v5601, %v5598
      %v5719 = vpack.c.b16 %v5602, %v5599
      %v5720 = vpack.c.b16 %v5606, %v5603
      %v5721 = vpack.c.b16 %v5607, %v5604
      %v5722 = vpack.c.b16 %v5608, %v5605
      %v5723 = vpack.c.b16 %v5612, %v5609
      %v5724 = vpack.c.b16 %v5613, %v5610
      %v5725 = vpack.c.b16 %v5614, %v5611
      %v5726 = vpack.c.b16 %v5618, %v5615
      %v5727 = vpack.c.b16 %v5619, %v5616
      %v5728 = vpack.c.b16 %v5620, %v5617
      %v5729 = vpack.c.b16 %v5624, %v5621
      %v5730 = vpack.c.b16 %v5625, %v5622
      %v5731 = vpack.c.b16 %v5626, %v5623
      %v5732 = vpack.c.b16 %v5630, %v5627
      %v5733 = vpack.c.b16 %v5631, %v5628
      %v5734 = vpack.c.b16 %v5632, %v5629
      %v5735 = vpack.c.b16 %v5636, %v5633
      %v5736 = vpack.c.b16 %v5637, %v5634
      %v5737 = vpack.c.b16 %v5638, %v5635
      %v5738 = vpack.c.b16 %v5642, %v5639
      %v5739 = vpack.c.b16 %v5643, %v5640
      %v5740 = vpack.c.b16 %v5644, %v5641
      %v5741 = vpack.c.b16 %v5648, %v5645
      %v5742 = vpack.c.b16 %v5649, %v5646
      %v5743 = vpack.c.b16 %v5650, %v5647
      %v5744 = vpack.c.b16 %v5654, %v5651
      %v5745 = vpack.c.b16 %v5655, %v5652
      %v5746 = vpack.c.b16 %v5656, %v5653
      %v5747 = vpack.c.b16 %v5660, %v5657
      %v5748 = vpack.c.b16 %v5661, %v5658
      %v5749 = vpack.c.b16 %v5662, %v5659
      %v5750 = vpack.c.b16 %v5666, %v5663
      %v5751 = vpack.c.b16 %v5667, %v5664
      %v5752 = vpack.c.b16 %v5668, %v5665
      %v5753 = vpack.c.b16 %v5672, %v5669
      %v5754 = vpack.c.b16 %v5673, %v5670
      %v5755 = vpack.c.b16 %v5674, %v5671
      %v5756 = vpack.c.b16 %v5678, %v5675
      %v5757 = vpack.c.b16 %v5679, %v5676
      %v5758 = vpack.c.b16 %v5680, %v5677
      %v5759 = vpack.c.b16 %v5684, %v5681
      %v5760 = vpack.c.b16 %v5685, %v5682
      %v5761 = vpack.c.b16 %v5686, %v5683
      %v5762 = vpack.c.b16 %v5690, %v5687
      %v5763 = vpack.c.b16 %v5691, %v5688
      %v5764 = vpack.c.b16 %v5692, %v5689
      %5837 = vmatpush.bf16.msra.mxu0 %v5714
      %5838 = vmatpush.bf16.msra.mxu0 %v5711
      %5839 = vmatpush.bf16.msra.mxu0 %v5708
      %5840 = vmatpush.bf16.msra.mxu0 %v5705
      %5841 = vmatpush.bf16.msra.mxu0 %v5702
      %5842 = vmatpush.bf16.msra.mxu0 %v5699
      %5843 = vmatpush.bf16.msra.mxu0 %v5696
      %5844 = vmatpush.bf16.msra.mxu0 %v5693
      %5845 = vmatmul.bf16.gmra.mxu0 %v5447
      %v5846 = vpop.f32.mrf.mxu0
      %v5847 = vadd.f32 %v5431, %v5846
      %v5848 = vpop.f32.mrf.mxu0
      %v5849 = vadd.f32 %v5431, %v5848
      %5850 = vdwg.mxu0
      %5851 = vmatpush.bf16.msra.mxu0 %v5738
      %5852 = vmatpush.bf16.msra.mxu0 %v5735
      %5853 = vmatpush.bf16.msra.mxu0 %v5732
      %5854 = vmatpush.bf16.msra.mxu0 %v5729
      %5855 = vmatpush.bf16.msra.mxu0 %v5726
      %5856 = vmatpush.bf16.msra.mxu0 %v5723
      %5857 = vmatpush.bf16.msra.mxu0 %v5720
      %5858 = vmatpush.bf16.msra.mxu0 %v5717
      %5859 = vmatmul.bf16.gmra.mxu0 %v5448
      %v5860 = vpop.f32.mrf.mxu0
      %v5861 = vadd.f32 %v5847, %v5860
      %v5862 = vpop.f32.mrf.mxu0
      %v5863 = vadd.f32 %v5849, %v5862
      %5864 = vdwg.mxu0
      %5865 = vmatpush.bf16.msra.mxu0 %v5762
      %5866 = vmatpush.bf16.msra.mxu0 %v5759
      %5867 = vmatpush.bf16.msra.mxu0 %v5756
      %5868 = vmatpush.bf16.msra.mxu0 %v5753
      %5869 = vmatpush.bf16.msra.mxu0 %v5750
      %5870 = vmatpush.bf16.msra.mxu0 %v5747
      %5871 = vmatpush.bf16.msra.mxu0 %v5744
      %5872 = vmatpush.bf16.msra.mxu0 %v5741
      %5873 = vmatmul.bf16.gmra.mxu0 %v5449
      %v5874 = vpop.f32.mrf.mxu0
      %v5875 = vadd.f32 %v5861, %v5874
      %v5876 = vpop.f32.mrf.mxu0
      %v5877 = vadd.f32 %v5863, %v5876
      %5878 = vdwg.mxu0
      %5879 = vmatpush.bf16.msra.mxu0 %v5715
      %5880 = vmatpush.bf16.msra.mxu0 %v5712
      %5881 = vmatpush.bf16.msra.mxu0 %v5709
      %5882 = vmatpush.bf16.msra.mxu0 %v5706
      %5883 = vmatpush.bf16.msra.mxu0 %v5703
      %5884 = vmatpush.bf16.msra.mxu0 %v5700
      %5885 = vmatpush.bf16.msra.mxu0 %v5697
      %5886 = vmatpush.bf16.msra.mxu0 %v5694
      %5887 = vmatmul.bf16.gmra.mxu0 %v5447
      %v5888 = vpop.f32.mrf.mxu0
      %v5889 = vadd.f32 %v5432, %v5888
      %v5890 = vpop.f32.mrf.mxu0
      %v5891 = vadd.f32 %v5432, %v5890
      %5892 = vdwg.mxu0
      %5893 = vmatpush.bf16.msra.mxu0 %v5739
      %5894 = vmatpush.bf16.msra.mxu0 %v5736
      %5895 = vmatpush.bf16.msra.mxu0 %v5733
      %5896 = vmatpush.bf16.msra.mxu0 %v5730
      %5897 = vmatpush.bf16.msra.mxu0 %v5727
      %5898 = vmatpush.bf16.msra.mxu0 %v5724
      %5899 = vmatpush.bf16.msra.mxu0 %v5721
      %5900 = vmatpush.bf16.msra.mxu0 %v5718
      %5901 = vmatmul.bf16.gmra.mxu0 %v5448
      %v5902 = vpop.f32.mrf.mxu0
      %v5903 = vadd.f32 %v5889, %v5902
      %v5904 = vpop.f32.mrf.mxu0
      %v5905 = vadd.f32 %v5891, %v5904
      %5906 = vdwg.mxu0
      %5907 = vmatpush.bf16.msra.mxu0 %v5763
      %5908 = vmatpush.bf16.msra.mxu0 %v5760
      %5909 = vmatpush.bf16.msra.mxu0 %v5757
      %5910 = vmatpush.bf16.msra.mxu0 %v5754
      %5911 = vmatpush.bf16.msra.mxu0 %v5751
      %5912 = vmatpush.bf16.msra.mxu0 %v5748
      %5913 = vmatpush.bf16.msra.mxu0 %v5745
      %5914 = vmatpush.bf16.msra.mxu0 %v5742
      %5915 = vmatmul.bf16.gmra.mxu0 %v5449
      %v5916 = vpop.f32.mrf.mxu0
      %v5917 = vadd.f32 %v5903, %v5916
      %v5918 = vpop.f32.mrf.mxu0
      %v5919 = vadd.f32 %v5905, %v5918
      %5920 = vdwg.mxu0
      %5921 = vmatpush.bf16.msra.mxu0 %v5716
      %5922 = vmatpush.bf16.msra.mxu0 %v5713
      %5923 = vmatpush.bf16.msra.mxu0 %v5710
      %5924 = vmatpush.bf16.msra.mxu0 %v5707
      %5925 = vmatpush.bf16.msra.mxu0 %v5704
      %5926 = vmatpush.bf16.msra.mxu0 %v5701
      %5927 = vmatpush.bf16.msra.mxu0 %v5698
      %5928 = vmatpush.bf16.msra.mxu0 %v5695
      %5929 = vmatmul.bf16.gmra.mxu0 %v5447
      %v5930 = vpop.f32.mrf.mxu0
      %v5931 = vadd.f32 %v5433, %v5930
      %v5932 = vpop.f32.mrf.mxu0
      %v5933 = vadd.f32 %v5433, %v5932
      %5934 = vdwg.mxu0
      %5935 = vmatpush.bf16.msra.mxu0 %v5740
      %5936 = vmatpush.bf16.msra.mxu0 %v5737
      %5937 = vmatpush.bf16.msra.mxu0 %v5734
      %5938 = vmatpush.bf16.msra.mxu0 %v5731
      %5939 = vmatpush.bf16.msra.mxu0 %v5728
      %5940 = vmatpush.bf16.msra.mxu0 %v5725
      %5941 = vmatpush.bf16.msra.mxu0 %v5722
      %5942 = vmatpush.bf16.msra.mxu0 %v5719
      %5943 = vmatmul.bf16.gmra.mxu0 %v5448
      %v5944 = vpop.f32.mrf.mxu0
      %v5945 = vadd.f32 %v5931, %v5944
      %v5946 = vpop.f32.mrf.mxu0
      %v5947 = vadd.f32 %v5933, %v5946
      %5948 = vdwg.mxu0
      %5949 = vmatpush.bf16.msra.mxu0 %v5764
      %5950 = vmatpush.bf16.msra.mxu0 %v5761
      %5951 = vmatpush.bf16.msra.mxu0 %v5758
      %5952 = vmatpush.bf16.msra.mxu0 %v5755
      %5953 = vmatpush.bf16.msra.mxu0 %v5752
      %5954 = vmatpush.bf16.msra.mxu0 %v5749
      %5955 = vmatpush.bf16.msra.mxu0 %v5746
      %5956 = vmatpush.bf16.msra.mxu0 %v5743
      %5957 = vmatmul.bf16.gmra.mxu0 %v5449
      %v5958 = vpop.f32.mrf.mxu0
      %v5959 = vadd.f32 %v5945, %v5958
      %v5960 = vpop.f32.mrf.mxu0
      %v5961 = vadd.f32 %v5947, %v5960
      %5962 = vdwg.mxu0
      %v5963 = vld [vmem:[#allocation10] sm:$0xff]
      %v5964 = vld [vmem:[#allocation10 + $0x8] sm:$0xff]
      %v5965 = vld [vmem:[#allocation10 + $0x10] sm:$0xff]
      %v5966 = vld [vmem:[#allocation10 + $0x18] sm:$0xff]
      %v5967 = vld [vmem:[#allocation10 + $0x20] sm:$0xff]
      %v5968 = vld [vmem:[#allocation10 + $0x28] sm:$0xff]
      %v5969 = vld [vmem:[#allocation10 + $0x30] sm:$0xff]
      %v5970 = vld [vmem:[#allocation10 + $0x38] sm:$0xff]
      %v5971 = vld [vmem:[#allocation10 + $0x40] sm:$0xff]
      %v5972 = vld [vmem:[#allocation10 + $0x48] sm:$0xff]
      %v5973 = vld [vmem:[#allocation10 + $0x50] sm:$0xff]
      %v5974 = vld [vmem:[#allocation10 + $0x58] sm:$0xff]
      %v5975 = vld [vmem:[#allocation10 + $0x60] sm:$0xff]
      %v5976 = vld [vmem:[#allocation10 + $0x68] sm:$0xff]
      %v5977 = vld [vmem:[#allocation10 + $0x70] sm:$0xff]
      %v5978 = vld [vmem:[#allocation10 + $0x78] sm:$0xff]
      %v5979 = vld [vmem:[#allocation10 + $0x80] sm:$0xff]
      %v5980 = vld [vmem:[#allocation10 + $0x88] sm:$0xff]
      %v5981 = vld [vmem:[#allocation10 + $0x90] sm:$0xff]
      %v5982 = vld [vmem:[#allocation10 + $0x98] sm:$0xff]
      %v5983 = vld [vmem:[#allocation10 + $0xa0] sm:$0xff]
      %v5984 = vld [vmem:[#allocation10 + $0xa8] sm:$0xff]
      %v5985 = vld [vmem:[#allocation10 + $0xb0] sm:$0xff]
      %v5986 = vld [vmem:[#allocation10 + $0xb8] sm:$0xff]
      %v5987 = vld [vmem:[#allocation10 + $0xc0] sm:$0xff]
      %v5988 = vld [vmem:[#allocation10 + $0xc8] sm:$0xff]
      %v5989 = vld [vmem:[#allocation10 + $0xd0] sm:$0xff]
      %v5990 = vld [vmem:[#allocation10 + $0xd8] sm:$0xff]
      %v5991 = vld [vmem:[#allocation10 + $0xe0] sm:$0xff]
      %v5992 = vld [vmem:[#allocation10 + $0xe8] sm:$0xff]
      %v5993 = vld [vmem:[#allocation10 + $0xf0] sm:$0xff]
      %v5994 = vld [vmem:[#allocation10 + $0xf8] sm:$0xff]
      %v5995 = vld [vmem:[#allocation10 + $0x100] sm:$0xff]
      %v5996 = vld [vmem:[#allocation10 + $0x108] sm:$0xff]
      %v5997 = vld [vmem:[#allocation10 + $0x110] sm:$0xff]
      %v5998 = vld [vmem:[#allocation10 + $0x118] sm:$0xff]
      %v5999 = vld [vmem:[#allocation10 + $0x120] sm:$0xff]
      %v6000 = vld [vmem:[#allocation10 + $0x128] sm:$0xff]
      %v6001 = vld [vmem:[#allocation10 + $0x130] sm:$0xff]
      %v6002 = vld [vmem:[#allocation10 + $0x138] sm:$0xff]
      %v6003 = vld [vmem:[#allocation10 + $0x140] sm:$0xff]
      %v6004 = vld [vmem:[#allocation10 + $0x148] sm:$0xff]
      %v6005 = vld [vmem:[#allocation10 + $0x150] sm:$0xff]
      %v6006 = vld [vmem:[#allocation10 + $0x158] sm:$0xff]
      %v6007 = vld [vmem:[#allocation10 + $0x160] sm:$0xff]
      %v6008 = vld [vmem:[#allocation10 + $0x168] sm:$0xff]
      %v6009 = vld [vmem:[#allocation10 + $0x170] sm:$0xff]
      %v6010 = vld [vmem:[#allocation10 + $0x178] sm:$0xff]
      %v6011 = vld [vmem:[#allocation10 + $0x180] sm:$0xff]
      %v6012 = vld [vmem:[#allocation10 + $0x188] sm:$0xff]
      %v6013 = vld [vmem:[#allocation10 + $0x190] sm:$0xff]
      %v6014 = vld [vmem:[#allocation10 + $0x198] sm:$0xff]
      %v6015 = vld [vmem:[#allocation10 + $0x1a0] sm:$0xff]
      %v6016 = vld [vmem:[#allocation10 + $0x1a8] sm:$0xff]
      %v6017 = vld [vmem:[#allocation10 + $0x1b0] sm:$0xff]
      %v6018 = vld [vmem:[#allocation10 + $0x1b8] sm:$0xff]
      %v6019 = vld [vmem:[#allocation10 + $0x1c0] sm:$0xff]
      %v6020 = vld [vmem:[#allocation10 + $0x1c8] sm:$0xff]
      %v6021 = vld [vmem:[#allocation10 + $0x1d0] sm:$0xff]
      %v6022 = vld [vmem:[#allocation10 + $0x1d8] sm:$0xff]
      %v6023 = vld [vmem:[#allocation10 + $0x1e0] sm:$0xff]
      %v6024 = vld [vmem:[#allocation10 + $0x1e8] sm:$0xff]
      %v6025 = vld [vmem:[#allocation10 + $0x1f0] sm:$0xff]
      %v6026 = vld [vmem:[#allocation10 + $0x1f8] sm:$0xff]
      %v6027 = vld [vmem:[#allocation10 + $0x200] sm:$0xff]
      %v6028 = vld [vmem:[#allocation10 + $0x208] sm:$0xff]
      %v6029 = vld [vmem:[#allocation10 + $0x210] sm:$0xff]
      %v6030 = vld [vmem:[#allocation10 + $0x218] sm:$0xff]
      %v6031 = vld [vmem:[#allocation10 + $0x220] sm:$0xff]
      %v6032 = vld [vmem:[#allocation10 + $0x228] sm:$0xff]
      %v6033 = vld [vmem:[#allocation10 + $0x230] sm:$0xff]
      %v6034 = vld [vmem:[#allocation10 + $0x238] sm:$0xff]
      %v6035 = vld [vmem:[#allocation10 + $0x240] sm:$0xff]
      %v6036 = vld [vmem:[#allocation10 + $0x248] sm:$0xff]
      %v6037 = vld [vmem:[#allocation10 + $0x250] sm:$0xff]
      %v6038 = vld [vmem:[#allocation10 + $0x258] sm:$0xff]
      %v6039 = vld [vmem:[#allocation10 + $0x260] sm:$0xff]
      %v6040 = vld [vmem:[#allocation10 + $0x268] sm:$0xff]
      %v6041 = vld [vmem:[#allocation10 + $0x270] sm:$0xff]
      %v6042 = vld [vmem:[#allocation10 + $0x278] sm:$0xff]
      %v6043 = vld [vmem:[#allocation10 + $0x280] sm:$0xff]
      %v6044 = vld [vmem:[#allocation10 + $0x288] sm:$0xff]
      %v6045 = vld [vmem:[#allocation10 + $0x290] sm:$0xff]
      %v6046 = vld [vmem:[#allocation10 + $0x298] sm:$0xff]
      %v6047 = vld [vmem:[#allocation10 + $0x2a0] sm:$0xff]
      %v6048 = vld [vmem:[#allocation10 + $0x2a8] sm:$0xff]
      %v6049 = vld [vmem:[#allocation10 + $0x2b0] sm:$0xff]
      %v6050 = vld [vmem:[#allocation10 + $0x2b8] sm:$0xff]
      %v6051 = vld [vmem:[#allocation10 + $0x2c0] sm:$0xff]
      %v6052 = vld [vmem:[#allocation10 + $0x2c8] sm:$0xff]
      %v6053 = vld [vmem:[#allocation10 + $0x2d0] sm:$0xff]
      %v6054 = vld [vmem:[#allocation10 + $0x2d8] sm:$0xff]
      %v6055 = vld [vmem:[#allocation10 + $0x2e0] sm:$0xff]
      %v6056 = vld [vmem:[#allocation10 + $0x2e8] sm:$0xff]
      %v6057 = vld [vmem:[#allocation10 + $0x2f0] sm:$0xff]
      %v6058 = vld [vmem:[#allocation10 + $0x2f8] sm:$0xff]
      %v6059 = vld [vmem:[#allocation10 + $0x300] sm:$0xff]
      %v6060 = vld [vmem:[#allocation10 + $0x308] sm:$0xff]
      %v6061 = vld [vmem:[#allocation10 + $0x310] sm:$0xff]
      %v6062 = vld [vmem:[#allocation10 + $0x318] sm:$0xff]
      %v6063 = vld [vmem:[#allocation10 + $0x320] sm:$0xff]
      %v6064 = vld [vmem:[#allocation10 + $0x328] sm:$0xff]
      %v6065 = vld [vmem:[#allocation10 + $0x330] sm:$0xff]
      %v6066 = vld [vmem:[#allocation10 + $0x338] sm:$0xff]
      %v6067 = vld [vmem:[#allocation10 + $0x340] sm:$0xff]
      %v6068 = vld [vmem:[#allocation10 + $0x348] sm:$0xff]
      %v6069 = vld [vmem:[#allocation10 + $0x350] sm:$0xff]
      %v6070 = vld [vmem:[#allocation10 + $0x358] sm:$0xff]
      %v6071 = vld [vmem:[#allocation10 + $0x360] sm:$0xff]
      %v6072 = vld [vmem:[#allocation10 + $0x368] sm:$0xff]
      %v6073 = vld [vmem:[#allocation10 + $0x370] sm:$0xff]
      %v6074 = vld [vmem:[#allocation10 + $0x378] sm:$0xff]
      %v6075 = vld [vmem:[#allocation10 + $0x380] sm:$0xff]
      %v6076 = vld [vmem:[#allocation10 + $0x388] sm:$0xff]
      %v6077 = vld [vmem:[#allocation10 + $0x390] sm:$0xff]
      %v6078 = vld [vmem:[#allocation10 + $0x398] sm:$0xff]
      %v6079 = vld [vmem:[#allocation10 + $0x3a0] sm:$0xff]
      %v6080 = vld [vmem:[#allocation10 + $0x3a8] sm:$0xff]
      %v6081 = vld [vmem:[#allocation10 + $0x3b0] sm:$0xff]
      %v6082 = vld [vmem:[#allocation10 + $0x3b8] sm:$0xff]
      %v6083 = vld [vmem:[#allocation10 + $0x3c0] sm:$0xff]
      %v6084 = vld [vmem:[#allocation10 + $0x3c8] sm:$0xff]
      %v6085 = vld [vmem:[#allocation10 + $0x3d0] sm:$0xff]
      %v6086 = vld [vmem:[#allocation10 + $0x3d8] sm:$0xff]
      %v6087 = vld [vmem:[#allocation10 + $0x3e0] sm:$0xff]
      %v6088 = vld [vmem:[#allocation10 + $0x3e8] sm:$0xff]
      %v6089 = vld [vmem:[#allocation10 + $0x3f0] sm:$0xff]
      %v6090 = vld [vmem:[#allocation10 + $0x3f8] sm:$0xff]
      %v6091 = vld [vmem:[#allocation10 + $0x400] sm:$0xff]
      %v6092 = vld [vmem:[#allocation10 + $0x408] sm:$0xff]
      %v6093 = vld [vmem:[#allocation10 + $0x410] sm:$0xff]
      %v6094 = vld [vmem:[#allocation10 + $0x418] sm:$0xff]
      %v6095 = vld [vmem:[#allocation10 + $0x420] sm:$0xff]
      %v6096 = vld [vmem:[#allocation10 + $0x428] sm:$0xff]
      %v6097 = vld [vmem:[#allocation10 + $0x430] sm:$0xff]
      %v6098 = vld [vmem:[#allocation10 + $0x438] sm:$0xff]
      %v6099 = vld [vmem:[#allocation10 + $0x440] sm:$0xff]
      %v6100 = vld [vmem:[#allocation10 + $0x448] sm:$0xff]
      %v6101 = vld [vmem:[#allocation10 + $0x450] sm:$0xff]
      %v6102 = vld [vmem:[#allocation10 + $0x458] sm:$0xff]
      %v6103 = vld [vmem:[#allocation10 + $0x460] sm:$0xff]
      %v6104 = vld [vmem:[#allocation10 + $0x468] sm:$0xff]
      %v6105 = vld [vmem:[#allocation10 + $0x470] sm:$0xff]
      %v6106 = vld [vmem:[#allocation10 + $0x478] sm:$0xff]
      %v6107 = vld [vmem:[#allocation10 + $0x480] sm:$0xff]
      %v6108 = vld [vmem:[#allocation10 + $0x488] sm:$0xff]
      %v6109 = vld [vmem:[#allocation10 + $0x490] sm:$0xff]
      %v6110 = vld [vmem:[#allocation10 + $0x498] sm:$0xff]
      %v6111 = vld [vmem:[#allocation10 + $0x4a0] sm:$0xff]
      %v6112 = vld [vmem:[#allocation10 + $0x4a8] sm:$0xff]
      %v6113 = vld [vmem:[#allocation10 + $0x4b0] sm:$0xff]
      %v6114 = vld [vmem:[#allocation10 + $0x4b8] sm:$0xff]
      %v6115 = vld [vmem:[#allocation10 + $0x4c0] sm:$0xff]
      %v6116 = vld [vmem:[#allocation10 + $0x4c8] sm:$0xff]
      %v6117 = vld [vmem:[#allocation10 + $0x4d0] sm:$0xff]
      %v6118 = vld [vmem:[#allocation10 + $0x4d8] sm:$0xff]
      %v6119 = vld [vmem:[#allocation10 + $0x4e0] sm:$0xff]
      %v6120 = vld [vmem:[#allocation10 + $0x4e8] sm:$0xff]
      %v6121 = vld [vmem:[#allocation10 + $0x4f0] sm:$0xff]
      %v6122 = vld [vmem:[#allocation10 + $0x4f8] sm:$0xff]
      %v6123 = vld [vmem:[#allocation10 + $0x500] sm:$0xff]
      %v6124 = vld [vmem:[#allocation10 + $0x508] sm:$0xff]
      %v6125 = vld [vmem:[#allocation10 + $0x510] sm:$0xff]
      %v6126 = vld [vmem:[#allocation10 + $0x518] sm:$0xff]
      %v6127 = vld [vmem:[#allocation10 + $0x520] sm:$0xff]
      %v6128 = vld [vmem:[#allocation10 + $0x528] sm:$0xff]
      %v6129 = vld [vmem:[#allocation10 + $0x530] sm:$0xff]
      %v6130 = vld [vmem:[#allocation10 + $0x538] sm:$0xff]
      %v6131 = vld [vmem:[#allocation10 + $0x540] sm:$0xff]
      %v6132 = vld [vmem:[#allocation10 + $0x548] sm:$0xff]
      %v6133 = vld [vmem:[#allocation10 + $0x550] sm:$0xff]
      %v6134 = vld [vmem:[#allocation10 + $0x558] sm:$0xff]
      %v6135 = vld [vmem:[#allocation10 + $0x560] sm:$0xff]
      %v6136 = vld [vmem:[#allocation10 + $0x568] sm:$0xff]
      %v6137 = vld [vmem:[#allocation10 + $0x570] sm:$0xff]
      %v6138 = vld [vmem:[#allocation10 + $0x578] sm:$0xff]
      %v6139 = vld [vmem:[#allocation10 + $0x580] sm:$0xff]
      %v6140 = vld [vmem:[#allocation10 + $0x588] sm:$0xff]
      %v6141 = vld [vmem:[#allocation10 + $0x590] sm:$0xff]
      %v6142 = vld [vmem:[#allocation10 + $0x598] sm:$0xff]
      %v6143 = vld [vmem:[#allocation10 + $0x5a0] sm:$0xff]
      %v6144 = vld [vmem:[#allocation10 + $0x5a8] sm:$0xff]
      %v6145 = vld [vmem:[#allocation10 + $0x5b0] sm:$0xff]
      %v6146 = vld [vmem:[#allocation10 + $0x5b8] sm:$0xff]
      %v6147 = vld [vmem:[#allocation10 + $0x5c0] sm:$0xff]
      %v6148 = vld [vmem:[#allocation10 + $0x5c8] sm:$0xff]
      %v6149 = vld [vmem:[#allocation10 + $0x5d0] sm:$0xff]
      %v6150 = vld [vmem:[#allocation10 + $0x5d8] sm:$0xff]
      %v6151 = vld [vmem:[#allocation10 + $0x5e0] sm:$0xff]
      %v6152 = vld [vmem:[#allocation10 + $0x5e8] sm:$0xff]
      %v6153 = vld [vmem:[#allocation10 + $0x5f0] sm:$0xff]
      %v6154 = vld [vmem:[#allocation10 + $0x5f8] sm:$0xff]
      %v6155 = vld [vmem:[#allocation10 + $0x600] sm:$0xff]
      %v6156 = vld [vmem:[#allocation10 + $0x608] sm:$0xff]
      %v6157 = vld [vmem:[#allocation10 + $0x610] sm:$0xff]
      %v6158 = vld [vmem:[#allocation10 + $0x618] sm:$0xff]
      %v6159 = vld [vmem:[#allocation10 + $0x620] sm:$0xff]
      %v6160 = vld [vmem:[#allocation10 + $0x628] sm:$0xff]
      %v6161 = vld [vmem:[#allocation10 + $0x630] sm:$0xff]
      %v6162 = vld [vmem:[#allocation10 + $0x638] sm:$0xff]
      %v6163 = vld [vmem:[#allocation10 + $0x640] sm:$0xff]
      %v6164 = vld [vmem:[#allocation10 + $0x648] sm:$0xff]
      %v6165 = vld [vmem:[#allocation10 + $0x650] sm:$0xff]
      %v6166 = vld [vmem:[#allocation10 + $0x658] sm:$0xff]
      %v6167 = vld [vmem:[#allocation10 + $0x660] sm:$0xff]
      %v6168 = vld [vmem:[#allocation10 + $0x668] sm:$0xff]
      %v6169 = vld [vmem:[#allocation10 + $0x670] sm:$0xff]
      %v6170 = vld [vmem:[#allocation10 + $0x678] sm:$0xff]
      %v6171 = vld [vmem:[#allocation10 + $0x680] sm:$0xff]
      %v6172 = vld [vmem:[#allocation10 + $0x688] sm:$0xff]
      %v6173 = vld [vmem:[#allocation10 + $0x690] sm:$0xff]
      %v6174 = vld [vmem:[#allocation10 + $0x698] sm:$0xff]
      %v6175 = vld [vmem:[#allocation10 + $0x6a0] sm:$0xff]
      %v6176 = vld [vmem:[#allocation10 + $0x6a8] sm:$0xff]
      %v6177 = vld [vmem:[#allocation10 + $0x6b0] sm:$0xff]
      %v6178 = vld [vmem:[#allocation10 + $0x6b8] sm:$0xff]
      %v6179 = vld [vmem:[#allocation10 + $0x6c0] sm:$0xff]
      %v6180 = vld [vmem:[#allocation10 + $0x6c8] sm:$0xff]
      %v6181 = vld [vmem:[#allocation10 + $0x6d0] sm:$0xff]
      %v6182 = vld [vmem:[#allocation10 + $0x6d8] sm:$0xff]
      %v6183 = vld [vmem:[#allocation10 + $0x6e0] sm:$0xff]
      %v6184 = vld [vmem:[#allocation10 + $0x6e8] sm:$0xff]
      %v6185 = vld [vmem:[#allocation10 + $0x6f0] sm:$0xff]
      %v6186 = vld [vmem:[#allocation10 + $0x6f8] sm:$0xff]
      %v6187 = vld [vmem:[#allocation10 + $0x700] sm:$0xff]
      %v6188 = vld [vmem:[#allocation10 + $0x708] sm:$0xff]
      %v6189 = vld [vmem:[#allocation10 + $0x710] sm:$0xff]
      %v6190 = vld [vmem:[#allocation10 + $0x718] sm:$0xff]
      %v6191 = vld [vmem:[#allocation10 + $0x720] sm:$0xff]
      %v6192 = vld [vmem:[#allocation10 + $0x728] sm:$0xff]
      %v6193 = vld [vmem:[#allocation10 + $0x730] sm:$0xff]
      %v6194 = vld [vmem:[#allocation10 + $0x738] sm:$0xff]
      %v6195 = vld [vmem:[#allocation10 + $0x740] sm:$0xff]
      %v6196 = vld [vmem:[#allocation10 + $0x748] sm:$0xff]
      %v6197 = vld [vmem:[#allocation10 + $0x750] sm:$0xff]
      %v6198 = vld [vmem:[#allocation10 + $0x758] sm:$0xff]
      %v6199 = vld [vmem:[#allocation10 + $0x760] sm:$0xff]
      %v6200 = vld [vmem:[#allocation10 + $0x768] sm:$0xff]
      %v6201 = vld [vmem:[#allocation10 + $0x770] sm:$0xff]
      %v6202 = vld [vmem:[#allocation10 + $0x778] sm:$0xff]
      %v6203 = vld [vmem:[#allocation10 + $0x780] sm:$0xff]
      %v6204 = vld [vmem:[#allocation10 + $0x788] sm:$0xff]
      %v6205 = vld [vmem:[#allocation10 + $0x790] sm:$0xff]
      %v6206 = vld [vmem:[#allocation10 + $0x798] sm:$0xff]
      %v6207 = vld [vmem:[#allocation10 + $0x7a0] sm:$0xff]
      %v6208 = vld [vmem:[#allocation10 + $0x7a8] sm:$0xff]
      %v6209 = vld [vmem:[#allocation10 + $0x7b0] sm:$0xff]
      %v6210 = vld [vmem:[#allocation10 + $0x7b8] sm:$0xff]
      %v6211 = vld [vmem:[#allocation10 + $0x7c0] sm:$0xff]
      %v6212 = vld [vmem:[#allocation10 + $0x7c8] sm:$0xff]
      %v6213 = vld [vmem:[#allocation10 + $0x7d0] sm:$0xff]
      %v6214 = vld [vmem:[#allocation10 + $0x7d8] sm:$0xff]
      %v6215 = vld [vmem:[#allocation10 + $0x7e0] sm:$0xff]
      %v6216 = vld [vmem:[#allocation10 + $0x7e8] sm:$0xff]
      %v6217 = vld [vmem:[#allocation10 + $0x7f0] sm:$0xff]
      %v6218 = vld [vmem:[#allocation10 + $0x7f8] sm:$0xff]
      %v6219 = vld [vmem:[#allocation10 + $0x800] sm:$0xff]
      %v6220 = vld [vmem:[#allocation10 + $0x808] sm:$0xff]
      %v6221 = vld [vmem:[#allocation10 + $0x810] sm:$0xff]
      %v6222 = vld [vmem:[#allocation10 + $0x818] sm:$0xff]
      %v6223 = vld [vmem:[#allocation10 + $0x820] sm:$0xff]
      %v6224 = vld [vmem:[#allocation10 + $0x828] sm:$0xff]
      %v6225 = vld [vmem:[#allocation10 + $0x830] sm:$0xff]
      %v6226 = vld [vmem:[#allocation10 + $0x838] sm:$0xff]
      %v6227 = vld [vmem:[#allocation10 + $0x840] sm:$0xff]
      %v6228 = vld [vmem:[#allocation10 + $0x848] sm:$0xff]
      %v6229 = vld [vmem:[#allocation10 + $0x850] sm:$0xff]
      %v6230 = vld [vmem:[#allocation10 + $0x858] sm:$0xff]
      %v6231 = vld [vmem:[#allocation10 + $0x860] sm:$0xff]
      %v6232 = vld [vmem:[#allocation10 + $0x868] sm:$0xff]
      %v6233 = vld [vmem:[#allocation10 + $0x870] sm:$0xff]
      %v6234 = vld [vmem:[#allocation10 + $0x878] sm:$0xff]
      %v6235 = vld [vmem:[#allocation10 + $0x880] sm:$0xff]
      %v6236 = vld [vmem:[#allocation10 + $0x888] sm:$0xff]
      %v6237 = vld [vmem:[#allocation10 + $0x890] sm:$0xff]
      %v6238 = vld [vmem:[#allocation10 + $0x898] sm:$0xff]
      %v6239 = vld [vmem:[#allocation10 + $0x8a0] sm:$0xff]
      %v6240 = vld [vmem:[#allocation10 + $0x8a8] sm:$0xff]
      %v6241 = vld [vmem:[#allocation10 + $0x8b0] sm:$0xff]
      %v6242 = vld [vmem:[#allocation10 + $0x8b8] sm:$0xff]
      %v6243 = vld [vmem:[#allocation10 + $0x8c0] sm:$0xff]
      %v6244 = vld [vmem:[#allocation10 + $0x8c8] sm:$0xff]
      %v6245 = vld [vmem:[#allocation10 + $0x8d0] sm:$0xff]
      %v6246 = vld [vmem:[#allocation10 + $0x8d8] sm:$0xff]
      %v6247 = vld [vmem:[#allocation10 + $0x8e0] sm:$0xff]
      %v6248 = vld [vmem:[#allocation10 + $0x8e8] sm:$0xff]
      %v6249 = vld [vmem:[#allocation10 + $0x8f0] sm:$0xff]
      %v6250 = vld [vmem:[#allocation10 + $0x8f8] sm:$0xff]
      %v6251 = vld [vmem:[#allocation10 + $0x900] sm:$0xff]
      %v6252 = vld [vmem:[#allocation10 + $0x908] sm:$0xff]
      %v6253 = vld [vmem:[#allocation10 + $0x910] sm:$0xff]
      %v6254 = vld [vmem:[#allocation10 + $0x918] sm:$0xff]
      %v6255 = vld [vmem:[#allocation10 + $0x920] sm:$0xff]
      %v6256 = vld [vmem:[#allocation10 + $0x928] sm:$0xff]
      %v6257 = vld [vmem:[#allocation10 + $0x930] sm:$0xff]
      %v6258 = vld [vmem:[#allocation10 + $0x938] sm:$0xff]
      %v6259 = vld [vmem:[#allocation10 + $0x940] sm:$0xff]
      %v6260 = vld [vmem:[#allocation10 + $0x948] sm:$0xff]
      %v6261 = vld [vmem:[#allocation10 + $0x950] sm:$0xff]
      %v6262 = vld [vmem:[#allocation10 + $0x958] sm:$0xff]
      %v6263 = vld [vmem:[#allocation10 + $0x960] sm:$0xff]
      %v6264 = vld [vmem:[#allocation10 + $0x968] sm:$0xff]
      %v6265 = vld [vmem:[#allocation10 + $0x970] sm:$0xff]
      %v6266 = vld [vmem:[#allocation10 + $0x978] sm:$0xff]
      %v6267 = vld [vmem:[#allocation10 + $0x980] sm:$0xff]
      %v6268 = vld [vmem:[#allocation10 + $0x988] sm:$0xff]
      %v6269 = vld [vmem:[#allocation10 + $0x990] sm:$0xff]
      %v6270 = vld [vmem:[#allocation10 + $0x998] sm:$0xff]
      %v6271 = vld [vmem:[#allocation10 + $0x9a0] sm:$0xff]
      %v6272 = vld [vmem:[#allocation10 + $0x9a8] sm:$0xff]
      %v6273 = vld [vmem:[#allocation10 + $0x9b0] sm:$0xff]
      %v6274 = vld [vmem:[#allocation10 + $0x9b8] sm:$0xff]
      %v6275 = vld [vmem:[#allocation10 + $0x9c0] sm:$0xff]
      %v6276 = vld [vmem:[#allocation10 + $0x9c8] sm:$0xff]
      %v6277 = vld [vmem:[#allocation10 + $0x9d0] sm:$0xff]
      %v6278 = vld [vmem:[#allocation10 + $0x9d8] sm:$0xff]
      %v6279 = vld [vmem:[#allocation10 + $0x9e0] sm:$0xff]
      %v6280 = vld [vmem:[#allocation10 + $0x9e8] sm:$0xff]
      %v6281 = vld [vmem:[#allocation10 + $0x9f0] sm:$0xff]
      %v6282 = vld [vmem:[#allocation10 + $0x9f8] sm:$0xff]
      %v6283 = vunpack.c.l.bf16 %v5963
      %v6284 = vunpack.c.h.bf16 %v5963
      %v6285 = vunpack.c.l.bf16 %v5964
      %v6286 = vunpack.c.h.bf16 %v5964
      %v6287 = vunpack.c.l.bf16 %v5965
      %v6288 = vunpack.c.h.bf16 %v5965
      %v6289 = vunpack.c.l.bf16 %v5966
      %v6290 = vunpack.c.h.bf16 %v5966
      %v6291 = vunpack.c.l.bf16 %v5967
      %v6292 = vunpack.c.h.bf16 %v5967
      %v6293 = vunpack.c.l.bf16 %v5968
      %v6294 = vunpack.c.h.bf16 %v5968
      %v6295 = vunpack.c.l.bf16 %v5969
      %v6296 = vunpack.c.h.bf16 %v5969
      %v6297 = vunpack.c.l.bf16 %v5970
      %v6298 = vunpack.c.h.bf16 %v5970
      %v6299 = vunpack.c.l.bf16 %v5971
      %v6300 = vunpack.c.h.bf16 %v5971
      %v6301 = vunpack.c.l.bf16 %v5972
      %v6302 = vunpack.c.h.bf16 %v5972
      %v6303 = vunpack.c.l.bf16 %v5973
      %v6304 = vunpack.c.h.bf16 %v5973
      %v6305 = vunpack.c.l.bf16 %v5974
      %v6306 = vunpack.c.h.bf16 %v5974
      %v6307 = vunpack.c.l.bf16 %v5975
      %v6308 = vunpack.c.h.bf16 %v5975
      %v6309 = vunpack.c.l.bf16 %v5976
      %v6310 = vunpack.c.h.bf16 %v5976
      %v6311 = vunpack.c.l.bf16 %v5977
      %v6312 = vunpack.c.h.bf16 %v5977
      %v6313 = vunpack.c.l.bf16 %v5978
      %v6314 = vunpack.c.h.bf16 %v5978
      %v6315 = vunpack.c.l.bf16 %v5979
      %v6316 = vunpack.c.h.bf16 %v5979
      %v6317 = vunpack.c.l.bf16 %v5980
      %v6318 = vunpack.c.h.bf16 %v5980
      %v6319 = vunpack.c.l.bf16 %v5981
      %v6320 = vunpack.c.h.bf16 %v5981
      %v6321 = vunpack.c.l.bf16 %v5982
      %v6322 = vunpack.c.h.bf16 %v5982
      %v6323 = vunpack.c.l.bf16 %v5983
      %v6324 = vunpack.c.h.bf16 %v5983
      %v6325 = vunpack.c.l.bf16 %v5984
      %v6326 = vunpack.c.h.bf16 %v5984
      %v6327 = vunpack.c.l.bf16 %v5985
      %v6328 = vunpack.c.h.bf16 %v5985
      %v6329 = vunpack.c.l.bf16 %v5986
      %v6330 = vunpack.c.h.bf16 %v5986
      %v6331 = vunpack.c.l.bf16 %v5987
      %v6332 = vunpack.c.h.bf16 %v5987
      %v6333 = vunpack.c.l.bf16 %v5988
      %v6334 = vunpack.c.h.bf16 %v5988
      %v6335 = vunpack.c.l.bf16 %v5989
      %v6336 = vunpack.c.h.bf16 %v5989
      %v6337 = vunpack.c.l.bf16 %v5990
      %v6338 = vunpack.c.h.bf16 %v5990
      %v6339 = vunpack.c.l.bf16 %v5991
      %v6340 = vunpack.c.h.bf16 %v5991
      %v6341 = vunpack.c.l.bf16 %v5992
      %v6342 = vunpack.c.h.bf16 %v5992
      %v6343 = vunpack.c.l.bf16 %v5993
      %v6344 = vunpack.c.h.bf16 %v5993
      %v6345 = vunpack.c.l.bf16 %v5994
      %v6346 = vunpack.c.h.bf16 %v5994
      %v6347 = vunpack.c.l.bf16 %v5995
      %v6348 = vunpack.c.h.bf16 %v5995
      %v6349 = vunpack.c.l.bf16 %v5996
      %v6350 = vunpack.c.h.bf16 %v5996
      %v6351 = vunpack.c.l.bf16 %v5997
      %v6352 = vunpack.c.h.bf16 %v5997
      %v6353 = vunpack.c.l.bf16 %v5998
      %v6354 = vunpack.c.h.bf16 %v5998
      %v6355 = vunpack.c.l.bf16 %v5999
      %v6356 = vunpack.c.h.bf16 %v5999
      %v6357 = vunpack.c.l.bf16 %v6000
      %v6358 = vunpack.c.h.bf16 %v6000
      %v6359 = vunpack.c.l.bf16 %v6001
      %v6360 = vunpack.c.h.bf16 %v6001
      %v6361 = vunpack.c.l.bf16 %v6002
      %v6362 = vunpack.c.h.bf16 %v6002
      %v6363 = vunpack.c.l.bf16 %v6003
      %v6364 = vunpack.c.h.bf16 %v6003
      %v6365 = vunpack.c.l.bf16 %v6004
      %v6366 = vunpack.c.h.bf16 %v6004
      %v6367 = vunpack.c.l.bf16 %v6005
      %v6368 = vunpack.c.h.bf16 %v6005
      %v6369 = vunpack.c.l.bf16 %v6006
      %v6370 = vunpack.c.h.bf16 %v6006
      %v6371 = vunpack.c.l.bf16 %v6007
      %v6372 = vunpack.c.h.bf16 %v6007
      %v6373 = vunpack.c.l.bf16 %v6008
      %v6374 = vunpack.c.h.bf16 %v6008
      %v6375 = vunpack.c.l.bf16 %v6009
      %v6376 = vunpack.c.h.bf16 %v6009
      %v6377 = vunpack.c.l.bf16 %v6010
      %v6378 = vunpack.c.h.bf16 %v6010
      %v6379 = vunpack.c.l.bf16 %v6011
      %v6380 = vunpack.c.h.bf16 %v6011
      %v6381 = vunpack.c.l.bf16 %v6012
      %v6382 = vunpack.c.h.bf16 %v6012
      %v6383 = vunpack.c.l.bf16 %v6013
      %v6384 = vunpack.c.h.bf16 %v6013
      %v6385 = vunpack.c.l.bf16 %v6014
      %v6386 = vunpack.c.h.bf16 %v6014
      %v6387 = vunpack.c.l.bf16 %v6015
      %v6388 = vunpack.c.h.bf16 %v6015
      %v6389 = vunpack.c.l.bf16 %v6016
      %v6390 = vunpack.c.h.bf16 %v6016
      %v6391 = vunpack.c.l.bf16 %v6017
      %v6392 = vunpack.c.h.bf16 %v6017
      %v6393 = vunpack.c.l.bf16 %v6018
      %v6394 = vunpack.c.h.bf16 %v6018
      %v6395 = vunpack.c.l.bf16 %v6019
      %v6396 = vunpack.c.h.bf16 %v6019
      %v6397 = vunpack.c.l.bf16 %v6020
      %v6398 = vunpack.c.h.bf16 %v6020
      %v6399 = vunpack.c.l.bf16 %v6021
      %v6400 = vunpack.c.h.bf16 %v6021
      %v6401 = vunpack.c.l.bf16 %v6022
      %v6402 = vunpack.c.h.bf16 %v6022
      %v6403 = vunpack.c.l.bf16 %v6023
      %v6404 = vunpack.c.h.bf16 %v6023
      %v6405 = vunpack.c.l.bf16 %v6024
      %v6406 = vunpack.c.h.bf16 %v6024
      %v6407 = vunpack.c.l.bf16 %v6025
      %v6408 = vunpack.c.h.bf16 %v6025
      %v6409 = vunpack.c.l.bf16 %v6026
      %v6410 = vunpack.c.h.bf16 %v6026
      %v6411 = vunpack.c.l.bf16 %v6027
      %v6412 = vunpack.c.h.bf16 %v6027
      %v6413 = vunpack.c.l.bf16 %v6028
      %v6414 = vunpack.c.h.bf16 %v6028
      %v6415 = vunpack.c.l.bf16 %v6029
      %v6416 = vunpack.c.h.bf16 %v6029
      %v6417 = vunpack.c.l.bf16 %v6030
      %v6418 = vunpack.c.h.bf16 %v6030
      %v6419 = vunpack.c.l.bf16 %v6031
      %v6420 = vunpack.c.h.bf16 %v6031
      %v6421 = vunpack.c.l.bf16 %v6032
      %v6422 = vunpack.c.h.bf16 %v6032
      %v6423 = vunpack.c.l.bf16 %v6033
      %v6424 = vunpack.c.h.bf16 %v6033
      %v6425 = vunpack.c.l.bf16 %v6034
      %v6426 = vunpack.c.h.bf16 %v6034
      %v6427 = vunpack.c.l.bf16 %v6035
      %v6428 = vunpack.c.h.bf16 %v6035
      %v6429 = vunpack.c.l.bf16 %v6036
      %v6430 = vunpack.c.h.bf16 %v6036
      %v6431 = vunpack.c.l.bf16 %v6037
      %v6432 = vunpack.c.h.bf16 %v6037
      %v6433 = vunpack.c.l.bf16 %v6038
      %v6434 = vunpack.c.h.bf16 %v6038
      %v6435 = vunpack.c.l.bf16 %v6039
      %v6436 = vunpack.c.h.bf16 %v6039
      %v6437 = vunpack.c.l.bf16 %v6040
      %v6438 = vunpack.c.h.bf16 %v6040
      %v6439 = vunpack.c.l.bf16 %v6041
      %v6440 = vunpack.c.h.bf16 %v6041
      %v6441 = vunpack.c.l.bf16 %v6042
      %v6442 = vunpack.c.h.bf16 %v6042
      %v6443 = vunpack.c.l.bf16 %v6043
      %v6444 = vunpack.c.h.bf16 %v6043
      %v6445 = vunpack.c.l.bf16 %v6044
      %v6446 = vunpack.c.h.bf16 %v6044
      %v6447 = vunpack.c.l.bf16 %v6045
      %v6448 = vunpack.c.h.bf16 %v6045
      %v6449 = vunpack.c.l.bf16 %v6046
      %v6450 = vunpack.c.h.bf16 %v6046
      %v6451 = vunpack.c.l.bf16 %v6047
      %v6452 = vunpack.c.h.bf16 %v6047
      %v6453 = vunpack.c.l.bf16 %v6048
      %v6454 = vunpack.c.h.bf16 %v6048
      %v6455 = vunpack.c.l.bf16 %v6049
      %v6456 = vunpack.c.h.bf16 %v6049
      %v6457 = vunpack.c.l.bf16 %v6050
      %v6458 = vunpack.c.h.bf16 %v6050
      %v6459 = vunpack.c.l.bf16 %v6051
      %v6460 = vunpack.c.h.bf16 %v6051
      %v6461 = vunpack.c.l.bf16 %v6052
      %v6462 = vunpack.c.h.bf16 %v6052
      %v6463 = vunpack.c.l.bf16 %v6053
      %v6464 = vunpack.c.h.bf16 %v6053
      %v6465 = vunpack.c.l.bf16 %v6054
      %v6466 = vunpack.c.h.bf16 %v6054
      %v6467 = vunpack.c.l.bf16 %v6055
      %v6468 = vunpack.c.h.bf16 %v6055
      %v6469 = vunpack.c.l.bf16 %v6056
      %v6470 = vunpack.c.h.bf16 %v6056
      %v6471 = vunpack.c.l.bf16 %v6057
      %v6472 = vunpack.c.h.bf16 %v6057
      %v6473 = vunpack.c.l.bf16 %v6058
      %v6474 = vunpack.c.h.bf16 %v6058
      %v6475 = vunpack.c.l.bf16 %v6059
      %v6476 = vunpack.c.h.bf16 %v6059
      %v6477 = vunpack.c.l.bf16 %v6060
      %v6478 = vunpack.c.h.bf16 %v6060
      %v6479 = vunpack.c.l.bf16 %v6061
      %v6480 = vunpack.c.h.bf16 %v6061
      %v6481 = vunpack.c.l.bf16 %v6062
      %v6482 = vunpack.c.h.bf16 %v6062
      %v6483 = vunpack.c.l.bf16 %v6063
      %v6484 = vunpack.c.h.bf16 %v6063
      %v6485 = vunpack.c.l.bf16 %v6064
      %v6486 = vunpack.c.h.bf16 %v6064
      %v6487 = vunpack.c.l.bf16 %v6065
      %v6488 = vunpack.c.h.bf16 %v6065
      %v6489 = vunpack.c.l.bf16 %v6066
      %v6490 = vunpack.c.h.bf16 %v6066
      %v6491 = vunpack.c.l.bf16 %v6067
      %v6492 = vunpack.c.h.bf16 %v6067
      %v6493 = vunpack.c.l.bf16 %v6068
      %v6494 = vunpack.c.h.bf16 %v6068
      %v6495 = vunpack.c.l.bf16 %v6069
      %v6496 = vunpack.c.h.bf16 %v6069
      %v6497 = vunpack.c.l.bf16 %v6070
      %v6498 = vunpack.c.h.bf16 %v6070
      %v6499 = vunpack.c.l.bf16 %v6071
      %v6500 = vunpack.c.h.bf16 %v6071
      %v6501 = vunpack.c.l.bf16 %v6072
      %v6502 = vunpack.c.h.bf16 %v6072
      %v6503 = vunpack.c.l.bf16 %v6073
      %v6504 = vunpack.c.h.bf16 %v6073
      %v6505 = vunpack.c.l.bf16 %v6074
      %v6506 = vunpack.c.h.bf16 %v6074
      %v6507 = vunpack.c.l.bf16 %v6075
      %v6508 = vunpack.c.h.bf16 %v6075
      %v6509 = vunpack.c.l.bf16 %v6076
      %v6510 = vunpack.c.h.bf16 %v6076
      %v6511 = vunpack.c.l.bf16 %v6077
      %v6512 = vunpack.c.h.bf16 %v6077
      %v6513 = vunpack.c.l.bf16 %v6078
      %v6514 = vunpack.c.h.bf16 %v6078
      %v6515 = vunpack.c.l.bf16 %v6079
      %v6516 = vunpack.c.h.bf16 %v6079
      %v6517 = vunpack.c.l.bf16 %v6080
      %v6518 = vunpack.c.h.bf16 %v6080
      %v6519 = vunpack.c.l.bf16 %v6081
      %v6520 = vunpack.c.h.bf16 %v6081
      %v6521 = vunpack.c.l.bf16 %v6082
      %v6522 = vunpack.c.h.bf16 %v6082
      %v6523 = vunpack.c.l.bf16 %v6083
      %v6524 = vunpack.c.h.bf16 %v6083
      %v6525 = vunpack.c.l.bf16 %v6084
      %v6526 = vunpack.c.h.bf16 %v6084
      %v6527 = vunpack.c.l.bf16 %v6085
      %v6528 = vunpack.c.h.bf16 %v6085
      %v6529 = vunpack.c.l.bf16 %v6086
      %v6530 = vunpack.c.h.bf16 %v6086
      %v6531 = vunpack.c.l.bf16 %v6087
      %v6532 = vunpack.c.h.bf16 %v6087
      %v6533 = vunpack.c.l.bf16 %v6088
      %v6534 = vunpack.c.h.bf16 %v6088
      %v6535 = vunpack.c.l.bf16 %v6089
      %v6536 = vunpack.c.h.bf16 %v6089
      %v6537 = vunpack.c.l.bf16 %v6090
      %v6538 = vunpack.c.h.bf16 %v6090
      %v6539 = vunpack.c.l.bf16 %v6091
      %v6540 = vunpack.c.h.bf16 %v6091
      %v6541 = vunpack.c.l.bf16 %v6092
      %v6542 = vunpack.c.h.bf16 %v6092
      %v6543 = vunpack.c.l.bf16 %v6093
      %v6544 = vunpack.c.h.bf16 %v6093
      %v6545 = vunpack.c.l.bf16 %v6094
      %v6546 = vunpack.c.h.bf16 %v6094
      %v6547 = vunpack.c.l.bf16 %v6095
      %v6548 = vunpack.c.h.bf16 %v6095
      %v6549 = vunpack.c.l.bf16 %v6096
      %v6550 = vunpack.c.h.bf16 %v6096
      %v6551 = vunpack.c.l.bf16 %v6097
      %v6552 = vunpack.c.h.bf16 %v6097
      %v6553 = vunpack.c.l.bf16 %v6098
      %v6554 = vunpack.c.h.bf16 %v6098
      %v6555 = vunpack.c.l.bf16 %v6099
      %v6556 = vunpack.c.h.bf16 %v6099
      %v6557 = vunpack.c.l.bf16 %v6100
      %v6558 = vunpack.c.h.bf16 %v6100
      %v6559 = vunpack.c.l.bf16 %v6101
      %v6560 = vunpack.c.h.bf16 %v6101
      %v6561 = vunpack.c.l.bf16 %v6102
      %v6562 = vunpack.c.h.bf16 %v6102
      %v6563 = vunpack.c.l.bf16 %v6103
      %v6564 = vunpack.c.h.bf16 %v6103
      %v6565 = vunpack.c.l.bf16 %v6104
      %v6566 = vunpack.c.h.bf16 %v6104
      %v6567 = vunpack.c.l.bf16 %v6105
      %v6568 = vunpack.c.h.bf16 %v6105
      %v6569 = vunpack.c.l.bf16 %v6106
      %v6570 = vunpack.c.h.bf16 %v6106
      %v6571 = vunpack.c.l.bf16 %v6107
      %v6572 = vunpack.c.h.bf16 %v6107
      %v6573 = vunpack.c.l.bf16 %v6108
      %v6574 = vunpack.c.h.bf16 %v6108
      %v6575 = vunpack.c.l.bf16 %v6109
      %v6576 = vunpack.c.h.bf16 %v6109
      %v6577 = vunpack.c.l.bf16 %v6110
      %v6578 = vunpack.c.h.bf16 %v6110
      %v6579 = vunpack.c.l.bf16 %v6111
      %v6580 = vunpack.c.h.bf16 %v6111
      %v6581 = vunpack.c.l.bf16 %v6112
      %v6582 = vunpack.c.h.bf16 %v6112
      %v6583 = vunpack.c.l.bf16 %v6113
      %v6584 = vunpack.c.h.bf16 %v6113
      %v6585 = vunpack.c.l.bf16 %v6114
      %v6586 = vunpack.c.h.bf16 %v6114
      %v6587 = vunpack.c.l.bf16 %v6115
      %v6588 = vunpack.c.h.bf16 %v6115
      %v6589 = vunpack.c.l.bf16 %v6116
      %v6590 = vunpack.c.h.bf16 %v6116
      %v6591 = vunpack.c.l.bf16 %v6117
      %v6592 = vunpack.c.h.bf16 %v6117
      %v6593 = vunpack.c.l.bf16 %v6118
      %v6594 = vunpack.c.h.bf16 %v6118
      %v6595 = vunpack.c.l.bf16 %v6119
      %v6596 = vunpack.c.h.bf16 %v6119
      %v6597 = vunpack.c.l.bf16 %v6120
      %v6598 = vunpack.c.h.bf16 %v6120
      %v6599 = vunpack.c.l.bf16 %v6121
      %v6600 = vunpack.c.h.bf16 %v6121
      %v6601 = vunpack.c.l.bf16 %v6122
      %v6602 = vunpack.c.h.bf16 %v6122
      %v6603 = vunpack.c.l.bf16 %v6123
      %v6604 = vunpack.c.h.bf16 %v6123
      %v6605 = vunpack.c.l.bf16 %v6124
      %v6606 = vunpack.c.h.bf16 %v6124
      %v6607 = vunpack.c.l.bf16 %v6125
      %v6608 = vunpack.c.h.bf16 %v6125
      %v6609 = vunpack.c.l.bf16 %v6126
      %v6610 = vunpack.c.h.bf16 %v6126
      %v6611 = vunpack.c.l.bf16 %v6127
      %v6612 = vunpack.c.h.bf16 %v6127
      %v6613 = vunpack.c.l.bf16 %v6128
      %v6614 = vunpack.c.h.bf16 %v6128
      %v6615 = vunpack.c.l.bf16 %v6129
      %v6616 = vunpack.c.h.bf16 %v6129
      %v6617 = vunpack.c.l.bf16 %v6130
      %v6618 = vunpack.c.h.bf16 %v6130
      %v6619 = vunpack.c.l.bf16 %v6131
      %v6620 = vunpack.c.h.bf16 %v6131
      %v6621 = vunpack.c.l.bf16 %v6132
      %v6622 = vunpack.c.h.bf16 %v6132
      %v6623 = vunpack.c.l.bf16 %v6133
      %v6624 = vunpack.c.h.bf16 %v6133
      %v6625 = vunpack.c.l.bf16 %v6134
      %v6626 = vunpack.c.h.bf16 %v6134
      %v6627 = vunpack.c.l.bf16 %v6135
      %v6628 = vunpack.c.h.bf16 %v6135
      %v6629 = vunpack.c.l.bf16 %v6136
      %v6630 = vunpack.c.h.bf16 %v6136
      %v6631 = vunpack.c.l.bf16 %v6137
      %v6632 = vunpack.c.h.bf16 %v6137
      %v6633 = vunpack.c.l.bf16 %v6138
      %v6634 = vunpack.c.h.bf16 %v6138
      %v6635 = vunpack.c.l.bf16 %v6139
      %v6636 = vunpack.c.h.bf16 %v6139
      %v6637 = vunpack.c.l.bf16 %v6140
      %v6638 = vunpack.c.h.bf16 %v6140
      %v6639 = vunpack.c.l.bf16 %v6141
      %v6640 = vunpack.c.h.bf16 %v6141
      %v6641 = vunpack.c.l.bf16 %v6142
      %v6642 = vunpack.c.h.bf16 %v6142
      %v6643 = vunpack.c.l.bf16 %v6143
      %v6644 = vunpack.c.h.bf16 %v6143
      %v6645 = vunpack.c.l.bf16 %v6144
      %v6646 = vunpack.c.h.bf16 %v6144
      %v6647 = vunpack.c.l.bf16 %v6145
      %v6648 = vunpack.c.h.bf16 %v6145
      %v6649 = vunpack.c.l.bf16 %v6146
      %v6650 = vunpack.c.h.bf16 %v6146
      %v6651 = vunpack.c.l.bf16 %v6147
      %v6652 = vunpack.c.h.bf16 %v6147
      %v6653 = vunpack.c.l.bf16 %v6148
      %v6654 = vunpack.c.h.bf16 %v6148
      %v6655 = vunpack.c.l.bf16 %v6149
      %v6656 = vunpack.c.h.bf16 %v6149
      %v6657 = vunpack.c.l.bf16 %v6150
      %v6658 = vunpack.c.h.bf16 %v6150
      %v6659 = vunpack.c.l.bf16 %v6151
      %v6660 = vunpack.c.h.bf16 %v6151
      %v6661 = vunpack.c.l.bf16 %v6152
      %v6662 = vunpack.c.h.bf16 %v6152
      %v6663 = vunpack.c.l.bf16 %v6153
      %v6664 = vunpack.c.h.bf16 %v6153
      %v6665 = vunpack.c.l.bf16 %v6154
      %v6666 = vunpack.c.h.bf16 %v6154
      %v6667 = vunpack.c.l.bf16 %v6155
      %v6668 = vunpack.c.h.bf16 %v6155
      %v6669 = vunpack.c.l.bf16 %v6156
      %v6670 = vunpack.c.h.bf16 %v6156
      %v6671 = vunpack.c.l.bf16 %v6157
      %v6672 = vunpack.c.h.bf16 %v6157
      %v6673 = vunpack.c.l.bf16 %v6158
      %v6674 = vunpack.c.h.bf16 %v6158
      %v6675 = vunpack.c.l.bf16 %v6159
      %v6676 = vunpack.c.h.bf16 %v6159
      %v6677 = vunpack.c.l.bf16 %v6160
      %v6678 = vunpack.c.h.bf16 %v6160
      %v6679 = vunpack.c.l.bf16 %v6161
      %v6680 = vunpack.c.h.bf16 %v6161
      %v6681 = vunpack.c.l.bf16 %v6162
      %v6682 = vunpack.c.h.bf16 %v6162
      %v6683 = vunpack.c.l.bf16 %v6163
      %v6684 = vunpack.c.h.bf16 %v6163
      %v6685 = vunpack.c.l.bf16 %v6164
      %v6686 = vunpack.c.h.bf16 %v6164
      %v6687 = vunpack.c.l.bf16 %v6165
      %v6688 = vunpack.c.h.bf16 %v6165
      %v6689 = vunpack.c.l.bf16 %v6166
      %v6690 = vunpack.c.h.bf16 %v6166
      %v6691 = vunpack.c.l.bf16 %v6167
      %v6692 = vunpack.c.h.bf16 %v6167
      %v6693 = vunpack.c.l.bf16 %v6168
      %v6694 = vunpack.c.h.bf16 %v6168
      %v6695 = vunpack.c.l.bf16 %v6169
      %v6696 = vunpack.c.h.bf16 %v6169
      %v6697 = vunpack.c.l.bf16 %v6170
      %v6698 = vunpack.c.h.bf16 %v6170
      %v6699 = vunpack.c.l.bf16 %v6171
      %v6700 = vunpack.c.h.bf16 %v6171
      %v6701 = vunpack.c.l.bf16 %v6172
      %v6702 = vunpack.c.h.bf16 %v6172
      %v6703 = vunpack.c.l.bf16 %v6173
      %v6704 = vunpack.c.h.bf16 %v6173
      %v6705 = vunpack.c.l.bf16 %v6174
      %v6706 = vunpack.c.h.bf16 %v6174
      %v6707 = vunpack.c.l.bf16 %v6175
      %v6708 = vunpack.c.h.bf16 %v6175
      %v6709 = vunpack.c.l.bf16 %v6176
      %v6710 = vunpack.c.h.bf16 %v6176
      %v6711 = vunpack.c.l.bf16 %v6177
      %v6712 = vunpack.c.h.bf16 %v6177
      %v6713 = vunpack.c.l.bf16 %v6178
      %v6714 = vunpack.c.h.bf16 %v6178
      %v6715 = vunpack.c.l.bf16 %v6179
      %v6716 = vunpack.c.h.bf16 %v6179
      %v6717 = vunpack.c.l.bf16 %v6180
      %v6718 = vunpack.c.h.bf16 %v6180
      %v6719 = vunpack.c.l.bf16 %v6181
      %v6720 = vunpack.c.h.bf16 %v6181
      %v6721 = vunpack.c.l.bf16 %v6182
      %v6722 = vunpack.c.h.bf16 %v6182
      %v6723 = vunpack.c.l.bf16 %v6183
      %v6724 = vunpack.c.h.bf16 %v6183
      %v6725 = vunpack.c.l.bf16 %v6184
      %v6726 = vunpack.c.h.bf16 %v6184
      %v6727 = vunpack.c.l.bf16 %v6185
      %v6728 = vunpack.c.h.bf16 %v6185
      %v6729 = vunpack.c.l.bf16 %v6186
      %v6730 = vunpack.c.h.bf16 %v6186
      %v6731 = vunpack.c.l.bf16 %v6187
      %v6732 = vunpack.c.h.bf16 %v6187
      %v6733 = vunpack.c.l.bf16 %v6188
      %v6734 = vunpack.c.h.bf16 %v6188
      %v6735 = vunpack.c.l.bf16 %v6189
      %v6736 = vunpack.c.h.bf16 %v6189
      %v6737 = vunpack.c.l.bf16 %v6190
      %v6738 = vunpack.c.h.bf16 %v6190
      %v6739 = vunpack.c.l.bf16 %v6191
      %v6740 = vunpack.c.h.bf16 %v6191
      %v6741 = vunpack.c.l.bf16 %v6192
      %v6742 = vunpack.c.h.bf16 %v6192
      %v6743 = vunpack.c.l.bf16 %v6193
      %v6744 = vunpack.c.h.bf16 %v6193
      %v6745 = vunpack.c.l.bf16 %v6194
      %v6746 = vunpack.c.h.bf16 %v6194
      %v6747 = vunpack.c.l.bf16 %v6195
      %v6748 = vunpack.c.h.bf16 %v6195
      %v6749 = vunpack.c.l.bf16 %v6196
      %v6750 = vunpack.c.h.bf16 %v6196
      %v6751 = vunpack.c.l.bf16 %v6197
      %v6752 = vunpack.c.h.bf16 %v6197
      %v6753 = vunpack.c.l.bf16 %v6198
      %v6754 = vunpack.c.h.bf16 %v6198
      %v6755 = vunpack.c.l.bf16 %v6199
      %v6756 = vunpack.c.h.bf16 %v6199
      %v6757 = vunpack.c.l.bf16 %v6200
      %v6758 = vunpack.c.h.bf16 %v6200
      %v6759 = vunpack.c.l.bf16 %v6201
      %v6760 = vunpack.c.h.bf16 %v6201
      %v6761 = vunpack.c.l.bf16 %v6202
      %v6762 = vunpack.c.h.bf16 %v6202
      %v6763 = vunpack.c.l.bf16 %v6203
      %v6764 = vunpack.c.h.bf16 %v6203
      %v6765 = vunpack.c.l.bf16 %v6204
      %v6766 = vunpack.c.h.bf16 %v6204
      %v6767 = vunpack.c.l.bf16 %v6205
      %v6768 = vunpack.c.h.bf16 %v6205
      %v6769 = vunpack.c.l.bf16 %v6206
      %v6770 = vunpack.c.h.bf16 %v6206
      %v6771 = vunpack.c.l.bf16 %v6207
      %v6772 = vunpack.c.h.bf16 %v6207
      %v6773 = vunpack.c.l.bf16 %v6208
      %v6774 = vunpack.c.h.bf16 %v6208
      %v6775 = vunpack.c.l.bf16 %v6209
      %v6776 = vunpack.c.h.bf16 %v6209
      %v6777 = vunpack.c.l.bf16 %v6210
      %v6778 = vunpack.c.h.bf16 %v6210
      %v6779 = vunpack.c.l.bf16 %v6211
      %v6780 = vunpack.c.h.bf16 %v6211
      %v6781 = vunpack.c.l.bf16 %v6212
      %v6782 = vunpack.c.h.bf16 %v6212
      %v6783 = vunpack.c.l.bf16 %v6213
      %v6784 = vunpack.c.h.bf16 %v6213
      %v6785 = vunpack.c.l.bf16 %v6214
      %v6786 = vunpack.c.h.bf16 %v6214
      %v6787 = vunpack.c.l.bf16 %v6215
      %v6788 = vunpack.c.h.bf16 %v6215
      %v6789 = vunpack.c.l.bf16 %v6216
      %v6790 = vunpack.c.h.bf16 %v6216
      %v6791 = vunpack.c.l.bf16 %v6217
      %v6792 = vunpack.c.h.bf16 %v6217
      %v6793 = vunpack.c.l.bf16 %v6218
      %v6794 = vunpack.c.h.bf16 %v6218
      %v6795 = vunpack.c.l.bf16 %v6219
      %v6796 = vunpack.c.h.bf16 %v6219
      %v6797 = vunpack.c.l.bf16 %v6220
      %v6798 = vunpack.c.h.bf16 %v6220
      %v6799 = vunpack.c.l.bf16 %v6221
      %v6800 = vunpack.c.h.bf16 %v6221
      %v6801 = vunpack.c.l.bf16 %v6222
      %v6802 = vunpack.c.h.bf16 %v6222
      %v6803 = vunpack.c.l.bf16 %v6223
      %v6804 = vunpack.c.h.bf16 %v6223
      %v6805 = vunpack.c.l.bf16 %v6224
      %v6806 = vunpack.c.h.bf16 %v6224
      %v6807 = vunpack.c.l.bf16 %v6225
      %v6808 = vunpack.c.h.bf16 %v6225
      %v6809 = vunpack.c.l.bf16 %v6226
      %v6810 = vunpack.c.h.bf16 %v6226
      %v6811 = vunpack.c.l.bf16 %v6227
      %v6812 = vunpack.c.h.bf16 %v6227
      %v6813 = vunpack.c.l.bf16 %v6228
      %v6814 = vunpack.c.h.bf16 %v6228
      %v6815 = vunpack.c.l.bf16 %v6229
      %v6816 = vunpack.c.h.bf16 %v6229
      %v6817 = vunpack.c.l.bf16 %v6230
      %v6818 = vunpack.c.h.bf16 %v6230
      %v6819 = vunpack.c.l.bf16 %v6231
      %v6820 = vunpack.c.h.bf16 %v6231
      %v6821 = vunpack.c.l.bf16 %v6232
      %v6822 = vunpack.c.h.bf16 %v6232
      %v6823 = vunpack.c.l.bf16 %v6233
      %v6824 = vunpack.c.h.bf16 %v6233
      %v6825 = vunpack.c.l.bf16 %v6234
      %v6826 = vunpack.c.h.bf16 %v6234
      %v6827 = vunpack.c.l.bf16 %v6235
      %v6828 = vunpack.c.h.bf16 %v6235
      %v6829 = vunpack.c.l.bf16 %v6236
      %v6830 = vunpack.c.h.bf16 %v6236
      %v6831 = vunpack.c.l.bf16 %v6237
      %v6832 = vunpack.c.h.bf16 %v6237
      %v6833 = vunpack.c.l.bf16 %v6238
      %v6834 = vunpack.c.h.bf16 %v6238
      %v6835 = vunpack.c.l.bf16 %v6239
      %v6836 = vunpack.c.h.bf16 %v6239
      %v6837 = vunpack.c.l.bf16 %v6240
      %v6838 = vunpack.c.h.bf16 %v6240
      %v6839 = vunpack.c.l.bf16 %v6241
      %v6840 = vunpack.c.h.bf16 %v6241
      %v6841 = vunpack.c.l.bf16 %v6242
      %v6842 = vunpack.c.h.bf16 %v6242
      %v6843 = vunpack.c.l.bf16 %v6243
      %v6844 = vunpack.c.h.bf16 %v6243
      %v6845 = vunpack.c.l.bf16 %v6244
      %v6846 = vunpack.c.h.bf16 %v6244
      %v6847 = vunpack.c.l.bf16 %v6245
      %v6848 = vunpack.c.h.bf16 %v6245
      %v6849 = vunpack.c.l.bf16 %v6246
      %v6850 = vunpack.c.h.bf16 %v6246
      %v6851 = vunpack.c.l.bf16 %v6247
      %v6852 = vunpack.c.h.bf16 %v6247
      %v6853 = vunpack.c.l.bf16 %v6248
      %v6854 = vunpack.c.h.bf16 %v6248
      %v6855 = vunpack.c.l.bf16 %v6249
      %v6856 = vunpack.c.h.bf16 %v6249
      %v6857 = vunpack.c.l.bf16 %v6250
      %v6858 = vunpack.c.h.bf16 %v6250
      %v6859 = vunpack.c.l.bf16 %v6251
      %v6860 = vunpack.c.h.bf16 %v6251
      %v6861 = vunpack.c.l.bf16 %v6252
      %v6862 = vunpack.c.h.bf16 %v6252
      %v6863 = vunpack.c.l.bf16 %v6253
      %v6864 = vunpack.c.h.bf16 %v6253
      %v6865 = vunpack.c.l.bf16 %v6254
      %v6866 = vunpack.c.h.bf16 %v6254
      %v6867 = vunpack.c.l.bf16 %v6255
      %v6868 = vunpack.c.h.bf16 %v6255
      %v6869 = vunpack.c.l.bf16 %v6256
      %v6870 = vunpack.c.h.bf16 %v6256
      %v6871 = vunpack.c.l.bf16 %v6257
      %v6872 = vunpack.c.h.bf16 %v6257
      %v6873 = vunpack.c.l.bf16 %v6258
      %v6874 = vunpack.c.h.bf16 %v6258
      %v6875 = vunpack.c.l.bf16 %v6259
      %v6876 = vunpack.c.h.bf16 %v6259
      %v6877 = vunpack.c.l.bf16 %v6260
      %v6878 = vunpack.c.h.bf16 %v6260
      %v6879 = vunpack.c.l.bf16 %v6261
      %v6880 = vunpack.c.h.bf16 %v6261
      %v6881 = vunpack.c.l.bf16 %v6262
      %v6882 = vunpack.c.h.bf16 %v6262
      %v6883 = vunpack.c.l.bf16 %v6263
      %v6884 = vunpack.c.h.bf16 %v6263
      %v6885 = vunpack.c.l.bf16 %v6264
      %v6886 = vunpack.c.h.bf16 %v6264
      %v6887 = vunpack.c.l.bf16 %v6265
      %v6888 = vunpack.c.h.bf16 %v6265
      %v6889 = vunpack.c.l.bf16 %v6266
      %v6890 = vunpack.c.h.bf16 %v6266
      %v6891 = vunpack.c.l.bf16 %v6267
      %v6892 = vunpack.c.h.bf16 %v6267
      %v6893 = vunpack.c.l.bf16 %v6268
      %v6894 = vunpack.c.h.bf16 %v6268
      %v6895 = vunpack.c.l.bf16 %v6269
      %v6896 = vunpack.c.h.bf16 %v6269
      %v6897 = vunpack.c.l.bf16 %v6270
      %v6898 = vunpack.c.h.bf16 %v6270
      %v6899 = vunpack.c.l.bf16 %v6271
      %v6900 = vunpack.c.h.bf16 %v6271
      %v6901 = vunpack.c.l.bf16 %v6272
      %v6902 = vunpack.c.h.bf16 %v6272
      %v6903 = vunpack.c.l.bf16 %v6273
      %v6904 = vunpack.c.h.bf16 %v6273
      %v6905 = vunpack.c.l.bf16 %v6274
      %v6906 = vunpack.c.h.bf16 %v6274
      %v6907 = vunpack.c.l.bf16 %v6275
      %v6908 = vunpack.c.h.bf16 %v6275
      %v6909 = vunpack.c.l.bf16 %v6276
      %v6910 = vunpack.c.h.bf16 %v6276
      %v6911 = vunpack.c.l.bf16 %v6277
      %v6912 = vunpack.c.h.bf16 %v6277
      %v6913 = vunpack.c.l.bf16 %v6278
      %v6914 = vunpack.c.h.bf16 %v6278
      %v6915 = vunpack.c.l.bf16 %v6279
      %v6916 = vunpack.c.h.bf16 %v6279
      %v6917 = vunpack.c.l.bf16 %v6280
      %v6918 = vunpack.c.h.bf16 %v6280
      %v6919 = vunpack.c.l.bf16 %v6281
      %v6920 = vunpack.c.h.bf16 %v6281
      %v6921 = vunpack.c.l.bf16 %v6282
      %v6922 = vunpack.c.h.bf16 %v6282
      %v6923 = vld [vmem:[#allocation11] sm:$0xff]
      %v6924 = vld [vmem:[#allocation11 + $0x8] sm:$0xff]
      %v6925 = vld [vmem:[#allocation11 + $0x10] sm:$0xff]
      %v6926 = vld [vmem:[#allocation11 + $0x18] sm:$0xff]
      %v6927 = vld [vmem:[#allocation11 + $0x20] sm:$0xff]
      %v6928 = vld [vmem:[#allocation11 + $0x28] sm:$0xff]
      %v6929 = vld [vmem:[#allocation11 + $0x30] sm:$0xff]
      %v6930 = vld [vmem:[#allocation11 + $0x38] sm:$0xff]
      %v6931 = vld [vmem:[#allocation11 + $0x40] sm:$0xff]
      %v6932 = vld [vmem:[#allocation11 + $0x48] sm:$0xff]
      %v6933 = vld [vmem:[#allocation11 + $0x50] sm:$0xff]
      %v6934 = vld [vmem:[#allocation11 + $0x58] sm:$0xff]
      %v6935 = vld [vmem:[#allocation11 + $0x60] sm:$0xff]
      %v6936 = vld [vmem:[#allocation11 + $0x68] sm:$0xff]
      %v6937 = vld [vmem:[#allocation11 + $0x70] sm:$0xff]
      %v6938 = vld [vmem:[#allocation11 + $0x78] sm:$0xff]
      %v6939 = vld [vmem:[#allocation11 + $0x80] sm:$0xff]
      %v6940 = vld [vmem:[#allocation11 + $0x88] sm:$0xff]
      %v6941 = vld [vmem:[#allocation11 + $0x90] sm:$0xff]
      %v6942 = vld [vmem:[#allocation11 + $0x98] sm:$0xff]
      %v6943 = vld [vmem:[#allocation11 + $0xa0] sm:$0xff]
      %v6944 = vld [vmem:[#allocation11 + $0xa8] sm:$0xff]
      %v6945 = vld [vmem:[#allocation11 + $0xb0] sm:$0xff]
      %v6946 = vld [vmem:[#allocation11 + $0xb8] sm:$0xff]
      %v6947 = vld [vmem:[#allocation11 + $0xc0] sm:$0xff]
      %v6948 = vld [vmem:[#allocation11 + $0xc8] sm:$0xff]
      %v6949 = vld [vmem:[#allocation11 + $0xd0] sm:$0xff]
      %v6950 = vld [vmem:[#allocation11 + $0xd8] sm:$0xff]
      %v6951 = vld [vmem:[#allocation11 + $0xe0] sm:$0xff]
      %v6952 = vld [vmem:[#allocation11 + $0xe8] sm:$0xff]
      %v6953 = vld [vmem:[#allocation11 + $0xf0] sm:$0xff]
      %v6954 = vld [vmem:[#allocation11 + $0xf8] sm:$0xff]
      %v6955 = vld [vmem:[#allocation11 + $0x100] sm:$0xff]
      %v6956 = vld [vmem:[#allocation11 + $0x108] sm:$0xff]
      %v6957 = vld [vmem:[#allocation11 + $0x110] sm:$0xff]
      %v6958 = vld [vmem:[#allocation11 + $0x118] sm:$0xff]
      %v6959 = vld [vmem:[#allocation11 + $0x120] sm:$0xff]
      %v6960 = vld [vmem:[#allocation11 + $0x128] sm:$0xff]
      %v6961 = vld [vmem:[#allocation11 + $0x130] sm:$0xff]
      %v6962 = vld [vmem:[#allocation11 + $0x138] sm:$0xff]
      %v6963 = vld [vmem:[#allocation11 + $0x140] sm:$0xff]
      %v6964 = vld [vmem:[#allocation11 + $0x148] sm:$0xff]
      %v6965 = vld [vmem:[#allocation11 + $0x150] sm:$0xff]
      %v6966 = vld [vmem:[#allocation11 + $0x158] sm:$0xff]
      %v6967 = vld [vmem:[#allocation11 + $0x160] sm:$0xff]
      %v6968 = vld [vmem:[#allocation11 + $0x168] sm:$0xff]
      %v6969 = vld [vmem:[#allocation11 + $0x170] sm:$0xff]
      %v6970 = vld [vmem:[#allocation11 + $0x178] sm:$0xff]
      %v6971 = vld [vmem:[#allocation11 + $0x180] sm:$0xff]
      %v6972 = vld [vmem:[#allocation11 + $0x188] sm:$0xff]
      %v6973 = vld [vmem:[#allocation11 + $0x190] sm:$0xff]
      %v6974 = vld [vmem:[#allocation11 + $0x198] sm:$0xff]
      %v6975 = vld [vmem:[#allocation11 + $0x1a0] sm:$0xff]
      %v6976 = vld [vmem:[#allocation11 + $0x1a8] sm:$0xff]
      %v6977 = vld [vmem:[#allocation11 + $0x1b0] sm:$0xff]
      %v6978 = vld [vmem:[#allocation11 + $0x1b8] sm:$0xff]
      %v6979 = vld [vmem:[#allocation11 + $0x1c0] sm:$0xff]
      %v6980 = vld [vmem:[#allocation11 + $0x1c8] sm:$0xff]
      %v6981 = vld [vmem:[#allocation11 + $0x1d0] sm:$0xff]
      %v6982 = vld [vmem:[#allocation11 + $0x1d8] sm:$0xff]
      %v6983 = vld [vmem:[#allocation11 + $0x1e0] sm:$0xff]
      %v6984 = vld [vmem:[#allocation11 + $0x1e8] sm:$0xff]
      %v6985 = vld [vmem:[#allocation11 + $0x1f0] sm:$0xff]
      %v6986 = vld [vmem:[#allocation11 + $0x1f8] sm:$0xff]
      %v6987 = vld [vmem:[#allocation11 + $0x200] sm:$0xff]
      %v6988 = vld [vmem:[#allocation11 + $0x208] sm:$0xff]
      %v6989 = vld [vmem:[#allocation11 + $0x210] sm:$0xff]
      %v6990 = vld [vmem:[#allocation11 + $0x218] sm:$0xff]
      %v6991 = vld [vmem:[#allocation11 + $0x220] sm:$0xff]
      %v6992 = vld [vmem:[#allocation11 + $0x228] sm:$0xff]
      %v6993 = vld [vmem:[#allocation11 + $0x230] sm:$0xff]
      %v6994 = vld [vmem:[#allocation11 + $0x238] sm:$0xff]
      %v6995 = vld [vmem:[#allocation11 + $0x240] sm:$0xff]
      %v6996 = vld [vmem:[#allocation11 + $0x248] sm:$0xff]
      %v6997 = vld [vmem:[#allocation11 + $0x250] sm:$0xff]
      %v6998 = vld [vmem:[#allocation11 + $0x258] sm:$0xff]
      %v6999 = vld [vmem:[#allocation11 + $0x260] sm:$0xff]
      %v7000 = vld [vmem:[#allocation11 + $0x268] sm:$0xff]
      %v7001 = vld [vmem:[#allocation11 + $0x270] sm:$0xff]
      %v7002 = vld [vmem:[#allocation11 + $0x278] sm:$0xff]
      %v7003 = vld [vmem:[#allocation11 + $0x280] sm:$0xff]
      %v7004 = vld [vmem:[#allocation11 + $0x288] sm:$0xff]
      %v7005 = vld [vmem:[#allocation11 + $0x290] sm:$0xff]
      %v7006 = vld [vmem:[#allocation11 + $0x298] sm:$0xff]
      %v7007 = vld [vmem:[#allocation11 + $0x2a0] sm:$0xff]
      %v7008 = vld [vmem:[#allocation11 + $0x2a8] sm:$0xff]
      %v7009 = vld [vmem:[#allocation11 + $0x2b0] sm:$0xff]
      %v7010 = vld [vmem:[#allocation11 + $0x2b8] sm:$0xff]
      %v7011 = vld [vmem:[#allocation11 + $0x2c0] sm:$0xff]
      %v7012 = vld [vmem:[#allocation11 + $0x2c8] sm:$0xff]
      %v7013 = vld [vmem:[#allocation11 + $0x2d0] sm:$0xff]
      %v7014 = vld [vmem:[#allocation11 + $0x2d8] sm:$0xff]
      %v7015 = vld [vmem:[#allocation11 + $0x2e0] sm:$0xff]
      %v7016 = vld [vmem:[#allocation11 + $0x2e8] sm:$0xff]
      %v7017 = vld [vmem:[#allocation11 + $0x2f0] sm:$0xff]
      %v7018 = vld [vmem:[#allocation11 + $0x2f8] sm:$0xff]
      %v7019 = vunpack.c.l.bf16 %v6923
      %v7020 = vunpack.c.h.bf16 %v6923
      %v7021 = vunpack.c.l.bf16 %v6924
      %v7022 = vunpack.c.h.bf16 %v6924
      %v7023 = vunpack.c.l.bf16 %v6925
      %v7024 = vunpack.c.h.bf16 %v6925
      %v7025 = vunpack.c.l.bf16 %v6926
      %v7026 = vunpack.c.h.bf16 %v6926
      %v7027 = vunpack.c.l.bf16 %v6927
      %v7028 = vunpack.c.h.bf16 %v6927
      %v7029 = vunpack.c.l.bf16 %v6928
      %v7030 = vunpack.c.h.bf16 %v6928
      %v7031 = vunpack.c.l.bf16 %v6929
      %v7032 = vunpack.c.h.bf16 %v6929
      %v7033 = vunpack.c.l.bf16 %v6930
      %v7034 = vunpack.c.h.bf16 %v6930
      %v7035 = vunpack.c.l.bf16 %v6931
      %v7036 = vunpack.c.h.bf16 %v6931
      %v7037 = vunpack.c.l.bf16 %v6932
      %v7038 = vunpack.c.h.bf16 %v6932
      %v7039 = vunpack.c.l.bf16 %v6933
      %v7040 = vunpack.c.h.bf16 %v6933
      %v7041 = vunpack.c.l.bf16 %v6934
      %v7042 = vunpack.c.h.bf16 %v6934
      %v7043 = vunpack.c.l.bf16 %v6935
      %v7044 = vunpack.c.h.bf16 %v6935
      %v7045 = vunpack.c.l.bf16 %v6936
      %v7046 = vunpack.c.h.bf16 %v6936
      %v7047 = vunpack.c.l.bf16 %v6937
      %v7048 = vunpack.c.h.bf16 %v6937
      %v7049 = vunpack.c.l.bf16 %v6938
      %v7050 = vunpack.c.h.bf16 %v6938
      %v7051 = vunpack.c.l.bf16 %v6939
      %v7052 = vunpack.c.h.bf16 %v6939
      %v7053 = vunpack.c.l.bf16 %v6940
      %v7054 = vunpack.c.h.bf16 %v6940
      %v7055 = vunpack.c.l.bf16 %v6941
      %v7056 = vunpack.c.h.bf16 %v6941
      %v7057 = vunpack.c.l.bf16 %v6942
      %v7058 = vunpack.c.h.bf16 %v6942
      %v7059 = vunpack.c.l.bf16 %v6943
      %v7060 = vunpack.c.h.bf16 %v6943
      %v7061 = vunpack.c.l.bf16 %v6944
      %v7062 = vunpack.c.h.bf16 %v6944
      %v7063 = vunpack.c.l.bf16 %v6945
      %v7064 = vunpack.c.h.bf16 %v6945
      %v7065 = vunpack.c.l.bf16 %v6946
      %v7066 = vunpack.c.h.bf16 %v6946
      %v7067 = vunpack.c.l.bf16 %v6947
      %v7068 = vunpack.c.h.bf16 %v6947
      %v7069 = vunpack.c.l.bf16 %v6948
      %v7070 = vunpack.c.h.bf16 %v6948
      %v7071 = vunpack.c.l.bf16 %v6949
      %v7072 = vunpack.c.h.bf16 %v6949
      %v7073 = vunpack.c.l.bf16 %v6950
      %v7074 = vunpack.c.h.bf16 %v6950
      %v7075 = vunpack.c.l.bf16 %v6951
      %v7076 = vunpack.c.h.bf16 %v6951
      %v7077 = vunpack.c.l.bf16 %v6952
      %v7078 = vunpack.c.h.bf16 %v6952
      %v7079 = vunpack.c.l.bf16 %v6953
      %v7080 = vunpack.c.h.bf16 %v6953
      %v7081 = vunpack.c.l.bf16 %v6954
      %v7082 = vunpack.c.h.bf16 %v6954
      %v7083 = vunpack.c.l.bf16 %v6955
      %v7084 = vunpack.c.h.bf16 %v6955
      %v7085 = vunpack.c.l.bf16 %v6956
      %v7086 = vunpack.c.h.bf16 %v6956
      %v7087 = vunpack.c.l.bf16 %v6957
      %v7088 = vunpack.c.h.bf16 %v6957
      %v7089 = vunpack.c.l.bf16 %v6958
      %v7090 = vunpack.c.h.bf16 %v6958
      %v7091 = vunpack.c.l.bf16 %v6959
      %v7092 = vunpack.c.h.bf16 %v6959
      %v7093 = vunpack.c.l.bf16 %v6960
      %v7094 = vunpack.c.h.bf16 %v6960
      %v7095 = vunpack.c.l.bf16 %v6961
      %v7096 = vunpack.c.h.bf16 %v6961
      %v7097 = vunpack.c.l.bf16 %v6962
      %v7098 = vunpack.c.h.bf16 %v6962
      %v7099 = vunpack.c.l.bf16 %v6963
      %v7100 = vunpack.c.h.bf16 %v6963
      %v7101 = vunpack.c.l.bf16 %v6964
      %v7102 = vunpack.c.h.bf16 %v6964
      %v7103 = vunpack.c.l.bf16 %v6965
      %v7104 = vunpack.c.h.bf16 %v6965
      %v7105 = vunpack.c.l.bf16 %v6966
      %v7106 = vunpack.c.h.bf16 %v6966
      %v7107 = vunpack.c.l.bf16 %v6967
      %v7108 = vunpack.c.h.bf16 %v6967
      %v7109 = vunpack.c.l.bf16 %v6968
      %v7110 = vunpack.c.h.bf16 %v6968
      %v7111 = vunpack.c.l.bf16 %v6969
      %v7112 = vunpack.c.h.bf16 %v6969
      %v7113 = vunpack.c.l.bf16 %v6970
      %v7114 = vunpack.c.h.bf16 %v6970
      %v7115 = vunpack.c.l.bf16 %v6971
      %v7116 = vunpack.c.h.bf16 %v6971
      %v7117 = vunpack.c.l.bf16 %v6972
      %v7118 = vunpack.c.h.bf16 %v6972
      %v7119 = vunpack.c.l.bf16 %v6973
      %v7120 = vunpack.c.h.bf16 %v6973
      %v7121 = vunpack.c.l.bf16 %v6974
      %v7122 = vunpack.c.h.bf16 %v6974
      %v7123 = vunpack.c.l.bf16 %v6975
      %v7124 = vunpack.c.h.bf16 %v6975
      %v7125 = vunpack.c.l.bf16 %v6976
      %v7126 = vunpack.c.h.bf16 %v6976
      %v7127 = vunpack.c.l.bf16 %v6977
      %v7128 = vunpack.c.h.bf16 %v6977
      %v7129 = vunpack.c.l.bf16 %v6978
      %v7130 = vunpack.c.h.bf16 %v6978
      %v7131 = vunpack.c.l.bf16 %v6979
      %v7132 = vunpack.c.h.bf16 %v6979
      %v7133 = vunpack.c.l.bf16 %v6980
      %v7134 = vunpack.c.h.bf16 %v6980
      %v7135 = vunpack.c.l.bf16 %v6981
      %v7136 = vunpack.c.h.bf16 %v6981
      %v7137 = vunpack.c.l.bf16 %v6982
      %v7138 = vunpack.c.h.bf16 %v6982
      %v7139 = vunpack.c.l.bf16 %v6983
      %v7140 = vunpack.c.h.bf16 %v6983
      %v7141 = vunpack.c.l.bf16 %v6984
      %v7142 = vunpack.c.h.bf16 %v6984
      %v7143 = vunpack.c.l.bf16 %v6985
      %v7144 = vunpack.c.h.bf16 %v6985
      %v7145 = vunpack.c.l.bf16 %v6986
      %v7146 = vunpack.c.h.bf16 %v6986
      %v7147 = vunpack.c.l.bf16 %v6987
      %v7148 = vunpack.c.h.bf16 %v6987
      %v7149 = vunpack.c.l.bf16 %v6988
      %v7150 = vunpack.c.h.bf16 %v6988
      %v7151 = vunpack.c.l.bf16 %v6989
      %v7152 = vunpack.c.h.bf16 %v6989
      %v7153 = vunpack.c.l.bf16 %v6990
      %v7154 = vunpack.c.h.bf16 %v6990
      %v7155 = vunpack.c.l.bf16 %v6991
      %v7156 = vunpack.c.h.bf16 %v6991
      %v7157 = vunpack.c.l.bf16 %v6992
      %v7158 = vunpack.c.h.bf16 %v6992
      %v7159 = vunpack.c.l.bf16 %v6993
      %v7160 = vunpack.c.h.bf16 %v6993
      %v7161 = vunpack.c.l.bf16 %v6994
      %v7162 = vunpack.c.h.bf16 %v6994
      %v7163 = vunpack.c.l.bf16 %v6995
      %v7164 = vunpack.c.h.bf16 %v6995
      %v7165 = vunpack.c.l.bf16 %v6996
      %v7166 = vunpack.c.h.bf16 %v6996
      %v7167 = vunpack.c.l.bf16 %v6997
      %v7168 = vunpack.c.h.bf16 %v6997
      %v7169 = vunpack.c.l.bf16 %v6998
      %v7170 = vunpack.c.h.bf16 %v6998
      %v7171 = vunpack.c.l.bf16 %v6999
      %v7172 = vunpack.c.h.bf16 %v6999
      %v7173 = vunpack.c.l.bf16 %v7000
      %v7174 = vunpack.c.h.bf16 %v7000
      %v7175 = vunpack.c.l.bf16 %v7001
      %v7176 = vunpack.c.h.bf16 %v7001
      %v7177 = vunpack.c.l.bf16 %v7002
      %v7178 = vunpack.c.h.bf16 %v7002
      %v7179 = vunpack.c.l.bf16 %v7003
      %v7180 = vunpack.c.h.bf16 %v7003
      %v7181 = vunpack.c.l.bf16 %v7004
      %v7182 = vunpack.c.h.bf16 %v7004
      %v7183 = vunpack.c.l.bf16 %v7005
      %v7184 = vunpack.c.h.bf16 %v7005
      %v7185 = vunpack.c.l.bf16 %v7006
      %v7186 = vunpack.c.h.bf16 %v7006
      %v7187 = vunpack.c.l.bf16 %v7007
      %v7188 = vunpack.c.h.bf16 %v7007
      %v7189 = vunpack.c.l.bf16 %v7008
      %v7190 = vunpack.c.h.bf16 %v7008
      %v7191 = vunpack.c.l.bf16 %v7009
      %v7192 = vunpack.c.h.bf16 %v7009
      %v7193 = vunpack.c.l.bf16 %v7010
      %v7194 = vunpack.c.h.bf16 %v7010
      %v7195 = vunpack.c.l.bf16 %v7011
      %v7196 = vunpack.c.h.bf16 %v7011
      %v7197 = vunpack.c.l.bf16 %v7012
      %v7198 = vunpack.c.h.bf16 %v7012
      %v7199 = vunpack.c.l.bf16 %v7013
      %v7200 = vunpack.c.h.bf16 %v7013
      %v7201 = vunpack.c.l.bf16 %v7014
      %v7202 = vunpack.c.h.bf16 %v7014
      %v7203 = vunpack.c.l.bf16 %v7015
      %v7204 = vunpack.c.h.bf16 %v7015
      %v7205 = vunpack.c.l.bf16 %v7016
      %v7206 = vunpack.c.h.bf16 %v7016
      %v7207 = vunpack.c.l.bf16 %v7017
      %v7208 = vunpack.c.h.bf16 %v7017
      %v7209 = vunpack.c.l.bf16 %v7018
      %v7210 = vunpack.c.h.bf16 %v7018
      %7211 = vmatpush.msra.mxu0 %v7079
      %7212 = vmatpush.msra.mxu0 %v7075
      %7213 = vmatpush.msra.mxu0 %v7071
      %7214 = vmatpush.msra.mxu0 %v7067
      %7215 = vmatpush.msra.mxu0 %v7063
      %7216 = vmatpush.msra.mxu0 %v7059
      %7217 = vmatpush.msra.mxu0 %v7055
      %7218 = vmatpush.msra.mxu0 %v7051
      %7219 = vmatpush.msra.mxu0 %v7047
      %7220 = vmatpush.msra.mxu0 %v7043
      %7221 = vmatpush.msra.mxu0 %v7039
      %7222 = vmatpush.msra.mxu0 %v7035
      %7223 = vmatpush.msra.mxu0 %v7031
      %7224 = vmatpush.msra.mxu0 %v7027
      %7225 = vmatpush.msra.mxu0 %v7023
      %7226 = vmatpush.msra.mxu0 %v7019
      %7227 = vmatmul.f32.gmra.mxu0 %v5875
      %v7228 = vpop.f32.mrf.mxu0
      %v7229 = vadd.f32 0.0, %v7228
      %7230 = vmatmul.f32.gmra.mxu0 %v5877
      %v7231 = vpop.f32.mrf.mxu0
      %v7232 = vadd.f32 0.0, %v7231
      %7233 = vdwg.mxu0
      %7234 = vmatpush.msra.mxu0 %v7143
      %7235 = vmatpush.msra.mxu0 %v7139
      %7236 = vmatpush.msra.mxu0 %v7135
      %7237 = vmatpush.msra.mxu0 %v7131
      %7238 = vmatpush.msra.mxu0 %v7127
      %7239 = vmatpush.msra.mxu0 %v7123
      %7240 = vmatpush.msra.mxu0 %v7119
      %7241 = vmatpush.msra.mxu0 %v7115
      %7242 = vmatpush.msra.mxu0 %v7111
      %7243 = vmatpush.msra.mxu0 %v7107
      %7244 = vmatpush.msra.mxu0 %v7103
      %7245 = vmatpush.msra.mxu0 %v7099
      %7246 = vmatpush.msra.mxu0 %v7095
      %7247 = vmatpush.msra.mxu0 %v7091
      %7248 = vmatpush.msra.mxu0 %v7087
      %7249 = vmatpush.msra.mxu0 %v7083
      %7250 = vmatmul.f32.gmra.mxu0 %v5917
      %v7251 = vpop.f32.mrf.mxu0
      %v7252 = vadd.f32 %v7229, %v7251
      %7253 = vmatmul.f32.gmra.mxu0 %v5919
      %v7254 = vpop.f32.mrf.mxu0
      %v7255 = vadd.f32 %v7232, %v7254
      %7256 = vdwg.mxu0
      %7257 = vmatpush.msra.mxu0 %v7207
      %7258 = vmatpush.msra.mxu0 %v7203
      %7259 = vmatpush.msra.mxu0 %v7199
      %7260 = vmatpush.msra.mxu0 %v7195
      %7261 = vmatpush.msra.mxu0 %v7191
      %7262 = vmatpush.msra.mxu0 %v7187
      %7263 = vmatpush.msra.mxu0 %v7183
      %7264 = vmatpush.msra.mxu0 %v7179
      %7265 = vmatpush.msra.mxu0 %v7175
      %7266 = vmatpush.msra.mxu0 %v7171
      %7267 = vmatpush.msra.mxu0 %v7167
      %7268 = vmatpush.msra.mxu0 %v7163
      %7269 = vmatpush.msra.mxu0 %v7159
      %7270 = vmatpush.msra.mxu0 %v7155
      %7271 = vmatpush.msra.mxu0 %v7151
      %7272 = vmatpush.msra.mxu0 %v7147
      %7273 = vmatmul.f32.gmra.mxu0 %v5959
      %v7274 = vpop.f32.mrf.mxu0
      %v7275 = vadd.f32 %v7252, %v7274
      %7276 = vmatmul.f32.gmra.mxu0 %v5961
      %v7277 = vpop.f32.mrf.mxu0
      %v7278 = vadd.f32 %v7255, %v7277
      %7279 = vdwg.mxu0
      %7280 = vmatpush.msra.mxu0 %v7080
      %7281 = vmatpush.msra.mxu0 %v7076
      %7282 = vmatpush.msra.mxu0 %v7072
      %7283 = vmatpush.msra.mxu0 %v7068
      %7284 = vmatpush.msra.mxu0 %v7064
      %7285 = vmatpush.msra.mxu0 %v7060
      %7286 = vmatpush.msra.mxu0 %v7056
      %7287 = vmatpush.msra.mxu0 %v7052
      %7288 = vmatpush.msra.mxu0 %v7048
      %7289 = vmatpush.msra.mxu0 %v7044
      %7290 = vmatpush.msra.mxu0 %v7040
      %7291 = vmatpush.msra.mxu0 %v7036
      %7292 = vmatpush.msra.mxu0 %v7032
      %7293 = vmatpush.msra.mxu0 %v7028
      %7294 = vmatpush.msra.mxu0 %v7024
      %7295 = vmatpush.msra.mxu0 %v7020
      %7296 = vmatmul.f32.gmra.mxu0 %v5875
      %v7297 = vpop.f32.mrf.mxu0
      %v7298 = vadd.f32 0.0, %v7297
      %7299 = vmatmul.f32.gmra.mxu0 %v5877
      %v7300 = vpop.f32.mrf.mxu0
      %v7301 = vadd.f32 0.0, %v7300
      %7302 = vdwg.mxu0
      %7303 = vmatpush.msra.mxu0 %v7144
      %7304 = vmatpush.msra.mxu0 %v7140
      %7305 = vmatpush.msra.mxu0 %v7136
      %7306 = vmatpush.msra.mxu0 %v7132
      %7307 = vmatpush.msra.mxu0 %v7128
      %7308 = vmatpush.msra.mxu0 %v7124
      %7309 = vmatpush.msra.mxu0 %v7120
      %7310 = vmatpush.msra.mxu0 %v7116
      %7311 = vmatpush.msra.mxu0 %v7112
      %7312 = vmatpush.msra.mxu0 %v7108
      %7313 = vmatpush.msra.mxu0 %v7104
      %7314 = vmatpush.msra.mxu0 %v7100
      %7315 = vmatpush.msra.mxu0 %v7096
      %7316 = vmatpush.msra.mxu0 %v7092
      %7317 = vmatpush.msra.mxu0 %v7088
      %7318 = vmatpush.msra.mxu0 %v7084
      %7319 = vmatmul.f32.gmra.mxu0 %v5917
      %v7320 = vpop.f32.mrf.mxu0
      %v7321 = vadd.f32 %v7298, %v7320
      %7322 = vmatmul.f32.gmra.mxu0 %v5919
      %v7323 = vpop.f32.mrf.mxu0
      %v7324 = vadd.f32 %v7301, %v7323
      %7325 = vdwg.mxu0
      %7326 = vmatpush.msra.mxu0 %v7208
      %7327 = vmatpush.msra.mxu0 %v7204
      %7328 = vmatpush.msra.mxu0 %v7200
      %7329 = vmatpush.msra.mxu0 %v7196
      %7330 = vmatpush.msra.mxu0 %v7192
      %7331 = vmatpush.msra.mxu0 %v7188
      %7332 = vmatpush.msra.mxu0 %v7184
      %7333 = vmatpush.msra.mxu0 %v7180
      %7334 = vmatpush.msra.mxu0 %v7176
      %7335 = vmatpush.msra.mxu0 %v7172
      %7336 = vmatpush.msra.mxu0 %v7168
      %7337 = vmatpush.msra.mxu0 %v7164
      %7338 = vmatpush.msra.mxu0 %v7160
      %7339 = vmatpush.msra.mxu0 %v7156
      %7340 = vmatpush.msra.mxu0 %v7152
      %7341 = vmatpush.msra.mxu0 %v7148
      %7342 = vmatmul.f32.gmra.mxu0 %v5959
      %v7343 = vpop.f32.mrf.mxu0
      %v7344 = vadd.f32 %v7321, %v7343
      %7345 = vmatmul.f32.gmra.mxu0 %v5961
      %v7346 = vpop.f32.mrf.mxu0
      %v7347 = vadd.f32 %v7324, %v7346
      %7348 = vdwg.mxu0
      %7349 = vmatpush.msra.mxu0 %v7081
      %7350 = vmatpush.msra.mxu0 %v7077
      %7351 = vmatpush.msra.mxu0 %v7073
      %7352 = vmatpush.msra.mxu0 %v7069
      %7353 = vmatpush.msra.mxu0 %v7065
      %7354 = vmatpush.msra.mxu0 %v7061
      %7355 = vmatpush.msra.mxu0 %v7057
      %7356 = vmatpush.msra.mxu0 %v7053
      %7357 = vmatpush.msra.mxu0 %v7049
      %7358 = vmatpush.msra.mxu0 %v7045
      %7359 = vmatpush.msra.mxu0 %v7041
      %7360 = vmatpush.msra.mxu0 %v7037
      %7361 = vmatpush.msra.mxu0 %v7033
      %7362 = vmatpush.msra.mxu0 %v7029
      %7363 = vmatpush.msra.mxu0 %v7025
      %7364 = vmatpush.msra.mxu0 %v7021
      %7365 = vmatmul.f32.gmra.mxu0 %v5875
      %v7366 = vpop.f32.mrf.mxu0
      %v7367 = vadd.f32 0.0, %v7366
      %7368 = vmatmul.f32.gmra.mxu0 %v5877
      %v7369 = vpop.f32.mrf.mxu0
      %v7370 = vadd.f32 0.0, %v7369
      %7371 = vdwg.mxu0
      %7372 = vmatpush.msra.mxu0 %v7145
      %7373 = vmatpush.msra.mxu0 %v7141
      %7374 = vmatpush.msra.mxu0 %v7137
      %7375 = vmatpush.msra.mxu0 %v7133
      %7376 = vmatpush.msra.mxu0 %v7129
      %7377 = vmatpush.msra.mxu0 %v7125
      %7378 = vmatpush.msra.mxu0 %v7121
      %7379 = vmatpush.msra.mxu0 %v7117
      %7380 = vmatpush.msra.mxu0 %v7113
      %7381 = vmatpush.msra.mxu0 %v7109
      %7382 = vmatpush.msra.mxu0 %v7105
      %7383 = vmatpush.msra.mxu0 %v7101
      %7384 = vmatpush.msra.mxu0 %v7097
      %7385 = vmatpush.msra.mxu0 %v7093
      %7386 = vmatpush.msra.mxu0 %v7089
      %7387 = vmatpush.msra.mxu0 %v7085
      %7388 = vmatmul.f32.gmra.mxu0 %v5917
      %v7389 = vpop.f32.mrf.mxu0
      %v7390 = vadd.f32 %v7367, %v7389
      %7391 = vmatmul.f32.gmra.mxu0 %v5919
      %v7392 = vpop.f32.mrf.mxu0
      %v7393 = vadd.f32 %v7370, %v7392
      %7394 = vdwg.mxu0
      %7395 = vmatpush.msra.mxu0 %v7209
      %7396 = vmatpush.msra.mxu0 %v7205
      %7397 = vmatpush.msra.mxu0 %v7201
      %7398 = vmatpush.msra.mxu0 %v7197
      %7399 = vmatpush.msra.mxu0 %v7193
      %7400 = vmatpush.msra.mxu0 %v7189
      %7401 = vmatpush.msra.mxu0 %v7185
      %7402 = vmatpush.msra.mxu0 %v7181
      %7403 = vmatpush.msra.mxu0 %v7177
      %7404 = vmatpush.msra.mxu0 %v7173
      %7405 = vmatpush.msra.mxu0 %v7169
      %7406 = vmatpush.msra.mxu0 %v7165
      %7407 = vmatpush.msra.mxu0 %v7161
      %7408 = vmatpush.msra.mxu0 %v7157
      %7409 = vmatpush.msra.mxu0 %v7153
      %7410 = vmatpush.msra.mxu0 %v7149
      %7411 = vmatmul.f32.gmra.mxu0 %v5959
      %v7412 = vpop.f32.mrf.mxu0
      %v7413 = vadd.f32 %v7390, %v7412
      %7414 = vmatmul.f32.gmra.mxu0 %v5961
      %v7415 = vpop.f32.mrf.mxu0
      %v7416 = vadd.f32 %v7393, %v7415
      %7417 = vdwg.mxu0
      %7418 = vmatpush.msra.mxu0 %v7082
      %7419 = vmatpush.msra.mxu0 %v7078
      %7420 = vmatpush.msra.mxu0 %v7074
      %7421 = vmatpush.msra.mxu0 %v7070
      %7422 = vmatpush.msra.mxu0 %v7066
      %7423 = vmatpush.msra.mxu0 %v7062
      %7424 = vmatpush.msra.mxu0 %v7058
      %7425 = vmatpush.msra.mxu0 %v7054
      %7426 = vmatpush.msra.mxu0 %v7050
      %7427 = vmatpush.msra.mxu0 %v7046
      %7428 = vmatpush.msra.mxu0 %v7042
      %7429 = vmatpush.msra.mxu0 %v7038
      %7430 = vmatpush.msra.mxu0 %v7034
      %7431 = vmatpush.msra.mxu0 %v7030
      %7432 = vmatpush.msra.mxu0 %v7026
      %7433 = vmatpush.msra.mxu0 %v7022
      %7434 = vmatmul.f32.gmra.mxu0 %v5875
      %v7435 = vpop.f32.mrf.mxu0
      %v7436 = vadd.f32 0.0, %v7435
      %7437 = vmatmul.f32.gmra.mxu0 %v5877
      %v7438 = vpop.f32.mrf.mxu0
      %v7439 = vadd.f32 0.0, %v7438
      %7440 = vdwg.mxu0
      %7441 = vmatpush.msra.mxu0 %v7146
      %7442 = vmatpush.msra.mxu0 %v7142
      %7443 = vmatpush.msra.mxu0 %v7138
      %7444 = vmatpush.msra.mxu0 %v7134
      %7445 = vmatpush.msra.mxu0 %v7130
      %7446 = vmatpush.msra.mxu0 %v7126
      %7447 = vmatpush.msra.mxu0 %v7122
      %7448 = vmatpush.msra.mxu0 %v7118
      %7449 = vmatpush.msra.mxu0 %v7114
      %7450 = vmatpush.msra.mxu0 %v7110
      %7451 = vmatpush.msra.mxu0 %v7106
      %7452 = vmatpush.msra.mxu0 %v7102
      %7453 = vmatpush.msra.mxu0 %v7098
      %7454 = vmatpush.msra.mxu0 %v7094
      %7455 = vmatpush.msra.mxu0 %v7090
      %7456 = vmatpush.msra.mxu0 %v7086
      %7457 = vmatmul.f32.gmra.mxu0 %v5917
      %v7458 = vpop.f32.mrf.mxu0
      %v7459 = vadd.f32 %v7436, %v7458
      %7460 = vmatmul.f32.gmra.mxu0 %v5919
      %v7461 = vpop.f32.mrf.mxu0
      %v7462 = vadd.f32 %v7439, %v7461
      %7463 = vdwg.mxu0
      %7464 = vmatpush.msra.mxu0 %v7210
      %7465 = vmatpush.msra.mxu0 %v7206
      %7466 = vmatpush.msra.mxu0 %v7202
      %7467 = vmatpush.msra.mxu0 %v7198
      %7468 = vmatpush.msra.mxu0 %v7194
      %7469 = vmatpush.msra.mxu0 %v7190
      %7470 = vmatpush.msra.mxu0 %v7186
      %7471 = vmatpush.msra.mxu0 %v7182
      %7472 = vmatpush.msra.mxu0 %v7178
      %7473 = vmatpush.msra.mxu0 %v7174
      %7474 = vmatpush.msra.mxu0 %v7170
      %7475 = vmatpush.msra.mxu0 %v7166
      %7476 = vmatpush.msra.mxu0 %v7162
      %7477 = vmatpush.msra.mxu0 %v7158
      %7478 = vmatpush.msra.mxu0 %v7154
      %7479 = vmatpush.msra.mxu0 %v7150
      %7480 = vmatmul.f32.gmra.mxu0 %v5959
      %v7481 = vpop.f32.mrf.mxu0
      %v7482 = vadd.f32 %v7459, %v7481
      %7483 = vmatmul.f32.gmra.mxu0 %v5961
      %v7484 = vpop.f32.mrf.mxu0
      %v7485 = vadd.f32 %v7462, %v7484
      %7486 = vdwg.mxu0
      %7487 = vmatpush.msra.mxu0 %v6343
      %7488 = vmatpush.msra.mxu0 %v6339
      %7489 = vmatpush.msra.mxu0 %v6335
      %7490 = vmatpush.msra.mxu0 %v6331
      %7491 = vmatpush.msra.mxu0 %v6327
      %7492 = vmatpush.msra.mxu0 %v6323
      %7493 = vmatpush.msra.mxu0 %v6319
      %7494 = vmatpush.msra.mxu0 %v6315
      %7495 = vmatpush.msra.mxu0 %v6311
      %7496 = vmatpush.msra.mxu0 %v6307
      %7497 = vmatpush.msra.mxu0 %v6303
      %7498 = vmatpush.msra.mxu0 %v6299
      %7499 = vmatpush.msra.mxu0 %v6295
      %7500 = vmatpush.msra.mxu0 %v6291
      %7501 = vmatpush.msra.mxu0 %v6287
      %7502 = vmatpush.msra.mxu0 %v6283
      %7503 = vmatmul.f32.gmra.mxu0 %v5309
      %v7504 = vpop.f32.mrf.mxu0
      %v7505 = vadd.f32 %v7275, %v7504
      %7506 = vmatmul.f32.gmra.mxu0 %v5319
      %v7507 = vpop.f32.mrf.mxu0
      %v7508 = vadd.f32 %v7278, %v7507
      %7509 = vdwg.mxu0
      %7510 = vmatpush.msra.mxu0 %v6407
      %7511 = vmatpush.msra.mxu0 %v6403
      %7512 = vmatpush.msra.mxu0 %v6399
      %7513 = vmatpush.msra.mxu0 %v6395
      %7514 = vmatpush.msra.mxu0 %v6391
      %7515 = vmatpush.msra.mxu0 %v6387
      %7516 = vmatpush.msra.mxu0 %v6383
      %7517 = vmatpush.msra.mxu0 %v6379
      %7518 = vmatpush.msra.mxu0 %v6375
      %7519 = vmatpush.msra.mxu0 %v6371
      %7520 = vmatpush.msra.mxu0 %v6367
      %7521 = vmatpush.msra.mxu0 %v6363
      %7522 = vmatpush.msra.mxu0 %v6359
      %7523 = vmatpush.msra.mxu0 %v6355
      %7524 = vmatpush.msra.mxu0 %v6351
      %7525 = vmatpush.msra.mxu0 %v6347
      %7526 = vmatmul.f32.gmra.mxu0 %v5310
      %v7527 = vpop.f32.mrf.mxu0
      %v7528 = vadd.f32 %v7505, %v7527
      %7529 = vmatmul.f32.gmra.mxu0 %v5320
      %v7530 = vpop.f32.mrf.mxu0
      %v7531 = vadd.f32 %v7508, %v7530
      %7532 = vdwg.mxu0
      %7533 = vmatpush.msra.mxu0 %v6471
      %7534 = vmatpush.msra.mxu0 %v6467
      %7535 = vmatpush.msra.mxu0 %v6463
      %7536 = vmatpush.msra.mxu0 %v6459
      %7537 = vmatpush.msra.mxu0 %v6455
      %7538 = vmatpush.msra.mxu0 %v6451
      %7539 = vmatpush.msra.mxu0 %v6447
      %7540 = vmatpush.msra.mxu0 %v6443
      %7541 = vmatpush.msra.mxu0 %v6439
      %7542 = vmatpush.msra.mxu0 %v6435
      %7543 = vmatpush.msra.mxu0 %v6431
      %7544 = vmatpush.msra.mxu0 %v6427
      %7545 = vmatpush.msra.mxu0 %v6423
      %7546 = vmatpush.msra.mxu0 %v6419
      %7547 = vmatpush.msra.mxu0 %v6415
      %7548 = vmatpush.msra.mxu0 %v6411
      %7549 = vmatmul.f32.gmra.mxu0 %v5311
      %v7550 = vpop.f32.mrf.mxu0
      %v7551 = vadd.f32 %v7528, %v7550
      %7552 = vmatmul.f32.gmra.mxu0 %v5321
      %v7553 = vpop.f32.mrf.mxu0
      %v7554 = vadd.f32 %v7531, %v7553
      %7555 = vdwg.mxu0
      %7556 = vmatpush.msra.mxu0 %v6535
      %7557 = vmatpush.msra.mxu0 %v6531
      %7558 = vmatpush.msra.mxu0 %v6527
      %7559 = vmatpush.msra.mxu0 %v6523
      %7560 = vmatpush.msra.mxu0 %v6519
      %7561 = vmatpush.msra.mxu0 %v6515
      %7562 = vmatpush.msra.mxu0 %v6511
      %7563 = vmatpush.msra.mxu0 %v6507
      %7564 = vmatpush.msra.mxu0 %v6503
      %7565 = vmatpush.msra.mxu0 %v6499
      %7566 = vmatpush.msra.mxu0 %v6495
      %7567 = vmatpush.msra.mxu0 %v6491
      %7568 = vmatpush.msra.mxu0 %v6487
      %7569 = vmatpush.msra.mxu0 %v6483
      %7570 = vmatpush.msra.mxu0 %v6479
      %7571 = vmatpush.msra.mxu0 %v6475
      %7572 = vmatmul.f32.gmra.mxu0 %v5312
      %v7573 = vpop.f32.mrf.mxu0
      %v7574 = vadd.f32 %v7551, %v7573
      %7575 = vmatmul.f32.gmra.mxu0 %v5322
      %v7576 = vpop.f32.mrf.mxu0
      %v7577 = vadd.f32 %v7554, %v7576
      %7578 = vdwg.mxu0
      %7579 = vmatpush.msra.mxu0 %v6599
      %7580 = vmatpush.msra.mxu0 %v6595
      %7581 = vmatpush.msra.mxu0 %v6591
      %7582 = vmatpush.msra.mxu0 %v6587
      %7583 = vmatpush.msra.mxu0 %v6583
      %7584 = vmatpush.msra.mxu0 %v6579
      %7585 = vmatpush.msra.mxu0 %v6575
      %7586 = vmatpush.msra.mxu0 %v6571
      %7587 = vmatpush.msra.mxu0 %v6567
      %7588 = vmatpush.msra.mxu0 %v6563
      %7589 = vmatpush.msra.mxu0 %v6559
      %7590 = vmatpush.msra.mxu0 %v6555
      %7591 = vmatpush.msra.mxu0 %v6551
      %7592 = vmatpush.msra.mxu0 %v6547
      %7593 = vmatpush.msra.mxu0 %v6543
      %7594 = vmatpush.msra.mxu0 %v6539
      %7595 = vmatmul.f32.gmra.mxu0 %v5313
      %v7596 = vpop.f32.mrf.mxu0
      %v7597 = vadd.f32 %v7574, %v7596
      %7598 = vmatmul.f32.gmra.mxu0 %v5323
      %v7599 = vpop.f32.mrf.mxu0
      %v7600 = vadd.f32 %v7577, %v7599
      %7601 = vdwg.mxu0
      %7602 = vmatpush.msra.mxu0 %v6663
      %7603 = vmatpush.msra.mxu0 %v6659
      %7604 = vmatpush.msra.mxu0 %v6655
      %7605 = vmatpush.msra.mxu0 %v6651
      %7606 = vmatpush.msra.mxu0 %v6647
      %7607 = vmatpush.msra.mxu0 %v6643
      %7608 = vmatpush.msra.mxu0 %v6639
      %7609 = vmatpush.msra.mxu0 %v6635
      %7610 = vmatpush.msra.mxu0 %v6631
      %7611 = vmatpush.msra.mxu0 %v6627
      %7612 = vmatpush.msra.mxu0 %v6623
      %7613 = vmatpush.msra.mxu0 %v6619
      %7614 = vmatpush.msra.mxu0 %v6615
      %7615 = vmatpush.msra.mxu0 %v6611
      %7616 = vmatpush.msra.mxu0 %v6607
      %7617 = vmatpush.msra.mxu0 %v6603
      %7618 = vmatmul.f32.gmra.mxu0 %v5314
      %v7619 = vpop.f32.mrf.mxu0
      %v7620 = vadd.f32 %v7597, %v7619
      %7621 = vmatmul.f32.gmra.mxu0 %v5324
      %v7622 = vpop.f32.mrf.mxu0
      %v7623 = vadd.f32 %v7600, %v7622
      %7624 = vdwg.mxu0
      %7625 = vmatpush.msra.mxu0 %v6727
      %7626 = vmatpush.msra.mxu0 %v6723
      %7627 = vmatpush.msra.mxu0 %v6719
      %7628 = vmatpush.msra.mxu0 %v6715
      %7629 = vmatpush.msra.mxu0 %v6711
      %7630 = vmatpush.msra.mxu0 %v6707
      %7631 = vmatpush.msra.mxu0 %v6703
      %7632 = vmatpush.msra.mxu0 %v6699
      %7633 = vmatpush.msra.mxu0 %v6695
      %7634 = vmatpush.msra.mxu0 %v6691
      %7635 = vmatpush.msra.mxu0 %v6687
      %7636 = vmatpush.msra.mxu0 %v6683
      %7637 = vmatpush.msra.mxu0 %v6679
      %7638 = vmatpush.msra.mxu0 %v6675
      %7639 = vmatpush.msra.mxu0 %v6671
      %7640 = vmatpush.msra.mxu0 %v6667
      %7641 = vmatmul.f32.gmra.mxu0 %v5315
      %v7642 = vpop.f32.mrf.mxu0
      %v7643 = vadd.f32 %v7620, %v7642
      %7644 = vmatmul.f32.gmra.mxu0 %v5325
      %v7645 = vpop.f32.mrf.mxu0
      %v7646 = vadd.f32 %v7623, %v7645
      %7647 = vdwg.mxu0
      %7648 = vmatpush.msra.mxu0 %v6791
      %7649 = vmatpush.msra.mxu0 %v6787
      %7650 = vmatpush.msra.mxu0 %v6783
      %7651 = vmatpush.msra.mxu0 %v6779
      %7652 = vmatpush.msra.mxu0 %v6775
      %7653 = vmatpush.msra.mxu0 %v6771
      %7654 = vmatpush.msra.mxu0 %v6767
      %7655 = vmatpush.msra.mxu0 %v6763
      %7656 = vmatpush.msra.mxu0 %v6759
      %7657 = vmatpush.msra.mxu0 %v6755
      %7658 = vmatpush.msra.mxu0 %v6751
      %7659 = vmatpush.msra.mxu0 %v6747
      %7660 = vmatpush.msra.mxu0 %v6743
      %7661 = vmatpush.msra.mxu0 %v6739
      %7662 = vmatpush.msra.mxu0 %v6735
      %7663 = vmatpush.msra.mxu0 %v6731
      %7664 = vmatmul.f32.gmra.mxu0 %v5316
      %v7665 = vpop.f32.mrf.mxu0
      %v7666 = vadd.f32 %v7643, %v7665
      %7667 = vmatmul.f32.gmra.mxu0 %v5326
      %v7668 = vpop.f32.mrf.mxu0
      %v7669 = vadd.f32 %v7646, %v7668
      %7670 = vdwg.mxu0
      %7671 = vmatpush.msra.mxu0 %v6855
      %7672 = vmatpush.msra.mxu0 %v6851
      %7673 = vmatpush.msra.mxu0 %v6847
      %7674 = vmatpush.msra.mxu0 %v6843
      %7675 = vmatpush.msra.mxu0 %v6839
      %7676 = vmatpush.msra.mxu0 %v6835
      %7677 = vmatpush.msra.mxu0 %v6831
      %7678 = vmatpush.msra.mxu0 %v6827
      %7679 = vmatpush.msra.mxu0 %v6823
      %7680 = vmatpush.msra.mxu0 %v6819
      %7681 = vmatpush.msra.mxu0 %v6815
      %7682 = vmatpush.msra.mxu0 %v6811
      %7683 = vmatpush.msra.mxu0 %v6807
      %7684 = vmatpush.msra.mxu0 %v6803
      %7685 = vmatpush.msra.mxu0 %v6799
      %7686 = vmatpush.msra.mxu0 %v6795
      %7687 = vmatmul.f32.gmra.mxu0 %v5317
      %v7688 = vpop.f32.mrf.mxu0
      %v7689 = vadd.f32 %v7666, %v7688
      %7690 = vmatmul.f32.gmra.mxu0 %v5327
      %v7691 = vpop.f32.mrf.mxu0
      %v7692 = vadd.f32 %v7669, %v7691
      %7693 = vdwg.mxu0
      %7694 = vmatpush.msra.mxu0 %v6919
      %7695 = vmatpush.msra.mxu0 %v6915
      %7696 = vmatpush.msra.mxu0 %v6911
      %7697 = vmatpush.msra.mxu0 %v6907
      %7698 = vmatpush.msra.mxu0 %v6903
      %7699 = vmatpush.msra.mxu0 %v6899
      %7700 = vmatpush.msra.mxu0 %v6895
      %7701 = vmatpush.msra.mxu0 %v6891
      %7702 = vmatpush.msra.mxu0 %v6887
      %7703 = vmatpush.msra.mxu0 %v6883
      %7704 = vmatpush.msra.mxu0 %v6879
      %7705 = vmatpush.msra.mxu0 %v6875
      %7706 = vmatpush.msra.mxu0 %v6871
      %7707 = vmatpush.msra.mxu0 %v6867
      %7708 = vmatpush.msra.mxu0 %v6863
      %7709 = vmatpush.msra.mxu0 %v6859
      %7710 = vmatmul.f32.gmra.mxu0 %v5318
      %v7711 = vpop.f32.mrf.mxu0
      %v7712 = vadd.f32 %v7689, %v7711
      %7713 = vmatmul.f32.gmra.mxu0 %v5328
      %v7714 = vpop.f32.mrf.mxu0
      %v7715 = vadd.f32 %v7692, %v7714
      %7716 = vdwg.mxu0
      %7717 = vmatpush.msra.mxu0 %v6344
      %7718 = vmatpush.msra.mxu0 %v6340
      %7719 = vmatpush.msra.mxu0 %v6336
      %7720 = vmatpush.msra.mxu0 %v6332
      %7721 = vmatpush.msra.mxu0 %v6328
      %7722 = vmatpush.msra.mxu0 %v6324
      %7723 = vmatpush.msra.mxu0 %v6320
      %7724 = vmatpush.msra.mxu0 %v6316
      %7725 = vmatpush.msra.mxu0 %v6312
      %7726 = vmatpush.msra.mxu0 %v6308
      %7727 = vmatpush.msra.mxu0 %v6304
      %7728 = vmatpush.msra.mxu0 %v6300
      %7729 = vmatpush.msra.mxu0 %v6296
      %7730 = vmatpush.msra.mxu0 %v6292
      %7731 = vmatpush.msra.mxu0 %v6288
      %7732 = vmatpush.msra.mxu0 %v6284
      %7733 = vmatmul.f32.gmra.mxu0 %v5309
      %v7734 = vpop.f32.mrf.mxu0
      %v7735 = vadd.f32 %v7344, %v7734
      %7736 = vmatmul.f32.gmra.mxu0 %v5319
      %v7737 = vpop.f32.mrf.mxu0
      %v7738 = vadd.f32 %v7347, %v7737
      %7739 = vdwg.mxu0
      %7740 = vmatpush.msra.mxu0 %v6408
      %7741 = vmatpush.msra.mxu0 %v6404
      %7742 = vmatpush.msra.mxu0 %v6400
      %7743 = vmatpush.msra.mxu0 %v6396
      %7744 = vmatpush.msra.mxu0 %v6392
      %7745 = vmatpush.msra.mxu0 %v6388
      %7746 = vmatpush.msra.mxu0 %v6384
      %7747 = vmatpush.msra.mxu0 %v6380
      %7748 = vmatpush.msra.mxu0 %v6376
      %7749 = vmatpush.msra.mxu0 %v6372
      %7750 = vmatpush.msra.mxu0 %v6368
      %7751 = vmatpush.msra.mxu0 %v6364
      %7752 = vmatpush.msra.mxu0 %v6360
      %7753 = vmatpush.msra.mxu0 %v6356
      %7754 = vmatpush.msra.mxu0 %v6352
      %7755 = vmatpush.msra.mxu0 %v6348
      %7756 = vmatmul.f32.gmra.mxu0 %v5310
      %v7757 = vpop.f32.mrf.mxu0
      %v7758 = vadd.f32 %v7735, %v7757
      %7759 = vmatmul.f32.gmra.mxu0 %v5320
      %v7760 = vpop.f32.mrf.mxu0
      %v7761 = vadd.f32 %v7738, %v7760
      %7762 = vdwg.mxu0
      %7763 = vmatpush.msra.mxu0 %v6472
      %7764 = vmatpush.msra.mxu0 %v6468
      %7765 = vmatpush.msra.mxu0 %v6464
      %7766 = vmatpush.msra.mxu0 %v6460
      %7767 = vmatpush.msra.mxu0 %v6456
      %7768 = vmatpush.msra.mxu0 %v6452
      %7769 = vmatpush.msra.mxu0 %v6448
      %7770 = vmatpush.msra.mxu0 %v6444
      %7771 = vmatpush.msra.mxu0 %v6440
      %7772 = vmatpush.msra.mxu0 %v6436
      %7773 = vmatpush.msra.mxu0 %v6432
      %7774 = vmatpush.msra.mxu0 %v6428
      %7775 = vmatpush.msra.mxu0 %v6424
      %7776 = vmatpush.msra.mxu0 %v6420
      %7777 = vmatpush.msra.mxu0 %v6416
      %7778 = vmatpush.msra.mxu0 %v6412
      %7779 = vmatmul.f32.gmra.mxu0 %v5311
      %v7780 = vpop.f32.mrf.mxu0
      %v7781 = vadd.f32 %v7758, %v7780
      %7782 = vmatmul.f32.gmra.mxu0 %v5321
      %v7783 = vpop.f32.mrf.mxu0
      %v7784 = vadd.f32 %v7761, %v7783
      %7785 = vdwg.mxu0
      %7786 = vmatpush.msra.mxu0 %v6536
      %7787 = vmatpush.msra.mxu0 %v6532
      %7788 = vmatpush.msra.mxu0 %v6528
      %7789 = vmatpush.msra.mxu0 %v6524
      %7790 = vmatpush.msra.mxu0 %v6520
      %7791 = vmatpush.msra.mxu0 %v6516
      %7792 = vmatpush.msra.mxu0 %v6512
      %7793 = vmatpush.msra.mxu0 %v6508
      %7794 = vmatpush.msra.mxu0 %v6504
      %7795 = vmatpush.msra.mxu0 %v6500
      %7796 = vmatpush.msra.mxu0 %v6496
      %7797 = vmatpush.msra.mxu0 %v6492
      %7798 = vmatpush.msra.mxu0 %v6488
      %7799 = vmatpush.msra.mxu0 %v6484
      %7800 = vmatpush.msra.mxu0 %v6480
      %7801 = vmatpush.msra.mxu0 %v6476
      %7802 = vmatmul.f32.gmra.mxu0 %v5312
      %v7803 = vpop.f32.mrf.mxu0
      %v7804 = vadd.f32 %v7781, %v7803
      %7805 = vmatmul.f32.gmra.mxu0 %v5322
      %v7806 = vpop.f32.mrf.mxu0
      %v7807 = vadd.f32 %v7784, %v7806
      %7808 = vdwg.mxu0
      %7809 = vmatpush.msra.mxu0 %v6600
      %7810 = vmatpush.msra.mxu0 %v6596
      %7811 = vmatpush.msra.mxu0 %v6592
      %7812 = vmatpush.msra.mxu0 %v6588
      %7813 = vmatpush.msra.mxu0 %v6584
      %7814 = vmatpush.msra.mxu0 %v6580
      %7815 = vmatpush.msra.mxu0 %v6576
      %7816 = vmatpush.msra.mxu0 %v6572
      %7817 = vmatpush.msra.mxu0 %v6568
      %7818 = vmatpush.msra.mxu0 %v6564
      %7819 = vmatpush.msra.mxu0 %v6560
      %7820 = vmatpush.msra.mxu0 %v6556
      %7821 = vmatpush.msra.mxu0 %v6552
      %7822 = vmatpush.msra.mxu0 %v6548
      %7823 = vmatpush.msra.mxu0 %v6544
      %7824 = vmatpush.msra.mxu0 %v6540
      %7825 = vmatmul.f32.gmra.mxu0 %v5313
      %v7826 = vpop.f32.mrf.mxu0
      %v7827 = vadd.f32 %v7804, %v7826
      %7828 = vmatmul.f32.gmra.mxu0 %v5323
      %v7829 = vpop.f32.mrf.mxu0
      %v7830 = vadd.f32 %v7807, %v7829
      %7831 = vdwg.mxu0
      %7832 = vmatpush.msra.mxu0 %v6664
      %7833 = vmatpush.msra.mxu0 %v6660
      %7834 = vmatpush.msra.mxu0 %v6656
      %7835 = vmatpush.msra.mxu0 %v6652
      %7836 = vmatpush.msra.mxu0 %v6648
      %7837 = vmatpush.msra.mxu0 %v6644
      %7838 = vmatpush.msra.mxu0 %v6640
      %7839 = vmatpush.msra.mxu0 %v6636
      %7840 = vmatpush.msra.mxu0 %v6632
      %7841 = vmatpush.msra.mxu0 %v6628
      %7842 = vmatpush.msra.mxu0 %v6624
      %7843 = vmatpush.msra.mxu0 %v6620
      %7844 = vmatpush.msra.mxu0 %v6616
      %7845 = vmatpush.msra.mxu0 %v6612
      %7846 = vmatpush.msra.mxu0 %v6608
      %7847 = vmatpush.msra.mxu0 %v6604
      %7848 = vmatmul.f32.gmra.mxu0 %v5314
      %v7849 = vpop.f32.mrf.mxu0
      %v7850 = vadd.f32 %v7827, %v7849
      %7851 = vmatmul.f32.gmra.mxu0 %v5324
      %v7852 = vpop.f32.mrf.mxu0
      %v7853 = vadd.f32 %v7830, %v7852
      %7854 = vdwg.mxu0
      %7855 = vmatpush.msra.mxu0 %v6728
      %7856 = vmatpush.msra.mxu0 %v6724
      %7857 = vmatpush.msra.mxu0 %v6720
      %7858 = vmatpush.msra.mxu0 %v6716
      %7859 = vmatpush.msra.mxu0 %v6712
      %7860 = vmatpush.msra.mxu0 %v6708
      %7861 = vmatpush.msra.mxu0 %v6704
      %7862 = vmatpush.msra.mxu0 %v6700
      %7863 = vmatpush.msra.mxu0 %v6696
      %7864 = vmatpush.msra.mxu0 %v6692
      %7865 = vmatpush.msra.mxu0 %v6688
      %7866 = vmatpush.msra.mxu0 %v6684
      %7867 = vmatpush.msra.mxu0 %v6680
      %7868 = vmatpush.msra.mxu0 %v6676
      %7869 = vmatpush.msra.mxu0 %v6672
      %7870 = vmatpush.msra.mxu0 %v6668
      %7871 = vmatmul.f32.gmra.mxu0 %v5315
      %v7872 = vpop.f32.mrf.mxu0
      %v7873 = vadd.f32 %v7850, %v7872
      %7874 = vmatmul.f32.gmra.mxu0 %v5325
      %v7875 = vpop.f32.mrf.mxu0
      %v7876 = vadd.f32 %v7853, %v7875
      %7877 = vdwg.mxu0
      %7878 = vmatpush.msra.mxu0 %v6792
      %7879 = vmatpush.msra.mxu0 %v6788
      %7880 = vmatpush.msra.mxu0 %v6784
      %7881 = vmatpush.msra.mxu0 %v6780
      %7882 = vmatpush.msra.mxu0 %v6776
      %7883 = vmatpush.msra.mxu0 %v6772
      %7884 = vmatpush.msra.mxu0 %v6768
      %7885 = vmatpush.msra.mxu0 %v6764
      %7886 = vmatpush.msra.mxu0 %v6760
      %7887 = vmatpush.msra.mxu0 %v6756
      %7888 = vmatpush.msra.mxu0 %v6752
      %7889 = vmatpush.msra.mxu0 %v6748
      %7890 = vmatpush.msra.mxu0 %v6744
      %7891 = vmatpush.msra.mxu0 %v6740
      %7892 = vmatpush.msra.mxu0 %v6736
      %7893 = vmatpush.msra.mxu0 %v6732
      %7894 = vmatmul.f32.gmra.mxu0 %v5316
      %v7895 = vpop.f32.mrf.mxu0
      %v7896 = vadd.f32 %v7873, %v7895
      %7897 = vmatmul.f32.gmra.mxu0 %v5326
      %v7898 = vpop.f32.mrf.mxu0
      %v7899 = vadd.f32 %v7876, %v7898
      %7900 = vdwg.mxu0
      %7901 = vmatpush.msra.mxu0 %v6856
      %7902 = vmatpush.msra.mxu0 %v6852
      %7903 = vmatpush.msra.mxu0 %v6848
      %7904 = vmatpush.msra.mxu0 %v6844
      %7905 = vmatpush.msra.mxu0 %v6840
      %7906 = vmatpush.msra.mxu0 %v6836
      %7907 = vmatpush.msra.mxu0 %v6832
      %7908 = vmatpush.msra.mxu0 %v6828
      %7909 = vmatpush.msra.mxu0 %v6824
      %7910 = vmatpush.msra.mxu0 %v6820
      %7911 = vmatpush.msra.mxu0 %v6816
      %7912 = vmatpush.msra.mxu0 %v6812
      %7913 = vmatpush.msra.mxu0 %v6808
      %7914 = vmatpush.msra.mxu0 %v6804
      %7915 = vmatpush.msra.mxu0 %v6800
      %7916 = vmatpush.msra.mxu0 %v6796
      %7917 = vmatmul.f32.gmra.mxu0 %v5317
      %v7918 = vpop.f32.mrf.mxu0
      %v7919 = vadd.f32 %v7896, %v7918
      %7920 = vmatmul.f32.gmra.mxu0 %v5327
      %v7921 = vpop.f32.mrf.mxu0
      %v7922 = vadd.f32 %v7899, %v7921
      %7923 = vdwg.mxu0
      %7924 = vmatpush.msra.mxu0 %v6920
      %7925 = vmatpush.msra.mxu0 %v6916
      %7926 = vmatpush.msra.mxu0 %v6912
      %7927 = vmatpush.msra.mxu0 %v6908
      %7928 = vmatpush.msra.mxu0 %v6904
      %7929 = vmatpush.msra.mxu0 %v6900
      %7930 = vmatpush.msra.mxu0 %v6896
      %7931 = vmatpush.msra.mxu0 %v6892
      %7932 = vmatpush.msra.mxu0 %v6888
      %7933 = vmatpush.msra.mxu0 %v6884
      %7934 = vmatpush.msra.mxu0 %v6880
      %7935 = vmatpush.msra.mxu0 %v6876
      %7936 = vmatpush.msra.mxu0 %v6872
      %7937 = vmatpush.msra.mxu0 %v6868
      %7938 = vmatpush.msra.mxu0 %v6864
      %7939 = vmatpush.msra.mxu0 %v6860
      %7940 = vmatmul.f32.gmra.mxu0 %v5318
      %v7941 = vpop.f32.mrf.mxu0
      %v7942 = vadd.f32 %v7919, %v7941
      %7943 = vmatmul.f32.gmra.mxu0 %v5328
      %v7944 = vpop.f32.mrf.mxu0
      %v7945 = vadd.f32 %v7922, %v7944
      %7946 = vdwg.mxu0
      %7947 = vmatpush.msra.mxu0 %v6345
      %7948 = vmatpush.msra.mxu0 %v6341
      %7949 = vmatpush.msra.mxu0 %v6337
      %7950 = vmatpush.msra.mxu0 %v6333
      %7951 = vmatpush.msra.mxu0 %v6329
      %7952 = vmatpush.msra.mxu0 %v6325
      %7953 = vmatpush.msra.mxu0 %v6321
      %7954 = vmatpush.msra.mxu0 %v6317
      %7955 = vmatpush.msra.mxu0 %v6313
      %7956 = vmatpush.msra.mxu0 %v6309
      %7957 = vmatpush.msra.mxu0 %v6305
      %7958 = vmatpush.msra.mxu0 %v6301
      %7959 = vmatpush.msra.mxu0 %v6297
      %7960 = vmatpush.msra.mxu0 %v6293
      %7961 = vmatpush.msra.mxu0 %v6289
      %7962 = vmatpush.msra.mxu0 %v6285
      %7963 = vmatmul.f32.gmra.mxu0 %v5309
      %v7964 = vpop.f32.mrf.mxu0
      %v7965 = vadd.f32 %v7413, %v7964
      %7966 = vmatmul.f32.gmra.mxu0 %v5319
      %v7967 = vpop.f32.mrf.mxu0
      %v7968 = vadd.f32 %v7416, %v7967
      %7969 = vdwg.mxu0
      %7970 = vmatpush.msra.mxu0 %v6409
      %7971 = vmatpush.msra.mxu0 %v6405
      %7972 = vmatpush.msra.mxu0 %v6401
      %7973 = vmatpush.msra.mxu0 %v6397
      %7974 = vmatpush.msra.mxu0 %v6393
      %7975 = vmatpush.msra.mxu0 %v6389
      %7976 = vmatpush.msra.mxu0 %v6385
      %7977 = vmatpush.msra.mxu0 %v6381
      %7978 = vmatpush.msra.mxu0 %v6377
      %7979 = vmatpush.msra.mxu0 %v6373
      %7980 = vmatpush.msra.mxu0 %v6369
      %7981 = vmatpush.msra.mxu0 %v6365
      %7982 = vmatpush.msra.mxu0 %v6361
      %7983 = vmatpush.msra.mxu0 %v6357
      %7984 = vmatpush.msra.mxu0 %v6353
      %7985 = vmatpush.msra.mxu0 %v6349
      %7986 = vmatmul.f32.gmra.mxu0 %v5310
      %v7987 = vpop.f32.mrf.mxu0
      %v7988 = vadd.f32 %v7965, %v7987
      %7989 = vmatmul.f32.gmra.mxu0 %v5320
      %v7990 = vpop.f32.mrf.mxu0
      %v7991 = vadd.f32 %v7968, %v7990
      %7992 = vdwg.mxu0
      %7993 = vmatpush.msra.mxu0 %v6473
      %7994 = vmatpush.msra.mxu0 %v6469
      %7995 = vmatpush.msra.mxu0 %v6465
      %7996 = vmatpush.msra.mxu0 %v6461
      %7997 = vmatpush.msra.mxu0 %v6457
      %7998 = vmatpush.msra.mxu0 %v6453
      %7999 = vmatpush.msra.mxu0 %v6449
      %8000 = vmatpush.msra.mxu0 %v6445
      %8001 = vmatpush.msra.mxu0 %v6441
      %8002 = vmatpush.msra.mxu0 %v6437
      %8003 = vmatpush.msra.mxu0 %v6433
      %8004 = vmatpush.msra.mxu0 %v6429
      %8005 = vmatpush.msra.mxu0 %v6425
      %8006 = vmatpush.msra.mxu0 %v6421
      %8007 = vmatpush.msra.mxu0 %v6417
      %8008 = vmatpush.msra.mxu0 %v6413
      %8009 = vmatmul.f32.gmra.mxu0 %v5311
      %v8010 = vpop.f32.mrf.mxu0
      %v8011 = vadd.f32 %v7988, %v8010
      %8012 = vmatmul.f32.gmra.mxu0 %v5321
      %v8013 = vpop.f32.mrf.mxu0
      %v8014 = vadd.f32 %v7991, %v8013
      %8015 = vdwg.mxu0
      %8016 = vmatpush.msra.mxu0 %v6537
      %8017 = vmatpush.msra.mxu0 %v6533
      %8018 = vmatpush.msra.mxu0 %v6529
      %8019 = vmatpush.msra.mxu0 %v6525
      %8020 = vmatpush.msra.mxu0 %v6521
      %8021 = vmatpush.msra.mxu0 %v6517
      %8022 = vmatpush.msra.mxu0 %v6513
      %8023 = vmatpush.msra.mxu0 %v6509
      %8024 = vmatpush.msra.mxu0 %v6505
      %8025 = vmatpush.msra.mxu0 %v6501
      %8026 = vmatpush.msra.mxu0 %v6497
      %8027 = vmatpush.msra.mxu0 %v6493
      %8028 = vmatpush.msra.mxu0 %v6489
      %8029 = vmatpush.msra.mxu0 %v6485
      %8030 = vmatpush.msra.mxu0 %v6481
      %8031 = vmatpush.msra.mxu0 %v6477
      %8032 = vmatmul.f32.gmra.mxu0 %v5312
      %v8033 = vpop.f32.mrf.mxu0
      %v8034 = vadd.f32 %v8011, %v8033
      %8035 = vmatmul.f32.gmra.mxu0 %v5322
      %v8036 = vpop.f32.mrf.mxu0
      %v8037 = vadd.f32 %v8014, %v8036
      %8038 = vdwg.mxu0
      %8039 = vmatpush.msra.mxu0 %v6601
      %8040 = vmatpush.msra.mxu0 %v6597
      %8041 = vmatpush.msra.mxu0 %v6593
      %8042 = vmatpush.msra.mxu0 %v6589
      %8043 = vmatpush.msra.mxu0 %v6585
      %8044 = vmatpush.msra.mxu0 %v6581
      %8045 = vmatpush.msra.mxu0 %v6577
      %8046 = vmatpush.msra.mxu0 %v6573
      %8047 = vmatpush.msra.mxu0 %v6569
      %8048 = vmatpush.msra.mxu0 %v6565
      %8049 = vmatpush.msra.mxu0 %v6561
      %8050 = vmatpush.msra.mxu0 %v6557
      %8051 = vmatpush.msra.mxu0 %v6553
      %8052 = vmatpush.msra.mxu0 %v6549
      %8053 = vmatpush.msra.mxu0 %v6545
      %8054 = vmatpush.msra.mxu0 %v6541
      %8055 = vmatmul.f32.gmra.mxu0 %v5313
      %v8056 = vpop.f32.mrf.mxu0
      %v8057 = vadd.f32 %v8034, %v8056
      %8058 = vmatmul.f32.gmra.mxu0 %v5323
      %v8059 = vpop.f32.mrf.mxu0
      %v8060 = vadd.f32 %v8037, %v8059
      %8061 = vdwg.mxu0
      %8062 = vmatpush.msra.mxu0 %v6665
      %8063 = vmatpush.msra.mxu0 %v6661
      %8064 = vmatpush.msra.mxu0 %v6657
      %8065 = vmatpush.msra.mxu0 %v6653
      %8066 = vmatpush.msra.mxu0 %v6649
      %8067 = vmatpush.msra.mxu0 %v6645
      %8068 = vmatpush.msra.mxu0 %v6641
      %8069 = vmatpush.msra.mxu0 %v6637
      %8070 = vmatpush.msra.mxu0 %v6633
      %8071 = vmatpush.msra.mxu0 %v6629
      %8072 = vmatpush.msra.mxu0 %v6625
      %8073 = vmatpush.msra.mxu0 %v6621
      %8074 = vmatpush.msra.mxu0 %v6617
      %8075 = vmatpush.msra.mxu0 %v6613
      %8076 = vmatpush.msra.mxu0 %v6609
      %8077 = vmatpush.msra.mxu0 %v6605
      %8078 = vmatmul.f32.gmra.mxu0 %v5314
      %v8079 = vpop.f32.mrf.mxu0
      %v8080 = vadd.f32 %v8057, %v8079
      %8081 = vmatmul.f32.gmra.mxu0 %v5324
      %v8082 = vpop.f32.mrf.mxu0
      %v8083 = vadd.f32 %v8060, %v8082
      %8084 = vdwg.mxu0
      %8085 = vmatpush.msra.mxu0 %v6729
      %8086 = vmatpush.msra.mxu0 %v6725
      %8087 = vmatpush.msra.mxu0 %v6721
      %8088 = vmatpush.msra.mxu0 %v6717
      %8089 = vmatpush.msra.mxu0 %v6713
      %8090 = vmatpush.msra.mxu0 %v6709
      %8091 = vmatpush.msra.mxu0 %v6705
      %8092 = vmatpush.msra.mxu0 %v6701
      %8093 = vmatpush.msra.mxu0 %v6697
      %8094 = vmatpush.msra.mxu0 %v6693
      %8095 = vmatpush.msra.mxu0 %v6689
      %8096 = vmatpush.msra.mxu0 %v6685
      %8097 = vmatpush.msra.mxu0 %v6681
      %8098 = vmatpush.msra.mxu0 %v6677
      %8099 = vmatpush.msra.mxu0 %v6673
      %8100 = vmatpush.msra.mxu0 %v6669
      %8101 = vmatmul.f32.gmra.mxu0 %v5315
      %v8102 = vpop.f32.mrf.mxu0
      %v8103 = vadd.f32 %v8080, %v8102
      %8104 = vmatmul.f32.gmra.mxu0 %v5325
      %v8105 = vpop.f32.mrf.mxu0
      %v8106 = vadd.f32 %v8083, %v8105
      %8107 = vdwg.mxu0
      %8108 = vmatpush.msra.mxu0 %v6793
      %8109 = vmatpush.msra.mxu0 %v6789
      %8110 = vmatpush.msra.mxu0 %v6785
      %8111 = vmatpush.msra.mxu0 %v6781
      %8112 = vmatpush.msra.mxu0 %v6777
      %8113 = vmatpush.msra.mxu0 %v6773
      %8114 = vmatpush.msra.mxu0 %v6769
      %8115 = vmatpush.msra.mxu0 %v6765
      %8116 = vmatpush.msra.mxu0 %v6761
      %8117 = vmatpush.msra.mxu0 %v6757
      %8118 = vmatpush.msra.mxu0 %v6753
      %8119 = vmatpush.msra.mxu0 %v6749
      %8120 = vmatpush.msra.mxu0 %v6745
      %8121 = vmatpush.msra.mxu0 %v6741
      %8122 = vmatpush.msra.mxu0 %v6737
      %8123 = vmatpush.msra.mxu0 %v6733
      %8124 = vmatmul.f32.gmra.mxu0 %v5316
      %v8125 = vpop.f32.mrf.mxu0
      %v8126 = vadd.f32 %v8103, %v8125
      %8127 = vmatmul.f32.gmra.mxu0 %v5326
      %v8128 = vpop.f32.mrf.mxu0
      %v8129 = vadd.f32 %v8106, %v8128
      %8130 = vdwg.mxu0
      %8131 = vmatpush.msra.mxu0 %v6857
      %8132 = vmatpush.msra.mxu0 %v6853
      %8133 = vmatpush.msra.mxu0 %v6849
      %8134 = vmatpush.msra.mxu0 %v6845
      %8135 = vmatpush.msra.mxu0 %v6841
      %8136 = vmatpush.msra.mxu0 %v6837
      %8137 = vmatpush.msra.mxu0 %v6833
      %8138 = vmatpush.msra.mxu0 %v6829
      %8139 = vmatpush.msra.mxu0 %v6825
      %8140 = vmatpush.msra.mxu0 %v6821
      %8141 = vmatpush.msra.mxu0 %v6817
      %8142 = vmatpush.msra.mxu0 %v6813
      %8143 = vmatpush.msra.mxu0 %v6809
      %8144 = vmatpush.msra.mxu0 %v6805
      %8145 = vmatpush.msra.mxu0 %v6801
      %8146 = vmatpush.msra.mxu0 %v6797
      %8147 = vmatmul.f32.gmra.mxu0 %v5317
      %v8148 = vpop.f32.mrf.mxu0
      %v8149 = vadd.f32 %v8126, %v8148
      %8150 = vmatmul.f32.gmra.mxu0 %v5327
      %v8151 = vpop.f32.mrf.mxu0
      %v8152 = vadd.f32 %v8129, %v8151
      %8153 = vdwg.mxu0
      %8154 = vmatpush.msra.mxu0 %v6921
      %8155 = vmatpush.msra.mxu0 %v6917
      %8156 = vmatpush.msra.mxu0 %v6913
      %8157 = vmatpush.msra.mxu0 %v6909
      %8158 = vmatpush.msra.mxu0 %v6905
      %8159 = vmatpush.msra.mxu0 %v6901
      %8160 = vmatpush.msra.mxu0 %v6897
      %8161 = vmatpush.msra.mxu0 %v6893
      %8162 = vmatpush.msra.mxu0 %v6889
      %8163 = vmatpush.msra.mxu0 %v6885
      %8164 = vmatpush.msra.mxu0 %v6881
      %8165 = vmatpush.msra.mxu0 %v6877
      %8166 = vmatpush.msra.mxu0 %v6873
      %8167 = vmatpush.msra.mxu0 %v6869
      %8168 = vmatpush.msra.mxu0 %v6865
      %8169 = vmatpush.msra.mxu0 %v6861
      %8170 = vmatmul.f32.gmra.mxu0 %v5318
      %v8171 = vpop.f32.mrf.mxu0
      %v8172 = vadd.f32 %v8149, %v8171
      %8173 = vmatmul.f32.gmra.mxu0 %v5328
      %v8174 = vpop.f32.mrf.mxu0
      %v8175 = vadd.f32 %v8152, %v8174
      %8176 = vdwg.mxu0
      %8177 = vmatpush.msra.mxu0 %v6346
      %8178 = vmatpush.msra.mxu0 %v6342
      %8179 = vmatpush.msra.mxu0 %v6338
      %8180 = vmatpush.msra.mxu0 %v6334
      %8181 = vmatpush.msra.mxu0 %v6330
      %8182 = vmatpush.msra.mxu0 %v6326
      %8183 = vmatpush.msra.mxu0 %v6322
      %8184 = vmatpush.msra.mxu0 %v6318
      %8185 = vmatpush.msra.mxu0 %v6314
      %8186 = vmatpush.msra.mxu0 %v6310
      %8187 = vmatpush.msra.mxu0 %v6306
      %8188 = vmatpush.msra.mxu0 %v6302
      %8189 = vmatpush.msra.mxu0 %v6298
      %8190 = vmatpush.msra.mxu0 %v6294
      %8191 = vmatpush.msra.mxu0 %v6290
      %8192 = vmatpush.msra.mxu0 %v6286
      %8193 = vmatmul.f32.gmra.mxu0 %v5309
      %v8194 = vpop.f32.mrf.mxu0
      %v8195 = vadd.f32 %v7482, %v8194
      %8196 = vmatmul.f32.gmra.mxu0 %v5319
      %v8197 = vpop.f32.mrf.mxu0
      %v8198 = vadd.f32 %v7485, %v8197
      %8199 = vdwg.mxu0
      %8200 = vmatpush.msra.mxu0 %v6410
      %8201 = vmatpush.msra.mxu0 %v6406
      %8202 = vmatpush.msra.mxu0 %v6402
      %8203 = vmatpush.msra.mxu0 %v6398
      %8204 = vmatpush.msra.mxu0 %v6394
      %8205 = vmatpush.msra.mxu0 %v6390
      %8206 = vmatpush.msra.mxu0 %v6386
      %8207 = vmatpush.msra.mxu0 %v6382
      %8208 = vmatpush.msra.mxu0 %v6378
      %8209 = vmatpush.msra.mxu0 %v6374
      %8210 = vmatpush.msra.mxu0 %v6370
      %8211 = vmatpush.msra.mxu0 %v6366
      %8212 = vmatpush.msra.mxu0 %v6362
      %8213 = vmatpush.msra.mxu0 %v6358
      %8214 = vmatpush.msra.mxu0 %v6354
      %8215 = vmatpush.msra.mxu0 %v6350
      %8216 = vmatmul.f32.gmra.mxu0 %v5310
      %v8217 = vpop.f32.mrf.mxu0
      %v8218 = vadd.f32 %v8195, %v8217
      %8219 = vmatmul.f32.gmra.mxu0 %v5320
      %v8220 = vpop.f32.mrf.mxu0
      %v8221 = vadd.f32 %v8198, %v8220
      %8222 = vdwg.mxu0
      %8223 = vmatpush.msra.mxu0 %v6474
      %8224 = vmatpush.msra.mxu0 %v6470
      %8225 = vmatpush.msra.mxu0 %v6466
      %8226 = vmatpush.msra.mxu0 %v6462
      %8227 = vmatpush.msra.mxu0 %v6458
      %8228 = vmatpush.msra.mxu0 %v6454
      %8229 = vmatpush.msra.mxu0 %v6450
      %8230 = vmatpush.msra.mxu0 %v6446
      %8231 = vmatpush.msra.mxu0 %v6442
      %8232 = vmatpush.msra.mxu0 %v6438
      %8233 = vmatpush.msra.mxu0 %v6434
      %8234 = vmatpush.msra.mxu0 %v6430
      %8235 = vmatpush.msra.mxu0 %v6426
      %8236 = vmatpush.msra.mxu0 %v6422
      %8237 = vmatpush.msra.mxu0 %v6418
      %8238 = vmatpush.msra.mxu0 %v6414
      %8239 = vmatmul.f32.gmra.mxu0 %v5311
      %v8240 = vpop.f32.mrf.mxu0
      %v8241 = vadd.f32 %v8218, %v8240
      %8242 = vmatmul.f32.gmra.mxu0 %v5321
      %v8243 = vpop.f32.mrf.mxu0
      %v8244 = vadd.f32 %v8221, %v8243
      %8245 = vdwg.mxu0
      %8246 = vmatpush.msra.mxu0 %v6538
      %8247 = vmatpush.msra.mxu0 %v6534
      %8248 = vmatpush.msra.mxu0 %v6530
      %8249 = vmatpush.msra.mxu0 %v6526
      %8250 = vmatpush.msra.mxu0 %v6522
      %8251 = vmatpush.msra.mxu0 %v6518
      %8252 = vmatpush.msra.mxu0 %v6514
      %8253 = vmatpush.msra.mxu0 %v6510
      %8254 = vmatpush.msra.mxu0 %v6506
      %8255 = vmatpush.msra.mxu0 %v6502
      %8256 = vmatpush.msra.mxu0 %v6498
      %8257 = vmatpush.msra.mxu0 %v6494
      %8258 = vmatpush.msra.mxu0 %v6490
      %8259 = vmatpush.msra.mxu0 %v6486
      %8260 = vmatpush.msra.mxu0 %v6482
      %8261 = vmatpush.msra.mxu0 %v6478
      %8262 = vmatmul.f32.gmra.mxu0 %v5312
      %v8263 = vpop.f32.mrf.mxu0
      %v8264 = vadd.f32 %v8241, %v8263
      %8265 = vmatmul.f32.gmra.mxu0 %v5322
      %v8266 = vpop.f32.mrf.mxu0
      %v8267 = vadd.f32 %v8244, %v8266
      %8268 = vdwg.mxu0
      %8269 = vmatpush.msra.mxu0 %v6602
      %8270 = vmatpush.msra.mxu0 %v6598
      %8271 = vmatpush.msra.mxu0 %v6594
      %8272 = vmatpush.msra.mxu0 %v6590
      %8273 = vmatpush.msra.mxu0 %v6586
      %8274 = vmatpush.msra.mxu0 %v6582
      %8275 = vmatpush.msra.mxu0 %v6578
      %8276 = vmatpush.msra.mxu0 %v6574
      %8277 = vmatpush.msra.mxu0 %v6570
      %8278 = vmatpush.msra.mxu0 %v6566
      %8279 = vmatpush.msra.mxu0 %v6562
      %8280 = vmatpush.msra.mxu0 %v6558
      %8281 = vmatpush.msra.mxu0 %v6554
      %8282 = vmatpush.msra.mxu0 %v6550
      %8283 = vmatpush.msra.mxu0 %v6546
      %8284 = vmatpush.msra.mxu0 %v6542
      %8285 = vmatmul.f32.gmra.mxu0 %v5313
      %v8286 = vpop.f32.mrf.mxu0
      %v8287 = vadd.f32 %v8264, %v8286
      %8288 = vmatmul.f32.gmra.mxu0 %v5323
      %v8289 = vpop.f32.mrf.mxu0
      %v8290 = vadd.f32 %v8267, %v8289
      %8291 = vdwg.mxu0
      %8292 = vmatpush.msra.mxu0 %v6666
      %8293 = vmatpush.msra.mxu0 %v6662
      %8294 = vmatpush.msra.mxu0 %v6658
      %8295 = vmatpush.msra.mxu0 %v6654
      %8296 = vmatpush.msra.mxu0 %v6650
      %8297 = vmatpush.msra.mxu0 %v6646
      %8298 = vmatpush.msra.mxu0 %v6642
      %8299 = vmatpush.msra.mxu0 %v6638
      %8300 = vmatpush.msra.mxu0 %v6634
      %8301 = vmatpush.msra.mxu0 %v6630
      %8302 = vmatpush.msra.mxu0 %v6626
      %8303 = vmatpush.msra.mxu0 %v6622
      %8304 = vmatpush.msra.mxu0 %v6618
      %8305 = vmatpush.msra.mxu0 %v6614
      %8306 = vmatpush.msra.mxu0 %v6610
      %8307 = vmatpush.msra.mxu0 %v6606
      %8308 = vmatmul.f32.gmra.mxu0 %v5314
      %v8309 = vpop.f32.mrf.mxu0
      %v8310 = vadd.f32 %v8287, %v8309
      %8311 = vmatmul.f32.gmra.mxu0 %v5324
      %v8312 = vpop.f32.mrf.mxu0
      %v8313 = vadd.f32 %v8290, %v8312
      %8314 = vdwg.mxu0
      %8315 = vmatpush.msra.mxu0 %v6730
      %8316 = vmatpush.msra.mxu0 %v6726
      %8317 = vmatpush.msra.mxu0 %v6722
      %8318 = vmatpush.msra.mxu0 %v6718
      %8319 = vmatpush.msra.mxu0 %v6714
      %8320 = vmatpush.msra.mxu0 %v6710
      %8321 = vmatpush.msra.mxu0 %v6706
      %8322 = vmatpush.msra.mxu0 %v6702
      %8323 = vmatpush.msra.mxu0 %v6698
      %8324 = vmatpush.msra.mxu0 %v6694
      %8325 = vmatpush.msra.mxu0 %v6690
      %8326 = vmatpush.msra.mxu0 %v6686
      %8327 = vmatpush.msra.mxu0 %v6682
      %8328 = vmatpush.msra.mxu0 %v6678
      %8329 = vmatpush.msra.mxu0 %v6674
      %8330 = vmatpush.msra.mxu0 %v6670
      %8331 = vmatmul.f32.gmra.mxu0 %v5315
      %v8332 = vpop.f32.mrf.mxu0
      %v8333 = vadd.f32 %v8310, %v8332
      %8334 = vmatmul.f32.gmra.mxu0 %v5325
      %v8335 = vpop.f32.mrf.mxu0
      %v8336 = vadd.f32 %v8313, %v8335
      %8337 = vdwg.mxu0
      %8338 = vmatpush.msra.mxu0 %v6794
      %8339 = vmatpush.msra.mxu0 %v6790
      %8340 = vmatpush.msra.mxu0 %v6786
      %8341 = vmatpush.msra.mxu0 %v6782
      %8342 = vmatpush.msra.mxu0 %v6778
      %8343 = vmatpush.msra.mxu0 %v6774
      %8344 = vmatpush.msra.mxu0 %v6770
      %8345 = vmatpush.msra.mxu0 %v6766
      %8346 = vmatpush.msra.mxu0 %v6762
      %8347 = vmatpush.msra.mxu0 %v6758
      %8348 = vmatpush.msra.mxu0 %v6754
      %8349 = vmatpush.msra.mxu0 %v6750
      %8350 = vmatpush.msra.mxu0 %v6746
      %8351 = vmatpush.msra.mxu0 %v6742
      %8352 = vmatpush.msra.mxu0 %v6738
      %8353 = vmatpush.msra.mxu0 %v6734
      %8354 = vmatmul.f32.gmra.mxu0 %v5316
      %v8355 = vpop.f32.mrf.mxu0
      %v8356 = vadd.f32 %v8333, %v8355
      %8357 = vmatmul.f32.gmra.mxu0 %v5326
      %v8358 = vpop.f32.mrf.mxu0
      %v8359 = vadd.f32 %v8336, %v8358
      %8360 = vdwg.mxu0
      %8361 = vmatpush.msra.mxu0 %v6858
      %8362 = vmatpush.msra.mxu0 %v6854
      %8363 = vmatpush.msra.mxu0 %v6850
      %8364 = vmatpush.msra.mxu0 %v6846
      %8365 = vmatpush.msra.mxu0 %v6842
      %8366 = vmatpush.msra.mxu0 %v6838
      %8367 = vmatpush.msra.mxu0 %v6834
      %8368 = vmatpush.msra.mxu0 %v6830
      %8369 = vmatpush.msra.mxu0 %v6826
      %8370 = vmatpush.msra.mxu0 %v6822
      %8371 = vmatpush.msra.mxu0 %v6818
      %8372 = vmatpush.msra.mxu0 %v6814
      %8373 = vmatpush.msra.mxu0 %v6810
      %8374 = vmatpush.msra.mxu0 %v6806
      %8375 = vmatpush.msra.mxu0 %v6802
      %8376 = vmatpush.msra.mxu0 %v6798
      %8377 = vmatmul.f32.gmra.mxu0 %v5317
      %v8378 = vpop.f32.mrf.mxu0
      %v8379 = vadd.f32 %v8356, %v8378
      %8380 = vmatmul.f32.gmra.mxu0 %v5327
      %v8381 = vpop.f32.mrf.mxu0
      %v8382 = vadd.f32 %v8359, %v8381
      %8383 = vdwg.mxu0
      %8384 = vmatpush.msra.mxu0 %v6922
      %8385 = vmatpush.msra.mxu0 %v6918
      %8386 = vmatpush.msra.mxu0 %v6914
      %8387 = vmatpush.msra.mxu0 %v6910
      %8388 = vmatpush.msra.mxu0 %v6906
      %8389 = vmatpush.msra.mxu0 %v6902
      %8390 = vmatpush.msra.mxu0 %v6898
      %8391 = vmatpush.msra.mxu0 %v6894
      %8392 = vmatpush.msra.mxu0 %v6890
      %8393 = vmatpush.msra.mxu0 %v6886
      %8394 = vmatpush.msra.mxu0 %v6882
      %8395 = vmatpush.msra.mxu0 %v6878
      %8396 = vmatpush.msra.mxu0 %v6874
      %8397 = vmatpush.msra.mxu0 %v6870
      %8398 = vmatpush.msra.mxu0 %v6866
      %8399 = vmatpush.msra.mxu0 %v6862
      %8400 = vmatmul.f32.gmra.mxu0 %v5318
      %v8401 = vpop.f32.mrf.mxu0
      %v8402 = vadd.f32 %v8379, %v8401
      %8403 = vmatmul.f32.gmra.mxu0 %v5328
      %v8404 = vpop.f32.mrf.mxu0
      %v8405 = vadd.f32 %v8382, %v8404
      %8406 = vdwg.mxu0
      %v8407 = vld [vmem:[#allocation13] sm:$0xf]
      %v8409 = vperm.slane %v8407, 0
      %v8410 = vperm.slane %v8407, 1
      %v8411 = vperm.slane %v8407, 2
      %v8412 = vperm.slane %v8407, 3
      %v8417 = vadd.f32 %v7712, %v8409
      %v8418 = vadd.f32 %v7942, %v8410
      %v8419 = vadd.f32 %v8172, %v8411
      %v8420 = vadd.f32 %v8402, %v8412
      %v8421 = vadd.f32 %v7715, %v8409
      %v8422 = vadd.f32 %v7945, %v8410
      %v8423 = vadd.f32 %v8175, %v8411
      %v8424 = vadd.f32 %v8405, %v8412
      %v8425 = vmax.f32 %v8417, 0.0
      %v8426 = vmax.f32 %v8418, 0.0
      %v8427 = vmax.f32 %v8419, 0.0
      %v8428 = vmax.f32 %v8420, 0.0
      %v8429 = vmax.f32 %v8421, 0.0
      %v8430 = vmax.f32 %v8422, 0.0
      %v8431 = vmax.f32 %v8423, 0.0
      %v8432 = vmax.f32 %v8424, 0.0
      %v8433 = vld [vmem:[#allocation14] sm:$0xf]
      %v8434 = vld [vmem:[#allocation14 + $0x4] sm:$0xf]
      %v8435 = vld [vmem:[#allocation14 + $0x8] sm:$0xf]
      %v8436 = vld [vmem:[#allocation14 + $0xc] sm:$0xf]
      %v8437 = vld [vmem:[#allocation14 + $0x10] sm:$0xf]
      %v8438 = vld [vmem:[#allocation14 + $0x14] sm:$0xf]
      %v8439 = vld [vmem:[#allocation14 + $0x18] sm:$0xf]
      %v8440 = vld [vmem:[#allocation14 + $0x1c] sm:$0xf]
      %v8441 = vld [vmem:[#allocation14 + $0x20] sm:$0xf]
      %v8442 = vld [vmem:[#allocation14 + $0x24] sm:$0xf]
      %v8443 = vld [vmem:[#allocation14 + $0x28] sm:$0xf]
      %v8444 = vld [vmem:[#allocation14 + $0x2c] sm:$0xf]
      %v8445 = vld [vmem:[#allocation14 + $0x30] sm:$0xf]
      %v8446 = vld [vmem:[#allocation14 + $0x34] sm:$0xf]
      %v8447 = vld [vmem:[#allocation14 + $0x38] sm:$0xf]
      %v8448 = vld [vmem:[#allocation14 + $0x3c] sm:$0xf]
      %v8449 = vld [vmem:[#allocation14 + $0x40] sm:$0xf]
      %v8450 = vld [vmem:[#allocation14 + $0x44] sm:$0xf]
      %v8451 = vld [vmem:[#allocation14 + $0x48] sm:$0xf]
      %v8452 = vld [vmem:[#allocation14 + $0x4c] sm:$0xf]
      %v8453 = vld [vmem:[#allocation14 + $0x50] sm:$0xf]
      %v8454 = vld [vmem:[#allocation14 + $0x54] sm:$0xf]
      %v8455 = vld [vmem:[#allocation14 + $0x58] sm:$0xf]
      %v8456 = vld [vmem:[#allocation14 + $0x5c] sm:$0xf]
      %v8457 = vld [vmem:[#allocation14 + $0x60] sm:$0xf]
      %v8458 = vld [vmem:[#allocation14 + $0x64] sm:$0xf]
      %v8459 = vld [vmem:[#allocation14 + $0x68] sm:$0xf]
      %v8460 = vld [vmem:[#allocation14 + $0x6c] sm:$0xf]
      %v8461 = vld [vmem:[#allocation14 + $0x70] sm:$0xf]
      %v8462 = vld [vmem:[#allocation14 + $0x74] sm:$0xf]
      %v8463 = vld [vmem:[#allocation14 + $0x78] sm:$0xf]
      %v8464 = vld [vmem:[#allocation14 + $0x7c] sm:$0xf]
      %v8465 = vld [vmem:[#allocation14 + $0x80] sm:$0xf]
      %v8466 = vld [vmem:[#allocation14 + $0x84] sm:$0xf]
      %v8467 = vld [vmem:[#allocation14 + $0x88] sm:$0xf]
      %v8468 = vld [vmem:[#allocation14 + $0x8c] sm:$0xf]
      %v8469 = vld [vmem:[#allocation14 + $0x90] sm:$0xf]
      %v8470 = vld [vmem:[#allocation14 + $0x94] sm:$0xf]
      %v8471 = vld [vmem:[#allocation14 + $0x98] sm:$0xf]
      %v8472 = vld [vmem:[#allocation14 + $0x9c] sm:$0xf]
      %v8473 = vld [vmem:[#allocation14 + $0xa0] sm:$0xf]
      %v8474 = vld [vmem:[#allocation14 + $0xa4] sm:$0xf]
      %v8475 = vld [vmem:[#allocation14 + $0xa8] sm:$0xf]
      %v8476 = vld [vmem:[#allocation14 + $0xac] sm:$0xf]
      %v8477 = vld [vmem:[#allocation14 + $0xb0] sm:$0xf]
      %v8478 = vld [vmem:[#allocation14 + $0xb4] sm:$0xf]
      %v8479 = vld [vmem:[#allocation14 + $0xb8] sm:$0xf]
      %v8480 = vld [vmem:[#allocation14 + $0xbc] sm:$0xf]
      %v8481 = vld [vmem:[#allocation14 + $0xc0] sm:$0xf]
      %v8482 = vld [vmem:[#allocation14 + $0xc4] sm:$0xf]
      %v8483 = vld [vmem:[#allocation14 + $0xc8] sm:$0xf]
      %v8484 = vld [vmem:[#allocation14 + $0xcc] sm:$0xf]
      %v8485 = vld [vmem:[#allocation14 + $0xd0] sm:$0xf]
      %v8486 = vld [vmem:[#allocation14 + $0xd4] sm:$0xf]
      %v8487 = vld [vmem:[#allocation14 + $0xd8] sm:$0xf]
      %v8488 = vld [vmem:[#allocation14 + $0xdc] sm:$0xf]
      %v8489 = vld [vmem:[#allocation14 + $0xe0] sm:$0xf]
      %v8490 = vld [vmem:[#allocation14 + $0xe4] sm:$0xf]
      %v8491 = vld [vmem:[#allocation14 + $0xe8] sm:$0xf]
      %v8492 = vld [vmem:[#allocation14 + $0xec] sm:$0xf]
      %v8493 = vld [vmem:[#allocation14 + $0xf0] sm:$0xf]
      %v8494 = vld [vmem:[#allocation14 + $0xf4] sm:$0xf]
      %v8495 = vld [vmem:[#allocation14 + $0xf8] sm:$0xf]
      %v8496 = vld [vmem:[#allocation14 + $0xfc] sm:$0xf]
      %v8497 = vunpack.c.l.bf16 %v8433
      %v8498 = vunpack.c.l.bf16 %v8434
      %v8499 = vunpack.c.l.bf16 %v8435
      %v8500 = vunpack.c.l.bf16 %v8436
      %v8501 = vunpack.c.l.bf16 %v8437
      %v8502 = vunpack.c.l.bf16 %v8438
      %v8503 = vunpack.c.l.bf16 %v8439
      %v8504 = vunpack.c.l.bf16 %v8440
      %v8505 = vunpack.c.l.bf16 %v8441
      %v8506 = vunpack.c.l.bf16 %v8442
      %v8507 = vunpack.c.l.bf16 %v8443
      %v8508 = vunpack.c.l.bf16 %v8444
      %v8509 = vunpack.c.l.bf16 %v8445
      %v8510 = vunpack.c.l.bf16 %v8446
      %v8511 = vunpack.c.l.bf16 %v8447
      %v8512 = vunpack.c.l.bf16 %v8448
      %v8513 = vunpack.c.l.bf16 %v8449
      %v8514 = vunpack.c.l.bf16 %v8450
      %v8515 = vunpack.c.l.bf16 %v8451
      %v8516 = vunpack.c.l.bf16 %v8452
      %v8517 = vunpack.c.l.bf16 %v8453
      %v8518 = vunpack.c.l.bf16 %v8454
      %v8519 = vunpack.c.l.bf16 %v8455
      %v8520 = vunpack.c.l.bf16 %v8456
      %v8521 = vunpack.c.l.bf16 %v8457
      %v8522 = vunpack.c.l.bf16 %v8458
      %v8523 = vunpack.c.l.bf16 %v8459
      %v8524 = vunpack.c.l.bf16 %v8460
      %v8525 = vunpack.c.l.bf16 %v8461
      %v8526 = vunpack.c.l.bf16 %v8462
      %v8527 = vunpack.c.l.bf16 %v8463
      %v8528 = vunpack.c.l.bf16 %v8464
      %v8529 = vunpack.c.l.bf16 %v8465
      %v8530 = vunpack.c.l.bf16 %v8466
      %v8531 = vunpack.c.l.bf16 %v8467
      %v8532 = vunpack.c.l.bf16 %v8468
      %v8533 = vunpack.c.l.bf16 %v8469
      %v8534 = vunpack.c.l.bf16 %v8470
      %v8535 = vunpack.c.l.bf16 %v8471
      %v8536 = vunpack.c.l.bf16 %v8472
      %v8537 = vunpack.c.l.bf16 %v8473
      %v8538 = vunpack.c.l.bf16 %v8474
      %v8539 = vunpack.c.l.bf16 %v8475
      %v8540 = vunpack.c.l.bf16 %v8476
      %v8541 = vunpack.c.l.bf16 %v8477
      %v8542 = vunpack.c.l.bf16 %v8478
      %v8543 = vunpack.c.l.bf16 %v8479
      %v8544 = vunpack.c.l.bf16 %v8480
      %v8545 = vunpack.c.l.bf16 %v8481
      %v8546 = vunpack.c.l.bf16 %v8482
      %v8547 = vunpack.c.l.bf16 %v8483
      %v8548 = vunpack.c.l.bf16 %v8484
      %v8549 = vunpack.c.l.bf16 %v8485
      %v8550 = vunpack.c.l.bf16 %v8486
      %v8551 = vunpack.c.l.bf16 %v8487
      %v8552 = vunpack.c.l.bf16 %v8488
      %v8553 = vunpack.c.l.bf16 %v8489
      %v8554 = vunpack.c.l.bf16 %v8490
      %v8555 = vunpack.c.l.bf16 %v8491
      %v8556 = vunpack.c.l.bf16 %v8492
      %v8557 = vunpack.c.l.bf16 %v8493
      %v8558 = vunpack.c.l.bf16 %v8494
      %v8559 = vunpack.c.l.bf16 %v8495
      %v8560 = vunpack.c.l.bf16 %v8496
      %v8561 = vld [vmem:[#allocation16] sm:$0x1]
      %v8563 = vperm.slane %v8561, 0
      %8565 = vmatpush.msra.mxu0 %v8512
      %8566 = vmatpush.msra.mxu0 %v8511
      %8567 = vmatpush.msra.mxu0 %v8510
      %8568 = vmatpush.msra.mxu0 %v8509
      %8569 = vmatpush.msra.mxu0 %v8508
      %8570 = vmatpush.msra.mxu0 %v8507
      %8571 = vmatpush.msra.mxu0 %v8506
      %8572 = vmatpush.msra.mxu0 %v8505
      %8573 = vmatpush.msra.mxu0 %v8504
      %8574 = vmatpush.msra.mxu0 %v8503
      %8575 = vmatpush.msra.mxu0 %v8502
      %8576 = vmatpush.msra.mxu0 %v8501
      %8577 = vmatpush.msra.mxu0 %v8500
      %8578 = vmatpush.msra.mxu0 %v8499
      %8579 = vmatpush.msra.mxu0 %v8498
      %8580 = vmatpush.msra.mxu0 %v8497
      %8581 = vmatmul.f32.gmra.mxu0 %v8425
      %v8582 = vpop.f32.mrf.mxu0
      %v8583 = vadd.f32 %v8563, %v8582
      %8584 = vmatmul.f32.gmra.mxu0 %v8429
      %v8585 = vpop.f32.mrf.mxu0
      %v8586 = vadd.f32 %v8563, %v8585
      %8587 = vdwg.mxu0
      %8588 = vmatpush.msra.mxu0 %v8528
      %8589 = vmatpush.msra.mxu0 %v8527
      %8590 = vmatpush.msra.mxu0 %v8526
      %8591 = vmatpush.msra.mxu0 %v8525
      %8592 = vmatpush.msra.mxu0 %v8524
      %8593 = vmatpush.msra.mxu0 %v8523
      %8594 = vmatpush.msra.mxu0 %v8522
      %8595 = vmatpush.msra.mxu0 %v8521
      %8596 = vmatpush.msra.mxu0 %v8520
      %8597 = vmatpush.msra.mxu0 %v8519
      %8598 = vmatpush.msra.mxu0 %v8518
      %8599 = vmatpush.msra.mxu0 %v8517
      %8600 = vmatpush.msra.mxu0 %v8516
      %8601 = vmatpush.msra.mxu0 %v8515
      %8602 = vmatpush.msra.mxu0 %v8514
      %8603 = vmatpush.msra.mxu0 %v8513
      %8604 = vmatmul.f32.gmra.mxu0 %v8426
      %v8605 = vpop.f32.mrf.mxu0
      %v8606 = vadd.f32 %v8583, %v8605
      %8607 = vmatmul.f32.gmra.mxu0 %v8430
      %v8608 = vpop.f32.mrf.mxu0
      %v8609 = vadd.f32 %v8586, %v8608
      %8610 = vdwg.mxu0
      %8611 = vmatpush.msra.mxu0 %v8544
      %8612 = vmatpush.msra.mxu0 %v8543
      %8613 = vmatpush.msra.mxu0 %v8542
      %8614 = vmatpush.msra.mxu0 %v8541
      %8615 = vmatpush.msra.mxu0 %v8540
      %8616 = vmatpush.msra.mxu0 %v8539
      %8617 = vmatpush.msra.mxu0 %v8538
      %8618 = vmatpush.msra.mxu0 %v8537
      %8619 = vmatpush.msra.mxu0 %v8536
      %8620 = vmatpush.msra.mxu0 %v8535
      %8621 = vmatpush.msra.mxu0 %v8534
      %8622 = vmatpush.msra.mxu0 %v8533
      %8623 = vmatpush.msra.mxu0 %v8532
      %8624 = vmatpush.msra.mxu0 %v8531
      %8625 = vmatpush.msra.mxu0 %v8530
      %8626 = vmatpush.msra.mxu0 %v8529
      %8627 = vmatmul.f32.gmra.mxu0 %v8427
      %v8628 = vpop.f32.mrf.mxu0
      %v8629 = vadd.f32 %v8606, %v8628
      %8630 = vmatmul.f32.gmra.mxu0 %v8431
      %v8631 = vpop.f32.mrf.mxu0
      %v8632 = vadd.f32 %v8609, %v8631
      %8633 = vdwg.mxu0
      %8634 = vmatpush.msra.mxu0 %v8560
      %8635 = vmatpush.msra.mxu0 %v8559
      %8636 = vmatpush.msra.mxu0 %v8558
      %8637 = vmatpush.msra.mxu0 %v8557
      %8638 = vmatpush.msra.mxu0 %v8556
      %8639 = vmatpush.msra.mxu0 %v8555
      %8640 = vmatpush.msra.mxu0 %v8554
      %8641 = vmatpush.msra.mxu0 %v8553
      %8642 = vmatpush.msra.mxu0 %v8552
      %8643 = vmatpush.msra.mxu0 %v8551
      %8644 = vmatpush.msra.mxu0 %v8550
      %8645 = vmatpush.msra.mxu0 %v8549
      %8646 = vmatpush.msra.mxu0 %v8548
      %8647 = vmatpush.msra.mxu0 %v8547
      %8648 = vmatpush.msra.mxu0 %v8546
      %8649 = vmatpush.msra.mxu0 %v8545
      %8650 = vmatmul.f32.gmra.mxu0 %v8428
      %v8651 = vpop.f32.mrf.mxu0
      %v8652 = vadd.f32 %v8629, %v8651
      %8653 = vmatmul.f32.gmra.mxu0 %v8432
      %v8654 = vpop.f32.mrf.mxu0
      %v8655 = vadd.f32 %v8632, %v8654
      %8656 = vdwg.mxu0
      %8657 = vst [vmem:[%s11] sm:$0xff] %v8652
      %8658 = vst [vmem:[%s11 + $0x8] sm:$0xff] %v8655
    $region89: #{multimodal_classifier_forward.1} parent=1 // pred_fallthru
      _
    // Predicated region
    $region90: #{multimodal_classifier_forward.1} parent=1 // pred_check
      _
    $region91: #{multimodal_classifier_forward.1} parent=1 // pred_check_branch
      %8660 = sbr.rel (0) target = $region93
    $region92: #{multimodal_classifier_forward.1} parent=1 // pred_region
      _
    $region93: #{multimodal_classifier_forward.1} parent=1 // pred_fallthru
      _
    // Predicated region
    $region94: #{multimodal_classifier_forward.1} parent=1 // pred_check
      _
    $region95: #{multimodal_classifier_forward.1} parent=1 // pred_check_branch
      %8662 = sbr.rel (0) target = $region97
    $region96: #{multimodal_classifier_forward.1} parent=1 // pred_region
      _
    $region97: #{multimodal_classifier_forward.1} parent=1 // pred_fallthru
      _
    %8663 = vsyncpa [#allocation4], 1
    %8664 = vsyncpa [#allocation6], 1
    %8665 = vsyncpa [#allocation9], 1
    %8666 = vsyncpa [#allocation12], 1
    %8667 = vsyncpa [#allocation15], 1

</llo_original>
